<compile_context>
chip_gen: v7x
topology: tpu7x:2x2x1
jax: 0.10.0
libtpu: 0.0.40
codegen_flags: <defaults>
</compile_context>

<pallas_src>
import functools

import jax
import jax.numpy as jnp
from jax import lax
from jax.experimental import pallas as pl
from jax.experimental.pallas import tpu as pltpu


# ----------------------------------------------------------------------------
# Fused kernel factory.  Per grid step it processes BBLK images.
#   x_ref:     (BBLK, H*W, C)  input images (row-major pixels, channels-last)
#   mqk_ref:   (C, C)          Wq @ Wk^T
#   ck_ref:    (1, C)          Wk @ bq
#   wvg_ref:   (C, C)          gamma_nl * Wv
#   bvg_ref:   (1, C)          gamma_nl * bv
#   mask_ref:  (H*W, H*W)      additive block-diagonal attention bias (0 / -1e30)
#   wtaps_ref: (9, C, C)       3x3 conv weight per tap, t = ky*3 + kx
#   scale_ref: (1, C)          gamma * bn_gamma / sqrt(var+eps)
#   bias_ref:  (1, C)          gamma * ((b_conv - mean)*bn_gamma/sqrt(var+eps) + bn_beta)
#   o_ref:     (BBLK, H*W, C)
#   pad_ref:   VMEM scratch (NROWS*STRIDE, C) zero-padded conv context
# ----------------------------------------------------------------------------
def _make_agcb_kernel(H, W, C, BBLK):
    HW = H * W

    # Flat padded-conv layout: row stride rounded up to a multiple of the
    # 8-sublane tile; the zero column tail (cols W..STRIDE-1) doubles as the
    # left/right 'SAME' padding via the flat wrap-around trick.
    STRIDE = max(W + 2, ((W + 2 + 7) // 8) * 8)
    R_TOP, R_BOT = 2, 2
    NROWS = R_TOP + H + R_BOT
    ROWS = H * STRIDE                      # conv rows computed (cols >= W dropped)
    STARTS = tuple((R_TOP + dy - 1) * STRIDE + (dx - 1)
                   for dy in range(3) for dx in range(3))
    # Wrap-around taps must land in zero padding / the zero column tail.
    assert STRIDE >= W + 2 and R_TOP >= 2 and R_BOT >= 2
    assert STRIDE % 8 == 0
    assert min(STARTS) >= 0 and max(STARTS) + ROWS <= NROWS * STRIDE

    def kernel(x_ref, mqk_ref, ck_ref, wvg_ref, bvg_ref, mask_ref,
               wtaps_ref, scale_ref, bias_ref, o_ref, pad_ref):
        f32 = jnp.float32

        # Scratch is per-core and persists across steps; re-zero every step so
        # correctness does not depend on how the "parallel" axis is split
        # across TensorCores (~60 vregs of stores, negligible).
        pad_ref[...] = jnp.zeros_like(pad_ref)

        mask = mask_ref[...]          # (HW, HW)
        mqk = mqk_ref[...]            # (C, C)
        ck = ck_ref[...]              # (1, C)
        wvg = wvg_ref[...]            # (C, C)
        bvg = bvg_ref[...]            # (1, C)
        scale = scale_ref[...]        # (1, C)
        bias = bias_ref[...]          # (1, C)

        for n in range(BBLK):
            x = x_ref[n]                                              # (HW, C)

            # ---- block-diagonal non-local attention over the whole image ----
            # e[i,j] = q_i . k_j  ==  (x_i @ Mqk + c) . x_j   (softmax-invariant
            # bq-side constants dropped); off-tile pairs masked to -1e30.
            y = jnp.dot(x, mqk, preferred_element_type=f32) + ck      # (HW, C)
            e = lax.dot_general(y, x, (((1,), (1,)), ((), ())),
                                preferred_element_type=f32) + mask    # (HW, HW)
            e = e - jnp.max(e, axis=-1, keepdims=True)
            p = jnp.exp(e)
            att = p * pl.reciprocal(jnp.sum(p, axis=-1, keepdims=True),
                                    approx=True)
            v = jnp.dot(x, wvg, preferred_element_type=f32) + bvg     # (HW, C)
            ctx = jnp.dot(att, v, preferred_element_type=f32) + x     # (HW, C)

            # ---- scatter ctx into the zero-padded conv scratch --------------
            # Image row y occupies flat rows [(R_TOP+y)*STRIDE, +W); every
            # start is a multiple of 8 sublanes, every store is 2 full tiles.
            for yy in range(H):
                row = ctx[yy * W:(yy + 1) * W, :]
                pad_ref[pl.ds((R_TOP + yy) * STRIDE, W), :] = row

            # ---- 3x3 conv: nine accumulated K=C matmuls (one per tap) -------
            acc = jnp.dot(pad_ref[pl.ds(STARTS[0], ROWS), :], wtaps_ref[0],
                          preferred_element_type=f32)
            for t in range(1, 9):
                acc = acc + jnp.dot(pad_ref[pl.ds(STARTS[t], ROWS), :],
                                    wtaps_ref[t], preferred_element_type=f32)
            conv = acc.reshape(H, STRIDE, C)[:, :W, :].reshape(HW, C)

            # ---- folded BN*gamma + residual + ReLU ---------------------------
            # NOTE: C=32 keeps the output store lane-masked; a lane-dense
            # (C, H*W) internal layout (review item 8) is the remaining lever.
            o_ref[n] = jnp.maximum(conv * scale + bias + x,
                                   0.0).astype(o_ref.dtype)

    return kernel, (NROWS * STRIDE, C)


# ----------------------------------------------------------------------------
# Public wrapper: NCHW in / NCHW out, matching the PyTorch module.
# ----------------------------------------------------------------------------
@functools.partial(jax.jit, static_argnames=("scale",))
def agcb_nogca_forward(x_nchw, params, scale=2):
    x = jnp.transpose(x_nchw, (0, 2, 3, 1)).astype(jnp.float32)      # NHWC
    B, H, W, C = x.shape
    S = scale
    assert H % S == 0 and W % S == 0
    HW = H * W
    hh, ww = H // S, W // S

    hp = lax.Precision.HIGHEST
    gnl = params['gamma_nl']
    mqk = jnp.dot(params['wq'], params['wk'].T, precision=hp)         # (C, C)
    ck = jnp.dot(params['wk'], params['bq'], precision=hp)[None, :]   # (1, C)
    wvg = gnl * params['wv']                                          # (C, C)
    bvg = (gnl * params['bv'])[None, :]                               # (1, C)

    eps = 1e-5
    inv_std = 1.0 / jnp.sqrt(params['bn_var'] + eps)
    scale_eff = (params['gamma'] * params['bn_g'] * inv_std)[None, :]
    bias_eff = (params['gamma'] * ((params['b3'] - params['bn_mean'])
                                   * params['bn_g'] * inv_std
                                   + params['bn_b']))[None, :]
    wtaps = params['w3'].reshape(9, C, C)        # HWIO -> (tap, Cin, Cout)

    # Additive block-diagonal attention mask (0 within a spatial tile,
    # -1e30 across tiles).  Same block every grid step -> DMA'd once.
    pix = jnp.arange(HW, dtype=jnp.int32)
    tid = (pix // W) // hh * S + (pix % W) // ww
    mask = jnp.where(tid[:, None] == tid[None, :], 0.0, -1e30).astype(jnp.float32)

    # At most 2 grid steps ("parallel" -> both v7x TensorCores busy); the
    # rest of the batch is folded into each step.
    nsteps = 2 if (B >= 2 and B % 2 == 0) else 1
    bblk = B // nsteps

    kernel, pad_shape = _make_agcb_kernel(H, W, C, bblk)
    out = pl.pallas_call(
        kernel,
        out_shape=jax.ShapeDtypeStruct((B, HW, C), jnp.float32),
        grid=(nsteps,),
        in_specs=[
            pl.BlockSpec((bblk, HW, C), lambda b: (b, 0, 0)),
            pl.BlockSpec((C, C), lambda b: (0, 0)),
            pl.BlockSpec((1, C), lambda b: (0, 0)),
            pl.BlockSpec((C, C), lambda b: (0, 0)),
            pl.BlockSpec((1, C), lambda b: (0, 0)),
            pl.BlockSpec((HW, HW), lambda b: (0, 0)),
            pl.BlockSpec((9, C, C), lambda b: (0, 0, 0)),
            pl.BlockSpec((1, C), lambda b: (0, 0)),
            pl.BlockSpec((1, C), lambda b: (0, 0)),
        ],
        out_specs=pl.BlockSpec((bblk, HW, C), lambda b: (b, 0, 0)),
        scratch_shapes=[pltpu.VMEM(pad_shape, jnp.float32)],
        compiler_params=pltpu.CompilerParams(dimension_semantics=("parallel",)),
    )(x.reshape(B, HW, C), mqk, ck, wvg, bvg, mask, wtaps, scale_eff, bias_eff)
    return jnp.transpose(out.reshape(B, H, W, C), (0, 3, 1, 2))       # NCHW


# ----------------------------------------------------------------------------
# Pure-JAX reference (same math, no Pallas) for a numerical sanity check.
# ----------------------------------------------------------------------------
def ref_forward(x_nchw, params, scale=2):
    x = jnp.transpose(x_nchw, (0, 2, 3, 1)).astype(jnp.float32)
    B, H, W, C = x.shape
    S = scale
    h, w = H // S, W // S
    prec = lax.Precision.HIGHEST

    def nl(xg):  # (G, N, C)
        q = jnp.einsum('gnc,cd->gnd', xg, params['wq'], precision=prec) + params['bq']
        k = jnp.einsum('gnc,cd->gnd', xg, params['wk'], precision=prec) + params['bk']
        v = jnp.einsum('gnc,cd->gnd', xg, params['wv'], precision=prec) + params['bv']
        e = jnp.einsum('gnd,gmd->gnm', q, k, precision=prec)
        a = jax.nn.softmax(e, axis=-1)
        return params['gamma_nl'] * jnp.einsum('gnm,gmc->gnc', a, v,
                                               precision=prec) + xg

    blocks = (x.reshape(B, S, h, S, w, C).transpose(0, 1, 3, 2, 4, 5)
               .reshape(B * S * S, h * w, C))
    ctx = nl(blocks).reshape(B, S, S, h, w, C).transpose(0, 1, 3, 2, 4, 5)
    ctx = ctx.reshape(B, H, W, C)

    conv = lax.conv_general_dilated(ctx, params['w3'], (1, 1), 'SAME',
                                    dimension_numbers=('NHWC', 'HWIO', 'NHWC'),
                                    precision=prec) + params['b3']
    eps = 1e-5
    bn = ((conv - params['bn_mean']) / jnp.sqrt(params['bn_var'] + eps)
          * params['bn_g'] + params['bn_b'])
    out = jnp.maximum(params['gamma'] * bn + x, 0.0)
    return jnp.transpose(out, (0, 3, 1, 2))


# ----------------------------------------------------------------------------
# Deterministic parameter init.
# NOTE: torch inits the gamma scalars to 0 (which would collapse the module to
# relu(x)); nonzero deterministic values are used so every path is exercised.
# BatchNorm is evaluated in inference mode with the running stats below.
# ----------------------------------------------------------------------------
def init_params(key, C, Ci):
    ks = jax.random.split(key, 12)
    n = lambda k, shp, s=0.1: s * jax.random.normal(k, shp, jnp.float32)
    return dict(
        wq=n(ks[0], (C, Ci)), bq=n(ks[1], (Ci,)),
        wk=n(ks[2], (C, Ci)), bk=n(ks[3], (Ci,)),
        wv=n(ks[4], (C, C)), bv=n(ks[5], (C,)),
        gamma_nl=jnp.float32(0.5),
        w3=n(ks[6], (3, 3, C, C)), b3=n(ks[7], (C,)),          # HWIO
        bn_g=1.0 + n(ks[8], (C,)), bn_b=n(ks[9], (C,)),
        bn_mean=n(ks[10], (C,), 0.05),
        bn_var=0.5 + jax.random.uniform(ks[11], (C,), jnp.float32),
        gamma=jnp.float32(0.3),
    )


if __name__ == "__main__":
    B, C, H, W = 2, 32, 16, 16          # planes = 32
    scale = 2
    reduce_ratio_nl = 8                 # inter_planes = 4
    Ci = C // reduce_ratio_nl

    key = jax.random.PRNGKey(0)
    kx, kp = jax.random.split(key)
    x = jax.random.normal(kx, (B, C, H, W), jnp.float32)   # NCHW, like the torch module
    params = init_params(kp, C, Ci)

    out = jax.block_until_ready(agcb_nogca_forward(x, params, scale=scale))
    assert out.shape == (B, C, H, W)

    ref = jax.block_until_ready(ref_forward(x, params, scale=scale))
    err = float(jnp.max(jnp.abs(out - ref)))
    if not bool(jnp.isfinite(out).all()) or err > 5e-3:
        raise AssertionError(f"kernel/reference mismatch, max abs err = {err}")

    print("KERNEL_OK")
</pallas_src>

<mosaic_0001>
module attributes {stable_mosaic.version = 11 : i64} {
  func.func @kernel(%arg0: i32, %arg1: memref<1x256x32xf32, #tpu.memory_space<vmem>>, %arg2: memref<32x32xf32, #tpu.memory_space<vmem>>, %arg3: memref<1x32xf32, #tpu.memory_space<vmem>>, %arg4: memref<32x32xf32, #tpu.memory_space<vmem>>, %arg5: memref<1x32xf32, #tpu.memory_space<vmem>>, %arg6: memref<256x256xf32, #tpu.memory_space<vmem>>, %arg7: memref<9x32x32xf32, #tpu.memory_space<vmem>>, %arg8: memref<1x32xf32, #tpu.memory_space<vmem>>, %arg9: memref<1x32xf32, #tpu.memory_space<vmem>>, %arg10: memref<1x256x32xf32, #tpu.memory_space<vmem>>, %arg11: memref<480x32xf32, #tpu.memory_space<vmem>>) attributes {dimension_semantics = [#tpu.dimension_semantics<parallel>], iteration_bounds = array<i64: 2>, scalar_prefetch = 0 : i64, scratch_operands = 1 : i64, tpu.core_type = #tpu.core_type<tc>, window_params = [{transform_indices = @transform_0, window_bounds = array<i64: 1, 256, 32>}, {pipeline_mode = #tpu.pipeline_mode<synchronous>, transform_indices = @transform_1, window_bounds = array<i64: 32, 32>}, {pipeline_mode = #tpu.pipeline_mode<synchronous>, transform_indices = @transform_2, window_bounds = array<i64: 1, 32>}, {pipeline_mode = #tpu.pipeline_mode<synchronous>, transform_indices = @transform_3, window_bounds = array<i64: 32, 32>}, {pipeline_mode = #tpu.pipeline_mode<synchronous>, transform_indices = @transform_4, window_bounds = array<i64: 1, 32>}, {pipeline_mode = #tpu.pipeline_mode<synchronous>, transform_indices = @transform_5, window_bounds = array<i64: 256, 256>}, {pipeline_mode = #tpu.pipeline_mode<synchronous>, transform_indices = @transform_6, window_bounds = array<i64: 9, 32, 32>}, {pipeline_mode = #tpu.pipeline_mode<synchronous>, transform_indices = @transform_7, window_bounds = array<i64: 1, 32>}, {pipeline_mode = #tpu.pipeline_mode<synchronous>, transform_indices = @transform_8, window_bounds = array<i64: 1, 32>}, {transform_indices = @transform_9, window_bounds = array<i64: 1, 256, 32>}]} {
    %cst = arith.constant 0.000000e+00 : f32
    %0 = vector.broadcast %cst : f32 to vector<480x32xf32>
    %c0 = arith.constant 0 : index
    %c0_0 = arith.constant 0 : index
    %1 = vector.load %arg11[%c0, %c0_0] : memref<480x32xf32, #tpu.memory_space<vmem>>, vector<480x32xf32>
    tpu.vector_store %arg11[%c0, %c0_0], %0 {strides = array<i32>} : memref<480x32xf32, #tpu.memory_space<vmem>>, vector<480x32xf32>,
    %c0_1 = arith.constant 0 : index
    %c0_2 = arith.constant 0 : index
    %2 = vector.load %arg6[%c0_1, %c0_2] : memref<256x256xf32, #tpu.memory_space<vmem>>, vector<256x256xf32>
    %c0_3 = arith.constant 0 : index
    %c0_4 = arith.constant 0 : index
    %3 = vector.load %arg2[%c0_3, %c0_4] : memref<32x32xf32, #tpu.memory_space<vmem>>, vector<32x32xf32>
    %c0_5 = arith.constant 0 : index
    %c0_6 = arith.constant 0 : index
    %4 = vector.load %arg3[%c0_5, %c0_6] : memref<1x32xf32, #tpu.memory_space<vmem>>, vector<1x32xf32>
    %c0_7 = arith.constant 0 : index
    %c0_8 = arith.constant 0 : index
    %5 = vector.load %arg4[%c0_7, %c0_8] : memref<32x32xf32, #tpu.memory_space<vmem>>, vector<32x32xf32>
    %c0_9 = arith.constant 0 : index
    %c0_10 = arith.constant 0 : index
    %6 = vector.load %arg5[%c0_9, %c0_10] : memref<1x32xf32, #tpu.memory_space<vmem>>, vector<1x32xf32>
    %c0_11 = arith.constant 0 : index
    %c0_12 = arith.constant 0 : index
    %7 = vector.load %arg8[%c0_11, %c0_12] : memref<1x32xf32, #tpu.memory_space<vmem>>, vector<1x32xf32>
    %c0_13 = arith.constant 0 : index
    %c0_14 = arith.constant 0 : index
    %8 = vector.load %arg9[%c0_13, %c0_14] : memref<1x32xf32, #tpu.memory_space<vmem>>, vector<1x32xf32>
    %c0_15 = arith.constant 0 : index
    %c0_16 = arith.constant 0 : index
    %c0_17 = arith.constant 0 : index
    %9 = vector.load %arg1[%c0_15, %c0_16, %c0_17] : memref<1x256x32xf32, #tpu.memory_space<vmem>>, vector<1x256x32xf32>
    %10 = vector.shape_cast %9 : vector<1x256x32xf32> to vector<256x32xf32>
    %cst_18 = arith.constant dense<0.000000e+00> : vector<256x32xf32>
    %11 = tpu.matmul %10, %3, %cst_18 {dimension_numbers = #tpu.dot_dimension_numbers<[1], [0], [0], [1], [0, 0, 1, 1], [], []>} : vector<256x32xf32>, vector<32x32xf32>, vector<256x32xf32> -> vector<256x32xf32>
    %12 = vector.broadcast %4 : vector<1x32xf32> to vector<256x32xf32>
    %13 = arith.addf %11, %12 : vector<256x32xf32>
    %cst_19 = arith.constant dense<0.000000e+00> : vector<256x256xf32>
    %14 = tpu.matmul %13, %10, %cst_19 {dimension_numbers = #tpu.dot_dimension_numbers<[1], [1], [0], [0], [0, 0, 1, 0], [], []>} : vector<256x32xf32>, vector<256x32xf32>, vector<256x256xf32> -> vector<256x256xf32>
    %15 = arith.addf %14, %2 : vector<256x256xf32>
    %cst_20 = arith.constant dense<0xFF800000> : vector<256xf32>
    %16 = vector.multi_reduction <maximumf>, %15, %cst_20 [1] : vector<256x256xf32> to vector<256xf32>
    %17 = vector.shape_cast %16 : vector<256xf32> to vector<256x1xf32>
    %18 = vector.broadcast %17 : vector<256x1xf32> to vector<256x256xf32>
    %19 = arith.subf %15, %18 : vector<256x256xf32>
    %20 = math.exp %19 : vector<256x256xf32>
    %cst_21 = arith.constant dense<0.000000e+00> : vector<256xf32>
    %21 = vector.multi_reduction <add>, %20, %cst_21 [1] : vector<256x256xf32> to vector<256xf32>
    %22 = vector.shape_cast %21 : vector<256xf32> to vector<256x1xf32>
    %23 = tpu.reciprocal %22 {approx = true} : vector<256x1xf32> -> vector<256x1xf32>
    %24 = vector.broadcast %23 : vector<256x1xf32> to vector<256x256xf32>
    %25 = arith.mulf %20, %24 : vector<256x256xf32>
    %cst_22 = arith.constant dense<0.000000e+00> : vector<256x32xf32>
    %26 = tpu.matmul %10, %5, %cst_22 {dimension_numbers = #tpu.dot_dimension_numbers<[1], [0], [0], [1], [0, 0, 1, 1], [], []>} : vector<256x32xf32>, vector<32x32xf32>, vector<256x32xf32> -> vector<256x32xf32>
    %27 = vector.broadcast %6 : vector<1x32xf32> to vector<256x32xf32>
    %28 = arith.addf %26, %27 : vector<256x32xf32>
    %cst_23 = arith.constant dense<0.000000e+00> : vector<256x32xf32>
    %29 = tpu.matmul %25, %28, %cst_23 {dimension_numbers = #tpu.dot_dimension_numbers<[1], [0], [0], [1], [0, 0, 1, 1], [], []>} : vector<256x256xf32>, vector<256x32xf32>, vector<256x32xf32> -> vector<256x32xf32>
    %30 = arith.addf %29, %10 : vector<256x32xf32>
    %31 = vector.extract_strided_slice %30 {offsets = [0, 0], sizes = [16, 32], strides = [1, 1]} : vector<256x32xf32> to vector<16x32xf32>
    %c48 = arith.constant 48 : index
    %c0_24 = arith.constant 0 : index
    %32 = vector.load %arg11[%c48, %c0_24] : memref<480x32xf32, #tpu.memory_space<vmem>>, vector<16x32xf32>
    tpu.vector_store %arg11[%c48, %c0_24], %31 {strides = array<i32>} : memref<480x32xf32, #tpu.memory_space<vmem>>, vector<16x32xf32>,
    %33 = vector.extract_strided_slice %30 {offsets = [16, 0], sizes = [16, 32], strides = [1, 1]} : vector<256x32xf32> to vector<16x32xf32>
    %c72 = arith.constant 72 : index
    %c0_25 = arith.constant 0 : index
    %34 = vector.load %arg11[%c72, %c0_25] : memref<480x32xf32, #tpu.memory_space<vmem>>, vector<16x32xf32>
    tpu.vector_store %arg11[%c72, %c0_25], %33 {strides = array<i32>} : memref<480x32xf32, #tpu.memory_space<vmem>>, vector<16x32xf32>,
    %35 = vector.extract_strided_slice %30 {offsets = [32, 0], sizes = [16, 32], strides = [1, 1]} : vector<256x32xf32> to vector<16x32xf32>
    %c96 = arith.constant 96 : index
    %c0_26 = arith.constant 0 : index
    %36 = vector.load %arg11[%c96, %c0_26] : memref<480x32xf32, #tpu.memory_space<vmem>>, vector<16x32xf32>
    tpu.vector_store %arg11[%c96, %c0_26], %35 {strides = array<i32>} : memref<480x32xf32, #tpu.memory_space<vmem>>, vector<16x32xf32>,
    %37 = vector.extract_strided_slice %30 {offsets = [48, 0], sizes = [16, 32], strides = [1, 1]} : vector<256x32xf32> to vector<16x32xf32>
    %c120 = arith.constant 120 : index
    %c0_27 = arith.constant 0 : index
    %38 = vector.load %arg11[%c120, %c0_27] : memref<480x32xf32, #tpu.memory_space<vmem>>, vector<16x32xf32>
    tpu.vector_store %arg11[%c120, %c0_27], %37 {strides = array<i32>} : memref<480x32xf32, #tpu.memory_space<vmem>>, vector<16x32xf32>,
    %39 = vector.extract_strided_slice %30 {offsets = [64, 0], sizes = [16, 32], strides = [1, 1]} : vector<256x32xf32> to vector<16x32xf32>
    %c144 = arith.constant 144 : index
    %c0_28 = arith.constant 0 : index
    %40 = vector.load %arg11[%c144, %c0_28] : memref<480x32xf32, #tpu.memory_space<vmem>>, vector<16x32xf32>
    tpu.vector_store %arg11[%c144, %c0_28], %39 {strides = array<i32>} : memref<480x32xf32, #tpu.memory_space<vmem>>, vector<16x32xf32>,
    %41 = vector.extract_strided_slice %30 {offsets = [80, 0], sizes = [16, 32], strides = [1, 1]} : vector<256x32xf32> to vector<16x32xf32>
    %c168 = arith.constant 168 : index
    %c0_29 = arith.constant 0 : index
    %42 = vector.load %arg11[%c168, %c0_29] : memref<480x32xf32, #tpu.memory_space<vmem>>, vector<16x32xf32>
    tpu.vector_store %arg11[%c168, %c0_29], %41 {strides = array<i32>} : memref<480x32xf32, #tpu.memory_space<vmem>>, vector<16x32xf32>,
    %43 = vector.extract_strided_slice %30 {offsets = [96, 0], sizes = [16, 32], strides = [1, 1]} : vector<256x32xf32> to vector<16x32xf32>
    %c192 = arith.constant 192 : index
    %c0_30 = arith.constant 0 : index
    %44 = vector.load %arg11[%c192, %c0_30] : memref<480x32xf32, #tpu.memory_space<vmem>>, vector<16x32xf32>
    tpu.vector_store %arg11[%c192, %c0_30], %43 {strides = array<i32>} : memref<480x32xf32, #tpu.memory_space<vmem>>, vector<16x32xf32>,
    %45 = vector.extract_strided_slice %30 {offsets = [112, 0], sizes = [16, 32], strides = [1, 1]} : vector<256x32xf32> to vector<16x32xf32>
    %c216 = arith.constant 216 : index
    %c0_31 = arith.constant 0 : index
    %46 = vector.load %arg11[%c216, %c0_31] : memref<480x32xf32, #tpu.memory_space<vmem>>, vector<16x32xf32>
    tpu.vector_store %arg11[%c216, %c0_31], %45 {strides = array<i32>} : memref<480x32xf32, #tpu.memory_space<vmem>>, vector<16x32xf32>,
    %47 = vector.extract_strided_slice %30 {offsets = [128, 0], sizes = [16, 32], strides = [1, 1]} : vector<256x32xf32> to vector<16x32xf32>
    %c240 = arith.constant 240 : index
    %c0_32 = arith.constant 0 : index
    %48 = vector.load %arg11[%c240, %c0_32] : memref<480x32xf32, #tpu.memory_space<vmem>>, vector<16x32xf32>
    tpu.vector_store %arg11[%c240, %c0_32], %47 {strides = array<i32>} : memref<480x32xf32, #tpu.memory_space<vmem>>, vector<16x32xf32>,
    %49 = vector.extract_strided_slice %30 {offsets = [144, 0], sizes = [16, 32], strides = [1, 1]} : vector<256x32xf32> to vector<16x32xf32>
    %c264 = arith.constant 264 : index
    %c0_33 = arith.constant 0 : index
    %50 = vector.load %arg11[%c264, %c0_33] : memref<480x32xf32, #tpu.memory_space<vmem>>, vector<16x32xf32>
    tpu.vector_store %arg11[%c264, %c0_33], %49 {strides = array<i32>} : memref<480x32xf32, #tpu.memory_space<vmem>>, vector<16x32xf32>,
    %51 = vector.extract_strided_slice %30 {offsets = [160, 0], sizes = [16, 32], strides = [1, 1]} : vector<256x32xf32> to vector<16x32xf32>
    %c288 = arith.constant 288 : index
    %c0_34 = arith.constant 0 : index
    %52 = vector.load %arg11[%c288, %c0_34] : memref<480x32xf32, #tpu.memory_space<vmem>>, vector<16x32xf32>
    tpu.vector_store %arg11[%c288, %c0_34], %51 {strides = array<i32>} : memref<480x32xf32, #tpu.memory_space<vmem>>, vector<16x32xf32>,
    %53 = vector.extract_strided_slice %30 {offsets = [176, 0], sizes = [16, 32], strides = [1, 1]} : vector<256x32xf32> to vector<16x32xf32>
    %c312 = arith.constant 312 : index
    %c0_35 = arith.constant 0 : index
    %54 = vector.load %arg11[%c312, %c0_35] : memref<480x32xf32, #tpu.memory_space<vmem>>, vector<16x32xf32>
    tpu.vector_store %arg11[%c312, %c0_35], %53 {strides = array<i32>} : memref<480x32xf32, #tpu.memory_space<vmem>>, vector<16x32xf32>,
    %55 = vector.extract_strided_slice %30 {offsets = [192, 0], sizes = [16, 32], strides = [1, 1]} : vector<256x32xf32> to vector<16x32xf32>
    %c336 = arith.constant 336 : index
    %c0_36 = arith.constant 0 : index
    %56 = vector.load %arg11[%c336, %c0_36] : memref<480x32xf32, #tpu.memory_space<vmem>>, vector<16x32xf32>
    tpu.vector_store %arg11[%c336, %c0_36], %55 {strides = array<i32>} : memref<480x32xf32, #tpu.memory_space<vmem>>, vector<16x32xf32>,
    %57 = vector.extract_strided_slice %30 {offsets = [208, 0], sizes = [16, 32], strides = [1, 1]} : vector<256x32xf32> to vector<16x32xf32>
    %c360 = arith.constant 360 : index
    %c0_37 = arith.constant 0 : index
    %58 = vector.load %arg11[%c360, %c0_37] : memref<480x32xf32, #tpu.memory_space<vmem>>, vector<16x32xf32>
    tpu.vector_store %arg11[%c360, %c0_37], %57 {strides = array<i32>} : memref<480x32xf32, #tpu.memory_space<vmem>>, vector<16x32xf32>,
    %59 = vector.extract_strided_slice %30 {offsets = [224, 0], sizes = [16, 32], strides = [1, 1]} : vector<256x32xf32> to vector<16x32xf32>
    %c384 = arith.constant 384 : index
    %c0_38 = arith.constant 0 : index
    %60 = vector.load %arg11[%c384, %c0_38] : memref<480x32xf32, #tpu.memory_space<vmem>>, vector<16x32xf32>
    tpu.vector_store %arg11[%c384, %c0_38], %59 {strides = array<i32>} : memref<480x32xf32, #tpu.memory_space<vmem>>, vector<16x32xf32>,
    %61 = vector.extract_strided_slice %30 {offsets = [240, 0], sizes = [16, 32], strides = [1, 1]} : vector<256x32xf32> to vector<16x32xf32>
    %c408 = arith.constant 408 : index
    %c0_39 = arith.constant 0 : index
    %62 = vector.load %arg11[%c408, %c0_39] : memref<480x32xf32, #tpu.memory_space<vmem>>, vector<16x32xf32>
    tpu.vector_store %arg11[%c408, %c0_39], %61 {strides = array<i32>} : memref<480x32xf32, #tpu.memory_space<vmem>>, vector<16x32xf32>,
    %c23 = arith.constant 23 : index
    %c0_40 = arith.constant 0 : index
    %63 = vector.load %arg11[%c23, %c0_40] : memref<480x32xf32, #tpu.memory_space<vmem>>, vector<384x32xf32>
    %c0_41 = arith.constant 0 : index
    %c0_42 = arith.constant 0 : index
    %c0_43 = arith.constant 0 : index
    %64 = vector.load %arg7[%c0_41, %c0_42, %c0_43] : memref<9x32x32xf32, #tpu.memory_space<vmem>>, vector<1x32x32xf32>
    %65 = vector.shape_cast %64 : vector<1x32x32xf32> to vector<32x32xf32>
    %cst_44 = arith.constant dense<0.000000e+00> : vector<384x32xf32>
    %66 = tpu.matmul %63, %65, %cst_44 {dimension_numbers = #tpu.dot_dimension_numbers<[1], [0], [0], [1], [0, 0, 1, 1], [], []>} : vector<384x32xf32>, vector<32x32xf32>, vector<384x32xf32> -> vector<384x32xf32>
    %c24 = arith.constant 24 : index
    %c0_45 = arith.constant 0 : index
    %67 = vector.load %arg11[%c24, %c0_45] : memref<480x32xf32, #tpu.memory_space<vmem>>, vector<384x32xf32>
    %c1 = arith.constant 1 : index
    %c0_46 = arith.constant 0 : index
    %c0_47 = arith.constant 0 : index
    %68 = vector.load %arg7[%c1, %c0_46, %c0_47] : memref<9x32x32xf32, #tpu.memory_space<vmem>>, vector<1x32x32xf32>
    %69 = vector.shape_cast %68 : vector<1x32x32xf32> to vector<32x32xf32>
    %cst_48 = arith.constant dense<0.000000e+00> : vector<384x32xf32>
    %70 = tpu.matmul %67, %69, %cst_48 {dimension_numbers = #tpu.dot_dimension_numbers<[1], [0], [0], [1], [0, 0, 1, 1], [], []>} : vector<384x32xf32>, vector<32x32xf32>, vector<384x32xf32> -> vector<384x32xf32>
    %71 = arith.addf %66, %70 : vector<384x32xf32>
    %c25 = arith.constant 25 : index
    %c0_49 = arith.constant 0 : index
    %72 = vector.load %arg11[%c25, %c0_49] : memref<480x32xf32, #tpu.memory_space<vmem>>, vector<384x32xf32>
    %c2 = arith.constant 2 : index
    %c0_50 = arith.constant 0 : index
    %c0_51 = arith.constant 0 : index
    %73 = vector.load %arg7[%c2, %c0_50, %c0_51] : memref<9x32x32xf32, #tpu.memory_space<vmem>>, vector<1x32x32xf32>
    %74 = vector.shape_cast %73 : vector<1x32x32xf32> to vector<32x32xf32>
    %cst_52 = arith.constant dense<0.000000e+00> : vector<384x32xf32>
    %75 = tpu.matmul %72, %74, %cst_52 {dimension_numbers = #tpu.dot_dimension_numbers<[1], [0], [0], [1], [0, 0, 1, 1], [], []>} : vector<384x32xf32>, vector<32x32xf32>, vector<384x32xf32> -> vector<384x32xf32>
    %76 = arith.addf %71, %75 : vector<384x32xf32>
    %c47 = arith.constant 47 : index
    %c0_53 = arith.constant 0 : index
    %77 = vector.load %arg11[%c47, %c0_53] : memref<480x32xf32, #tpu.memory_space<vmem>>, vector<384x32xf32>
    %c3 = arith.constant 3 : index
    %c0_54 = arith.constant 0 : index
    %c0_55 = arith.constant 0 : index
    %78 = vector.load %arg7[%c3, %c0_54, %c0_55] : memref<9x32x32xf32, #tpu.memory_space<vmem>>, vector<1x32x32xf32>
    %79 = vector.shape_cast %78 : vector<1x32x32xf32> to vector<32x32xf32>
    %cst_56 = arith.constant dense<0.000000e+00> : vector<384x32xf32>
    %80 = tpu.matmul %77, %79, %cst_56 {dimension_numbers = #tpu.dot_dimension_numbers<[1], [0], [0], [1], [0, 0, 1, 1], [], []>} : vector<384x32xf32>, vector<32x32xf32>, vector<384x32xf32> -> vector<384x32xf32>
    %81 = arith.addf %76, %80 : vector<384x32xf32>
    %c48_57 = arith.constant 48 : index
    %c0_58 = arith.constant 0 : index
    %82 = vector.load %arg11[%c48_57, %c0_58] : memref<480x32xf32, #tpu.memory_space<vmem>>, vector<384x32xf32>
    %c4 = arith.constant 4 : index
    %c0_59 = arith.constant 0 : index
    %c0_60 = arith.constant 0 : index
    %83 = vector.load %arg7[%c4, %c0_59, %c0_60] : memref<9x32x32xf32, #tpu.memory_space<vmem>>, vector<1x32x32xf32>
    %84 = vector.shape_cast %83 : vector<1x32x32xf32> to vector<32x32xf32>
    %cst_61 = arith.constant dense<0.000000e+00> : vector<384x32xf32>
    %85 = tpu.matmul %82, %84, %cst_61 {dimension_numbers = #tpu.dot_dimension_numbers<[1], [0], [0], [1], [0, 0, 1, 1], [], []>} : vector<384x32xf32>, vector<32x32xf32>, vector<384x32xf32> -> vector<384x32xf32>
    %86 = arith.addf %81, %85 : vector<384x32xf32>
    %c49 = arith.constant 49 : index
    %c0_62 = arith.constant 0 : index
    %87 = vector.load %arg11[%c49, %c0_62] : memref<480x32xf32, #tpu.memory_space<vmem>>, vector<384x32xf32>
    %c5 = arith.constant 5 : index
    %c0_63 = arith.constant 0 : index
    %c0_64 = arith.constant 0 : index
    %88 = vector.load %arg7[%c5, %c0_63, %c0_64] : memref<9x32x32xf32, #tpu.memory_space<vmem>>, vector<1x32x32xf32>
    %89 = vector.shape_cast %88 : vector<1x32x32xf32> to vector<32x32xf32>
    %cst_65 = arith.constant dense<0.000000e+00> : vector<384x32xf32>
    %90 = tpu.matmul %87, %89, %cst_65 {dimension_numbers = #tpu.dot_dimension_numbers<[1], [0], [0], [1], [0, 0, 1, 1], [], []>} : vector<384x32xf32>, vector<32x32xf32>, vector<384x32xf32> -> vector<384x32xf32>
    %91 = arith.addf %86, %90 : vector<384x32xf32>
    %c71 = arith.constant 71 : index
    %c0_66 = arith.constant 0 : index
    %92 = vector.load %arg11[%c71, %c0_66] : memref<480x32xf32, #tpu.memory_space<vmem>>, vector<384x32xf32>
    %c6 = arith.constant 6 : index
    %c0_67 = arith.constant 0 : index
    %c0_68 = arith.constant 0 : index
    %93 = vector.load %arg7[%c6, %c0_67, %c0_68] : memref<9x32x32xf32, #tpu.memory_space<vmem>>, vector<1x32x32xf32>
    %94 = vector.shape_cast %93 : vector<1x32x32xf32> to vector<32x32xf32>
    %cst_69 = arith.constant dense<0.000000e+00> : vector<384x32xf32>
    %95 = tpu.matmul %92, %94, %cst_69 {dimension_numbers = #tpu.dot_dimension_numbers<[1], [0], [0], [1], [0, 0, 1, 1], [], []>} : vector<384x32xf32>, vector<32x32xf32>, vector<384x32xf32> -> vector<384x32xf32>
    %96 = arith.addf %91, %95 : vector<384x32xf32>
    %c72_70 = arith.constant 72 : index
    %c0_71 = arith.constant 0 : index
    %97 = vector.load %arg11[%c72_70, %c0_71] : memref<480x32xf32, #tpu.memory_space<vmem>>, vector<384x32xf32>
    %c7 = arith.constant 7 : index
    %c0_72 = arith.constant 0 : index
    %c0_73 = arith.constant 0 : index
    %98 = vector.load %arg7[%c7, %c0_72, %c0_73] : memref<9x32x32xf32, #tpu.memory_space<vmem>>, vector<1x32x32xf32>
    %99 = vector.shape_cast %98 : vector<1x32x32xf32> to vector<32x32xf32>
    %cst_74 = arith.constant dense<0.000000e+00> : vector<384x32xf32>
    %100 = tpu.matmul %97, %99, %cst_74 {dimension_numbers = #tpu.dot_dimension_numbers<[1], [0], [0], [1], [0, 0, 1, 1], [], []>} : vector<384x32xf32>, vector<32x32xf32>, vector<384x32xf32> -> vector<384x32xf32>
    %101 = arith.addf %96, %100 : vector<384x32xf32>
    %c73 = arith.constant 73 : index
    %c0_75 = arith.constant 0 : index
    %102 = vector.load %arg11[%c73, %c0_75] : memref<480x32xf32, #tpu.memory_space<vmem>>, vector<384x32xf32>
    %c8 = arith.constant 8 : index
    %c0_76 = arith.constant 0 : index
    %c0_77 = arith.constant 0 : index
    %103 = vector.load %arg7[%c8, %c0_76, %c0_77] : memref<9x32x32xf32, #tpu.memory_space<vmem>>, vector<1x32x32xf32>
    %104 = vector.shape_cast %103 : vector<1x32x32xf32> to vector<32x32xf32>
    %cst_78 = arith.constant dense<0.000000e+00> : vector<384x32xf32>
    %105 = tpu.matmul %102, %104, %cst_78 {dimension_numbers = #tpu.dot_dimension_numbers<[1], [0], [0], [1], [0, 0, 1, 1], [], []>} : vector<384x32xf32>, vector<32x32xf32>, vector<384x32xf32> -> vector<384x32xf32>
    %106 = arith.addf %101, %105 : vector<384x32xf32>
    %107 = vector.shape_cast %106 : vector<384x32xf32> to vector<16x24x32xf32>
    %108 = vector.extract_strided_slice %107 {offsets = [0, 0, 0], sizes = [16, 16, 32], strides = [1, 1, 1]} : vector<16x24x32xf32> to vector<16x16x32xf32>
    %109 = vector.shape_cast %108 : vector<16x16x32xf32> to vector<256x32xf32>
    %110 = vector.broadcast %7 : vector<1x32xf32> to vector<256x32xf32>
    %111 = arith.mulf %109, %110 : vector<256x32xf32>
    %112 = vector.broadcast %8 : vector<1x32xf32> to vector<256x32xf32>
    %113 = arith.addf %111, %112 : vector<256x32xf32>
    %114 = arith.addf %113, %10 : vector<256x32xf32>
    %cst_79 = arith.constant 0.000000e+00 : f32
    %115 = vector.broadcast %cst_79 : f32 to vector<256x32xf32>
    %116 = arith.maximumf %114, %115 : vector<256x32xf32>
    %c0_80 = arith.constant 0 : index
    %c0_81 = arith.constant 0 : index
    %c0_82 = arith.constant 0 : index
    %117 = vector.load %arg10[%c0_80, %c0_81, %c0_82] : memref<1x256x32xf32, #tpu.memory_space<vmem>>, vector<1x256x32xf32>
    %118 = vector.shape_cast %117 : vector<1x256x32xf32> to vector<256x32xf32>
    %119 = vector.shape_cast %116 : vector<256x32xf32> to vector<1x256x32xf32>
    tpu.vector_store %arg10[%c0_80, %c0_81, %c0_82], %119 {strides = array<i32>} : memref<1x256x32xf32, #tpu.memory_space<vmem>>, vector<1x256x32xf32>,
    return
  }
  func.func @transform_0(%arg0: i32) -> (i32, i32, i32) {
    %c0_i32 = arith.constant 0 : i32
    %c0_i32_0 = arith.constant 0 : i32
    %c0_i32_1 = arith.constant 0 : i32
    return %arg0, %c0_i32, %c0_i32_0 : i32, i32, i32
  }
  func.func @transform_1(%arg0: i32) -> (i32, i32) {
    %c0_i32 = arith.constant 0 : i32
    %c0_i32_0 = arith.constant 0 : i32
    %c0_i32_1 = arith.constant 0 : i32
    return %c0_i32, %c0_i32_0 : i32, i32
  }
  func.func @transform_2(%arg0: i32) -> (i32, i32) {
    %c0_i32 = arith.constant 0 : i32
    %c0_i32_0 = arith.constant 0 : i32
    %c0_i32_1 = arith.constant 0 : i32
    return %c0_i32, %c0_i32_0 : i32, i32
  }
  func.func @transform_3(%arg0: i32) -> (i32, i32) {
    %c0_i32 = arith.constant 0 : i32
    %c0_i32_0 = arith.constant 0 : i32
    %c0_i32_1 = arith.constant 0 : i32
    return %c0_i32, %c0_i32_0 : i32, i32
  }
  func.func @transform_4(%arg0: i32) -> (i32, i32) {
    %c0_i32 = arith.constant 0 : i32
    %c0_i32_0 = arith.constant 0 : i32
    %c0_i32_1 = arith.constant 0 : i32
    return %c0_i32, %c0_i32_0 : i32, i32
  }
  func.func @transform_5(%arg0: i32) -> (i32, i32) {
    %c0_i32 = arith.constant 0 : i32
    %c0_i32_0 = arith.constant 0 : i32
    %c0_i32_1 = arith.constant 0 : i32
    return %c0_i32, %c0_i32_0 : i32, i32
  }
  func.func @transform_6(%arg0: i32) -> (i32, i32, i32) {
    %c0_i32 = arith.constant 0 : i32
    %c0_i32_0 = arith.constant 0 : i32
    %c0_i32_1 = arith.constant 0 : i32
    %c0_i32_2 = arith.constant 0 : i32
    return %c0_i32, %c0_i32_0, %c0_i32_1 : i32, i32, i32
  }
  func.func @transform_7(%arg0: i32) -> (i32, i32) {
    %c0_i32 = arith.constant 0 : i32
    %c0_i32_0 = arith.constant 0 : i32
    %c0_i32_1 = arith.constant 0 : i32
    return %c0_i32, %c0_i32_0 : i32, i32
  }
  func.func @transform_8(%arg0: i32) -> (i32, i32) {
    %c0_i32 = arith.constant 0 : i32
    %c0_i32_0 = arith.constant 0 : i32
    %c0_i32_1 = arith.constant 0 : i32
    return %c0_i32, %c0_i32_0 : i32, i32
  }
  func.func @transform_9(%arg0: i32) -> (i32, i32, i32) {
    %c0_i32 = arith.constant 0 : i32
    %c0_i32_0 = arith.constant 0 : i32
    %c0_i32_1 = arith.constant 0 : i32
    return %arg0, %c0_i32, %c0_i32_0 : i32, i32, i32
  }
}

</mosaic_0001>

<llo_original>
// kernel: agcb_nogca_forward.1
$region0: #{agcb_nogca_forward.1}
  #allocation0 [shape = 'u32[]', space=smem, size = 0x4, offset = 0x4, fixed_abs, tag = 'smem constant byte address 0x4 - core index']
  #allocation1 [shape = 'u32[144,128]{1,0:T(1,128)}', space=vmem, size = 0x12000, scoped, tag = 'internal scratch']
  #allocation2 [shape = 'f32[480,32]{1,0:T(8,128)}', space=vmem, size = 0x3c000, scoped, tag = 'scratch operand']
  %s0 = inlined_call_operand.vmem [shape: f32[2,256,32], index: 0, kind: input, shape index: {}]
  %s1 = inlined_call_operand.vmem [shape: f32[32,32], index: 1, kind: input, shape index: {}]
  %s2 = inlined_call_operand.vmem [shape: f32[1,32], index: 2, kind: input, shape index: {}]
  %s3 = inlined_call_operand.vmem [shape: f32[32,32], index: 3, kind: input, shape index: {}]
  %s4 = inlined_call_operand.vmem [shape: f32[1,32], index: 4, kind: input, shape index: {}]
  %s5 = inlined_call_operand.vmem [shape: f32[256,256], index: 5, kind: input, shape index: {}]
  %s6 = inlined_call_operand.hbm [shape: f32[9,32,32], index: 6, kind: input, shape index: {}]
  %s7 = inlined_call_operand.vmem [shape: f32[1,32], index: 7, kind: input, shape index: {}]
  %s8 = inlined_call_operand.vmem [shape: f32[1,32], index: 8, kind: input, shape index: {}]
  %s9 = inlined_call_operand.hbm [shape: f32[2,256,32], index: 9, kind: output, shape index: {}]
  %s10 = sld [smem:[#allocation0]]
  $region73: #{agcb_nogca_forward.1} parent=0
    _
  %s12 = ssub.s32 1, %s10
  %s13 = scalar_select 0, %s12, %s10
  $region1: #{agcb_nogca_forward.1} parent=0
    #allocation3 [shape = 'u8[147456]{0}', space=vmem, size = 0x24000, scoped, tag = 'input window, operand 6, single buffered']
    #allocation4 [shape = 's32[2]{0}', space=sflag, size = 0x8, scoped, tag = 'scoped memory for agcb_nogca_forward.1']
    #allocation5 [shape = 's32[2]{0}', space=sflag, size = 0x8, scoped, tag = 'scoped memory for agcb_nogca_forward.1']
    #allocation6 [shape = 'u8[262144]{0}', space=vmem, size = 0x40000, scoped, tag = 'output window, operand 0']
    %14 = vsyncpa [#allocation4], 0
    %15 = vsyncpa [#allocation5], 0
    %s16 = scalar_lea.sflag [#allocation5], 1
    %17 = vsyncpa %s16, 0
    loop: start=0, step=1, limit=4
    $region2: #{agcb_nogca_forward.1} parent=1 // loop_pre_header
      _
    $region3: #{agcb_nogca_forward.1} parent=1 // loop_header
      %s19 = sphi 0, %s23
      %p20 = scmp.ge.s32.totalorder %s19, 4
      %s29 = sphi 0, %s31
      %s32 = sphi 0, %s29
      %s33 = sphi 0, %s32
      %s49 = sphi 0, %s33
      %s53 = sphi 0, %s53
      %s55 = sphi 0, %s53
      %s56 = sphi 0, %s55
      %s70 = sphi 0, %s56
      %s74 = sphi 0, %s74
      %s76 = sphi 0, %s74
      %s77 = sphi 0, %s76
      %s91 = sphi 0, %s77
      %s95 = sphi 0, %s95
      %s97 = sphi 0, %s95
      %s98 = sphi 0, %s97
      %s112 = sphi 0, %s98
      %s116 = sphi 0, %s116
      %s118 = sphi 0, %s116
      %s119 = sphi 0, %s118
      %s133 = sphi 0, %s119
      %s137 = sphi 0, %s137
      %s139 = sphi 0, %s137
      %s140 = sphi 0, %s139
      %s154 = sphi 0, %s140
      %s158 = sphi 0, %s158
      %s160 = sphi 0, %s158
      %s161 = sphi 0, %s160
      %s175 = sphi 0, %s161
      %s179 = sphi 0, %s179
      %s181 = sphi 0, %s179
      %s182 = sphi 0, %s181
      %s196 = sphi 0, %s182
      %s200 = sphi 0, %s200
      %s202 = sphi 0, %s200
      %s203 = sphi 0, %s202
      %s217 = sphi 0, %s203
      %s223 = sphi 0, %s225
      %s226 = sphi 0, %s223
      %s227 = sphi 0, %s226
      %s243 = sphi 0, %s227
    $region4: #{agcb_nogca_forward.1} parent=1 // loop_header_branch
      %22 = sbr.rel (%p20) target = $region8
    $region5: #{agcb_nogca_forward.1} parent=1 // loop_body
      %s24 = ssub.s32 %s19, 1
      %s25 = ssub.s32 %s19, 2
      %s26 = sadd.s32 %s19, 1
      %s27 = ssub.s32 %s19, %s26
      %p28 = scmp.eq.s32.totalorder %s27, 0
      %s30 = sadd.s32 %s29, 1
      %s31 = scalar_select %p28, %s29, %s30
      %p34 = pneg %p28
      %p35 = scmp.eq.s32.totalorder %s19, 1
      %p36 = por %p34, %p35
      %p37 = scmp.ne.s32.totalorder %s29, %s32
      %p38 = scmp.eq.s32.totalorder %s19, 0
      %p39 = por %p37, %p38
      %p40 = scmp.ne.s32.totalorder %s29, %s32
      %p41 = scmp.eq.s32.totalorder %s24, 1
      %p42 = por %p40, %p41
      %p43 = scmp.ne.s32.totalorder %s32, %s33
      %p44 = scmp.eq.s32.totalorder %s24, 0
      %p45 = por %p43, %p44
      %p46 = scmp.ne.s32.totalorder %s32, %s33
      %p47 = scmp.eq.s32.totalorder %s25, 1
      %p48 = por %p46, %p47
      %p50 = scmp.ne.s32.totalorder %s33, %s49
      %p51 = scmp.eq.s32.totalorder %s25, 0
      %p52 = por %p50, %p51
      %s54 = sadd.s32 %s53, 1
      %p57 = scmp.eq.s32.totalorder %s19, 1
      %p58 = scmp.ne.s32.totalorder %s53, %s55
      %p59 = scmp.eq.s32.totalorder %s19, 0
      %p60 = por %p58, %p59
      %p61 = scmp.ne.s32.totalorder %s53, %s55
      %p62 = scmp.eq.s32.totalorder %s24, 1
      %p63 = por %p61, %p62
      %p64 = scmp.ne.s32.totalorder %s55, %s56
      %p65 = scmp.eq.s32.totalorder %s24, 0
      %p66 = por %p64, %p65
      %p67 = scmp.ne.s32.totalorder %s55, %s56
      %p68 = scmp.eq.s32.totalorder %s25, 1
      %p69 = por %p67, %p68
      %p71 = scmp.ne.s32.totalorder %s56, %s70
      %p72 = scmp.eq.s32.totalorder %s25, 0
      %p73 = por %p71, %p72
      %s75 = sadd.s32 %s74, 1
      %p78 = scmp.eq.s32.totalorder %s19, 1
      %p79 = scmp.ne.s32.totalorder %s74, %s76
      %p80 = scmp.eq.s32.totalorder %s19, 0
      %p81 = por %p79, %p80
      %p82 = scmp.ne.s32.totalorder %s74, %s76
      %p83 = scmp.eq.s32.totalorder %s24, 1
      %p84 = por %p82, %p83
      %p85 = scmp.ne.s32.totalorder %s76, %s77
      %p86 = scmp.eq.s32.totalorder %s24, 0
      %p87 = por %p85, %p86
      %p88 = scmp.ne.s32.totalorder %s76, %s77
      %p89 = scmp.eq.s32.totalorder %s25, 1
      %p90 = por %p88, %p89
      %p92 = scmp.ne.s32.totalorder %s77, %s91
      %p93 = scmp.eq.s32.totalorder %s25, 0
      %p94 = por %p92, %p93
      %s96 = sadd.s32 %s95, 1
      %p99 = scmp.eq.s32.totalorder %s19, 1
      %p100 = scmp.ne.s32.totalorder %s95, %s97
      %p101 = scmp.eq.s32.totalorder %s19, 0
      %p102 = por %p100, %p101
      %p103 = scmp.ne.s32.totalorder %s95, %s97
      %p104 = scmp.eq.s32.totalorder %s24, 1
      %p105 = por %p103, %p104
      %p106 = scmp.ne.s32.totalorder %s97, %s98
      %p107 = scmp.eq.s32.totalorder %s24, 0
      %p108 = por %p106, %p107
      %p109 = scmp.ne.s32.totalorder %s97, %s98
      %p110 = scmp.eq.s32.totalorder %s25, 1
      %p111 = por %p109, %p110
      %p113 = scmp.ne.s32.totalorder %s98, %s112
      %p114 = scmp.eq.s32.totalorder %s25, 0
      %p115 = por %p113, %p114
      %s117 = sadd.s32 %s116, 1
      %p120 = scmp.eq.s32.totalorder %s19, 1
      %p121 = scmp.ne.s32.totalorder %s116, %s118
      %p122 = scmp.eq.s32.totalorder %s19, 0
      %p123 = por %p121, %p122
      %p124 = scmp.ne.s32.totalorder %s116, %s118
      %p125 = scmp.eq.s32.totalorder %s24, 1
      %p126 = por %p124, %p125
      %p127 = scmp.ne.s32.totalorder %s118, %s119
      %p128 = scmp.eq.s32.totalorder %s24, 0
      %p129 = por %p127, %p128
      %p130 = scmp.ne.s32.totalorder %s118, %s119
      %p131 = scmp.eq.s32.totalorder %s25, 1
      %p132 = por %p130, %p131
      %p134 = scmp.ne.s32.totalorder %s119, %s133
      %p135 = scmp.eq.s32.totalorder %s25, 0
      %p136 = por %p134, %p135
      %s138 = sadd.s32 %s137, 1
      %p141 = scmp.eq.s32.totalorder %s19, 1
      %p142 = scmp.ne.s32.totalorder %s137, %s139
      %p143 = scmp.eq.s32.totalorder %s19, 0
      %p144 = por %p142, %p143
      %p145 = scmp.ne.s32.totalorder %s137, %s139
      %p146 = scmp.eq.s32.totalorder %s24, 1
      %p147 = por %p145, %p146
      %p148 = scmp.ne.s32.totalorder %s139, %s140
      %p149 = scmp.eq.s32.totalorder %s24, 0
      %p150 = por %p148, %p149
      %p151 = scmp.ne.s32.totalorder %s139, %s140
      %p152 = scmp.eq.s32.totalorder %s25, 1
      %p153 = por %p151, %p152
      %p155 = scmp.ne.s32.totalorder %s140, %s154
      %p156 = scmp.eq.s32.totalorder %s25, 0
      %p157 = por %p155, %p156
      %s159 = sadd.s32 %s158, 1
      %p162 = scmp.eq.s32.totalorder %s19, 1
      %p163 = scmp.ne.s32.totalorder %s158, %s160
      %p164 = scmp.eq.s32.totalorder %s19, 0
      %p165 = por %p163, %p164
      %p166 = scmp.ne.s32.totalorder %s158, %s160
      %p167 = scmp.eq.s32.totalorder %s24, 1
      %p168 = por %p166, %p167
      %p169 = scmp.ne.s32.totalorder %s160, %s161
      %p170 = scmp.eq.s32.totalorder %s24, 0
      %p171 = por %p169, %p170
      %p172 = scmp.ne.s32.totalorder %s160, %s161
      %p173 = scmp.eq.s32.totalorder %s25, 1
      %p174 = por %p172, %p173
      %p176 = scmp.ne.s32.totalorder %s161, %s175
      %p177 = scmp.eq.s32.totalorder %s25, 0
      %p178 = por %p176, %p177
      %s180 = sadd.s32 %s179, 1
      %p183 = scmp.eq.s32.totalorder %s19, 1
      %p184 = scmp.ne.s32.totalorder %s179, %s181
      %p185 = scmp.eq.s32.totalorder %s19, 0
      %p186 = por %p184, %p185
      %p187 = scmp.ne.s32.totalorder %s179, %s181
      %p188 = scmp.eq.s32.totalorder %s24, 1
      %p189 = por %p187, %p188
      %p190 = scmp.ne.s32.totalorder %s181, %s182
      %p191 = scmp.eq.s32.totalorder %s24, 0
      %p192 = por %p190, %p191
      %p193 = scmp.ne.s32.totalorder %s181, %s182
      %p194 = scmp.eq.s32.totalorder %s25, 1
      %p195 = por %p193, %p194
      %p197 = scmp.ne.s32.totalorder %s182, %s196
      %p198 = scmp.eq.s32.totalorder %s25, 0
      %p199 = por %p197, %p198
      %s201 = sadd.s32 %s200, 1
      %p204 = scmp.eq.s32.totalorder %s19, 1
      %p205 = scmp.ne.s32.totalorder %s200, %s202
      %p206 = scmp.eq.s32.totalorder %s19, 0
      %p207 = por %p205, %p206
      %p208 = scmp.ne.s32.totalorder %s200, %s202
      %p209 = scmp.eq.s32.totalorder %s24, 1
      %p210 = por %p208, %p209
      %p211 = scmp.ne.s32.totalorder %s202, %s203
      %p212 = scmp.eq.s32.totalorder %s24, 0
      %p213 = por %p211, %p212
      %p214 = scmp.ne.s32.totalorder %s202, %s203
      %p215 = scmp.eq.s32.totalorder %s25, 1
      %p216 = por %p214, %p215
      %p218 = scmp.ne.s32.totalorder %s203, %s217
      %p219 = scmp.eq.s32.totalorder %s25, 0
      %p220 = por %p218, %p219
      %s221 = ssub.s32 %s19, %s26
      %p222 = scmp.eq.s32.totalorder %s221, 0
      %s224 = sadd.s32 %s223, 1
      %s225 = scalar_select %p222, %s223, %s224
      %p228 = pneg %p222
      %p229 = scmp.eq.s32.totalorder %s19, 1
      %p230 = por %p228, %p229
      %p231 = scmp.ne.s32.totalorder %s223, %s226
      %p232 = scmp.eq.s32.totalorder %s19, 0
      %p233 = por %p231, %p232
      %p234 = scmp.ne.s32.totalorder %s223, %s226
      %p235 = scmp.eq.s32.totalorder %s24, 1
      %p236 = por %p234, %p235
      %p237 = scmp.ne.s32.totalorder %s226, %s227
      %p238 = scmp.eq.s32.totalorder %s24, 0
      %p239 = por %p237, %p238
      %p240 = scmp.ne.s32.totalorder %s226, %s227
      %p241 = scmp.eq.s32.totalorder %s25, 1
      %p242 = por %p240, %p241
      %p244 = scmp.ne.s32.totalorder %s227, %s243
      %p245 = scmp.eq.s32.totalorder %s25, 0
      %p246 = por %p244, %p245
      %p247 = scmp.le.s32.totalorder 1, %s19
      %p248 = scmp.lt.s32.totalorder %s19, 3
      %p249 = pnand %p247, %p248
      %p250 = pneg %p249
      // Predicated region
      $region9: #{agcb_nogca_forward.1} parent=5 // pred_check
        _
      $region10: #{agcb_nogca_forward.1} parent=5 // pred_check_branch
        %252 = sbr.rel (%p249) target = $region12
      $region11: #{agcb_nogca_forward.1} parent=5 // pred_region
        %s253 = ssub.s32 %s19, 1
        // Predicated region
        $region13: #{agcb_nogca_forward.1} parent=11 // pred_check
          %p254 = pneg %p66
        $region14: #{agcb_nogca_forward.1} parent=11 // pred_check_branch
          %256 = sbr.rel (%p254) target = $region16
        $region15: #{agcb_nogca_forward.1} parent=11 // pred_region
          _
        $region16: #{agcb_nogca_forward.1} parent=11 // pred_fallthru
          _
        // Predicated region
        $region17: #{agcb_nogca_forward.1} parent=11 // pred_check
          %p257 = pneg %p87
        $region18: #{agcb_nogca_forward.1} parent=11 // pred_check_branch
          %259 = sbr.rel (%p257) target = $region20
        $region19: #{agcb_nogca_forward.1} parent=11 // pred_region
          _
        $region20: #{agcb_nogca_forward.1} parent=11 // pred_fallthru
          _
        // Predicated region
        $region21: #{agcb_nogca_forward.1} parent=11 // pred_check
          %p260 = pneg %p108
        $region22: #{agcb_nogca_forward.1} parent=11 // pred_check_branch
          %262 = sbr.rel (%p260) target = $region24
        $region23: #{agcb_nogca_forward.1} parent=11 // pred_region
          _
        $region24: #{agcb_nogca_forward.1} parent=11 // pred_fallthru
          _
        // Predicated region
        $region25: #{agcb_nogca_forward.1} parent=11 // pred_check
          %p263 = pneg %p129
        $region26: #{agcb_nogca_forward.1} parent=11 // pred_check_branch
          %265 = sbr.rel (%p263) target = $region28
        $region27: #{agcb_nogca_forward.1} parent=11 // pred_region
          _
        $region28: #{agcb_nogca_forward.1} parent=11 // pred_fallthru
          _
        // Predicated region
        $region29: #{agcb_nogca_forward.1} parent=11 // pred_check
          %p266 = pneg %p150
        $region30: #{agcb_nogca_forward.1} parent=11 // pred_check_branch
          %268 = sbr.rel (%p266) target = $region32
        $region31: #{agcb_nogca_forward.1} parent=11 // pred_region
          _
        $region32: #{agcb_nogca_forward.1} parent=11 // pred_fallthru
          _
        // Predicated region
        $region33: #{agcb_nogca_forward.1} parent=11 // pred_check
          %p269 = pneg %p171
        $region34: #{agcb_nogca_forward.1} parent=11 // pred_check_branch
          %271 = sbr.rel (%p269) target = $region36
        $region35: #{agcb_nogca_forward.1} parent=11 // pred_region
          %s273 = ssub.s32 4608, 4608
          %274 = vsyncadd [#allocation4], %s273
          %s275 = sshll.u32 [#allocation3], 4
          %s276 = int_to_ptr.vmem [resolvable:$true] %s275
          %281 = dma.hbm_to_vmem [thread:$0]  %s6, 4608, %s276, [#allocation4], 128, 128, 8
        $region36: #{agcb_nogca_forward.1} parent=11 // pred_fallthru
          _
        // Predicated region
        $region37: #{agcb_nogca_forward.1} parent=11 // pred_check
          %p282 = pneg %p192
        $region38: #{agcb_nogca_forward.1} parent=11 // pred_check_branch
          %284 = sbr.rel (%p282) target = $region40
        $region39: #{agcb_nogca_forward.1} parent=11 // pred_region
          _
        $region40: #{agcb_nogca_forward.1} parent=11 // pred_fallthru
          _
        // Predicated region
        $region41: #{agcb_nogca_forward.1} parent=11 // pred_check
          %p285 = pneg %p213
        $region42: #{agcb_nogca_forward.1} parent=11 // pred_check_branch
          %287 = sbr.rel (%p285) target = $region44
        $region43: #{agcb_nogca_forward.1} parent=11 // pred_region
          _
        $region44: #{agcb_nogca_forward.1} parent=11 // pred_fallthru
          _
      $region12: #{agcb_nogca_forward.1} parent=5 // pred_fallthru
        _
      %p288 = scmp.lt.s32.totalorder %s19, 2
      // Predicated region
      $region45: #{agcb_nogca_forward.1} parent=5 // pred_check
        %p289 = pneg %p288
      $region46: #{agcb_nogca_forward.1} parent=5 // pred_check_branch
        %291 = sbr.rel (%p289) target = $region48
      $region47: #{agcb_nogca_forward.1} parent=5 // pred_region
        // Predicated region
        $region49: #{agcb_nogca_forward.1} parent=47 // pred_check
          %p292 = pneg %p39
        $region50: #{agcb_nogca_forward.1} parent=47 // pred_check_branch
          %294 = sbr.rel (%p292) target = $region52
        $region51: #{agcb_nogca_forward.1} parent=47 // pred_region
          %p295 = scmp.lt.s32.totalorder %s19, 1
          %s296 = scalar_select %p295, %s19, 1
          %s297 = smul.addr %s296, 32
          %s298 = smul.addr %s297, 8
          %s299 = scalar_lea.vmem %s0, %s298
        $region52: #{agcb_nogca_forward.1} parent=47 // pred_fallthru
          _
      $region48: #{agcb_nogca_forward.1} parent=5 // pred_fallthru
        _
      %p300 = scmp.le.s32.totalorder 1, %s19
      %p301 = scmp.lt.s32.totalorder %s19, 3
      %p302 = pnand %p300, %p301
      %p303 = pneg %p302
      // Predicated region
      $region53: #{agcb_nogca_forward.1} parent=5 // pred_check
        _
      $region54: #{agcb_nogca_forward.1} parent=5 // pred_check_branch
        %305 = sbr.rel (%p302) target = $region56
      $region55: #{agcb_nogca_forward.1} parent=5 // pred_region
        %s306 = ssub.s32 %s19, 1
        // Predicated region
        $region57: #{agcb_nogca_forward.1} parent=55 // pred_check
          %p307 = pneg %p171
        $region58: #{agcb_nogca_forward.1} parent=55 // pred_check_branch
          %309 = sbr.rel (%p307) target = $region60
        $region59: #{agcb_nogca_forward.1} parent=55 // pred_region
          %310 = dma.done [#allocation4], 4608
        $region60: #{agcb_nogca_forward.1} parent=55 // pred_fallthru
          _
        %p311 = scmp.lt.s32.totalorder %s24, 1
        %s312 = scalar_select %p311, %s24, 1
        %s313 = smul.addr %s312, 32
        %s314 = smul.addr %s313, 8
        %s315 = scalar_lea.vmem %s0, %s314
        %p316 = pneg %p45
        %p317 = pneg %p42
        %p318 = pneg %p66
        %p319 = pneg %p63
        %p320 = pneg %p87
        %p321 = pneg %p84
        %p322 = pneg %p108
        %p323 = pneg %p105
        %p324 = pneg %p129
        %p325 = pneg %p126
        %p326 = pneg %p150
        %p327 = pneg %p147
        %p328 = pneg %p171
        %p329 = pneg %p168
        %p330 = pneg %p192
        %p331 = pneg %p189
        %p332 = pneg %p213
        %p333 = pneg %p210
        %p334 = pneg %p239
        %p335 = pneg %p236
        %s336 = sand.u32 %s226, 1
        %s337 = scalar_lea.sflag [#allocation5], %s336
        %s338 = sand.u32 %s226, 1
        %s339 = smul.addr %s338, 256
        %s340 = scalar_lea.vmem [#allocation6], %s339
        %p341 = scmp.lt.s32.totalorder %s24, 1
        %s342 = scalar_select %p341, %s24, 1
        %s343 = smul.addr %s342, 32
        %s344 = smul.addr %s343, 8
        %s345 = scalar_lea.vmem %s0, %s344
        %vm346 = vcmask 261120
        %347 = vst.msk [vmem:[#allocation2] sm:$0xff] %vm346, 0.0
        %348 = vst.msk [vmem:[#allocation2 + $0x8] sm:$0xff] %vm346, 0.0
        %349 = vst.msk [vmem:[#allocation2 + $0x10] sm:$0xff] %vm346, 0.0
        %350 = vst.msk [vmem:[#allocation2 + $0x18] sm:$0xff] %vm346, 0.0
        %351 = vst.msk [vmem:[#allocation2 + $0x20] sm:$0xff] %vm346, 0.0
        %352 = vst.msk [vmem:[#allocation2 + $0x28] sm:$0xff] %vm346, 0.0
        %353 = vst.msk [vmem:[#allocation2 + $0x30] sm:$0xff] %vm346, 0.0
        %354 = vst.msk [vmem:[#allocation2 + $0x38] sm:$0xff] %vm346, 0.0
        %355 = vst.msk [vmem:[#allocation2 + $0x40] sm:$0xff] %vm346, 0.0
        %356 = vst.msk [vmem:[#allocation2 + $0x48] sm:$0xff] %vm346, 0.0
        %357 = vst.msk [vmem:[#allocation2 + $0x50] sm:$0xff] %vm346, 0.0
        %358 = vst.msk [vmem:[#allocation2 + $0x58] sm:$0xff] %vm346, 0.0
        %359 = vst.msk [vmem:[#allocation2 + $0x60] sm:$0xff] %vm346, 0.0
        %360 = vst.msk [vmem:[#allocation2 + $0x68] sm:$0xff] %vm346, 0.0
        %361 = vst.msk [vmem:[#allocation2 + $0x70] sm:$0xff] %vm346, 0.0
        %362 = vst.msk [vmem:[#allocation2 + $0x78] sm:$0xff] %vm346, 0.0
        %363 = vst.msk [vmem:[#allocation2 + $0x80] sm:$0xff] %vm346, 0.0
        %364 = vst.msk [vmem:[#allocation2 + $0x88] sm:$0xff] %vm346, 0.0
        %365 = vst.msk [vmem:[#allocation2 + $0x90] sm:$0xff] %vm346, 0.0
        %366 = vst.msk [vmem:[#allocation2 + $0x98] sm:$0xff] %vm346, 0.0
        %367 = vst.msk [vmem:[#allocation2 + $0xa0] sm:$0xff] %vm346, 0.0
        %368 = vst.msk [vmem:[#allocation2 + $0xa8] sm:$0xff] %vm346, 0.0
        %369 = vst.msk [vmem:[#allocation2 + $0xb0] sm:$0xff] %vm346, 0.0
        %370 = vst.msk [vmem:[#allocation2 + $0xb8] sm:$0xff] %vm346, 0.0
        %371 = vst.msk [vmem:[#allocation2 + $0xc0] sm:$0xff] %vm346, 0.0
        %372 = vst.msk [vmem:[#allocation2 + $0xc8] sm:$0xff] %vm346, 0.0
        %373 = vst.msk [vmem:[#allocation2 + $0xd0] sm:$0xff] %vm346, 0.0
        %374 = vst.msk [vmem:[#allocation2 + $0xd8] sm:$0xff] %vm346, 0.0
        %375 = vst.msk [vmem:[#allocation2 + $0xe0] sm:$0xff] %vm346, 0.0
        %376 = vst.msk [vmem:[#allocation2 + $0xe8] sm:$0xff] %vm346, 0.0
        %377 = vst.msk [vmem:[#allocation2 + $0xf0] sm:$0xff] %vm346, 0.0
        %378 = vst.msk [vmem:[#allocation2 + $0xf8] sm:$0xff] %vm346, 0.0
        %379 = vst.msk [vmem:[#allocation2 + $0x100] sm:$0xff] %vm346, 0.0
        %380 = vst.msk [vmem:[#allocation2 + $0x108] sm:$0xff] %vm346, 0.0
        %381 = vst.msk [vmem:[#allocation2 + $0x110] sm:$0xff] %vm346, 0.0
        %382 = vst.msk [vmem:[#allocation2 + $0x118] sm:$0xff] %vm346, 0.0
        %383 = vst.msk [vmem:[#allocation2 + $0x120] sm:$0xff] %vm346, 0.0
        %384 = vst.msk [vmem:[#allocation2 + $0x128] sm:$0xff] %vm346, 0.0
        %385 = vst.msk [vmem:[#allocation2 + $0x130] sm:$0xff] %vm346, 0.0
        %386 = vst.msk [vmem:[#allocation2 + $0x138] sm:$0xff] %vm346, 0.0
        %387 = vst.msk [vmem:[#allocation2 + $0x140] sm:$0xff] %vm346, 0.0
        %388 = vst.msk [vmem:[#allocation2 + $0x148] sm:$0xff] %vm346, 0.0
        %389 = vst.msk [vmem:[#allocation2 + $0x150] sm:$0xff] %vm346, 0.0
        %390 = vst.msk [vmem:[#allocation2 + $0x158] sm:$0xff] %vm346, 0.0
        %391 = vst.msk [vmem:[#allocation2 + $0x160] sm:$0xff] %vm346, 0.0
        %392 = vst.msk [vmem:[#allocation2 + $0x168] sm:$0xff] %vm346, 0.0
        %393 = vst.msk [vmem:[#allocation2 + $0x170] sm:$0xff] %vm346, 0.0
        %394 = vst.msk [vmem:[#allocation2 + $0x178] sm:$0xff] %vm346, 0.0
        %395 = vst.msk [vmem:[#allocation2 + $0x180] sm:$0xff] %vm346, 0.0
        %396 = vst.msk [vmem:[#allocation2 + $0x188] sm:$0xff] %vm346, 0.0
        %397 = vst.msk [vmem:[#allocation2 + $0x190] sm:$0xff] %vm346, 0.0
        %398 = vst.msk [vmem:[#allocation2 + $0x198] sm:$0xff] %vm346, 0.0
        %399 = vst.msk [vmem:[#allocation2 + $0x1a0] sm:$0xff] %vm346, 0.0
        %400 = vst.msk [vmem:[#allocation2 + $0x1a8] sm:$0xff] %vm346, 0.0
        %401 = vst.msk [vmem:[#allocation2 + $0x1b0] sm:$0xff] %vm346, 0.0
        %402 = vst.msk [vmem:[#allocation2 + $0x1b8] sm:$0xff] %vm346, 0.0
        %403 = vst.msk [vmem:[#allocation2 + $0x1c0] sm:$0xff] %vm346, 0.0
        %404 = vst.msk [vmem:[#allocation2 + $0x1c8] sm:$0xff] %vm346, 0.0
        %405 = vst.msk [vmem:[#allocation2 + $0x1d0] sm:$0xff] %vm346, 0.0
        %406 = vst.msk [vmem:[#allocation2 + $0x1d8] sm:$0xff] %vm346, 0.0
        %v407 = vld [vmem:[%s5] sm:$0xff]
        %v408 = vld [vmem:[%s5 + $0x8] sm:$0xff]
        %v409 = vld [vmem:[%s5 + $0x10] sm:$0xff]
        %v410 = vld [vmem:[%s5 + $0x18] sm:$0xff]
        %v411 = vld [vmem:[%s5 + $0x20] sm:$0xff]
        %v412 = vld [vmem:[%s5 + $0x28] sm:$0xff]
        %v413 = vld [vmem:[%s5 + $0x30] sm:$0xff]
        %v414 = vld [vmem:[%s5 + $0x38] sm:$0xff]
        %v415 = vld [vmem:[%s5 + $0x40] sm:$0xff]
        %v416 = vld [vmem:[%s5 + $0x48] sm:$0xff]
        %v417 = vld [vmem:[%s5 + $0x50] sm:$0xff]
        %v418 = vld [vmem:[%s5 + $0x58] sm:$0xff]
        %v419 = vld [vmem:[%s5 + $0x60] sm:$0xff]
        %v420 = vld [vmem:[%s5 + $0x68] sm:$0xff]
        %v421 = vld [vmem:[%s5 + $0x70] sm:$0xff]
        %v422 = vld [vmem:[%s5 + $0x78] sm:$0xff]
        %v423 = vld [vmem:[%s5 + $0x80] sm:$0xff]
        %v424 = vld [vmem:[%s5 + $0x88] sm:$0xff]
        %v425 = vld [vmem:[%s5 + $0x90] sm:$0xff]
        %v426 = vld [vmem:[%s5 + $0x98] sm:$0xff]
        %v427 = vld [vmem:[%s5 + $0xa0] sm:$0xff]
        %v428 = vld [vmem:[%s5 + $0xa8] sm:$0xff]
        %v429 = vld [vmem:[%s5 + $0xb0] sm:$0xff]
        %v430 = vld [vmem:[%s5 + $0xb8] sm:$0xff]
        %v431 = vld [vmem:[%s5 + $0xc0] sm:$0xff]
        %v432 = vld [vmem:[%s5 + $0xc8] sm:$0xff]
        %v433 = vld [vmem:[%s5 + $0xd0] sm:$0xff]
        %v434 = vld [vmem:[%s5 + $0xd8] sm:$0xff]
        %v435 = vld [vmem:[%s5 + $0xe0] sm:$0xff]
        %v436 = vld [vmem:[%s5 + $0xe8] sm:$0xff]
        %v437 = vld [vmem:[%s5 + $0xf0] sm:$0xff]
        %v438 = vld [vmem:[%s5 + $0xf8] sm:$0xff]
        %v439 = vld [vmem:[%s5 + $0x100] sm:$0xff]
        %v440 = vld [vmem:[%s5 + $0x108] sm:$0xff]
        %v441 = vld [vmem:[%s5 + $0x110] sm:$0xff]
        %v442 = vld [vmem:[%s5 + $0x118] sm:$0xff]
        %v443 = vld [vmem:[%s5 + $0x120] sm:$0xff]
        %v444 = vld [vmem:[%s5 + $0x128] sm:$0xff]
        %v445 = vld [vmem:[%s5 + $0x130] sm:$0xff]
        %v446 = vld [vmem:[%s5 + $0x138] sm:$0xff]
        %v447 = vld [vmem:[%s5 + $0x140] sm:$0xff]
        %v448 = vld [vmem:[%s5 + $0x148] sm:$0xff]
        %v449 = vld [vmem:[%s5 + $0x150] sm:$0xff]
        %v450 = vld [vmem:[%s5 + $0x158] sm:$0xff]
        %v451 = vld [vmem:[%s5 + $0x160] sm:$0xff]
        %v452 = vld [vmem:[%s5 + $0x168] sm:$0xff]
        %v453 = vld [vmem:[%s5 + $0x170] sm:$0xff]
        %v454 = vld [vmem:[%s5 + $0x178] sm:$0xff]
        %v455 = vld [vmem:[%s5 + $0x180] sm:$0xff]
        %v456 = vld [vmem:[%s5 + $0x188] sm:$0xff]
        %v457 = vld [vmem:[%s5 + $0x190] sm:$0xff]
        %v458 = vld [vmem:[%s5 + $0x198] sm:$0xff]
        %v459 = vld [vmem:[%s5 + $0x1a0] sm:$0xff]
        %v460 = vld [vmem:[%s5 + $0x1a8] sm:$0xff]
        %v461 = vld [vmem:[%s5 + $0x1b0] sm:$0xff]
        %v462 = vld [vmem:[%s5 + $0x1b8] sm:$0xff]
        %v463 = vld [vmem:[%s5 + $0x1c0] sm:$0xff]
        %v464 = vld [vmem:[%s5 + $0x1c8] sm:$0xff]
        %v465 = vld [vmem:[%s5 + $0x1d0] sm:$0xff]
        %v466 = vld [vmem:[%s5 + $0x1d8] sm:$0xff]
        %v467 = vld [vmem:[%s5 + $0x1e0] sm:$0xff]
        %v468 = vld [vmem:[%s5 + $0x1e8] sm:$0xff]
        %v469 = vld [vmem:[%s5 + $0x1f0] sm:$0xff]
        %v470 = vld [vmem:[%s5 + $0x1f8] sm:$0xff]
        %v471 = vld [vmem:[%s1] sm:$0xff]
        %v472 = vld [vmem:[%s1 + $0x8] sm:$0xff]
        %v473 = vld [vmem:[%s1 + $0x10] sm:$0xff]
        %v474 = vld [vmem:[%s1 + $0x18] sm:$0xff]
        %v475 = vld [vmem:[%s2] sm:$0x1]
        %v476 = vld [vmem:[%s3] sm:$0xff]
        %v477 = vld [vmem:[%s3 + $0x8] sm:$0xff]
        %v478 = vld [vmem:[%s3 + $0x10] sm:$0xff]
        %v479 = vld [vmem:[%s3 + $0x18] sm:$0xff]
        %v480 = vld [vmem:[%s4] sm:$0x1]
        %v481 = vld [vmem:[%s7] sm:$0x1]
        %v482 = vld [vmem:[%s8] sm:$0x1]
        %v483 = vld [vmem:[%s345] sm:$0xff]
        %v484 = vld [vmem:[%s345 + $0x8] sm:$0xff]
        %v485 = vld [vmem:[%s345 + $0x10] sm:$0xff]
        %v486 = vld [vmem:[%s345 + $0x18] sm:$0xff]
        %v487 = vld [vmem:[%s345 + $0x20] sm:$0xff]
        %v488 = vld [vmem:[%s345 + $0x28] sm:$0xff]
        %v489 = vld [vmem:[%s345 + $0x30] sm:$0xff]
        %v490 = vld [vmem:[%s345 + $0x38] sm:$0xff]
        %v491 = vld [vmem:[%s345 + $0x40] sm:$0xff]
        %v492 = vld [vmem:[%s345 + $0x48] sm:$0xff]
        %v493 = vld [vmem:[%s345 + $0x50] sm:$0xff]
        %v494 = vld [vmem:[%s345 + $0x58] sm:$0xff]
        %v495 = vld [vmem:[%s345 + $0x60] sm:$0xff]
        %v496 = vld [vmem:[%s345 + $0x68] sm:$0xff]
        %v497 = vld [vmem:[%s345 + $0x70] sm:$0xff]
        %v498 = vld [vmem:[%s345 + $0x78] sm:$0xff]
        %v499 = vld [vmem:[%s345 + $0x80] sm:$0xff]
        %v500 = vld [vmem:[%s345 + $0x88] sm:$0xff]
        %v501 = vld [vmem:[%s345 + $0x90] sm:$0xff]
        %v502 = vld [vmem:[%s345 + $0x98] sm:$0xff]
        %v503 = vld [vmem:[%s345 + $0xa0] sm:$0xff]
        %v504 = vld [vmem:[%s345 + $0xa8] sm:$0xff]
        %v505 = vld [vmem:[%s345 + $0xb0] sm:$0xff]
        %v506 = vld [vmem:[%s345 + $0xb8] sm:$0xff]
        %v507 = vld [vmem:[%s345 + $0xc0] sm:$0xff]
        %v508 = vld [vmem:[%s345 + $0xc8] sm:$0xff]
        %v509 = vld [vmem:[%s345 + $0xd0] sm:$0xff]
        %v510 = vld [vmem:[%s345 + $0xd8] sm:$0xff]
        %v511 = vld [vmem:[%s345 + $0xe0] sm:$0xff]
        %v512 = vld [vmem:[%s345 + $0xe8] sm:$0xff]
        %v513 = vld [vmem:[%s345 + $0xf0] sm:$0xff]
        %v514 = vld [vmem:[%s345 + $0xf8] sm:$0xff]
        %v516 = vlaneseq
        %v517 = vshrl.u32 %v516, 7
        %v518 = vsub.s32 0, %v517
        %v519 = vrot.slane %v475, %v518
        %v522 = vsel %vm346, %v483, 0
        %v525 = vsel %vm346, %v484, 0
        %v528 = vsel %vm346, %v485, 0
        %v531 = vsel %vm346, %v486, 0
        %v534 = vsel %vm346, %v487, 0
        %v537 = vsel %vm346, %v488, 0
        %v540 = vsel %vm346, %v489, 0
        %v543 = vsel %vm346, %v490, 0
        %v546 = vsel %vm346, %v491, 0
        %v549 = vsel %vm346, %v492, 0
        %v552 = vsel %vm346, %v493, 0
        %v555 = vsel %vm346, %v494, 0
        %v558 = vsel %vm346, %v495, 0
        %v561 = vsel %vm346, %v496, 0
        %v564 = vsel %vm346, %v497, 0
        %v567 = vsel %vm346, %v498, 0
        %v570 = vsel %vm346, %v499, 0
        %v573 = vsel %vm346, %v500, 0
        %v576 = vsel %vm346, %v501, 0
        %v579 = vsel %vm346, %v502, 0
        %v582 = vsel %vm346, %v503, 0
        %v585 = vsel %vm346, %v504, 0
        %v588 = vsel %vm346, %v505, 0
        %v591 = vsel %vm346, %v506, 0
        %v594 = vsel %vm346, %v507, 0
        %v597 = vsel %vm346, %v508, 0
        %v600 = vsel %vm346, %v509, 0
        %v603 = vsel %vm346, %v510, 0
        %v606 = vsel %vm346, %v511, 0
        %v609 = vsel %vm346, %v512, 0
        %v612 = vsel %vm346, %v513, 0
        %v615 = vsel %vm346, %v514, 0
        %617 = vmatprep.subr.mxu0 0.0
        %618 = vmatpush1.msra.mxu0 %v471
        %619 = vmatprep.subr.mxu0 0.0
        %620 = vmatpush1.msra.mxu0 %v472
        %621 = vmatprep.subr.mxu0 0.0
        %622 = vmatpush1.msra.mxu0 %v473
        %623 = vmatprep.subr.mxu0 0.0
        %624 = vmatpush1.msra.mxu0 %v474
        %625 = vmatprep.subr.mxu0 0.0
        %626 = vmatpush1.msra.mxu0 0.0
        %627 = vmatprep.subr.mxu0 0.0
        %628 = vmatpush1.msra.mxu0 0.0
        %629 = vmatprep.subr.mxu0 0.0
        %630 = vmatpush1.msra.mxu0 0.0
        %631 = vmatprep.subr.mxu0 0.0
        %632 = vmatpush1.msra.mxu0 0.0
        %633 = vmatprep.subr.mxu0 0.0
        %634 = vmatpush1.msra.mxu0 0.0
        %635 = vmatprep.subr.mxu0 0.0
        %636 = vmatpush1.msra.mxu0 0.0
        %637 = vmatprep.subr.mxu0 0.0
        %638 = vmatpush1.msra.mxu0 0.0
        %639 = vmatprep.subr.mxu0 0.0
        %640 = vmatpush1.msra.mxu0 0.0
        %641 = vmatprep.subr.mxu0 0.0
        %642 = vmatpush1.msra.mxu0 0.0
        %643 = vmatprep.subr.mxu0 0.0
        %644 = vmatpush1.msra.mxu0 0.0
        %645 = vmatprep.subr.mxu0 0.0
        %646 = vmatpush1.msra.mxu0 0.0
        %647 = vmatprep.subr.mxu0 0.0
        %648 = vmatpush1.msra.mxu0 0.0
        %649 = vmatprep.subr.mxu0 0.0
        %650 = vmatpush1.msra.mxu0 0.0
        %651 = vmatprep.subr.mxu0 0.0
        %652 = vmatpush1.msra.mxu0 0.0
        %653 = vmatprep.subr.mxu0 0.0
        %654 = vmatpush1.msra.mxu0 0.0
        %655 = vmatprep.subr.mxu0 0.0
        %656 = vmatpush1.msra.mxu0 0.0
        %657 = vmatprep.subr.mxu0 0.0
        %658 = vmatpush1.msra.mxu0 0.0
        %659 = vmatprep.subr.mxu0 0.0
        %660 = vmatpush1.msra.mxu0 0.0
        %661 = vmatprep.subr.mxu0 0.0
        %662 = vmatpush1.msra.mxu0 0.0
        %663 = vmatprep.subr.mxu0 0.0
        %664 = vmatpush1.msra.mxu0 0.0
        %665 = vmatprep.subr.mxu0 0.0
        %666 = vmatpush1.msra.mxu0 0.0
        %667 = vmatprep.subr.mxu0 0.0
        %668 = vmatpush1.msra.mxu0 0.0
        %669 = vmatprep.subr.mxu0 0.0
        %670 = vmatpush1.msra.mxu0 0.0
        %671 = vmatprep.subr.mxu0 0.0
        %672 = vmatpush1.msra.mxu0 0.0
        %673 = vmatprep.subr.mxu0 0.0
        %674 = vmatpush1.msra.mxu0 0.0
        %675 = vmatprep.subr.mxu0 0.0
        %676 = vmatpush1.msra.mxu0 0.0
        %677 = vmatprep.subr.mxu0 0.0
        %678 = vmatpush1.msra.mxu0 0.0
        %679 = vmatprep.subr.mxu0 0.0
        %680 = vmatpush1.msra.mxu0 0.0
        %681 = vmatprep.mubr.f32.mxu0 0.0
        %682 = vmatmul.mubr.f32.gmra.mrb[0].mxu0 %v522
        %v683 = vpop.f32.mrb[0].mxu0
        %v684 = vadd.f32 %v519, %v683
        %v685 = vpop.f32.mrb[0].mxu0
        %686 = vmatprep.mubr.f32.mxu0 0.0
        %687 = vmatmul.mubr.f32.gmra.mrb[0].mxu0 %v525
        %v688 = vpop.f32.mrb[0].mxu0
        %v689 = vadd.f32 %v519, %v688
        %v690 = vpop.f32.mrb[0].mxu0
        %691 = vmatprep.mubr.f32.mxu0 0.0
        %692 = vmatmul.mubr.f32.gmra.mrb[0].mxu0 %v528
        %v693 = vpop.f32.mrb[0].mxu0
        %v694 = vadd.f32 %v519, %v693
        %v695 = vpop.f32.mrb[0].mxu0
        %696 = vmatprep.mubr.f32.mxu0 0.0
        %697 = vmatmul.mubr.f32.gmra.mrb[0].mxu0 %v531
        %v698 = vpop.f32.mrb[0].mxu0
        %v699 = vadd.f32 %v519, %v698
        %v700 = vpop.f32.mrb[0].mxu0
        %701 = vmatprep.mubr.f32.mxu0 0.0
        %702 = vmatmul.mubr.f32.gmra.mrb[0].mxu0 %v534
        %v703 = vpop.f32.mrb[0].mxu0
        %v704 = vadd.f32 %v519, %v703
        %v705 = vpop.f32.mrb[0].mxu0
        %706 = vmatprep.mubr.f32.mxu0 0.0
        %707 = vmatmul.mubr.f32.gmra.mrb[0].mxu0 %v537
        %v708 = vpop.f32.mrb[0].mxu0
        %v709 = vadd.f32 %v519, %v708
        %v710 = vpop.f32.mrb[0].mxu0
        %711 = vmatprep.mubr.f32.mxu0 0.0
        %712 = vmatmul.mubr.f32.gmra.mrb[0].mxu0 %v540
        %v713 = vpop.f32.mrb[0].mxu0
        %v714 = vadd.f32 %v519, %v713
        %v715 = vpop.f32.mrb[0].mxu0
        %716 = vmatprep.mubr.f32.mxu0 0.0
        %717 = vmatmul.mubr.f32.gmra.mrb[0].mxu0 %v543
        %v718 = vpop.f32.mrb[0].mxu0
        %v719 = vadd.f32 %v519, %v718
        %v720 = vpop.f32.mrb[0].mxu0
        %721 = vmatprep.mubr.f32.mxu0 0.0
        %722 = vmatmul.mubr.f32.gmra.mrb[0].mxu0 %v546
        %v723 = vpop.f32.mrb[0].mxu0
        %v724 = vadd.f32 %v519, %v723
        %v725 = vpop.f32.mrb[0].mxu0
        %726 = vmatprep.mubr.f32.mxu0 0.0
        %727 = vmatmul.mubr.f32.gmra.mrb[0].mxu0 %v549
        %v728 = vpop.f32.mrb[0].mxu0
        %v729 = vadd.f32 %v519, %v728
        %v730 = vpop.f32.mrb[0].mxu0
        %731 = vmatprep.mubr.f32.mxu0 0.0
        %732 = vmatmul.mubr.f32.gmra.mrb[0].mxu0 %v552
        %v733 = vpop.f32.mrb[0].mxu0
        %v734 = vadd.f32 %v519, %v733
        %v735 = vpop.f32.mrb[0].mxu0
        %736 = vmatprep.mubr.f32.mxu0 0.0
        %737 = vmatmul.mubr.f32.gmra.mrb[0].mxu0 %v555
        %v738 = vpop.f32.mrb[0].mxu0
        %v739 = vadd.f32 %v519, %v738
        %v740 = vpop.f32.mrb[0].mxu0
        %741 = vmatprep.mubr.f32.mxu0 0.0
        %742 = vmatmul.mubr.f32.gmra.mrb[0].mxu0 %v558
        %v743 = vpop.f32.mrb[0].mxu0
        %v744 = vadd.f32 %v519, %v743
        %v745 = vpop.f32.mrb[0].mxu0
        %746 = vmatprep.mubr.f32.mxu0 0.0
        %747 = vmatmul.mubr.f32.gmra.mrb[0].mxu0 %v561
        %v748 = vpop.f32.mrb[0].mxu0
        %v749 = vadd.f32 %v519, %v748
        %v750 = vpop.f32.mrb[0].mxu0
        %751 = vmatprep.mubr.f32.mxu0 0.0
        %752 = vmatmul.mubr.f32.gmra.mrb[0].mxu0 %v564
        %v753 = vpop.f32.mrb[0].mxu0
        %v754 = vadd.f32 %v519, %v753
        %v755 = vpop.f32.mrb[0].mxu0
        %756 = vmatprep.mubr.f32.mxu0 0.0
        %757 = vmatmul.mubr.f32.gmra.mrb[0].mxu0 %v567
        %v758 = vpop.f32.mrb[0].mxu0
        %v759 = vadd.f32 %v519, %v758
        %v760 = vpop.f32.mrb[0].mxu0
        %761 = vmatprep.mubr.f32.mxu0 0.0
        %762 = vmatmul.mubr.f32.gmra.mrb[0].mxu0 %v570
        %v763 = vpop.f32.mrb[0].mxu0
        %v764 = vadd.f32 %v519, %v763
        %v765 = vpop.f32.mrb[0].mxu0
        %766 = vmatprep.mubr.f32.mxu0 0.0
        %767 = vmatmul.mubr.f32.gmra.mrb[0].mxu0 %v573
        %v768 = vpop.f32.mrb[0].mxu0
        %v769 = vadd.f32 %v519, %v768
        %v770 = vpop.f32.mrb[0].mxu0
        %771 = vmatprep.mubr.f32.mxu0 0.0
        %772 = vmatmul.mubr.f32.gmra.mrb[0].mxu0 %v576
        %v773 = vpop.f32.mrb[0].mxu0
        %v774 = vadd.f32 %v519, %v773
        %v775 = vpop.f32.mrb[0].mxu0
        %776 = vmatprep.mubr.f32.mxu0 0.0
        %777 = vmatmul.mubr.f32.gmra.mrb[0].mxu0 %v579
        %v778 = vpop.f32.mrb[0].mxu0
        %v779 = vadd.f32 %v519, %v778
        %v780 = vpop.f32.mrb[0].mxu0
        %781 = vmatprep.mubr.f32.mxu0 0.0
        %782 = vmatmul.mubr.f32.gmra.mrb[0].mxu0 %v582
        %v783 = vpop.f32.mrb[0].mxu0
        %v784 = vadd.f32 %v519, %v783
        %v785 = vpop.f32.mrb[0].mxu0
        %786 = vmatprep.mubr.f32.mxu0 0.0
        %787 = vmatmul.mubr.f32.gmra.mrb[0].mxu0 %v585
        %v788 = vpop.f32.mrb[0].mxu0
        %v789 = vadd.f32 %v519, %v788
        %v790 = vpop.f32.mrb[0].mxu0
        %791 = vmatprep.mubr.f32.mxu0 0.0
        %792 = vmatmul.mubr.f32.gmra.mrb[0].mxu0 %v588
        %v793 = vpop.f32.mrb[0].mxu0
        %v794 = vadd.f32 %v519, %v793
        %v795 = vpop.f32.mrb[0].mxu0
        %796 = vmatprep.mubr.f32.mxu0 0.0
        %797 = vmatmul.mubr.f32.gmra.mrb[0].mxu0 %v591
        %v798 = vpop.f32.mrb[0].mxu0
        %v799 = vadd.f32 %v519, %v798
        %v800 = vpop.f32.mrb[0].mxu0
        %801 = vmatprep.mubr.f32.mxu0 0.0
        %802 = vmatmul.mubr.f32.gmra.mrb[0].mxu0 %v594
        %v803 = vpop.f32.mrb[0].mxu0
        %v804 = vadd.f32 %v519, %v803
        %v805 = vpop.f32.mrb[0].mxu0
        %806 = vmatprep.mubr.f32.mxu0 0.0
        %807 = vmatmul.mubr.f32.gmra.mrb[0].mxu0 %v597
        %v808 = vpop.f32.mrb[0].mxu0
        %v809 = vadd.f32 %v519, %v808
        %v810 = vpop.f32.mrb[0].mxu0
        %811 = vmatprep.mubr.f32.mxu0 0.0
        %812 = vmatmul.mubr.f32.gmra.mrb[0].mxu0 %v600
        %v813 = vpop.f32.mrb[0].mxu0
        %v814 = vadd.f32 %v519, %v813
        %v815 = vpop.f32.mrb[0].mxu0
        %816 = vmatprep.mubr.f32.mxu0 0.0
        %817 = vmatmul.mubr.f32.gmra.mrb[0].mxu0 %v603
        %v818 = vpop.f32.mrb[0].mxu0
        %v819 = vadd.f32 %v519, %v818
        %v820 = vpop.f32.mrb[0].mxu0
        %821 = vmatprep.mubr.f32.mxu0 0.0
        %822 = vmatmul.mubr.f32.gmra.mrb[0].mxu0 %v606
        %v823 = vpop.f32.mrb[0].mxu0
        %v824 = vadd.f32 %v519, %v823
        %v825 = vpop.f32.mrb[0].mxu0
        %826 = vmatprep.mubr.f32.mxu0 0.0
        %827 = vmatmul.mubr.f32.gmra.mrb[0].mxu0 %v609
        %v828 = vpop.f32.mrb[0].mxu0
        %v829 = vadd.f32 %v519, %v828
        %v830 = vpop.f32.mrb[0].mxu0
        %831 = vmatprep.mubr.f32.mxu0 0.0
        %832 = vmatmul.mubr.f32.gmra.mrb[0].mxu0 %v612
        %v833 = vpop.f32.mrb[0].mxu0
        %v834 = vadd.f32 %v519, %v833
        %v835 = vpop.f32.mrb[0].mxu0
        %836 = vmatprep.mubr.f32.mxu0 0.0
        %837 = vmatmul.mubr.f32.gmra.mrb[0].mxu0 %v615
        %v838 = vpop.f32.mrb[0].mxu0
        %v839 = vadd.f32 %v519, %v838
        %v840 = vpop.f32.mrb[0].mxu0
        %841 = vdwg.mxu0
        %v843 = vsel %vm346, %v684, 0
        %v846 = vsel %vm346, %v689, 0
        %v849 = vsel %vm346, %v694, 0
        %v852 = vsel %vm346, %v699, 0
        %v855 = vsel %vm346, %v704, 0
        %v858 = vsel %vm346, %v709, 0
        %v861 = vsel %vm346, %v714, 0
        %v864 = vsel %vm346, %v719, 0
        %v867 = vsel %vm346, %v724, 0
        %v870 = vsel %vm346, %v729, 0
        %v873 = vsel %vm346, %v734, 0
        %v876 = vsel %vm346, %v739, 0
        %v879 = vsel %vm346, %v744, 0
        %v882 = vsel %vm346, %v749, 0
        %v885 = vsel %vm346, %v754, 0
        %v888 = vsel %vm346, %v759, 0
        %v891 = vsel %vm346, %v764, 0
        %v894 = vsel %vm346, %v769, 0
        %v897 = vsel %vm346, %v774, 0
        %v900 = vsel %vm346, %v779, 0
        %v903 = vsel %vm346, %v784, 0
        %v906 = vsel %vm346, %v789, 0
        %v909 = vsel %vm346, %v794, 0
        %v912 = vsel %vm346, %v799, 0
        %v915 = vsel %vm346, %v804, 0
        %v918 = vsel %vm346, %v809, 0
        %v921 = vsel %vm346, %v814, 0
        %v924 = vsel %vm346, %v819, 0
        %v927 = vsel %vm346, %v824, 0
        %v930 = vsel %vm346, %v829, 0
        %v933 = vsel %vm346, %v834, 0
        %v936 = vsel %vm346, %v839, 0
        %938 = vmatprep.subr.mxu0 0.0
        %939 = vmatpush1.xpose.msra.mxu0 %v522
        %940 = vmatprep.subr.mxu0 0.0
        %941 = vmatpush1.xpose.msra.mxu0 %v525
        %942 = vmatprep.subr.mxu0 0.0
        %943 = vmatpush1.xpose.msra.mxu0 %v528
        %944 = vmatprep.subr.mxu0 0.0
        %945 = vmatpush1.xpose.msra.mxu0 %v531
        %946 = vmatprep.subr.mxu0 0.0
        %947 = vmatpush1.xpose.msra.mxu0 %v534
        %948 = vmatprep.subr.mxu0 0.0
        %949 = vmatpush1.xpose.msra.mxu0 %v537
        %950 = vmatprep.subr.mxu0 0.0
        %951 = vmatpush1.xpose.msra.mxu0 %v540
        %952 = vmatprep.subr.mxu0 0.0
        %953 = vmatpush1.xpose.msra.mxu0 %v543
        %954 = vmatprep.subr.mxu0 0.0
        %955 = vmatpush1.xpose.msra.mxu0 %v546
        %956 = vmatprep.subr.mxu0 0.0
        %957 = vmatpush1.xpose.msra.mxu0 %v549
        %958 = vmatprep.subr.mxu0 0.0
        %959 = vmatpush1.xpose.msra.mxu0 %v552
        %960 = vmatprep.subr.mxu0 0.0
        %961 = vmatpush1.xpose.msra.mxu0 %v555
        %962 = vmatprep.subr.mxu0 0.0
        %963 = vmatpush1.xpose.msra.mxu0 %v558
        %964 = vmatprep.subr.mxu0 0.0
        %965 = vmatpush1.xpose.msra.mxu0 %v561
        %966 = vmatprep.subr.mxu0 0.0
        %967 = vmatpush1.xpose.msra.mxu0 %v564
        %968 = vmatprep.subr.mxu0 0.0
        %969 = vmatpush1.xpose.msra.mxu0 %v567
        %970 = vmatprep.subr.mxu0 0.0
        %971 = vmatpush1.xpose.msra.mxu0 %v570
        %972 = vmatprep.subr.mxu0 0.0
        %973 = vmatpush1.xpose.msra.mxu0 %v573
        %974 = vmatprep.subr.mxu0 0.0
        %975 = vmatpush1.xpose.msra.mxu0 %v576
        %976 = vmatprep.subr.mxu0 0.0
        %977 = vmatpush1.xpose.msra.mxu0 %v579
        %978 = vmatprep.subr.mxu0 0.0
        %979 = vmatpush1.xpose.msra.mxu0 %v582
        %980 = vmatprep.subr.mxu0 0.0
        %981 = vmatpush1.xpose.msra.mxu0 %v585
        %982 = vmatprep.subr.mxu0 0.0
        %983 = vmatpush1.xpose.msra.mxu0 %v588
        %984 = vmatprep.subr.mxu0 0.0
        %985 = vmatpush1.xpose.msra.mxu0 %v591
        %986 = vmatprep.subr.mxu0 0.0
        %987 = vmatpush1.xpose.msra.mxu0 %v594
        %988 = vmatprep.subr.mxu0 0.0
        %989 = vmatpush1.xpose.msra.mxu0 %v597
        %990 = vmatprep.subr.mxu0 0.0
        %991 = vmatpush1.xpose.msra.mxu0 %v600
        %992 = vmatprep.subr.mxu0 0.0
        %993 = vmatpush1.xpose.msra.mxu0 %v603
        %994 = vmatprep.subr.mxu0 0.0
        %995 = vmatpush1.xpose.msra.mxu0 %v606
        %996 = vmatprep.subr.mxu0 0.0
        %997 = vmatpush1.xpose.msra.mxu0 %v609
        %998 = vmatprep.subr.mxu0 0.0
        %999 = vmatpush1.xpose.msra.mxu0 %v612
        %1000 = vmatprep.subr.mxu0 0.0
        %1001 = vmatpush1.xpose.msra.mxu0 %v615
        %1002 = vmatprep.mubr.f32.mxu0 0.0
        %1003 = vmatmul.mubr.f32.gmra.mrb[0].mxu0 %v843
        %v1004 = vpop.f32.mrb[0].mxu0
        %v1005 = vadd.f32 %v407, %v1004
        %v1006 = vpop.f32.mrb[0].mxu0
        %v1007 = vadd.f32 %v408, %v1006
        %1008 = vmatprep.mubr.f32.mxu0 0.0
        %1009 = vmatmul.mubr.f32.gmra.mrb[0].mxu0 %v846
        %v1010 = vpop.f32.mrb[0].mxu0
        %v1011 = vadd.f32 %v409, %v1010
        %v1012 = vpop.f32.mrb[0].mxu0
        %v1013 = vadd.f32 %v410, %v1012
        %1014 = vmatprep.mubr.f32.mxu0 0.0
        %1015 = vmatmul.mubr.f32.gmra.mrb[0].mxu0 %v849
        %v1016 = vpop.f32.mrb[0].mxu0
        %v1017 = vadd.f32 %v411, %v1016
        %v1018 = vpop.f32.mrb[0].mxu0
        %v1019 = vadd.f32 %v412, %v1018
        %1020 = vmatprep.mubr.f32.mxu0 0.0
        %1021 = vmatmul.mubr.f32.gmra.mrb[0].mxu0 %v852
        %v1022 = vpop.f32.mrb[0].mxu0
        %v1023 = vadd.f32 %v413, %v1022
        %v1024 = vpop.f32.mrb[0].mxu0
        %v1025 = vadd.f32 %v414, %v1024
        %1026 = vmatprep.mubr.f32.mxu0 0.0
        %1027 = vmatmul.mubr.f32.gmra.mrb[0].mxu0 %v855
        %v1028 = vpop.f32.mrb[0].mxu0
        %v1029 = vadd.f32 %v415, %v1028
        %v1030 = vpop.f32.mrb[0].mxu0
        %v1031 = vadd.f32 %v416, %v1030
        %1032 = vmatprep.mubr.f32.mxu0 0.0
        %1033 = vmatmul.mubr.f32.gmra.mrb[0].mxu0 %v858
        %v1034 = vpop.f32.mrb[0].mxu0
        %v1035 = vadd.f32 %v417, %v1034
        %v1036 = vpop.f32.mrb[0].mxu0
        %v1037 = vadd.f32 %v418, %v1036
        %1038 = vmatprep.mubr.f32.mxu0 0.0
        %1039 = vmatmul.mubr.f32.gmra.mrb[0].mxu0 %v861
        %v1040 = vpop.f32.mrb[0].mxu0
        %v1041 = vadd.f32 %v419, %v1040
        %v1042 = vpop.f32.mrb[0].mxu0
        %v1043 = vadd.f32 %v420, %v1042
        %1044 = vmatprep.mubr.f32.mxu0 0.0
        %1045 = vmatmul.mubr.f32.gmra.mrb[0].mxu0 %v864
        %v1046 = vpop.f32.mrb[0].mxu0
        %v1047 = vadd.f32 %v421, %v1046
        %v1048 = vpop.f32.mrb[0].mxu0
        %v1049 = vadd.f32 %v422, %v1048
        %1050 = vmatprep.mubr.f32.mxu0 0.0
        %1051 = vmatmul.mubr.f32.gmra.mrb[0].mxu0 %v867
        %v1052 = vpop.f32.mrb[0].mxu0
        %v1053 = vadd.f32 %v423, %v1052
        %v1054 = vpop.f32.mrb[0].mxu0
        %v1055 = vadd.f32 %v424, %v1054
        %1056 = vmatprep.mubr.f32.mxu0 0.0
        %1057 = vmatmul.mubr.f32.gmra.mrb[0].mxu0 %v870
        %v1058 = vpop.f32.mrb[0].mxu0
        %v1059 = vadd.f32 %v425, %v1058
        %v1060 = vpop.f32.mrb[0].mxu0
        %v1061 = vadd.f32 %v426, %v1060
        %1062 = vmatprep.mubr.f32.mxu0 0.0
        %1063 = vmatmul.mubr.f32.gmra.mrb[0].mxu0 %v873
        %v1064 = vpop.f32.mrb[0].mxu0
        %v1065 = vadd.f32 %v427, %v1064
        %v1066 = vpop.f32.mrb[0].mxu0
        %v1067 = vadd.f32 %v428, %v1066
        %1068 = vmatprep.mubr.f32.mxu0 0.0
        %1069 = vmatmul.mubr.f32.gmra.mrb[0].mxu0 %v876
        %v1070 = vpop.f32.mrb[0].mxu0
        %v1071 = vadd.f32 %v429, %v1070
        %v1072 = vpop.f32.mrb[0].mxu0
        %v1073 = vadd.f32 %v430, %v1072
        %1074 = vmatprep.mubr.f32.mxu0 0.0
        %1075 = vmatmul.mubr.f32.gmra.mrb[0].mxu0 %v879
        %v1076 = vpop.f32.mrb[0].mxu0
        %v1077 = vadd.f32 %v431, %v1076
        %v1078 = vpop.f32.mrb[0].mxu0
        %v1079 = vadd.f32 %v432, %v1078
        %1080 = vmatprep.mubr.f32.mxu0 0.0
        %1081 = vmatmul.mubr.f32.gmra.mrb[0].mxu0 %v882
        %v1082 = vpop.f32.mrb[0].mxu0
        %v1083 = vadd.f32 %v433, %v1082
        %v1084 = vpop.f32.mrb[0].mxu0
        %v1085 = vadd.f32 %v434, %v1084
        %1086 = vmatprep.mubr.f32.mxu0 0.0
        %1087 = vmatmul.mubr.f32.gmra.mrb[0].mxu0 %v885
        %v1088 = vpop.f32.mrb[0].mxu0
        %v1089 = vadd.f32 %v435, %v1088
        %v1090 = vpop.f32.mrb[0].mxu0
        %v1091 = vadd.f32 %v436, %v1090
        %1092 = vmatprep.mubr.f32.mxu0 0.0
        %1093 = vmatmul.mubr.f32.gmra.mrb[0].mxu0 %v888
        %v1094 = vpop.f32.mrb[0].mxu0
        %v1095 = vadd.f32 %v437, %v1094
        %v1096 = vpop.f32.mrb[0].mxu0
        %v1097 = vadd.f32 %v438, %v1096
        %1098 = vmatprep.mubr.f32.mxu0 0.0
        %1099 = vmatmul.mubr.f32.gmra.mrb[0].mxu0 %v891
        %v1100 = vpop.f32.mrb[0].mxu0
        %v1101 = vadd.f32 %v439, %v1100
        %v1102 = vpop.f32.mrb[0].mxu0
        %v1103 = vadd.f32 %v440, %v1102
        %1104 = vmatprep.mubr.f32.mxu0 0.0
        %1105 = vmatmul.mubr.f32.gmra.mrb[0].mxu0 %v894
        %v1106 = vpop.f32.mrb[0].mxu0
        %v1107 = vadd.f32 %v441, %v1106
        %v1108 = vpop.f32.mrb[0].mxu0
        %v1109 = vadd.f32 %v442, %v1108
        %1110 = vmatprep.mubr.f32.mxu0 0.0
        %1111 = vmatmul.mubr.f32.gmra.mrb[0].mxu0 %v897
        %v1112 = vpop.f32.mrb[0].mxu0
        %v1113 = vadd.f32 %v443, %v1112
        %v1114 = vpop.f32.mrb[0].mxu0
        %v1115 = vadd.f32 %v444, %v1114
        %1116 = vmatprep.mubr.f32.mxu0 0.0
        %1117 = vmatmul.mubr.f32.gmra.mrb[0].mxu0 %v900
        %v1118 = vpop.f32.mrb[0].mxu0
        %v1119 = vadd.f32 %v445, %v1118
        %v1120 = vpop.f32.mrb[0].mxu0
        %v1121 = vadd.f32 %v446, %v1120
        %1122 = vmatprep.mubr.f32.mxu0 0.0
        %1123 = vmatmul.mubr.f32.gmra.mrb[0].mxu0 %v903
        %v1124 = vpop.f32.mrb[0].mxu0
        %v1125 = vadd.f32 %v447, %v1124
        %v1126 = vpop.f32.mrb[0].mxu0
        %v1127 = vadd.f32 %v448, %v1126
        %1128 = vmatprep.mubr.f32.mxu0 0.0
        %1129 = vmatmul.mubr.f32.gmra.mrb[0].mxu0 %v906
        %v1130 = vpop.f32.mrb[0].mxu0
        %v1131 = vadd.f32 %v449, %v1130
        %v1132 = vpop.f32.mrb[0].mxu0
        %v1133 = vadd.f32 %v450, %v1132
        %1134 = vmatprep.mubr.f32.mxu0 0.0
        %1135 = vmatmul.mubr.f32.gmra.mrb[0].mxu0 %v909
        %v1136 = vpop.f32.mrb[0].mxu0
        %v1137 = vadd.f32 %v451, %v1136
        %v1138 = vpop.f32.mrb[0].mxu0
        %v1139 = vadd.f32 %v452, %v1138
        %1140 = vmatprep.mubr.f32.mxu0 0.0
        %1141 = vmatmul.mubr.f32.gmra.mrb[0].mxu0 %v912
        %v1142 = vpop.f32.mrb[0].mxu0
        %v1143 = vadd.f32 %v453, %v1142
        %v1144 = vpop.f32.mrb[0].mxu0
        %v1145 = vadd.f32 %v454, %v1144
        %1146 = vmatprep.mubr.f32.mxu0 0.0
        %1147 = vmatmul.mubr.f32.gmra.mrb[0].mxu0 %v915
        %v1148 = vpop.f32.mrb[0].mxu0
        %v1149 = vadd.f32 %v455, %v1148
        %v1150 = vpop.f32.mrb[0].mxu0
        %v1151 = vadd.f32 %v456, %v1150
        %1152 = vmatprep.mubr.f32.mxu0 0.0
        %1153 = vmatmul.mubr.f32.gmra.mrb[0].mxu0 %v918
        %v1154 = vpop.f32.mrb[0].mxu0
        %v1155 = vadd.f32 %v457, %v1154
        %v1156 = vpop.f32.mrb[0].mxu0
        %v1157 = vadd.f32 %v458, %v1156
        %1158 = vmatprep.mubr.f32.mxu0 0.0
        %1159 = vmatmul.mubr.f32.gmra.mrb[0].mxu0 %v921
        %v1160 = vpop.f32.mrb[0].mxu0
        %v1161 = vadd.f32 %v459, %v1160
        %v1162 = vpop.f32.mrb[0].mxu0
        %v1163 = vadd.f32 %v460, %v1162
        %1164 = vmatprep.mubr.f32.mxu0 0.0
        %1165 = vmatmul.mubr.f32.gmra.mrb[0].mxu0 %v924
        %v1166 = vpop.f32.mrb[0].mxu0
        %v1167 = vadd.f32 %v461, %v1166
        %v1168 = vpop.f32.mrb[0].mxu0
        %v1169 = vadd.f32 %v462, %v1168
        %1170 = vmatprep.mubr.f32.mxu0 0.0
        %1171 = vmatmul.mubr.f32.gmra.mrb[0].mxu0 %v927
        %v1172 = vpop.f32.mrb[0].mxu0
        %v1173 = vadd.f32 %v463, %v1172
        %v1174 = vpop.f32.mrb[0].mxu0
        %v1175 = vadd.f32 %v464, %v1174
        %1176 = vmatprep.mubr.f32.mxu0 0.0
        %1177 = vmatmul.mubr.f32.gmra.mrb[0].mxu0 %v930
        %v1178 = vpop.f32.mrb[0].mxu0
        %v1179 = vadd.f32 %v465, %v1178
        %v1180 = vpop.f32.mrb[0].mxu0
        %v1181 = vadd.f32 %v466, %v1180
        %1182 = vmatprep.mubr.f32.mxu0 0.0
        %1183 = vmatmul.mubr.f32.gmra.mrb[0].mxu0 %v933
        %v1184 = vpop.f32.mrb[0].mxu0
        %v1185 = vadd.f32 %v467, %v1184
        %v1186 = vpop.f32.mrb[0].mxu0
        %v1187 = vadd.f32 %v468, %v1186
        %1188 = vmatprep.mubr.f32.mxu0 0.0
        %1189 = vmatmul.mubr.f32.gmra.mrb[0].mxu0 %v936
        %v1190 = vpop.f32.mrb[0].mxu0
        %v1191 = vadd.f32 %v469, %v1190
        %v1192 = vpop.f32.mrb[0].mxu0
        %v1193 = vadd.f32 %v470, %v1192
        %1194 = vdwg.mxu0
        %v1195 = vmax.f32 %v1005, %v1007
        %1196 = vmax.xlane.f32.xlu0 %v1195
        %v1197 = vpop.xlane.xlu0 %1196
        %v1198 = vmax.f32 %v1011, %v1013
        %1199 = vmax.xlane.f32.xlu0 %v1198
        %v1200 = vpop.xlane.xlu0 %1199
        %v1201 = vmax.f32 %v1017, %v1019
        %1202 = vmax.xlane.f32.xlu0 %v1201
        %v1203 = vpop.xlane.xlu0 %1202
        %v1204 = vmax.f32 %v1023, %v1025
        %1205 = vmax.xlane.f32.xlu0 %v1204
        %v1206 = vpop.xlane.xlu0 %1205
        %v1207 = vmax.f32 %v1029, %v1031
        %1208 = vmax.xlane.f32.xlu0 %v1207
        %v1209 = vpop.xlane.xlu0 %1208
        %v1210 = vmax.f32 %v1035, %v1037
        %1211 = vmax.xlane.f32.xlu0 %v1210
        %v1212 = vpop.xlane.xlu0 %1211
        %v1213 = vmax.f32 %v1041, %v1043
        %1214 = vmax.xlane.f32.xlu0 %v1213
        %v1215 = vpop.xlane.xlu0 %1214
        %v1216 = vmax.f32 %v1047, %v1049
        %1217 = vmax.xlane.f32.xlu0 %v1216
        %v1218 = vpop.xlane.xlu0 %1217
        %v1219 = vmax.f32 %v1053, %v1055
        %1220 = vmax.xlane.f32.xlu0 %v1219
        %v1221 = vpop.xlane.xlu0 %1220
        %v1222 = vmax.f32 %v1059, %v1061
        %1223 = vmax.xlane.f32.xlu0 %v1222
        %v1224 = vpop.xlane.xlu0 %1223
        %v1225 = vmax.f32 %v1065, %v1067
        %1226 = vmax.xlane.f32.xlu0 %v1225
        %v1227 = vpop.xlane.xlu0 %1226
        %v1228 = vmax.f32 %v1071, %v1073
        %1229 = vmax.xlane.f32.xlu0 %v1228
        %v1230 = vpop.xlane.xlu0 %1229
        %v1231 = vmax.f32 %v1077, %v1079
        %1232 = vmax.xlane.f32.xlu0 %v1231
        %v1233 = vpop.xlane.xlu0 %1232
        %v1234 = vmax.f32 %v1083, %v1085
        %1235 = vmax.xlane.f32.xlu0 %v1234
        %v1236 = vpop.xlane.xlu0 %1235
        %v1237 = vmax.f32 %v1089, %v1091
        %1238 = vmax.xlane.f32.xlu0 %v1237
        %v1239 = vpop.xlane.xlu0 %1238
        %v1240 = vmax.f32 %v1095, %v1097
        %1241 = vmax.xlane.f32.xlu0 %v1240
        %v1242 = vpop.xlane.xlu0 %1241
        %v1243 = vmax.f32 %v1101, %v1103
        %1244 = vmax.xlane.f32.xlu0 %v1243
        %v1245 = vpop.xlane.xlu0 %1244
        %v1246 = vmax.f32 %v1107, %v1109
        %1247 = vmax.xlane.f32.xlu0 %v1246
        %v1248 = vpop.xlane.xlu0 %1247
        %v1249 = vmax.f32 %v1113, %v1115
        %1250 = vmax.xlane.f32.xlu0 %v1249
        %v1251 = vpop.xlane.xlu0 %1250
        %v1252 = vmax.f32 %v1119, %v1121
        %1253 = vmax.xlane.f32.xlu0 %v1252
        %v1254 = vpop.xlane.xlu0 %1253
        %v1255 = vmax.f32 %v1125, %v1127
        %1256 = vmax.xlane.f32.xlu0 %v1255
        %v1257 = vpop.xlane.xlu0 %1256
        %v1258 = vmax.f32 %v1131, %v1133
        %1259 = vmax.xlane.f32.xlu0 %v1258
        %v1260 = vpop.xlane.xlu0 %1259
        %v1261 = vmax.f32 %v1137, %v1139
        %1262 = vmax.xlane.f32.xlu0 %v1261
        %v1263 = vpop.xlane.xlu0 %1262
        %v1264 = vmax.f32 %v1143, %v1145
        %1265 = vmax.xlane.f32.xlu0 %v1264
        %v1266 = vpop.xlane.xlu0 %1265
        %v1267 = vmax.f32 %v1149, %v1151
        %1268 = vmax.xlane.f32.xlu0 %v1267
        %v1269 = vpop.xlane.xlu0 %1268
        %v1270 = vmax.f32 %v1155, %v1157
        %1271 = vmax.xlane.f32.xlu0 %v1270
        %v1272 = vpop.xlane.xlu0 %1271
        %v1273 = vmax.f32 %v1161, %v1163
        %1274 = vmax.xlane.f32.xlu0 %v1273
        %v1275 = vpop.xlane.xlu0 %1274
        %v1276 = vmax.f32 %v1167, %v1169
        %1277 = vmax.xlane.f32.xlu0 %v1276
        %v1278 = vpop.xlane.xlu0 %1277
        %v1279 = vmax.f32 %v1173, %v1175
        %1280 = vmax.xlane.f32.xlu0 %v1279
        %v1281 = vpop.xlane.xlu0 %1280
        %v1282 = vmax.f32 %v1179, %v1181
        %1283 = vmax.xlane.f32.xlu0 %v1282
        %v1284 = vpop.xlane.xlu0 %1283
        %v1285 = vmax.f32 %v1185, %v1187
        %1286 = vmax.xlane.f32.xlu0 %v1285
        %v1287 = vpop.xlane.xlu0 %1286
        %v1288 = vmax.f32 %v1191, %v1193
        %1289 = vmax.xlane.f32.xlu0 %v1288
        %v1290 = vpop.xlane.xlu0 %1289
        %v1291 = vsub.f32 %v1005, %v1197
        %v1292 = vsub.f32 %v1007, %v1197
        %v1293 = vsub.f32 %v1011, %v1200
        %v1294 = vsub.f32 %v1013, %v1200
        %v1295 = vsub.f32 %v1017, %v1203
        %v1296 = vsub.f32 %v1019, %v1203
        %v1297 = vsub.f32 %v1023, %v1206
        %v1298 = vsub.f32 %v1025, %v1206
        %v1299 = vsub.f32 %v1029, %v1209
        %v1300 = vsub.f32 %v1031, %v1209
        %v1301 = vsub.f32 %v1035, %v1212
        %v1302 = vsub.f32 %v1037, %v1212
        %v1303 = vsub.f32 %v1041, %v1215
        %v1304 = vsub.f32 %v1043, %v1215
        %v1305 = vsub.f32 %v1047, %v1218
        %v1306 = vsub.f32 %v1049, %v1218
        %v1307 = vsub.f32 %v1053, %v1221
        %v1308 = vsub.f32 %v1055, %v1221
        %v1309 = vsub.f32 %v1059, %v1224
        %v1310 = vsub.f32 %v1061, %v1224
        %v1311 = vsub.f32 %v1065, %v1227
        %v1312 = vsub.f32 %v1067, %v1227
        %v1313 = vsub.f32 %v1071, %v1230
        %v1314 = vsub.f32 %v1073, %v1230
        %v1315 = vsub.f32 %v1077, %v1233
        %v1316 = vsub.f32 %v1079, %v1233
        %v1317 = vsub.f32 %v1083, %v1236
        %v1318 = vsub.f32 %v1085, %v1236
        %v1319 = vsub.f32 %v1089, %v1239
        %v1320 = vsub.f32 %v1091, %v1239
        %v1321 = vsub.f32 %v1095, %v1242
        %v1322 = vsub.f32 %v1097, %v1242
        %v1323 = vsub.f32 %v1101, %v1245
        %v1324 = vsub.f32 %v1103, %v1245
        %v1325 = vsub.f32 %v1107, %v1248
        %v1326 = vsub.f32 %v1109, %v1248
        %v1327 = vsub.f32 %v1113, %v1251
        %v1328 = vsub.f32 %v1115, %v1251
        %v1329 = vsub.f32 %v1119, %v1254
        %v1330 = vsub.f32 %v1121, %v1254
        %v1331 = vsub.f32 %v1125, %v1257
        %v1332 = vsub.f32 %v1127, %v1257
        %v1333 = vsub.f32 %v1131, %v1260
        %v1334 = vsub.f32 %v1133, %v1260
        %v1335 = vsub.f32 %v1137, %v1263
        %v1336 = vsub.f32 %v1139, %v1263
        %v1337 = vsub.f32 %v1143, %v1266
        %v1338 = vsub.f32 %v1145, %v1266
        %v1339 = vsub.f32 %v1149, %v1269
        %v1340 = vsub.f32 %v1151, %v1269
        %v1341 = vsub.f32 %v1155, %v1272
        %v1342 = vsub.f32 %v1157, %v1272
        %v1343 = vsub.f32 %v1161, %v1275
        %v1344 = vsub.f32 %v1163, %v1275
        %v1345 = vsub.f32 %v1167, %v1278
        %v1346 = vsub.f32 %v1169, %v1278
        %v1347 = vsub.f32 %v1173, %v1281
        %v1348 = vsub.f32 %v1175, %v1281
        %v1349 = vsub.f32 %v1179, %v1284
        %v1350 = vsub.f32 %v1181, %v1284
        %v1351 = vsub.f32 %v1185, %v1287
        %v1352 = vsub.f32 %v1187, %v1287
        %v1353 = vsub.f32 %v1191, %v1290
        %v1354 = vsub.f32 %v1193, %v1290
        %v1355 = vmul.f32 %v1291, 1.442695
        %v1356 = vpow.pop %v1355
        %v1357 = vmul.f32 %v1292, 1.442695
        %v1358 = vpow.pop %v1357
        %v1359 = vmul.f32 %v1293, 1.442695
        %v1360 = vpow.pop %v1359
        %v1361 = vmul.f32 %v1294, 1.442695
        %v1362 = vpow.pop %v1361
        %v1363 = vmul.f32 %v1295, 1.442695
        %v1364 = vpow.pop %v1363
        %v1365 = vmul.f32 %v1296, 1.442695
        %v1366 = vpow.pop %v1365
        %v1367 = vmul.f32 %v1297, 1.442695
        %v1368 = vpow.pop %v1367
        %v1369 = vmul.f32 %v1298, 1.442695
        %v1370 = vpow.pop %v1369
        %v1371 = vmul.f32 %v1299, 1.442695
        %v1372 = vpow.pop %v1371
        %v1373 = vmul.f32 %v1300, 1.442695
        %v1374 = vpow.pop %v1373
        %v1375 = vmul.f32 %v1301, 1.442695
        %v1376 = vpow.pop %v1375
        %v1377 = vmul.f32 %v1302, 1.442695
        %v1378 = vpow.pop %v1377
        %v1379 = vmul.f32 %v1303, 1.442695
        %v1380 = vpow.pop %v1379
        %v1381 = vmul.f32 %v1304, 1.442695
        %v1382 = vpow.pop %v1381
        %v1383 = vmul.f32 %v1305, 1.442695
        %v1384 = vpow.pop %v1383
        %v1385 = vmul.f32 %v1306, 1.442695
        %v1386 = vpow.pop %v1385
        %v1387 = vmul.f32 %v1307, 1.442695
        %v1388 = vpow.pop %v1387
        %v1389 = vmul.f32 %v1308, 1.442695
        %v1390 = vpow.pop %v1389
        %v1391 = vmul.f32 %v1309, 1.442695
        %v1392 = vpow.pop %v1391
        %v1393 = vmul.f32 %v1310, 1.442695
        %v1394 = vpow.pop %v1393
        %v1395 = vmul.f32 %v1311, 1.442695
        %v1396 = vpow.pop %v1395
        %v1397 = vmul.f32 %v1312, 1.442695
        %v1398 = vpow.pop %v1397
        %v1399 = vmul.f32 %v1313, 1.442695
        %v1400 = vpow.pop %v1399
        %v1401 = vmul.f32 %v1314, 1.442695
        %v1402 = vpow.pop %v1401
        %v1403 = vmul.f32 %v1315, 1.442695
        %v1404 = vpow.pop %v1403
        %v1405 = vmul.f32 %v1316, 1.442695
        %v1406 = vpow.pop %v1405
        %v1407 = vmul.f32 %v1317, 1.442695
        %v1408 = vpow.pop %v1407
        %v1409 = vmul.f32 %v1318, 1.442695
        %v1410 = vpow.pop %v1409
        %v1411 = vmul.f32 %v1319, 1.442695
        %v1412 = vpow.pop %v1411
        %v1413 = vmul.f32 %v1320, 1.442695
        %v1414 = vpow.pop %v1413
        %v1415 = vmul.f32 %v1321, 1.442695
        %v1416 = vpow.pop %v1415
        %v1417 = vmul.f32 %v1322, 1.442695
        %v1418 = vpow.pop %v1417
        %v1419 = vmul.f32 %v1323, 1.442695
        %v1420 = vpow.pop %v1419
        %v1421 = vmul.f32 %v1324, 1.442695
        %v1422 = vpow.pop %v1421
        %v1423 = vmul.f32 %v1325, 1.442695
        %v1424 = vpow.pop %v1423
        %v1425 = vmul.f32 %v1326, 1.442695
        %v1426 = vpow.pop %v1425
        %v1427 = vmul.f32 %v1327, 1.442695
        %v1428 = vpow.pop %v1427
        %v1429 = vmul.f32 %v1328, 1.442695
        %v1430 = vpow.pop %v1429
        %v1431 = vmul.f32 %v1329, 1.442695
        %v1432 = vpow.pop %v1431
        %v1433 = vmul.f32 %v1330, 1.442695
        %v1434 = vpow.pop %v1433
        %v1435 = vmul.f32 %v1331, 1.442695
        %v1436 = vpow.pop %v1435
        %v1437 = vmul.f32 %v1332, 1.442695
        %v1438 = vpow.pop %v1437
        %v1439 = vmul.f32 %v1333, 1.442695
        %v1440 = vpow.pop %v1439
        %v1441 = vmul.f32 %v1334, 1.442695
        %v1442 = vpow.pop %v1441
        %v1443 = vmul.f32 %v1335, 1.442695
        %v1444 = vpow.pop %v1443
        %v1445 = vmul.f32 %v1336, 1.442695
        %v1446 = vpow.pop %v1445
        %v1447 = vmul.f32 %v1337, 1.442695
        %v1448 = vpow.pop %v1447
        %v1449 = vmul.f32 %v1338, 1.442695
        %v1450 = vpow.pop %v1449
        %v1451 = vmul.f32 %v1339, 1.442695
        %v1452 = vpow.pop %v1451
        %v1453 = vmul.f32 %v1340, 1.442695
        %v1454 = vpow.pop %v1453
        %v1455 = vmul.f32 %v1341, 1.442695
        %v1456 = vpow.pop %v1455
        %v1457 = vmul.f32 %v1342, 1.442695
        %v1458 = vpow.pop %v1457
        %v1459 = vmul.f32 %v1343, 1.442695
        %v1460 = vpow.pop %v1459
        %v1461 = vmul.f32 %v1344, 1.442695
        %v1462 = vpow.pop %v1461
        %v1463 = vmul.f32 %v1345, 1.442695
        %v1464 = vpow.pop %v1463
        %v1465 = vmul.f32 %v1346, 1.442695
        %v1466 = vpow.pop %v1465
        %v1467 = vmul.f32 %v1347, 1.442695
        %v1468 = vpow.pop %v1467
        %v1469 = vmul.f32 %v1348, 1.442695
        %v1470 = vpow.pop %v1469
        %v1471 = vmul.f32 %v1349, 1.442695
        %v1472 = vpow.pop %v1471
        %v1473 = vmul.f32 %v1350, 1.442695
        %v1474 = vpow.pop %v1473
        %v1475 = vmul.f32 %v1351, 1.442695
        %v1476 = vpow.pop %v1475
        %v1477 = vmul.f32 %v1352, 1.442695
        %v1478 = vpow.pop %v1477
        %v1479 = vmul.f32 %v1353, 1.442695
        %v1480 = vpow.pop %v1479
        %v1481 = vmul.f32 %v1354, 1.442695
        %v1482 = vpow.pop %v1481
        %v1483 = vadd.f32 %v1356, %v1358
        %1484 = vadd.xlane.f32.xlu0 %v1483
        %v1485 = vpop.xlane.xlu0 %1484
        %v1486 = vadd.f32 %v1360, %v1362
        %1487 = vadd.xlane.f32.xlu0 %v1486
        %v1488 = vpop.xlane.xlu0 %1487
        %v1489 = vadd.f32 %v1364, %v1366
        %1490 = vadd.xlane.f32.xlu0 %v1489
        %v1491 = vpop.xlane.xlu0 %1490
        %v1492 = vadd.f32 %v1368, %v1370
        %1493 = vadd.xlane.f32.xlu0 %v1492
        %v1494 = vpop.xlane.xlu0 %1493
        %v1495 = vadd.f32 %v1372, %v1374
        %1496 = vadd.xlane.f32.xlu0 %v1495
        %v1497 = vpop.xlane.xlu0 %1496
        %v1498 = vadd.f32 %v1376, %v1378
        %1499 = vadd.xlane.f32.xlu0 %v1498
        %v1500 = vpop.xlane.xlu0 %1499
        %v1501 = vadd.f32 %v1380, %v1382
        %1502 = vadd.xlane.f32.xlu0 %v1501
        %v1503 = vpop.xlane.xlu0 %1502
        %v1504 = vadd.f32 %v1384, %v1386
        %1505 = vadd.xlane.f32.xlu0 %v1504
        %v1506 = vpop.xlane.xlu0 %1505
        %v1507 = vadd.f32 %v1388, %v1390
        %1508 = vadd.xlane.f32.xlu0 %v1507
        %v1509 = vpop.xlane.xlu0 %1508
        %v1510 = vadd.f32 %v1392, %v1394
        %1511 = vadd.xlane.f32.xlu0 %v1510
        %v1512 = vpop.xlane.xlu0 %1511
        %v1513 = vadd.f32 %v1396, %v1398
        %1514 = vadd.xlane.f32.xlu0 %v1513
        %v1515 = vpop.xlane.xlu0 %1514
        %v1516 = vadd.f32 %v1400, %v1402
        %1517 = vadd.xlane.f32.xlu0 %v1516
        %v1518 = vpop.xlane.xlu0 %1517
        %v1519 = vadd.f32 %v1404, %v1406
        %1520 = vadd.xlane.f32.xlu0 %v1519
        %v1521 = vpop.xlane.xlu0 %1520
        %v1522 = vadd.f32 %v1408, %v1410
        %1523 = vadd.xlane.f32.xlu0 %v1522
        %v1524 = vpop.xlane.xlu0 %1523
        %v1525 = vadd.f32 %v1412, %v1414
        %1526 = vadd.xlane.f32.xlu0 %v1525
        %v1527 = vpop.xlane.xlu0 %1526
        %v1528 = vadd.f32 %v1416, %v1418
        %1529 = vadd.xlane.f32.xlu0 %v1528
        %v1530 = vpop.xlane.xlu0 %1529
        %v1531 = vadd.f32 %v1420, %v1422
        %1532 = vadd.xlane.f32.xlu0 %v1531
        %v1533 = vpop.xlane.xlu0 %1532
        %v1534 = vadd.f32 %v1424, %v1426
        %1535 = vadd.xlane.f32.xlu0 %v1534
        %v1536 = vpop.xlane.xlu0 %1535
        %v1537 = vadd.f32 %v1428, %v1430
        %1538 = vadd.xlane.f32.xlu0 %v1537
        %v1539 = vpop.xlane.xlu0 %1538
        %v1540 = vadd.f32 %v1432, %v1434
        %1541 = vadd.xlane.f32.xlu0 %v1540
        %v1542 = vpop.xlane.xlu0 %1541
        %v1543 = vadd.f32 %v1436, %v1438
        %1544 = vadd.xlane.f32.xlu0 %v1543
        %v1545 = vpop.xlane.xlu0 %1544
        %v1546 = vadd.f32 %v1440, %v1442
        %1547 = vadd.xlane.f32.xlu0 %v1546
        %v1548 = vpop.xlane.xlu0 %1547
        %v1549 = vadd.f32 %v1444, %v1446
        %1550 = vadd.xlane.f32.xlu0 %v1549
        %v1551 = vpop.xlane.xlu0 %1550
        %v1552 = vadd.f32 %v1448, %v1450
        %1553 = vadd.xlane.f32.xlu0 %v1552
        %v1554 = vpop.xlane.xlu0 %1553
        %v1555 = vadd.f32 %v1452, %v1454
        %1556 = vadd.xlane.f32.xlu0 %v1555
        %v1557 = vpop.xlane.xlu0 %1556
        %v1558 = vadd.f32 %v1456, %v1458
        %1559 = vadd.xlane.f32.xlu0 %v1558
        %v1560 = vpop.xlane.xlu0 %1559
        %v1561 = vadd.f32 %v1460, %v1462
        %1562 = vadd.xlane.f32.xlu0 %v1561
        %v1563 = vpop.xlane.xlu0 %1562
        %v1564 = vadd.f32 %v1464, %v1466
        %1565 = vadd.xlane.f32.xlu0 %v1564
        %v1566 = vpop.xlane.xlu0 %1565
        %v1567 = vadd.f32 %v1468, %v1470
        %1568 = vadd.xlane.f32.xlu0 %v1567
        %v1569 = vpop.xlane.xlu0 %1568
        %v1570 = vadd.f32 %v1472, %v1474
        %1571 = vadd.xlane.f32.xlu0 %v1570
        %v1572 = vpop.xlane.xlu0 %1571
        %v1573 = vadd.f32 %v1476, %v1478
        %1574 = vadd.xlane.f32.xlu0 %v1573
        %v1575 = vpop.xlane.xlu0 %1574
        %v1576 = vadd.f32 %v1480, %v1482
        %1577 = vadd.xlane.f32.xlu0 %v1576
        %v1578 = vpop.xlane.xlu0 %1577
        %v1579 = vrcp.pop %v1485
        %v1580 = vrcp.pop %v1488
        %v1581 = vrcp.pop %v1491
        %v1582 = vrcp.pop %v1494
        %v1583 = vrcp.pop %v1497
        %v1584 = vrcp.pop %v1500
        %v1585 = vrcp.pop %v1503
        %v1586 = vrcp.pop %v1506
        %v1587 = vrcp.pop %v1509
        %v1588 = vrcp.pop %v1512
        %v1589 = vrcp.pop %v1515
        %v1590 = vrcp.pop %v1518
        %v1591 = vrcp.pop %v1521
        %v1592 = vrcp.pop %v1524
        %v1593 = vrcp.pop %v1527
        %v1594 = vrcp.pop %v1530
        %v1595 = vrcp.pop %v1533
        %v1596 = vrcp.pop %v1536
        %v1597 = vrcp.pop %v1539
        %v1598 = vrcp.pop %v1542
        %v1599 = vrcp.pop %v1545
        %v1600 = vrcp.pop %v1548
        %v1601 = vrcp.pop %v1551
        %v1602 = vrcp.pop %v1554
        %v1603 = vrcp.pop %v1557
        %v1604 = vrcp.pop %v1560
        %v1605 = vrcp.pop %v1563
        %v1606 = vrcp.pop %v1566
        %v1607 = vrcp.pop %v1569
        %v1608 = vrcp.pop %v1572
        %v1609 = vrcp.pop %v1575
        %v1610 = vrcp.pop %v1578
        %v1611 = vmul.f32 %v1356, %v1579
        %v1612 = vmul.f32 %v1358, %v1579
        %v1613 = vmul.f32 %v1360, %v1580
        %v1614 = vmul.f32 %v1362, %v1580
        %v1615 = vmul.f32 %v1364, %v1581
        %v1616 = vmul.f32 %v1366, %v1581
        %v1617 = vmul.f32 %v1368, %v1582
        %v1618 = vmul.f32 %v1370, %v1582
        %v1619 = vmul.f32 %v1372, %v1583
        %v1620 = vmul.f32 %v1374, %v1583
        %v1621 = vmul.f32 %v1376, %v1584
        %v1622 = vmul.f32 %v1378, %v1584
        %v1623 = vmul.f32 %v1380, %v1585
        %v1624 = vmul.f32 %v1382, %v1585
        %v1625 = vmul.f32 %v1384, %v1586
        %v1626 = vmul.f32 %v1386, %v1586
        %v1627 = vmul.f32 %v1388, %v1587
        %v1628 = vmul.f32 %v1390, %v1587
        %v1629 = vmul.f32 %v1392, %v1588
        %v1630 = vmul.f32 %v1394, %v1588
        %v1631 = vmul.f32 %v1396, %v1589
        %v1632 = vmul.f32 %v1398, %v1589
        %v1633 = vmul.f32 %v1400, %v1590
        %v1634 = vmul.f32 %v1402, %v1590
        %v1635 = vmul.f32 %v1404, %v1591
        %v1636 = vmul.f32 %v1406, %v1591
        %v1637 = vmul.f32 %v1408, %v1592
        %v1638 = vmul.f32 %v1410, %v1592
        %v1639 = vmul.f32 %v1412, %v1593
        %v1640 = vmul.f32 %v1414, %v1593
        %v1641 = vmul.f32 %v1416, %v1594
        %v1642 = vmul.f32 %v1418, %v1594
        %v1643 = vmul.f32 %v1420, %v1595
        %v1644 = vmul.f32 %v1422, %v1595
        %v1645 = vmul.f32 %v1424, %v1596
        %v1646 = vmul.f32 %v1426, %v1596
        %v1647 = vmul.f32 %v1428, %v1597
        %v1648 = vmul.f32 %v1430, %v1597
        %v1649 = vmul.f32 %v1432, %v1598
        %v1650 = vmul.f32 %v1434, %v1598
        %v1651 = vmul.f32 %v1436, %v1599
        %v1652 = vmul.f32 %v1438, %v1599
        %v1653 = vmul.f32 %v1440, %v1600
        %v1654 = vmul.f32 %v1442, %v1600
        %v1655 = vmul.f32 %v1444, %v1601
        %v1656 = vmul.f32 %v1446, %v1601
        %v1657 = vmul.f32 %v1448, %v1602
        %v1658 = vmul.f32 %v1450, %v1602
        %v1659 = vmul.f32 %v1452, %v1603
        %v1660 = vmul.f32 %v1454, %v1603
        %v1661 = vmul.f32 %v1456, %v1604
        %v1662 = vmul.f32 %v1458, %v1604
        %v1663 = vmul.f32 %v1460, %v1605
        %v1664 = vmul.f32 %v1462, %v1605
        %v1665 = vmul.f32 %v1464, %v1606
        %v1666 = vmul.f32 %v1466, %v1606
        %v1667 = vmul.f32 %v1468, %v1607
        %v1668 = vmul.f32 %v1470, %v1607
        %v1669 = vmul.f32 %v1472, %v1608
        %v1670 = vmul.f32 %v1474, %v1608
        %v1671 = vmul.f32 %v1476, %v1609
        %v1672 = vmul.f32 %v1478, %v1609
        %v1673 = vmul.f32 %v1480, %v1610
        %v1674 = vmul.f32 %v1482, %v1610
        %v1676 = vlaneseq
        %v1677 = vshrl.u32 %v1676, 7
        %v1678 = vsub.s32 0, %v1677
        %v1679 = vrot.slane %v480, %v1678
        %1681 = vmatprep.subr.mxu0 0.0
        %1682 = vmatpush1.msra.mxu0 %v476
        %1683 = vmatprep.subr.mxu0 0.0
        %1684 = vmatpush1.msra.mxu0 %v477
        %1685 = vmatprep.subr.mxu0 0.0
        %1686 = vmatpush1.msra.mxu0 %v478
        %1687 = vmatprep.subr.mxu0 0.0
        %1688 = vmatpush1.msra.mxu0 %v479
        %1689 = vmatprep.subr.mxu0 0.0
        %1690 = vmatpush1.msra.mxu0 0.0
        %1691 = vmatprep.subr.mxu0 0.0
        %1692 = vmatpush1.msra.mxu0 0.0
        %1693 = vmatprep.subr.mxu0 0.0
        %1694 = vmatpush1.msra.mxu0 0.0
        %1695 = vmatprep.subr.mxu0 0.0
        %1696 = vmatpush1.msra.mxu0 0.0
        %1697 = vmatprep.subr.mxu0 0.0
        %1698 = vmatpush1.msra.mxu0 0.0
        %1699 = vmatprep.subr.mxu0 0.0
        %1700 = vmatpush1.msra.mxu0 0.0
        %1701 = vmatprep.subr.mxu0 0.0
        %1702 = vmatpush1.msra.mxu0 0.0
        %1703 = vmatprep.subr.mxu0 0.0
        %1704 = vmatpush1.msra.mxu0 0.0
        %1705 = vmatprep.subr.mxu0 0.0
        %1706 = vmatpush1.msra.mxu0 0.0
        %1707 = vmatprep.subr.mxu0 0.0
        %1708 = vmatpush1.msra.mxu0 0.0
        %1709 = vmatprep.subr.mxu0 0.0
        %1710 = vmatpush1.msra.mxu0 0.0
        %1711 = vmatprep.subr.mxu0 0.0
        %1712 = vmatpush1.msra.mxu0 0.0
        %1713 = vmatprep.subr.mxu0 0.0
        %1714 = vmatpush1.msra.mxu0 0.0
        %1715 = vmatprep.subr.mxu0 0.0
        %1716 = vmatpush1.msra.mxu0 0.0
        %1717 = vmatprep.subr.mxu0 0.0
        %1718 = vmatpush1.msra.mxu0 0.0
        %1719 = vmatprep.subr.mxu0 0.0
        %1720 = vmatpush1.msra.mxu0 0.0
        %1721 = vmatprep.subr.mxu0 0.0
        %1722 = vmatpush1.msra.mxu0 0.0
        %1723 = vmatprep.subr.mxu0 0.0
        %1724 = vmatpush1.msra.mxu0 0.0
        %1725 = vmatprep.subr.mxu0 0.0
        %1726 = vmatpush1.msra.mxu0 0.0
        %1727 = vmatprep.subr.mxu0 0.0
        %1728 = vmatpush1.msra.mxu0 0.0
        %1729 = vmatprep.subr.mxu0 0.0
        %1730 = vmatpush1.msra.mxu0 0.0
        %1731 = vmatprep.subr.mxu0 0.0
        %1732 = vmatpush1.msra.mxu0 0.0
        %1733 = vmatprep.subr.mxu0 0.0
        %1734 = vmatpush1.msra.mxu0 0.0
        %1735 = vmatprep.subr.mxu0 0.0
        %1736 = vmatpush1.msra.mxu0 0.0
        %1737 = vmatprep.subr.mxu0 0.0
        %1738 = vmatpush1.msra.mxu0 0.0
        %1739 = vmatprep.subr.mxu0 0.0
        %1740 = vmatpush1.msra.mxu0 0.0
        %1741 = vmatprep.subr.mxu0 0.0
        %1742 = vmatpush1.msra.mxu0 0.0
        %1743 = vmatprep.subr.mxu0 0.0
        %1744 = vmatpush1.msra.mxu0 0.0
        %1745 = vmatprep.mubr.f32.mxu0 0.0
        %1746 = vmatmul.mubr.f32.gmra.mrb[0].mxu0 %v522
        %v1747 = vpop.f32.mrb[0].mxu0
        %v1748 = vadd.f32 %v1679, %v1747
        %v1749 = vpop.f32.mrb[0].mxu0
        %1750 = vmatprep.mubr.f32.mxu0 0.0
        %1751 = vmatmul.mubr.f32.gmra.mrb[0].mxu0 %v525
        %v1752 = vpop.f32.mrb[0].mxu0
        %v1753 = vadd.f32 %v1679, %v1752
        %v1754 = vpop.f32.mrb[0].mxu0
        %1755 = vmatprep.mubr.f32.mxu0 0.0
        %1756 = vmatmul.mubr.f32.gmra.mrb[0].mxu0 %v528
        %v1757 = vpop.f32.mrb[0].mxu0
        %v1758 = vadd.f32 %v1679, %v1757
        %v1759 = vpop.f32.mrb[0].mxu0
        %1760 = vmatprep.mubr.f32.mxu0 0.0
        %1761 = vmatmul.mubr.f32.gmra.mrb[0].mxu0 %v531
        %v1762 = vpop.f32.mrb[0].mxu0
        %v1763 = vadd.f32 %v1679, %v1762
        %v1764 = vpop.f32.mrb[0].mxu0
        %1765 = vmatprep.mubr.f32.mxu0 0.0
        %1766 = vmatmul.mubr.f32.gmra.mrb[0].mxu0 %v534
        %v1767 = vpop.f32.mrb[0].mxu0
        %v1768 = vadd.f32 %v1679, %v1767
        %v1769 = vpop.f32.mrb[0].mxu0
        %1770 = vmatprep.mubr.f32.mxu0 0.0
        %1771 = vmatmul.mubr.f32.gmra.mrb[0].mxu0 %v537
        %v1772 = vpop.f32.mrb[0].mxu0
        %v1773 = vadd.f32 %v1679, %v1772
        %v1774 = vpop.f32.mrb[0].mxu0
        %1775 = vmatprep.mubr.f32.mxu0 0.0
        %1776 = vmatmul.mubr.f32.gmra.mrb[0].mxu0 %v540
        %v1777 = vpop.f32.mrb[0].mxu0
        %v1778 = vadd.f32 %v1679, %v1777
        %v1779 = vpop.f32.mrb[0].mxu0
        %1780 = vmatprep.mubr.f32.mxu0 0.0
        %1781 = vmatmul.mubr.f32.gmra.mrb[0].mxu0 %v543
        %v1782 = vpop.f32.mrb[0].mxu0
        %v1783 = vadd.f32 %v1679, %v1782
        %v1784 = vpop.f32.mrb[0].mxu0
        %1785 = vmatprep.mubr.f32.mxu0 0.0
        %1786 = vmatmul.mubr.f32.gmra.mrb[0].mxu0 %v546
        %v1787 = vpop.f32.mrb[0].mxu0
        %v1788 = vadd.f32 %v1679, %v1787
        %v1789 = vpop.f32.mrb[0].mxu0
        %1790 = vmatprep.mubr.f32.mxu0 0.0
        %1791 = vmatmul.mubr.f32.gmra.mrb[0].mxu0 %v549
        %v1792 = vpop.f32.mrb[0].mxu0
        %v1793 = vadd.f32 %v1679, %v1792
        %v1794 = vpop.f32.mrb[0].mxu0
        %1795 = vmatprep.mubr.f32.mxu0 0.0
        %1796 = vmatmul.mubr.f32.gmra.mrb[0].mxu0 %v552
        %v1797 = vpop.f32.mrb[0].mxu0
        %v1798 = vadd.f32 %v1679, %v1797
        %v1799 = vpop.f32.mrb[0].mxu0
        %1800 = vmatprep.mubr.f32.mxu0 0.0
        %1801 = vmatmul.mubr.f32.gmra.mrb[0].mxu0 %v555
        %v1802 = vpop.f32.mrb[0].mxu0
        %v1803 = vadd.f32 %v1679, %v1802
        %v1804 = vpop.f32.mrb[0].mxu0
        %1805 = vmatprep.mubr.f32.mxu0 0.0
        %1806 = vmatmul.mubr.f32.gmra.mrb[0].mxu0 %v558
        %v1807 = vpop.f32.mrb[0].mxu0
        %v1808 = vadd.f32 %v1679, %v1807
        %v1809 = vpop.f32.mrb[0].mxu0
        %1810 = vmatprep.mubr.f32.mxu0 0.0
        %1811 = vmatmul.mubr.f32.gmra.mrb[0].mxu0 %v561
        %v1812 = vpop.f32.mrb[0].mxu0
        %v1813 = vadd.f32 %v1679, %v1812
        %v1814 = vpop.f32.mrb[0].mxu0
        %1815 = vmatprep.mubr.f32.mxu0 0.0
        %1816 = vmatmul.mubr.f32.gmra.mrb[0].mxu0 %v564
        %v1817 = vpop.f32.mrb[0].mxu0
        %v1818 = vadd.f32 %v1679, %v1817
        %v1819 = vpop.f32.mrb[0].mxu0
        %1820 = vmatprep.mubr.f32.mxu0 0.0
        %1821 = vmatmul.mubr.f32.gmra.mrb[0].mxu0 %v567
        %v1822 = vpop.f32.mrb[0].mxu0
        %v1823 = vadd.f32 %v1679, %v1822
        %v1824 = vpop.f32.mrb[0].mxu0
        %1825 = vmatprep.mubr.f32.mxu0 0.0
        %1826 = vmatmul.mubr.f32.gmra.mrb[0].mxu0 %v570
        %v1827 = vpop.f32.mrb[0].mxu0
        %v1828 = vadd.f32 %v1679, %v1827
        %v1829 = vpop.f32.mrb[0].mxu0
        %1830 = vmatprep.mubr.f32.mxu0 0.0
        %1831 = vmatmul.mubr.f32.gmra.mrb[0].mxu0 %v573
        %v1832 = vpop.f32.mrb[0].mxu0
        %v1833 = vadd.f32 %v1679, %v1832
        %v1834 = vpop.f32.mrb[0].mxu0
        %1835 = vmatprep.mubr.f32.mxu0 0.0
        %1836 = vmatmul.mubr.f32.gmra.mrb[0].mxu0 %v576
        %v1837 = vpop.f32.mrb[0].mxu0
        %v1838 = vadd.f32 %v1679, %v1837
        %v1839 = vpop.f32.mrb[0].mxu0
        %1840 = vmatprep.mubr.f32.mxu0 0.0
        %1841 = vmatmul.mubr.f32.gmra.mrb[0].mxu0 %v579
        %v1842 = vpop.f32.mrb[0].mxu0
        %v1843 = vadd.f32 %v1679, %v1842
        %v1844 = vpop.f32.mrb[0].mxu0
        %1845 = vmatprep.mubr.f32.mxu0 0.0
        %1846 = vmatmul.mubr.f32.gmra.mrb[0].mxu0 %v582
        %v1847 = vpop.f32.mrb[0].mxu0
        %v1848 = vadd.f32 %v1679, %v1847
        %v1849 = vpop.f32.mrb[0].mxu0
        %1850 = vmatprep.mubr.f32.mxu0 0.0
        %1851 = vmatmul.mubr.f32.gmra.mrb[0].mxu0 %v585
        %v1852 = vpop.f32.mrb[0].mxu0
        %v1853 = vadd.f32 %v1679, %v1852
        %v1854 = vpop.f32.mrb[0].mxu0
        %1855 = vmatprep.mubr.f32.mxu0 0.0
        %1856 = vmatmul.mubr.f32.gmra.mrb[0].mxu0 %v588
        %v1857 = vpop.f32.mrb[0].mxu0
        %v1858 = vadd.f32 %v1679, %v1857
        %v1859 = vpop.f32.mrb[0].mxu0
        %1860 = vmatprep.mubr.f32.mxu0 0.0
        %1861 = vmatmul.mubr.f32.gmra.mrb[0].mxu0 %v591
        %v1862 = vpop.f32.mrb[0].mxu0
        %v1863 = vadd.f32 %v1679, %v1862
        %v1864 = vpop.f32.mrb[0].mxu0
        %1865 = vmatprep.mubr.f32.mxu0 0.0
        %1866 = vmatmul.mubr.f32.gmra.mrb[0].mxu0 %v594
        %v1867 = vpop.f32.mrb[0].mxu0
        %v1868 = vadd.f32 %v1679, %v1867
        %v1869 = vpop.f32.mrb[0].mxu0
        %1870 = vmatprep.mubr.f32.mxu0 0.0
        %1871 = vmatmul.mubr.f32.gmra.mrb[0].mxu0 %v597
        %v1872 = vpop.f32.mrb[0].mxu0
        %v1873 = vadd.f32 %v1679, %v1872
        %v1874 = vpop.f32.mrb[0].mxu0
        %1875 = vmatprep.mubr.f32.mxu0 0.0
        %1876 = vmatmul.mubr.f32.gmra.mrb[0].mxu0 %v600
        %v1877 = vpop.f32.mrb[0].mxu0
        %v1878 = vadd.f32 %v1679, %v1877
        %v1879 = vpop.f32.mrb[0].mxu0
        %1880 = vmatprep.mubr.f32.mxu0 0.0
        %1881 = vmatmul.mubr.f32.gmra.mrb[0].mxu0 %v603
        %v1882 = vpop.f32.mrb[0].mxu0
        %v1883 = vadd.f32 %v1679, %v1882
        %v1884 = vpop.f32.mrb[0].mxu0
        %1885 = vmatprep.mubr.f32.mxu0 0.0
        %1886 = vmatmul.mubr.f32.gmra.mrb[0].mxu0 %v606
        %v1887 = vpop.f32.mrb[0].mxu0
        %v1888 = vadd.f32 %v1679, %v1887
        %v1889 = vpop.f32.mrb[0].mxu0
        %1890 = vmatprep.mubr.f32.mxu0 0.0
        %1891 = vmatmul.mubr.f32.gmra.mrb[0].mxu0 %v609
        %v1892 = vpop.f32.mrb[0].mxu0
        %v1893 = vadd.f32 %v1679, %v1892
        %v1894 = vpop.f32.mrb[0].mxu0
        %1895 = vmatprep.mubr.f32.mxu0 0.0
        %1896 = vmatmul.mubr.f32.gmra.mrb[0].mxu0 %v612
        %v1897 = vpop.f32.mrb[0].mxu0
        %v1898 = vadd.f32 %v1679, %v1897
        %v1899 = vpop.f32.mrb[0].mxu0
        %1900 = vmatprep.mubr.f32.mxu0 0.0
        %1901 = vmatmul.mubr.f32.gmra.mrb[0].mxu0 %v615
        %v1902 = vpop.f32.mrb[0].mxu0
        %v1903 = vadd.f32 %v1679, %v1902
        %v1904 = vpop.f32.mrb[0].mxu0
        %1905 = vdwg.mxu0
        %1906 = vmatprep.subr.mxu0 0.0
        %1907 = vmatpush1.msra.mxu0 %v1748
        %1908 = vmatprep.subr.mxu0 0.0
        %1909 = vmatpush1.msra.mxu0 %v1753
        %1910 = vmatprep.subr.mxu0 0.0
        %1911 = vmatpush1.msra.mxu0 %v1758
        %1912 = vmatprep.subr.mxu0 0.0
        %1913 = vmatpush1.msra.mxu0 %v1763
        %1914 = vmatprep.subr.mxu0 0.0
        %1915 = vmatpush1.msra.mxu0 %v1768
        %1916 = vmatprep.subr.mxu0 0.0
        %1917 = vmatpush1.msra.mxu0 %v1773
        %1918 = vmatprep.subr.mxu0 0.0
        %1919 = vmatpush1.msra.mxu0 %v1778
        %1920 = vmatprep.subr.mxu0 0.0
        %1921 = vmatpush1.msra.mxu0 %v1783
        %1922 = vmatprep.subr.mxu0 0.0
        %1923 = vmatpush1.msra.mxu0 %v1788
        %1924 = vmatprep.subr.mxu0 0.0
        %1925 = vmatpush1.msra.mxu0 %v1793
        %1926 = vmatprep.subr.mxu0 0.0
        %1927 = vmatpush1.msra.mxu0 %v1798
        %1928 = vmatprep.subr.mxu0 0.0
        %1929 = vmatpush1.msra.mxu0 %v1803
        %1930 = vmatprep.subr.mxu0 0.0
        %1931 = vmatpush1.msra.mxu0 %v1808
        %1932 = vmatprep.subr.mxu0 0.0
        %1933 = vmatpush1.msra.mxu0 %v1813
        %1934 = vmatprep.subr.mxu0 0.0
        %1935 = vmatpush1.msra.mxu0 %v1818
        %1936 = vmatprep.subr.mxu0 0.0
        %1937 = vmatpush1.msra.mxu0 %v1823
        %1938 = vmatprep.subr.mxu0 0.0
        %1939 = vmatpush1.msra.mxu0 %v1828
        %1940 = vmatprep.subr.mxu0 0.0
        %1941 = vmatpush1.msra.mxu0 %v1833
        %1942 = vmatprep.subr.mxu0 0.0
        %1943 = vmatpush1.msra.mxu0 %v1838
        %1944 = vmatprep.subr.mxu0 0.0
        %1945 = vmatpush1.msra.mxu0 %v1843
        %1946 = vmatprep.subr.mxu0 0.0
        %1947 = vmatpush1.msra.mxu0 %v1848
        %1948 = vmatprep.subr.mxu0 0.0
        %1949 = vmatpush1.msra.mxu0 %v1853
        %1950 = vmatprep.subr.mxu0 0.0
        %1951 = vmatpush1.msra.mxu0 %v1858
        %1952 = vmatprep.subr.mxu0 0.0
        %1953 = vmatpush1.msra.mxu0 %v1863
        %1954 = vmatprep.subr.mxu0 0.0
        %1955 = vmatpush1.msra.mxu0 %v1868
        %1956 = vmatprep.subr.mxu0 0.0
        %1957 = vmatpush1.msra.mxu0 %v1873
        %1958 = vmatprep.subr.mxu0 0.0
        %1959 = vmatpush1.msra.mxu0 %v1878
        %1960 = vmatprep.subr.mxu0 0.0
        %1961 = vmatpush1.msra.mxu0 %v1883
        %1962 = vmatprep.subr.mxu0 0.0
        %1963 = vmatpush1.msra.mxu0 %v1888
        %1964 = vmatprep.subr.mxu0 0.0
        %1965 = vmatpush1.msra.mxu0 %v1893
        %1966 = vmatprep.subr.mxu0 0.0
        %1967 = vmatpush1.msra.mxu0 %v1898
        %1968 = vmatprep.subr.mxu0 0.0
        %1969 = vmatpush1.msra.mxu0 %v1903
        %1970 = vmatprep.mubr.f32.mxu0 %v1612
        %1971 = vmatmul.mubr.f32.gmra.mrb[0].mxu0 %v1611
        %v1972 = vpop.f32.mrb[0].mxu0
        %v1973 = vadd.f32 %v483, %v1972
        %v1974 = vpop.f32.mrb[0].mxu0
        %1975 = vmatprep.mubr.f32.mxu0 %v1614
        %1976 = vmatmul.mubr.f32.gmra.mrb[0].mxu0 %v1613
        %v1977 = vpop.f32.mrb[0].mxu0
        %v1978 = vadd.f32 %v484, %v1977
        %v1979 = vpop.f32.mrb[0].mxu0
        %1980 = vmatprep.mubr.f32.mxu0 %v1616
        %1981 = vmatmul.mubr.f32.gmra.mrb[0].mxu0 %v1615
        %v1982 = vpop.f32.mrb[0].mxu0
        %v1983 = vadd.f32 %v485, %v1982
        %v1984 = vpop.f32.mrb[0].mxu0
        %1985 = vmatprep.mubr.f32.mxu0 %v1618
        %1986 = vmatmul.mubr.f32.gmra.mrb[0].mxu0 %v1617
        %v1987 = vpop.f32.mrb[0].mxu0
        %v1988 = vadd.f32 %v486, %v1987
        %v1989 = vpop.f32.mrb[0].mxu0
        %1990 = vmatprep.mubr.f32.mxu0 %v1620
        %1991 = vmatmul.mubr.f32.gmra.mrb[0].mxu0 %v1619
        %v1992 = vpop.f32.mrb[0].mxu0
        %v1993 = vadd.f32 %v487, %v1992
        %v1994 = vpop.f32.mrb[0].mxu0
        %1995 = vmatprep.mubr.f32.mxu0 %v1622
        %1996 = vmatmul.mubr.f32.gmra.mrb[0].mxu0 %v1621
        %v1997 = vpop.f32.mrb[0].mxu0
        %v1998 = vadd.f32 %v488, %v1997
        %v1999 = vpop.f32.mrb[0].mxu0
        %2000 = vmatprep.mubr.f32.mxu0 %v1624
        %2001 = vmatmul.mubr.f32.gmra.mrb[0].mxu0 %v1623
        %v2002 = vpop.f32.mrb[0].mxu0
        %v2003 = vadd.f32 %v489, %v2002
        %v2004 = vpop.f32.mrb[0].mxu0
        %2005 = vmatprep.mubr.f32.mxu0 %v1626
        %2006 = vmatmul.mubr.f32.gmra.mrb[0].mxu0 %v1625
        %v2007 = vpop.f32.mrb[0].mxu0
        %v2008 = vadd.f32 %v490, %v2007
        %v2009 = vpop.f32.mrb[0].mxu0
        %2010 = vmatprep.mubr.f32.mxu0 %v1628
        %2011 = vmatmul.mubr.f32.gmra.mrb[0].mxu0 %v1627
        %v2012 = vpop.f32.mrb[0].mxu0
        %v2013 = vadd.f32 %v491, %v2012
        %v2014 = vpop.f32.mrb[0].mxu0
        %2015 = vmatprep.mubr.f32.mxu0 %v1630
        %2016 = vmatmul.mubr.f32.gmra.mrb[0].mxu0 %v1629
        %v2017 = vpop.f32.mrb[0].mxu0
        %v2018 = vadd.f32 %v492, %v2017
        %v2019 = vpop.f32.mrb[0].mxu0
        %2020 = vmatprep.mubr.f32.mxu0 %v1632
        %2021 = vmatmul.mubr.f32.gmra.mrb[0].mxu0 %v1631
        %v2022 = vpop.f32.mrb[0].mxu0
        %v2023 = vadd.f32 %v493, %v2022
        %v2024 = vpop.f32.mrb[0].mxu0
        %2025 = vmatprep.mubr.f32.mxu0 %v1634
        %2026 = vmatmul.mubr.f32.gmra.mrb[0].mxu0 %v1633
        %v2027 = vpop.f32.mrb[0].mxu0
        %v2028 = vadd.f32 %v494, %v2027
        %v2029 = vpop.f32.mrb[0].mxu0
        %2030 = vmatprep.mubr.f32.mxu0 %v1636
        %2031 = vmatmul.mubr.f32.gmra.mrb[0].mxu0 %v1635
        %v2032 = vpop.f32.mrb[0].mxu0
        %v2033 = vadd.f32 %v495, %v2032
        %v2034 = vpop.f32.mrb[0].mxu0
        %2035 = vmatprep.mubr.f32.mxu0 %v1638
        %2036 = vmatmul.mubr.f32.gmra.mrb[0].mxu0 %v1637
        %v2037 = vpop.f32.mrb[0].mxu0
        %v2038 = vadd.f32 %v496, %v2037
        %v2039 = vpop.f32.mrb[0].mxu0
        %2040 = vmatprep.mubr.f32.mxu0 %v1640
        %2041 = vmatmul.mubr.f32.gmra.mrb[0].mxu0 %v1639
        %v2042 = vpop.f32.mrb[0].mxu0
        %v2043 = vadd.f32 %v497, %v2042
        %v2044 = vpop.f32.mrb[0].mxu0
        %2045 = vmatprep.mubr.f32.mxu0 %v1642
        %2046 = vmatmul.mubr.f32.gmra.mrb[0].mxu0 %v1641
        %v2047 = vpop.f32.mrb[0].mxu0
        %v2048 = vadd.f32 %v498, %v2047
        %v2049 = vpop.f32.mrb[0].mxu0
        %2050 = vmatprep.mubr.f32.mxu0 %v1644
        %2051 = vmatmul.mubr.f32.gmra.mrb[0].mxu0 %v1643
        %v2052 = vpop.f32.mrb[0].mxu0
        %v2053 = vadd.f32 %v499, %v2052
        %v2054 = vpop.f32.mrb[0].mxu0
        %2055 = vmatprep.mubr.f32.mxu0 %v1646
        %2056 = vmatmul.mubr.f32.gmra.mrb[0].mxu0 %v1645
        %v2057 = vpop.f32.mrb[0].mxu0
        %v2058 = vadd.f32 %v500, %v2057
        %v2059 = vpop.f32.mrb[0].mxu0
        %2060 = vmatprep.mubr.f32.mxu0 %v1648
        %2061 = vmatmul.mubr.f32.gmra.mrb[0].mxu0 %v1647
        %v2062 = vpop.f32.mrb[0].mxu0
        %v2063 = vadd.f32 %v501, %v2062
        %v2064 = vpop.f32.mrb[0].mxu0
        %2065 = vmatprep.mubr.f32.mxu0 %v1650
        %2066 = vmatmul.mubr.f32.gmra.mrb[0].mxu0 %v1649
        %v2067 = vpop.f32.mrb[0].mxu0
        %v2068 = vadd.f32 %v502, %v2067
        %v2069 = vpop.f32.mrb[0].mxu0
        %2070 = vmatprep.mubr.f32.mxu0 %v1652
        %2071 = vmatmul.mubr.f32.gmra.mrb[0].mxu0 %v1651
        %v2072 = vpop.f32.mrb[0].mxu0
        %v2073 = vadd.f32 %v503, %v2072
        %v2074 = vpop.f32.mrb[0].mxu0
        %2075 = vmatprep.mubr.f32.mxu0 %v1654
        %2076 = vmatmul.mubr.f32.gmra.mrb[0].mxu0 %v1653
        %v2077 = vpop.f32.mrb[0].mxu0
        %v2078 = vadd.f32 %v504, %v2077
        %v2079 = vpop.f32.mrb[0].mxu0
        %2080 = vmatprep.mubr.f32.mxu0 %v1656
        %2081 = vmatmul.mubr.f32.gmra.mrb[0].mxu0 %v1655
        %v2082 = vpop.f32.mrb[0].mxu0
        %v2083 = vadd.f32 %v505, %v2082
        %v2084 = vpop.f32.mrb[0].mxu0
        %2085 = vmatprep.mubr.f32.mxu0 %v1658
        %2086 = vmatmul.mubr.f32.gmra.mrb[0].mxu0 %v1657
        %v2087 = vpop.f32.mrb[0].mxu0
        %v2088 = vadd.f32 %v506, %v2087
        %v2089 = vpop.f32.mrb[0].mxu0
        %2090 = vmatprep.mubr.f32.mxu0 %v1660
        %2091 = vmatmul.mubr.f32.gmra.mrb[0].mxu0 %v1659
        %v2092 = vpop.f32.mrb[0].mxu0
        %v2093 = vadd.f32 %v507, %v2092
        %v2094 = vpop.f32.mrb[0].mxu0
        %2095 = vmatprep.mubr.f32.mxu0 %v1662
        %2096 = vmatmul.mubr.f32.gmra.mrb[0].mxu0 %v1661
        %v2097 = vpop.f32.mrb[0].mxu0
        %v2098 = vadd.f32 %v508, %v2097
        %v2099 = vpop.f32.mrb[0].mxu0
        %2100 = vmatprep.mubr.f32.mxu0 %v1664
        %2101 = vmatmul.mubr.f32.gmra.mrb[0].mxu0 %v1663
        %v2102 = vpop.f32.mrb[0].mxu0
        %v2103 = vadd.f32 %v509, %v2102
        %v2104 = vpop.f32.mrb[0].mxu0
        %2105 = vmatprep.mubr.f32.mxu0 %v1666
        %2106 = vmatmul.mubr.f32.gmra.mrb[0].mxu0 %v1665
        %v2107 = vpop.f32.mrb[0].mxu0
        %v2108 = vadd.f32 %v510, %v2107
        %v2109 = vpop.f32.mrb[0].mxu0
        %2110 = vmatprep.mubr.f32.mxu0 %v1668
        %2111 = vmatmul.mubr.f32.gmra.mrb[0].mxu0 %v1667
        %v2112 = vpop.f32.mrb[0].mxu0
        %v2113 = vadd.f32 %v511, %v2112
        %v2114 = vpop.f32.mrb[0].mxu0
        %2115 = vmatprep.mubr.f32.mxu0 %v1670
        %2116 = vmatmul.mubr.f32.gmra.mrb[0].mxu0 %v1669
        %v2117 = vpop.f32.mrb[0].mxu0
        %v2118 = vadd.f32 %v512, %v2117
        %v2119 = vpop.f32.mrb[0].mxu0
        %2120 = vmatprep.mubr.f32.mxu0 %v1672
        %2121 = vmatmul.mubr.f32.gmra.mrb[0].mxu0 %v1671
        %v2122 = vpop.f32.mrb[0].mxu0
        %v2123 = vadd.f32 %v513, %v2122
        %v2124 = vpop.f32.mrb[0].mxu0
        %2125 = vmatprep.mubr.f32.mxu0 %v1674
        %2126 = vmatmul.mubr.f32.gmra.mrb[0].mxu0 %v1673
        %v2127 = vpop.f32.mrb[0].mxu0
        %v2128 = vadd.f32 %v514, %v2127
        %v2129 = vpop.f32.mrb[0].mxu0
        %2130 = vdwg.mxu0
        %2131 = vst.msk [vmem:[#allocation2 + $0x30] sm:$0xff] %vm346, %v1973
        %2132 = vst.msk [vmem:[#allocation2 + $0x38] sm:$0xff] %vm346, %v1978
        %2133 = vst.msk [vmem:[#allocation2 + $0x48] sm:$0xff] %vm346, %v1983
        %2134 = vst.msk [vmem:[#allocation2 + $0x50] sm:$0xff] %vm346, %v1988
        %2135 = vst.msk [vmem:[#allocation2 + $0x60] sm:$0xff] %vm346, %v1993
        %2136 = vst.msk [vmem:[#allocation2 + $0x68] sm:$0xff] %vm346, %v1998
        %2137 = vst.msk [vmem:[#allocation2 + $0x78] sm:$0xff] %vm346, %v2003
        %2138 = vst.msk [vmem:[#allocation2 + $0x80] sm:$0xff] %vm346, %v2008
        %2139 = vst.msk [vmem:[#allocation2 + $0x90] sm:$0xff] %vm346, %v2013
        %2140 = vst.msk [vmem:[#allocation2 + $0x98] sm:$0xff] %vm346, %v2018
        %2141 = vst.msk [vmem:[#allocation2 + $0xa8] sm:$0xff] %vm346, %v2023
        %2142 = vst.msk [vmem:[#allocation2 + $0xb0] sm:$0xff] %vm346, %v2028
        %2143 = vst.msk [vmem:[#allocation2 + $0xc0] sm:$0xff] %vm346, %v2033
        %2144 = vst.msk [vmem:[#allocation2 + $0xc8] sm:$0xff] %vm346, %v2038
        %2145 = vst.msk [vmem:[#allocation2 + $0xd8] sm:$0xff] %vm346, %v2043
        %2146 = vst.msk [vmem:[#allocation2 + $0xe0] sm:$0xff] %vm346, %v2048
        %2147 = vst.msk [vmem:[#allocation2 + $0xf0] sm:$0xff] %vm346, %v2053
        %2148 = vst.msk [vmem:[#allocation2 + $0xf8] sm:$0xff] %vm346, %v2058
        %2149 = vst.msk [vmem:[#allocation2 + $0x108] sm:$0xff] %vm346, %v2063
        %2150 = vst.msk [vmem:[#allocation2 + $0x110] sm:$0xff] %vm346, %v2068
        %2151 = vst.msk [vmem:[#allocation2 + $0x120] sm:$0xff] %vm346, %v2073
        %2152 = vst.msk [vmem:[#allocation2 + $0x128] sm:$0xff] %vm346, %v2078
        %2153 = vst.msk [vmem:[#allocation2 + $0x138] sm:$0xff] %vm346, %v2083
        %2154 = vst.msk [vmem:[#allocation2 + $0x140] sm:$0xff] %vm346, %v2088
        %2155 = vst.msk [vmem:[#allocation2 + $0x150] sm:$0xff] %vm346, %v2093
        %2156 = vst.msk [vmem:[#allocation2 + $0x158] sm:$0xff] %vm346, %v2098
        %2157 = vst.msk [vmem:[#allocation2 + $0x168] sm:$0xff] %vm346, %v2103
        %2158 = vst.msk [vmem:[#allocation2 + $0x170] sm:$0xff] %vm346, %v2108
        %2159 = vst.msk [vmem:[#allocation2 + $0x180] sm:$0xff] %vm346, %v2113
        %2160 = vst.msk [vmem:[#allocation2 + $0x188] sm:$0xff] %vm346, %v2118
        %2161 = vst.msk [vmem:[#allocation2 + $0x198] sm:$0xff] %vm346, %v2123
        %2162 = vst.msk [vmem:[#allocation2 + $0x1a0] sm:$0xff] %vm346, %v2128
        %v2163 = vld [vmem:[#allocation2 + $0x17] sm:$0xff]
        %v2164 = vld [vmem:[#allocation2 + $0x1f] sm:$0xff]
        %v2165 = vld [vmem:[#allocation2 + $0x27] sm:$0xff]
        %v2166 = vld [vmem:[#allocation2 + $0x2f] sm:$0xff]
        %v2167 = vld [vmem:[#allocation2 + $0x37] sm:$0xff]
        %v2168 = vld [vmem:[#allocation2 + $0x3f] sm:$0xff]
        %v2169 = vld [vmem:[#allocation2 + $0x47] sm:$0xff]
        %v2170 = vld [vmem:[#allocation2 + $0x4f] sm:$0xff]
        %v2171 = vld [vmem:[#allocation2 + $0x57] sm:$0xff]
        %v2172 = vld [vmem:[#allocation2 + $0x5f] sm:$0xff]
        %v2173 = vld [vmem:[#allocation2 + $0x67] sm:$0xff]
        %v2174 = vld [vmem:[#allocation2 + $0x6f] sm:$0xff]
        %v2175 = vld [vmem:[#allocation2 + $0x77] sm:$0xff]
        %v2176 = vld [vmem:[#allocation2 + $0x7f] sm:$0xff]
        %v2177 = vld [vmem:[#allocation2 + $0x87] sm:$0xff]
        %v2178 = vld [vmem:[#allocation2 + $0x8f] sm:$0xff]
        %v2179 = vld [vmem:[#allocation2 + $0x97] sm:$0xff]
        %v2180 = vld [vmem:[#allocation2 + $0x9f] sm:$0xff]
        %v2181 = vld [vmem:[#allocation2 + $0xa7] sm:$0xff]
        %v2182 = vld [vmem:[#allocation2 + $0xaf] sm:$0xff]
        %v2183 = vld [vmem:[#allocation2 + $0xb7] sm:$0xff]
        %v2184 = vld [vmem:[#allocation2 + $0xbf] sm:$0xff]
        %v2185 = vld [vmem:[#allocation2 + $0xc7] sm:$0xff]
        %v2186 = vld [vmem:[#allocation2 + $0xcf] sm:$0xff]
        %v2187 = vld [vmem:[#allocation2 + $0xd7] sm:$0xff]
        %v2188 = vld [vmem:[#allocation2 + $0xdf] sm:$0xff]
        %v2189 = vld [vmem:[#allocation2 + $0xe7] sm:$0xff]
        %v2190 = vld [vmem:[#allocation2 + $0xef] sm:$0xff]
        %v2191 = vld [vmem:[#allocation2 + $0xf7] sm:$0xff]
        %v2192 = vld [vmem:[#allocation2 + $0xff] sm:$0xff]
        %v2193 = vld [vmem:[#allocation2 + $0x107] sm:$0xff]
        %v2194 = vld [vmem:[#allocation2 + $0x10f] sm:$0xff]
        %v2195 = vld [vmem:[#allocation2 + $0x117] sm:$0xff]
        %v2196 = vld [vmem:[#allocation2 + $0x11f] sm:$0xff]
        %v2197 = vld [vmem:[#allocation2 + $0x127] sm:$0xff]
        %v2198 = vld [vmem:[#allocation2 + $0x12f] sm:$0xff]
        %v2199 = vld [vmem:[#allocation2 + $0x137] sm:$0xff]
        %v2200 = vld [vmem:[#allocation2 + $0x13f] sm:$0xff]
        %v2201 = vld [vmem:[#allocation2 + $0x147] sm:$0xff]
        %v2202 = vld [vmem:[#allocation2 + $0x14f] sm:$0xff]
        %v2203 = vld [vmem:[#allocation2 + $0x157] sm:$0xff]
        %v2204 = vld [vmem:[#allocation2 + $0x15f] sm:$0xff]
        %v2205 = vld [vmem:[#allocation2 + $0x167] sm:$0xff]
        %v2206 = vld [vmem:[#allocation2 + $0x16f] sm:$0xff]
        %v2207 = vld [vmem:[#allocation2 + $0x177] sm:$0xff]
        %v2208 = vld [vmem:[#allocation2 + $0x17f] sm:$0xff]
        %v2209 = vld [vmem:[#allocation2 + $0x187] sm:$0xff]
        %v2210 = vld [vmem:[#allocation2 + $0x18f] sm:$0xff]
        %v2211 = vld [vmem:[#allocation3] sm:$0xff]
        %v2212 = vld [vmem:[#allocation3 + $0x8] sm:$0xff]
        %v2213 = vld [vmem:[#allocation3 + $0x10] sm:$0xff]
        %v2214 = vld [vmem:[#allocation3 + $0x18] sm:$0xff]
        %v2215 = vld [vmem:[#allocation2 + $0x18] sm:$0xff]
        %v2216 = vld [vmem:[#allocation2 + $0x20] sm:$0xff]
        %v2217 = vld [vmem:[#allocation2 + $0x28] sm:$0xff]
        %v2218 = vld [vmem:[#allocation2 + $0x30] sm:$0xff]
        %v2219 = vld [vmem:[#allocation2 + $0x38] sm:$0xff]
        %v2220 = vld [vmem:[#allocation2 + $0x40] sm:$0xff]
        %v2221 = vld [vmem:[#allocation2 + $0x48] sm:$0xff]
        %v2222 = vld [vmem:[#allocation2 + $0x50] sm:$0xff]
        %v2223 = vld [vmem:[#allocation2 + $0x58] sm:$0xff]
        %v2224 = vld [vmem:[#allocation2 + $0x60] sm:$0xff]
        %v2225 = vld [vmem:[#allocation2 + $0x68] sm:$0xff]
        %v2226 = vld [vmem:[#allocation2 + $0x70] sm:$0xff]
        %v2227 = vld [vmem:[#allocation2 + $0x78] sm:$0xff]
        %v2228 = vld [vmem:[#allocation2 + $0x80] sm:$0xff]
        %v2229 = vld [vmem:[#allocation2 + $0x88] sm:$0xff]
        %v2230 = vld [vmem:[#allocation2 + $0x90] sm:$0xff]
        %v2231 = vld [vmem:[#allocation2 + $0x98] sm:$0xff]
        %v2232 = vld [vmem:[#allocation2 + $0xa0] sm:$0xff]
        %v2233 = vld [vmem:[#allocation2 + $0xa8] sm:$0xff]
        %v2234 = vld [vmem:[#allocation2 + $0xb0] sm:$0xff]
        %v2235 = vld [vmem:[#allocation2 + $0xb8] sm:$0xff]
        %v2236 = vld [vmem:[#allocation2 + $0xc0] sm:$0xff]
        %v2237 = vld [vmem:[#allocation2 + $0xc8] sm:$0xff]
        %v2238 = vld [vmem:[#allocation2 + $0xd0] sm:$0xff]
        %v2239 = vld [vmem:[#allocation2 + $0xd8] sm:$0xff]
        %v2240 = vld [vmem:[#allocation2 + $0xe0] sm:$0xff]
        %v2241 = vld [vmem:[#allocation2 + $0xe8] sm:$0xff]
        %v2242 = vld [vmem:[#allocation2 + $0xf0] sm:$0xff]
        %v2243 = vld [vmem:[#allocation2 + $0xf8] sm:$0xff]
        %v2244 = vld [vmem:[#allocation2 + $0x100] sm:$0xff]
        %v2245 = vld [vmem:[#allocation2 + $0x108] sm:$0xff]
        %v2246 = vld [vmem:[#allocation2 + $0x110] sm:$0xff]
        %v2247 = vld [vmem:[#allocation2 + $0x118] sm:$0xff]
        %v2248 = vld [vmem:[#allocation2 + $0x120] sm:$0xff]
        %v2249 = vld [vmem:[#allocation2 + $0x128] sm:$0xff]
        %v2250 = vld [vmem:[#allocation2 + $0x130] sm:$0xff]
        %v2251 = vld [vmem:[#allocation2 + $0x138] sm:$0xff]
        %v2252 = vld [vmem:[#allocation2 + $0x140] sm:$0xff]
        %v2253 = vld [vmem:[#allocation2 + $0x148] sm:$0xff]
        %v2254 = vld [vmem:[#allocation2 + $0x150] sm:$0xff]
        %v2255 = vld [vmem:[#allocation2 + $0x158] sm:$0xff]
        %v2256 = vld [vmem:[#allocation2 + $0x160] sm:$0xff]
        %v2257 = vld [vmem:[#allocation2 + $0x168] sm:$0xff]
        %v2258 = vld [vmem:[#allocation2 + $0x170] sm:$0xff]
        %v2259 = vld [vmem:[#allocation2 + $0x178] sm:$0xff]
        %v2260 = vld [vmem:[#allocation2 + $0x180] sm:$0xff]
        %v2261 = vld [vmem:[#allocation2 + $0x188] sm:$0xff]
        %v2262 = vld [vmem:[#allocation2 + $0x190] sm:$0xff]
        %s2263 = scalar_lea.vmem [#allocation3], 32
        %v2264 = vld [vmem:[%s2263] sm:$0xff]
        %v2265 = vld [vmem:[%s2263 + $0x8] sm:$0xff]
        %v2266 = vld [vmem:[%s2263 + $0x10] sm:$0xff]
        %v2267 = vld [vmem:[%s2263 + $0x18] sm:$0xff]
        %v2269 = vsel %vm346, %v2215, 0
        %v2272 = vsel %vm346, %v2216, 0
        %v2275 = vsel %vm346, %v2217, 0
        %v2278 = vsel %vm346, %v2218, 0
        %v2281 = vsel %vm346, %v2219, 0
        %v2284 = vsel %vm346, %v2220, 0
        %v2287 = vsel %vm346, %v2221, 0
        %v2290 = vsel %vm346, %v2222, 0
        %v2293 = vsel %vm346, %v2223, 0
        %v2296 = vsel %vm346, %v2224, 0
        %v2299 = vsel %vm346, %v2225, 0
        %v2302 = vsel %vm346, %v2226, 0
        %v2305 = vsel %vm346, %v2227, 0
        %v2308 = vsel %vm346, %v2228, 0
        %v2311 = vsel %vm346, %v2229, 0
        %v2314 = vsel %vm346, %v2230, 0
        %v2317 = vsel %vm346, %v2231, 0
        %v2320 = vsel %vm346, %v2232, 0
        %v2323 = vsel %vm346, %v2233, 0
        %v2326 = vsel %vm346, %v2234, 0
        %v2329 = vsel %vm346, %v2235, 0
        %v2332 = vsel %vm346, %v2236, 0
        %v2335 = vsel %vm346, %v2237, 0
        %v2338 = vsel %vm346, %v2238, 0
        %v2341 = vsel %vm346, %v2239, 0
        %v2344 = vsel %vm346, %v2240, 0
        %v2347 = vsel %vm346, %v2241, 0
        %v2350 = vsel %vm346, %v2242, 0
        %v2353 = vsel %vm346, %v2243, 0
        %v2356 = vsel %vm346, %v2244, 0
        %v2359 = vsel %vm346, %v2245, 0
        %v2362 = vsel %vm346, %v2246, 0
        %v2365 = vsel %vm346, %v2247, 0
        %v2368 = vsel %vm346, %v2248, 0
        %v2371 = vsel %vm346, %v2249, 0
        %v2374 = vsel %vm346, %v2250, 0
        %v2377 = vsel %vm346, %v2251, 0
        %v2380 = vsel %vm346, %v2252, 0
        %v2383 = vsel %vm346, %v2253, 0
        %v2386 = vsel %vm346, %v2254, 0
        %v2389 = vsel %vm346, %v2255, 0
        %v2392 = vsel %vm346, %v2256, 0
        %v2395 = vsel %vm346, %v2257, 0
        %v2398 = vsel %vm346, %v2258, 0
        %v2401 = vsel %vm346, %v2259, 0
        %v2404 = vsel %vm346, %v2260, 0
        %v2407 = vsel %vm346, %v2261, 0
        %v2410 = vsel %vm346, %v2262, 0
        %2412 = vmatprep.subr.mxu0 0.0
        %2413 = vmatpush1.msra.mxu0 %v2264
        %2414 = vmatprep.subr.mxu0 0.0
        %2415 = vmatpush1.msra.mxu0 %v2265
        %2416 = vmatprep.subr.mxu0 0.0
        %2417 = vmatpush1.msra.mxu0 %v2266
        %2418 = vmatprep.subr.mxu0 0.0
        %2419 = vmatpush1.msra.mxu0 %v2267
        %2420 = vmatprep.subr.mxu0 0.0
        %2421 = vmatpush1.msra.mxu0 0.0
        %2422 = vmatprep.subr.mxu0 0.0
        %2423 = vmatpush1.msra.mxu0 0.0
        %2424 = vmatprep.subr.mxu0 0.0
        %2425 = vmatpush1.msra.mxu0 0.0
        %2426 = vmatprep.subr.mxu0 0.0
        %2427 = vmatpush1.msra.mxu0 0.0
        %2428 = vmatprep.subr.mxu0 0.0
        %2429 = vmatpush1.msra.mxu0 0.0
        %2430 = vmatprep.subr.mxu0 0.0
        %2431 = vmatpush1.msra.mxu0 0.0
        %2432 = vmatprep.subr.mxu0 0.0
        %2433 = vmatpush1.msra.mxu0 0.0
        %2434 = vmatprep.subr.mxu0 0.0
        %2435 = vmatpush1.msra.mxu0 0.0
        %2436 = vmatprep.subr.mxu0 0.0
        %2437 = vmatpush1.msra.mxu0 0.0
        %2438 = vmatprep.subr.mxu0 0.0
        %2439 = vmatpush1.msra.mxu0 0.0
        %2440 = vmatprep.subr.mxu0 0.0
        %2441 = vmatpush1.msra.mxu0 0.0
        %2442 = vmatprep.subr.mxu0 0.0
        %2443 = vmatpush1.msra.mxu0 0.0
        %2444 = vmatprep.subr.mxu0 0.0
        %2445 = vmatpush1.msra.mxu0 0.0
        %2446 = vmatprep.subr.mxu0 0.0
        %2447 = vmatpush1.msra.mxu0 0.0
        %2448 = vmatprep.subr.mxu0 0.0
        %2449 = vmatpush1.msra.mxu0 0.0
        %2450 = vmatprep.subr.mxu0 0.0
        %2451 = vmatpush1.msra.mxu0 0.0
        %2452 = vmatprep.subr.mxu0 0.0
        %2453 = vmatpush1.msra.mxu0 0.0
        %2454 = vmatprep.subr.mxu0 0.0
        %2455 = vmatpush1.msra.mxu0 0.0
        %2456 = vmatprep.subr.mxu0 0.0
        %2457 = vmatpush1.msra.mxu0 0.0
        %2458 = vmatprep.subr.mxu0 0.0
        %2459 = vmatpush1.msra.mxu0 0.0
        %2460 = vmatprep.subr.mxu0 0.0
        %2461 = vmatpush1.msra.mxu0 0.0
        %2462 = vmatprep.subr.mxu0 0.0
        %2463 = vmatpush1.msra.mxu0 0.0
        %2464 = vmatprep.subr.mxu0 0.0
        %2465 = vmatpush1.msra.mxu0 0.0
        %2466 = vmatprep.subr.mxu0 0.0
        %2467 = vmatpush1.msra.mxu0 0.0
        %2468 = vmatprep.subr.mxu0 0.0
        %2469 = vmatpush1.msra.mxu0 0.0
        %2470 = vmatprep.subr.mxu0 0.0
        %2471 = vmatpush1.msra.mxu0 0.0
        %2472 = vmatprep.subr.mxu0 0.0
        %2473 = vmatpush1.msra.mxu0 0.0
        %2474 = vmatprep.subr.mxu0 0.0
        %2475 = vmatpush1.msra.mxu0 0.0
        %2476 = vmatprep.mubr.f32.mxu0 0.0
        %2477 = vmatmul.mubr.f32.gmra.mrb[0].mxu0 %v2269
        %v2478 = vpop.f32.mrb[0].mxu0
        %v2479 = vadd.f32 0.0, %v2478
        %v2480 = vpop.f32.mrb[0].mxu0
        %2481 = vmatprep.mubr.f32.mxu0 0.0
        %2482 = vmatmul.mubr.f32.gmra.mrb[0].mxu0 %v2272
        %v2483 = vpop.f32.mrb[0].mxu0
        %v2484 = vadd.f32 0.0, %v2483
        %v2485 = vpop.f32.mrb[0].mxu0
        %2486 = vmatprep.mubr.f32.mxu0 0.0
        %2487 = vmatmul.mubr.f32.gmra.mrb[0].mxu0 %v2275
        %v2488 = vpop.f32.mrb[0].mxu0
        %v2489 = vpop.f32.mrb[0].mxu0
        %2490 = vmatprep.mubr.f32.mxu0 0.0
        %2491 = vmatmul.mubr.f32.gmra.mrb[0].mxu0 %v2278
        %v2492 = vpop.f32.mrb[0].mxu0
        %v2493 = vadd.f32 0.0, %v2492
        %v2494 = vpop.f32.mrb[0].mxu0
        %2495 = vmatprep.mubr.f32.mxu0 0.0
        %2496 = vmatmul.mubr.f32.gmra.mrb[0].mxu0 %v2281
        %v2497 = vpop.f32.mrb[0].mxu0
        %v2498 = vadd.f32 0.0, %v2497
        %v2499 = vpop.f32.mrb[0].mxu0
        %2500 = vmatprep.mubr.f32.mxu0 0.0
        %2501 = vmatmul.mubr.f32.gmra.mrb[0].mxu0 %v2284
        %v2502 = vpop.f32.mrb[0].mxu0
        %v2503 = vpop.f32.mrb[0].mxu0
        %2504 = vmatprep.mubr.f32.mxu0 0.0
        %2505 = vmatmul.mubr.f32.gmra.mrb[0].mxu0 %v2287
        %v2506 = vpop.f32.mrb[0].mxu0
        %v2507 = vadd.f32 0.0, %v2506
        %v2508 = vpop.f32.mrb[0].mxu0
        %2509 = vmatprep.mubr.f32.mxu0 0.0
        %2510 = vmatmul.mubr.f32.gmra.mrb[0].mxu0 %v2290
        %v2511 = vpop.f32.mrb[0].mxu0
        %v2512 = vadd.f32 0.0, %v2511
        %v2513 = vpop.f32.mrb[0].mxu0
        %2514 = vmatprep.mubr.f32.mxu0 0.0
        %2515 = vmatmul.mubr.f32.gmra.mrb[0].mxu0 %v2293
        %v2516 = vpop.f32.mrb[0].mxu0
        %v2517 = vpop.f32.mrb[0].mxu0
        %2518 = vmatprep.mubr.f32.mxu0 0.0
        %2519 = vmatmul.mubr.f32.gmra.mrb[0].mxu0 %v2296
        %v2520 = vpop.f32.mrb[0].mxu0
        %v2521 = vadd.f32 0.0, %v2520
        %v2522 = vpop.f32.mrb[0].mxu0
        %2523 = vmatprep.mubr.f32.mxu0 0.0
        %2524 = vmatmul.mubr.f32.gmra.mrb[0].mxu0 %v2299
        %v2525 = vpop.f32.mrb[0].mxu0
        %v2526 = vadd.f32 0.0, %v2525
        %v2527 = vpop.f32.mrb[0].mxu0
        %2528 = vmatprep.mubr.f32.mxu0 0.0
        %2529 = vmatmul.mubr.f32.gmra.mrb[0].mxu0 %v2302
        %v2530 = vpop.f32.mrb[0].mxu0
        %v2531 = vpop.f32.mrb[0].mxu0
        %2532 = vmatprep.mubr.f32.mxu0 0.0
        %2533 = vmatmul.mubr.f32.gmra.mrb[0].mxu0 %v2305
        %v2534 = vpop.f32.mrb[0].mxu0
        %v2535 = vadd.f32 0.0, %v2534
        %v2536 = vpop.f32.mrb[0].mxu0
        %2537 = vmatprep.mubr.f32.mxu0 0.0
        %2538 = vmatmul.mubr.f32.gmra.mrb[0].mxu0 %v2308
        %v2539 = vpop.f32.mrb[0].mxu0
        %v2540 = vadd.f32 0.0, %v2539
        %v2541 = vpop.f32.mrb[0].mxu0
        %2542 = vmatprep.mubr.f32.mxu0 0.0
        %2543 = vmatmul.mubr.f32.gmra.mrb[0].mxu0 %v2311
        %v2544 = vpop.f32.mrb[0].mxu0
        %v2545 = vpop.f32.mrb[0].mxu0
        %2546 = vmatprep.mubr.f32.mxu0 0.0
        %2547 = vmatmul.mubr.f32.gmra.mrb[0].mxu0 %v2314
        %v2548 = vpop.f32.mrb[0].mxu0
        %v2549 = vadd.f32 0.0, %v2548
        %v2550 = vpop.f32.mrb[0].mxu0
        %2551 = vmatprep.mubr.f32.mxu0 0.0
        %2552 = vmatmul.mubr.f32.gmra.mrb[0].mxu0 %v2317
        %v2553 = vpop.f32.mrb[0].mxu0
        %v2554 = vadd.f32 0.0, %v2553
        %v2555 = vpop.f32.mrb[0].mxu0
        %2556 = vmatprep.mubr.f32.mxu0 0.0
        %2557 = vmatmul.mubr.f32.gmra.mrb[0].mxu0 %v2320
        %v2558 = vpop.f32.mrb[0].mxu0
        %v2559 = vpop.f32.mrb[0].mxu0
        %2560 = vmatprep.mubr.f32.mxu0 0.0
        %2561 = vmatmul.mubr.f32.gmra.mrb[0].mxu0 %v2323
        %v2562 = vpop.f32.mrb[0].mxu0
        %v2563 = vadd.f32 0.0, %v2562
        %v2564 = vpop.f32.mrb[0].mxu0
        %2565 = vmatprep.mubr.f32.mxu0 0.0
        %2566 = vmatmul.mubr.f32.gmra.mrb[0].mxu0 %v2326
        %v2567 = vpop.f32.mrb[0].mxu0
        %v2568 = vadd.f32 0.0, %v2567
        %v2569 = vpop.f32.mrb[0].mxu0
        %2570 = vmatprep.mubr.f32.mxu0 0.0
        %2571 = vmatmul.mubr.f32.gmra.mrb[0].mxu0 %v2329
        %v2572 = vpop.f32.mrb[0].mxu0
        %v2573 = vpop.f32.mrb[0].mxu0
        %2574 = vmatprep.mubr.f32.mxu0 0.0
        %2575 = vmatmul.mubr.f32.gmra.mrb[0].mxu0 %v2332
        %v2576 = vpop.f32.mrb[0].mxu0
        %v2577 = vadd.f32 0.0, %v2576
        %v2578 = vpop.f32.mrb[0].mxu0
        %2579 = vmatprep.mubr.f32.mxu0 0.0
        %2580 = vmatmul.mubr.f32.gmra.mrb[0].mxu0 %v2335
        %v2581 = vpop.f32.mrb[0].mxu0
        %v2582 = vadd.f32 0.0, %v2581
        %v2583 = vpop.f32.mrb[0].mxu0
        %2584 = vmatprep.mubr.f32.mxu0 0.0
        %2585 = vmatmul.mubr.f32.gmra.mrb[0].mxu0 %v2338
        %v2586 = vpop.f32.mrb[0].mxu0
        %v2587 = vpop.f32.mrb[0].mxu0
        %2588 = vmatprep.mubr.f32.mxu0 0.0
        %2589 = vmatmul.mubr.f32.gmra.mrb[0].mxu0 %v2341
        %v2590 = vpop.f32.mrb[0].mxu0
        %v2591 = vadd.f32 0.0, %v2590
        %v2592 = vpop.f32.mrb[0].mxu0
        %2593 = vmatprep.mubr.f32.mxu0 0.0
        %2594 = vmatmul.mubr.f32.gmra.mrb[0].mxu0 %v2344
        %v2595 = vpop.f32.mrb[0].mxu0
        %v2596 = vadd.f32 0.0, %v2595
        %v2597 = vpop.f32.mrb[0].mxu0
        %2598 = vmatprep.mubr.f32.mxu0 0.0
        %2599 = vmatmul.mubr.f32.gmra.mrb[0].mxu0 %v2347
        %v2600 = vpop.f32.mrb[0].mxu0
        %v2601 = vpop.f32.mrb[0].mxu0
        %2602 = vmatprep.mubr.f32.mxu0 0.0
        %2603 = vmatmul.mubr.f32.gmra.mrb[0].mxu0 %v2350
        %v2604 = vpop.f32.mrb[0].mxu0
        %v2605 = vadd.f32 0.0, %v2604
        %v2606 = vpop.f32.mrb[0].mxu0
        %2607 = vmatprep.mubr.f32.mxu0 0.0
        %2608 = vmatmul.mubr.f32.gmra.mrb[0].mxu0 %v2353
        %v2609 = vpop.f32.mrb[0].mxu0
        %v2610 = vadd.f32 0.0, %v2609
        %v2611 = vpop.f32.mrb[0].mxu0
        %2612 = vmatprep.mubr.f32.mxu0 0.0
        %2613 = vmatmul.mubr.f32.gmra.mrb[0].mxu0 %v2356
        %v2614 = vpop.f32.mrb[0].mxu0
        %v2615 = vpop.f32.mrb[0].mxu0
        %2616 = vmatprep.mubr.f32.mxu0 0.0
        %2617 = vmatmul.mubr.f32.gmra.mrb[0].mxu0 %v2359
        %v2618 = vpop.f32.mrb[0].mxu0
        %v2619 = vadd.f32 0.0, %v2618
        %v2620 = vpop.f32.mrb[0].mxu0
        %2621 = vmatprep.mubr.f32.mxu0 0.0
        %2622 = vmatmul.mubr.f32.gmra.mrb[0].mxu0 %v2362
        %v2623 = vpop.f32.mrb[0].mxu0
        %v2624 = vadd.f32 0.0, %v2623
        %v2625 = vpop.f32.mrb[0].mxu0
        %2626 = vmatprep.mubr.f32.mxu0 0.0
        %2627 = vmatmul.mubr.f32.gmra.mrb[0].mxu0 %v2365
        %v2628 = vpop.f32.mrb[0].mxu0
        %v2629 = vpop.f32.mrb[0].mxu0
        %2630 = vmatprep.mubr.f32.mxu0 0.0
        %2631 = vmatmul.mubr.f32.gmra.mrb[0].mxu0 %v2368
        %v2632 = vpop.f32.mrb[0].mxu0
        %v2633 = vadd.f32 0.0, %v2632
        %v2634 = vpop.f32.mrb[0].mxu0
        %2635 = vmatprep.mubr.f32.mxu0 0.0
        %2636 = vmatmul.mubr.f32.gmra.mrb[0].mxu0 %v2371
        %v2637 = vpop.f32.mrb[0].mxu0
        %v2638 = vadd.f32 0.0, %v2637
        %v2639 = vpop.f32.mrb[0].mxu0
        %2640 = vmatprep.mubr.f32.mxu0 0.0
        %2641 = vmatmul.mubr.f32.gmra.mrb[0].mxu0 %v2374
        %v2642 = vpop.f32.mrb[0].mxu0
        %v2643 = vpop.f32.mrb[0].mxu0
        %2644 = vmatprep.mubr.f32.mxu0 0.0
        %2645 = vmatmul.mubr.f32.gmra.mrb[0].mxu0 %v2377
        %v2646 = vpop.f32.mrb[0].mxu0
        %v2647 = vadd.f32 0.0, %v2646
        %v2648 = vpop.f32.mrb[0].mxu0
        %2649 = vmatprep.mubr.f32.mxu0 0.0
        %2650 = vmatmul.mubr.f32.gmra.mrb[0].mxu0 %v2380
        %v2651 = vpop.f32.mrb[0].mxu0
        %v2652 = vadd.f32 0.0, %v2651
        %v2653 = vpop.f32.mrb[0].mxu0
        %2654 = vmatprep.mubr.f32.mxu0 0.0
        %2655 = vmatmul.mubr.f32.gmra.mrb[0].mxu0 %v2383
        %v2656 = vpop.f32.mrb[0].mxu0
        %v2657 = vpop.f32.mrb[0].mxu0
        %2658 = vmatprep.mubr.f32.mxu0 0.0
        %2659 = vmatmul.mubr.f32.gmra.mrb[0].mxu0 %v2386
        %v2660 = vpop.f32.mrb[0].mxu0
        %v2661 = vadd.f32 0.0, %v2660
        %v2662 = vpop.f32.mrb[0].mxu0
        %2663 = vmatprep.mubr.f32.mxu0 0.0
        %2664 = vmatmul.mubr.f32.gmra.mrb[0].mxu0 %v2389
        %v2665 = vpop.f32.mrb[0].mxu0
        %v2666 = vadd.f32 0.0, %v2665
        %v2667 = vpop.f32.mrb[0].mxu0
        %2668 = vmatprep.mubr.f32.mxu0 0.0
        %2669 = vmatmul.mubr.f32.gmra.mrb[0].mxu0 %v2392
        %v2670 = vpop.f32.mrb[0].mxu0
        %v2671 = vpop.f32.mrb[0].mxu0
        %2672 = vmatprep.mubr.f32.mxu0 0.0
        %2673 = vmatmul.mubr.f32.gmra.mrb[0].mxu0 %v2395
        %v2674 = vpop.f32.mrb[0].mxu0
        %v2675 = vadd.f32 0.0, %v2674
        %v2676 = vpop.f32.mrb[0].mxu0
        %2677 = vmatprep.mubr.f32.mxu0 0.0
        %2678 = vmatmul.mubr.f32.gmra.mrb[0].mxu0 %v2398
        %v2679 = vpop.f32.mrb[0].mxu0
        %v2680 = vadd.f32 0.0, %v2679
        %v2681 = vpop.f32.mrb[0].mxu0
        %2682 = vmatprep.mubr.f32.mxu0 0.0
        %2683 = vmatmul.mubr.f32.gmra.mrb[0].mxu0 %v2401
        %v2684 = vpop.f32.mrb[0].mxu0
        %v2685 = vpop.f32.mrb[0].mxu0
        %2686 = vmatprep.mubr.f32.mxu0 0.0
        %2687 = vmatmul.mubr.f32.gmra.mrb[0].mxu0 %v2404
        %v2688 = vpop.f32.mrb[0].mxu0
        %v2689 = vadd.f32 0.0, %v2688
        %v2690 = vpop.f32.mrb[0].mxu0
        %2691 = vmatprep.mubr.f32.mxu0 0.0
        %2692 = vmatmul.mubr.f32.gmra.mrb[0].mxu0 %v2407
        %v2693 = vpop.f32.mrb[0].mxu0
        %v2694 = vadd.f32 0.0, %v2693
        %v2695 = vpop.f32.mrb[0].mxu0
        %2696 = vmatprep.mubr.f32.mxu0 0.0
        %2697 = vmatmul.mubr.f32.gmra.mrb[0].mxu0 %v2410
        %v2698 = vpop.f32.mrb[0].mxu0
        %v2699 = vpop.f32.mrb[0].mxu0
        %2700 = vdwg.mxu0
        %v2702 = vsel %vm346, %v2163, 0
        %v2705 = vsel %vm346, %v2164, 0
        %v2708 = vsel %vm346, %v2165, 0
        %v2711 = vsel %vm346, %v2166, 0
        %v2714 = vsel %vm346, %v2167, 0
        %v2717 = vsel %vm346, %v2168, 0
        %v2720 = vsel %vm346, %v2169, 0
        %v2723 = vsel %vm346, %v2170, 0
        %v2726 = vsel %vm346, %v2171, 0
        %v2729 = vsel %vm346, %v2172, 0
        %v2732 = vsel %vm346, %v2173, 0
        %v2735 = vsel %vm346, %v2174, 0
        %v2738 = vsel %vm346, %v2175, 0
        %v2741 = vsel %vm346, %v2176, 0
        %v2744 = vsel %vm346, %v2177, 0
        %v2747 = vsel %vm346, %v2178, 0
        %v2750 = vsel %vm346, %v2179, 0
        %v2753 = vsel %vm346, %v2180, 0
        %v2756 = vsel %vm346, %v2181, 0
        %v2759 = vsel %vm346, %v2182, 0
        %v2762 = vsel %vm346, %v2183, 0
        %v2765 = vsel %vm346, %v2184, 0
        %v2768 = vsel %vm346, %v2185, 0
        %v2771 = vsel %vm346, %v2186, 0
        %v2774 = vsel %vm346, %v2187, 0
        %v2777 = vsel %vm346, %v2188, 0
        %v2780 = vsel %vm346, %v2189, 0
        %v2783 = vsel %vm346, %v2190, 0
        %v2786 = vsel %vm346, %v2191, 0
        %v2789 = vsel %vm346, %v2192, 0
        %v2792 = vsel %vm346, %v2193, 0
        %v2795 = vsel %vm346, %v2194, 0
        %v2798 = vsel %vm346, %v2195, 0
        %v2801 = vsel %vm346, %v2196, 0
        %v2804 = vsel %vm346, %v2197, 0
        %v2807 = vsel %vm346, %v2198, 0
        %v2810 = vsel %vm346, %v2199, 0
        %v2813 = vsel %vm346, %v2200, 0
        %v2816 = vsel %vm346, %v2201, 0
        %v2819 = vsel %vm346, %v2202, 0
        %v2822 = vsel %vm346, %v2203, 0
        %v2825 = vsel %vm346, %v2204, 0
        %v2828 = vsel %vm346, %v2205, 0
        %v2831 = vsel %vm346, %v2206, 0
        %v2834 = vsel %vm346, %v2207, 0
        %v2837 = vsel %vm346, %v2208, 0
        %v2840 = vsel %vm346, %v2209, 0
        %v2843 = vsel %vm346, %v2210, 0
        %2845 = vmatprep.subr.mxu0 0.0
        %2846 = vmatpush1.msra.mxu0 %v2211
        %2847 = vmatprep.subr.mxu0 0.0
        %2848 = vmatpush1.msra.mxu0 %v2212
        %2849 = vmatprep.subr.mxu0 0.0
        %2850 = vmatpush1.msra.mxu0 %v2213
        %2851 = vmatprep.subr.mxu0 0.0
        %2852 = vmatpush1.msra.mxu0 %v2214
        %2853 = vmatprep.subr.mxu0 0.0
        %2854 = vmatpush1.msra.mxu0 0.0
        %2855 = vmatprep.subr.mxu0 0.0
        %2856 = vmatpush1.msra.mxu0 0.0
        %2857 = vmatprep.subr.mxu0 0.0
        %2858 = vmatpush1.msra.mxu0 0.0
        %2859 = vmatprep.subr.mxu0 0.0
        %2860 = vmatpush1.msra.mxu0 0.0
        %2861 = vmatprep.subr.mxu0 0.0
        %2862 = vmatpush1.msra.mxu0 0.0
        %2863 = vmatprep.subr.mxu0 0.0
        %2864 = vmatpush1.msra.mxu0 0.0
        %2865 = vmatprep.subr.mxu0 0.0
        %2866 = vmatpush1.msra.mxu0 0.0
        %2867 = vmatprep.subr.mxu0 0.0
        %2868 = vmatpush1.msra.mxu0 0.0
        %2869 = vmatprep.subr.mxu0 0.0
        %2870 = vmatpush1.msra.mxu0 0.0
        %2871 = vmatprep.subr.mxu0 0.0
        %2872 = vmatpush1.msra.mxu0 0.0
        %2873 = vmatprep.subr.mxu0 0.0
        %2874 = vmatpush1.msra.mxu0 0.0
        %2875 = vmatprep.subr.mxu0 0.0
        %2876 = vmatpush1.msra.mxu0 0.0
        %2877 = vmatprep.subr.mxu0 0.0
        %2878 = vmatpush1.msra.mxu0 0.0
        %2879 = vmatprep.subr.mxu0 0.0
        %2880 = vmatpush1.msra.mxu0 0.0
        %2881 = vmatprep.subr.mxu0 0.0
        %2882 = vmatpush1.msra.mxu0 0.0
        %2883 = vmatprep.subr.mxu0 0.0
        %2884 = vmatpush1.msra.mxu0 0.0
        %2885 = vmatprep.subr.mxu0 0.0
        %2886 = vmatpush1.msra.mxu0 0.0
        %2887 = vmatprep.subr.mxu0 0.0
        %2888 = vmatpush1.msra.mxu0 0.0
        %2889 = vmatprep.subr.mxu0 0.0
        %2890 = vmatpush1.msra.mxu0 0.0
        %2891 = vmatprep.subr.mxu0 0.0
        %2892 = vmatpush1.msra.mxu0 0.0
        %2893 = vmatprep.subr.mxu0 0.0
        %2894 = vmatpush1.msra.mxu0 0.0
        %2895 = vmatprep.subr.mxu0 0.0
        %2896 = vmatpush1.msra.mxu0 0.0
        %2897 = vmatprep.subr.mxu0 0.0
        %2898 = vmatpush1.msra.mxu0 0.0
        %2899 = vmatprep.subr.mxu0 0.0
        %2900 = vmatpush1.msra.mxu0 0.0
        %2901 = vmatprep.subr.mxu0 0.0
        %2902 = vmatpush1.msra.mxu0 0.0
        %2903 = vmatprep.subr.mxu0 0.0
        %2904 = vmatpush1.msra.mxu0 0.0
        %2905 = vmatprep.subr.mxu0 0.0
        %2906 = vmatpush1.msra.mxu0 0.0
        %2907 = vmatprep.subr.mxu0 0.0
        %2908 = vmatpush1.msra.mxu0 0.0
        %2909 = vmatprep.mubr.f32.mxu0 0.0
        %2910 = vmatmul.mubr.f32.gmra.mrb[0].mxu0 %v2702
        %v2911 = vpop.f32.mrb[0].mxu0
        %v2912 = vadd.f32 %v2479, %v2911
        %v2913 = vpop.f32.mrb[0].mxu0
        %2914 = vmatprep.mubr.f32.mxu0 0.0
        %2915 = vmatmul.mubr.f32.gmra.mrb[0].mxu0 %v2705
        %v2916 = vpop.f32.mrb[0].mxu0
        %v2917 = vadd.f32 %v2484, %v2916
        %v2918 = vpop.f32.mrb[0].mxu0
        %2919 = vmatprep.mubr.f32.mxu0 0.0
        %2920 = vmatmul.mubr.f32.gmra.mrb[0].mxu0 %v2708
        %v2921 = vpop.f32.mrb[0].mxu0
        %v2922 = vpop.f32.mrb[0].mxu0
        %2923 = vmatprep.mubr.f32.mxu0 0.0
        %2924 = vmatmul.mubr.f32.gmra.mrb[0].mxu0 %v2711
        %v2925 = vpop.f32.mrb[0].mxu0
        %v2926 = vadd.f32 %v2493, %v2925
        %v2927 = vpop.f32.mrb[0].mxu0
        %2928 = vmatprep.mubr.f32.mxu0 0.0
        %2929 = vmatmul.mubr.f32.gmra.mrb[0].mxu0 %v2714
        %v2930 = vpop.f32.mrb[0].mxu0
        %v2931 = vadd.f32 %v2498, %v2930
        %v2932 = vpop.f32.mrb[0].mxu0
        %2933 = vmatprep.mubr.f32.mxu0 0.0
        %2934 = vmatmul.mubr.f32.gmra.mrb[0].mxu0 %v2717
        %v2935 = vpop.f32.mrb[0].mxu0
        %v2936 = vpop.f32.mrb[0].mxu0
        %2937 = vmatprep.mubr.f32.mxu0 0.0
        %2938 = vmatmul.mubr.f32.gmra.mrb[0].mxu0 %v2720
        %v2939 = vpop.f32.mrb[0].mxu0
        %v2940 = vadd.f32 %v2507, %v2939
        %v2941 = vpop.f32.mrb[0].mxu0
        %2942 = vmatprep.mubr.f32.mxu0 0.0
        %2943 = vmatmul.mubr.f32.gmra.mrb[0].mxu0 %v2723
        %v2944 = vpop.f32.mrb[0].mxu0
        %v2945 = vadd.f32 %v2512, %v2944
        %v2946 = vpop.f32.mrb[0].mxu0
        %2947 = vmatprep.mubr.f32.mxu0 0.0
        %2948 = vmatmul.mubr.f32.gmra.mrb[0].mxu0 %v2726
        %v2949 = vpop.f32.mrb[0].mxu0
        %v2950 = vpop.f32.mrb[0].mxu0
        %2951 = vmatprep.mubr.f32.mxu0 0.0
        %2952 = vmatmul.mubr.f32.gmra.mrb[0].mxu0 %v2729
        %v2953 = vpop.f32.mrb[0].mxu0
        %v2954 = vadd.f32 %v2521, %v2953
        %v2955 = vpop.f32.mrb[0].mxu0
        %2956 = vmatprep.mubr.f32.mxu0 0.0
        %2957 = vmatmul.mubr.f32.gmra.mrb[0].mxu0 %v2732
        %v2958 = vpop.f32.mrb[0].mxu0
        %v2959 = vadd.f32 %v2526, %v2958
        %v2960 = vpop.f32.mrb[0].mxu0
        %2961 = vmatprep.mubr.f32.mxu0 0.0
        %2962 = vmatmul.mubr.f32.gmra.mrb[0].mxu0 %v2735
        %v2963 = vpop.f32.mrb[0].mxu0
        %v2964 = vpop.f32.mrb[0].mxu0
        %2965 = vmatprep.mubr.f32.mxu0 0.0
        %2966 = vmatmul.mubr.f32.gmra.mrb[0].mxu0 %v2738
        %v2967 = vpop.f32.mrb[0].mxu0
        %v2968 = vadd.f32 %v2535, %v2967
        %v2969 = vpop.f32.mrb[0].mxu0
        %2970 = vmatprep.mubr.f32.mxu0 0.0
        %2971 = vmatmul.mubr.f32.gmra.mrb[0].mxu0 %v2741
        %v2972 = vpop.f32.mrb[0].mxu0
        %v2973 = vadd.f32 %v2540, %v2972
        %v2974 = vpop.f32.mrb[0].mxu0
        %2975 = vmatprep.mubr.f32.mxu0 0.0
        %2976 = vmatmul.mubr.f32.gmra.mrb[0].mxu0 %v2744
        %v2977 = vpop.f32.mrb[0].mxu0
        %v2978 = vpop.f32.mrb[0].mxu0
        %2979 = vmatprep.mubr.f32.mxu0 0.0
        %2980 = vmatmul.mubr.f32.gmra.mrb[0].mxu0 %v2747
        %v2981 = vpop.f32.mrb[0].mxu0
        %v2982 = vadd.f32 %v2549, %v2981
        %v2983 = vpop.f32.mrb[0].mxu0
        %2984 = vmatprep.mubr.f32.mxu0 0.0
        %2985 = vmatmul.mubr.f32.gmra.mrb[0].mxu0 %v2750
        %v2986 = vpop.f32.mrb[0].mxu0
        %v2987 = vadd.f32 %v2554, %v2986
        %v2988 = vpop.f32.mrb[0].mxu0
        %2989 = vmatprep.mubr.f32.mxu0 0.0
        %2990 = vmatmul.mubr.f32.gmra.mrb[0].mxu0 %v2753
        %v2991 = vpop.f32.mrb[0].mxu0
        %v2992 = vpop.f32.mrb[0].mxu0
        %2993 = vmatprep.mubr.f32.mxu0 0.0
        %2994 = vmatmul.mubr.f32.gmra.mrb[0].mxu0 %v2756
        %v2995 = vpop.f32.mrb[0].mxu0
        %v2996 = vadd.f32 %v2563, %v2995
        %v2997 = vpop.f32.mrb[0].mxu0
        %2998 = vmatprep.mubr.f32.mxu0 0.0
        %2999 = vmatmul.mubr.f32.gmra.mrb[0].mxu0 %v2759
        %v3000 = vpop.f32.mrb[0].mxu0
        %v3001 = vadd.f32 %v2568, %v3000
        %v3002 = vpop.f32.mrb[0].mxu0
        %3003 = vmatprep.mubr.f32.mxu0 0.0
        %3004 = vmatmul.mubr.f32.gmra.mrb[0].mxu0 %v2762
        %v3005 = vpop.f32.mrb[0].mxu0
        %v3006 = vpop.f32.mrb[0].mxu0
        %3007 = vmatprep.mubr.f32.mxu0 0.0
        %3008 = vmatmul.mubr.f32.gmra.mrb[0].mxu0 %v2765
        %v3009 = vpop.f32.mrb[0].mxu0
        %v3010 = vadd.f32 %v2577, %v3009
        %v3011 = vpop.f32.mrb[0].mxu0
        %3012 = vmatprep.mubr.f32.mxu0 0.0
        %3013 = vmatmul.mubr.f32.gmra.mrb[0].mxu0 %v2768
        %v3014 = vpop.f32.mrb[0].mxu0
        %v3015 = vadd.f32 %v2582, %v3014
        %v3016 = vpop.f32.mrb[0].mxu0
        %3017 = vmatprep.mubr.f32.mxu0 0.0
        %3018 = vmatmul.mubr.f32.gmra.mrb[0].mxu0 %v2771
        %v3019 = vpop.f32.mrb[0].mxu0
        %v3020 = vpop.f32.mrb[0].mxu0
        %3021 = vmatprep.mubr.f32.mxu0 0.0
        %3022 = vmatmul.mubr.f32.gmra.mrb[0].mxu0 %v2774
        %v3023 = vpop.f32.mrb[0].mxu0
        %v3024 = vadd.f32 %v2591, %v3023
        %v3025 = vpop.f32.mrb[0].mxu0
        %3026 = vmatprep.mubr.f32.mxu0 0.0
        %3027 = vmatmul.mubr.f32.gmra.mrb[0].mxu0 %v2777
        %v3028 = vpop.f32.mrb[0].mxu0
        %v3029 = vadd.f32 %v2596, %v3028
        %v3030 = vpop.f32.mrb[0].mxu0
        %3031 = vmatprep.mubr.f32.mxu0 0.0
        %3032 = vmatmul.mubr.f32.gmra.mrb[0].mxu0 %v2780
        %v3033 = vpop.f32.mrb[0].mxu0
        %v3034 = vpop.f32.mrb[0].mxu0
        %3035 = vmatprep.mubr.f32.mxu0 0.0
        %3036 = vmatmul.mubr.f32.gmra.mrb[0].mxu0 %v2783
        %v3037 = vpop.f32.mrb[0].mxu0
        %v3038 = vadd.f32 %v2605, %v3037
        %v3039 = vpop.f32.mrb[0].mxu0
        %3040 = vmatprep.mubr.f32.mxu0 0.0
        %3041 = vmatmul.mubr.f32.gmra.mrb[0].mxu0 %v2786
        %v3042 = vpop.f32.mrb[0].mxu0
        %v3043 = vadd.f32 %v2610, %v3042
        %v3044 = vpop.f32.mrb[0].mxu0
        %3045 = vmatprep.mubr.f32.mxu0 0.0
        %3046 = vmatmul.mubr.f32.gmra.mrb[0].mxu0 %v2789
        %v3047 = vpop.f32.mrb[0].mxu0
        %v3048 = vpop.f32.mrb[0].mxu0
        %3049 = vmatprep.mubr.f32.mxu0 0.0
        %3050 = vmatmul.mubr.f32.gmra.mrb[0].mxu0 %v2792
        %v3051 = vpop.f32.mrb[0].mxu0
        %v3052 = vadd.f32 %v2619, %v3051
        %v3053 = vpop.f32.mrb[0].mxu0
        %3054 = vmatprep.mubr.f32.mxu0 0.0
        %3055 = vmatmul.mubr.f32.gmra.mrb[0].mxu0 %v2795
        %v3056 = vpop.f32.mrb[0].mxu0
        %v3057 = vadd.f32 %v2624, %v3056
        %v3058 = vpop.f32.mrb[0].mxu0
        %3059 = vmatprep.mubr.f32.mxu0 0.0
        %3060 = vmatmul.mubr.f32.gmra.mrb[0].mxu0 %v2798
        %v3061 = vpop.f32.mrb[0].mxu0
        %v3062 = vpop.f32.mrb[0].mxu0
        %3063 = vmatprep.mubr.f32.mxu0 0.0
        %3064 = vmatmul.mubr.f32.gmra.mrb[0].mxu0 %v2801
        %v3065 = vpop.f32.mrb[0].mxu0
        %v3066 = vadd.f32 %v2633, %v3065
        %v3067 = vpop.f32.mrb[0].mxu0
        %3068 = vmatprep.mubr.f32.mxu0 0.0
        %3069 = vmatmul.mubr.f32.gmra.mrb[0].mxu0 %v2804
        %v3070 = vpop.f32.mrb[0].mxu0
        %v3071 = vadd.f32 %v2638, %v3070
        %v3072 = vpop.f32.mrb[0].mxu0
        %3073 = vmatprep.mubr.f32.mxu0 0.0
        %3074 = vmatmul.mubr.f32.gmra.mrb[0].mxu0 %v2807
        %v3075 = vpop.f32.mrb[0].mxu0
        %v3076 = vpop.f32.mrb[0].mxu0
        %3077 = vmatprep.mubr.f32.mxu0 0.0
        %3078 = vmatmul.mubr.f32.gmra.mrb[0].mxu0 %v2810
        %v3079 = vpop.f32.mrb[0].mxu0
        %v3080 = vadd.f32 %v2647, %v3079
        %v3081 = vpop.f32.mrb[0].mxu0
        %3082 = vmatprep.mubr.f32.mxu0 0.0
        %3083 = vmatmul.mubr.f32.gmra.mrb[0].mxu0 %v2813
        %v3084 = vpop.f32.mrb[0].mxu0
        %v3085 = vadd.f32 %v2652, %v3084
        %v3086 = vpop.f32.mrb[0].mxu0
        %3087 = vmatprep.mubr.f32.mxu0 0.0
        %3088 = vmatmul.mubr.f32.gmra.mrb[0].mxu0 %v2816
        %v3089 = vpop.f32.mrb[0].mxu0
        %v3090 = vpop.f32.mrb[0].mxu0
        %3091 = vmatprep.mubr.f32.mxu0 0.0
        %3092 = vmatmul.mubr.f32.gmra.mrb[0].mxu0 %v2819
        %v3093 = vpop.f32.mrb[0].mxu0
        %v3094 = vadd.f32 %v2661, %v3093
        %v3095 = vpop.f32.mrb[0].mxu0
        %3096 = vmatprep.mubr.f32.mxu0 0.0
        %3097 = vmatmul.mubr.f32.gmra.mrb[0].mxu0 %v2822
        %v3098 = vpop.f32.mrb[0].mxu0
        %v3099 = vadd.f32 %v2666, %v3098
        %v3100 = vpop.f32.mrb[0].mxu0
        %3101 = vmatprep.mubr.f32.mxu0 0.0
        %3102 = vmatmul.mubr.f32.gmra.mrb[0].mxu0 %v2825
        %v3103 = vpop.f32.mrb[0].mxu0
        %v3104 = vpop.f32.mrb[0].mxu0
        %3105 = vmatprep.mubr.f32.mxu0 0.0
        %3106 = vmatmul.mubr.f32.gmra.mrb[0].mxu0 %v2828
        %v3107 = vpop.f32.mrb[0].mxu0
        %v3108 = vadd.f32 %v2675, %v3107
        %v3109 = vpop.f32.mrb[0].mxu0
        %3110 = vmatprep.mubr.f32.mxu0 0.0
        %3111 = vmatmul.mubr.f32.gmra.mrb[0].mxu0 %v2831
        %v3112 = vpop.f32.mrb[0].mxu0
        %v3113 = vadd.f32 %v2680, %v3112
        %v3114 = vpop.f32.mrb[0].mxu0
        %3115 = vmatprep.mubr.f32.mxu0 0.0
        %3116 = vmatmul.mubr.f32.gmra.mrb[0].mxu0 %v2834
        %v3117 = vpop.f32.mrb[0].mxu0
        %v3118 = vpop.f32.mrb[0].mxu0
        %3119 = vmatprep.mubr.f32.mxu0 0.0
        %3120 = vmatmul.mubr.f32.gmra.mrb[0].mxu0 %v2837
        %v3121 = vpop.f32.mrb[0].mxu0
        %v3122 = vadd.f32 %v2689, %v3121
        %v3123 = vpop.f32.mrb[0].mxu0
        %3124 = vmatprep.mubr.f32.mxu0 0.0
        %3125 = vmatmul.mubr.f32.gmra.mrb[0].mxu0 %v2840
        %v3126 = vpop.f32.mrb[0].mxu0
        %v3127 = vadd.f32 %v2694, %v3126
        %v3128 = vpop.f32.mrb[0].mxu0
        %3129 = vmatprep.mubr.f32.mxu0 0.0
        %3130 = vmatmul.mubr.f32.gmra.mrb[0].mxu0 %v2843
        %v3131 = vpop.f32.mrb[0].mxu0
        %v3132 = vpop.f32.mrb[0].mxu0
        %3133 = vdwg.mxu0
        %v3134 = vld [vmem:[#allocation2 + $0x19] sm:$0xff]
        %v3135 = vld [vmem:[#allocation2 + $0x21] sm:$0xff]
        %v3136 = vld [vmem:[#allocation2 + $0x29] sm:$0xff]
        %v3137 = vld [vmem:[#allocation2 + $0x31] sm:$0xff]
        %v3138 = vld [vmem:[#allocation2 + $0x39] sm:$0xff]
        %v3139 = vld [vmem:[#allocation2 + $0x41] sm:$0xff]
        %v3140 = vld [vmem:[#allocation2 + $0x49] sm:$0xff]
        %v3141 = vld [vmem:[#allocation2 + $0x51] sm:$0xff]
        %v3142 = vld [vmem:[#allocation2 + $0x59] sm:$0xff]
        %v3143 = vld [vmem:[#allocation2 + $0x61] sm:$0xff]
        %v3144 = vld [vmem:[#allocation2 + $0x69] sm:$0xff]
        %v3145 = vld [vmem:[#allocation2 + $0x71] sm:$0xff]
        %v3146 = vld [vmem:[#allocation2 + $0x79] sm:$0xff]
        %v3147 = vld [vmem:[#allocation2 + $0x81] sm:$0xff]
        %v3148 = vld [vmem:[#allocation2 + $0x89] sm:$0xff]
        %v3149 = vld [vmem:[#allocation2 + $0x91] sm:$0xff]
        %v3150 = vld [vmem:[#allocation2 + $0x99] sm:$0xff]
        %v3151 = vld [vmem:[#allocation2 + $0xa1] sm:$0xff]
        %v3152 = vld [vmem:[#allocation2 + $0xa9] sm:$0xff]
        %v3153 = vld [vmem:[#allocation2 + $0xb1] sm:$0xff]
        %v3154 = vld [vmem:[#allocation2 + $0xb9] sm:$0xff]
        %v3155 = vld [vmem:[#allocation2 + $0xc1] sm:$0xff]
        %v3156 = vld [vmem:[#allocation2 + $0xc9] sm:$0xff]
        %v3157 = vld [vmem:[#allocation2 + $0xd1] sm:$0xff]
        %v3158 = vld [vmem:[#allocation2 + $0xd9] sm:$0xff]
        %v3159 = vld [vmem:[#allocation2 + $0xe1] sm:$0xff]
        %v3160 = vld [vmem:[#allocation2 + $0xe9] sm:$0xff]
        %v3161 = vld [vmem:[#allocation2 + $0xf1] sm:$0xff]
        %v3162 = vld [vmem:[#allocation2 + $0xf9] sm:$0xff]
        %v3163 = vld [vmem:[#allocation2 + $0x101] sm:$0xff]
        %v3164 = vld [vmem:[#allocation2 + $0x109] sm:$0xff]
        %v3165 = vld [vmem:[#allocation2 + $0x111] sm:$0xff]
        %v3166 = vld [vmem:[#allocation2 + $0x119] sm:$0xff]
        %v3167 = vld [vmem:[#allocation2 + $0x121] sm:$0xff]
        %v3168 = vld [vmem:[#allocation2 + $0x129] sm:$0xff]
        %v3169 = vld [vmem:[#allocation2 + $0x131] sm:$0xff]
        %v3170 = vld [vmem:[#allocation2 + $0x139] sm:$0xff]
        %v3171 = vld [vmem:[#allocation2 + $0x141] sm:$0xff]
        %v3172 = vld [vmem:[#allocation2 + $0x149] sm:$0xff]
        %v3173 = vld [vmem:[#allocation2 + $0x151] sm:$0xff]
        %v3174 = vld [vmem:[#allocation2 + $0x159] sm:$0xff]
        %v3175 = vld [vmem:[#allocation2 + $0x161] sm:$0xff]
        %v3176 = vld [vmem:[#allocation2 + $0x169] sm:$0xff]
        %v3177 = vld [vmem:[#allocation2 + $0x171] sm:$0xff]
        %v3178 = vld [vmem:[#allocation2 + $0x179] sm:$0xff]
        %v3179 = vld [vmem:[#allocation2 + $0x181] sm:$0xff]
        %v3180 = vld [vmem:[#allocation2 + $0x189] sm:$0xff]
        %v3181 = vld [vmem:[#allocation2 + $0x191] sm:$0xff]
        %s3182 = scalar_lea.vmem [#allocation3], 64
        %v3183 = vld [vmem:[%s3182] sm:$0xff]
        %v3184 = vld [vmem:[%s3182 + $0x8] sm:$0xff]
        %v3185 = vld [vmem:[%s3182 + $0x10] sm:$0xff]
        %v3186 = vld [vmem:[%s3182 + $0x18] sm:$0xff]
        %v3188 = vsel %vm346, %v3134, 0
        %v3191 = vsel %vm346, %v3135, 0
        %v3194 = vsel %vm346, %v3136, 0
        %v3197 = vsel %vm346, %v3137, 0
        %v3200 = vsel %vm346, %v3138, 0
        %v3203 = vsel %vm346, %v3139, 0
        %v3206 = vsel %vm346, %v3140, 0
        %v3209 = vsel %vm346, %v3141, 0
        %v3212 = vsel %vm346, %v3142, 0
        %v3215 = vsel %vm346, %v3143, 0
        %v3218 = vsel %vm346, %v3144, 0
        %v3221 = vsel %vm346, %v3145, 0
        %v3224 = vsel %vm346, %v3146, 0
        %v3227 = vsel %vm346, %v3147, 0
        %v3230 = vsel %vm346, %v3148, 0
        %v3233 = vsel %vm346, %v3149, 0
        %v3236 = vsel %vm346, %v3150, 0
        %v3239 = vsel %vm346, %v3151, 0
        %v3242 = vsel %vm346, %v3152, 0
        %v3245 = vsel %vm346, %v3153, 0
        %v3248 = vsel %vm346, %v3154, 0
        %v3251 = vsel %vm346, %v3155, 0
        %v3254 = vsel %vm346, %v3156, 0
        %v3257 = vsel %vm346, %v3157, 0
        %v3260 = vsel %vm346, %v3158, 0
        %v3263 = vsel %vm346, %v3159, 0
        %v3266 = vsel %vm346, %v3160, 0
        %v3269 = vsel %vm346, %v3161, 0
        %v3272 = vsel %vm346, %v3162, 0
        %v3275 = vsel %vm346, %v3163, 0
        %v3278 = vsel %vm346, %v3164, 0
        %v3281 = vsel %vm346, %v3165, 0
        %v3284 = vsel %vm346, %v3166, 0
        %v3287 = vsel %vm346, %v3167, 0
        %v3290 = vsel %vm346, %v3168, 0
        %v3293 = vsel %vm346, %v3169, 0
        %v3296 = vsel %vm346, %v3170, 0
        %v3299 = vsel %vm346, %v3171, 0
        %v3302 = vsel %vm346, %v3172, 0
        %v3305 = vsel %vm346, %v3173, 0
        %v3308 = vsel %vm346, %v3174, 0
        %v3311 = vsel %vm346, %v3175, 0
        %v3314 = vsel %vm346, %v3176, 0
        %v3317 = vsel %vm346, %v3177, 0
        %v3320 = vsel %vm346, %v3178, 0
        %v3323 = vsel %vm346, %v3179, 0
        %v3326 = vsel %vm346, %v3180, 0
        %v3329 = vsel %vm346, %v3181, 0
        %3331 = vmatprep.subr.mxu0 0.0
        %3332 = vmatpush1.msra.mxu0 %v3183
        %3333 = vmatprep.subr.mxu0 0.0
        %3334 = vmatpush1.msra.mxu0 %v3184
        %3335 = vmatprep.subr.mxu0 0.0
        %3336 = vmatpush1.msra.mxu0 %v3185
        %3337 = vmatprep.subr.mxu0 0.0
        %3338 = vmatpush1.msra.mxu0 %v3186
        %3339 = vmatprep.subr.mxu0 0.0
        %3340 = vmatpush1.msra.mxu0 0.0
        %3341 = vmatprep.subr.mxu0 0.0
        %3342 = vmatpush1.msra.mxu0 0.0
        %3343 = vmatprep.subr.mxu0 0.0
        %3344 = vmatpush1.msra.mxu0 0.0
        %3345 = vmatprep.subr.mxu0 0.0
        %3346 = vmatpush1.msra.mxu0 0.0
        %3347 = vmatprep.subr.mxu0 0.0
        %3348 = vmatpush1.msra.mxu0 0.0
        %3349 = vmatprep.subr.mxu0 0.0
        %3350 = vmatpush1.msra.mxu0 0.0
        %3351 = vmatprep.subr.mxu0 0.0
        %3352 = vmatpush1.msra.mxu0 0.0
        %3353 = vmatprep.subr.mxu0 0.0
        %3354 = vmatpush1.msra.mxu0 0.0
        %3355 = vmatprep.subr.mxu0 0.0
        %3356 = vmatpush1.msra.mxu0 0.0
        %3357 = vmatprep.subr.mxu0 0.0
        %3358 = vmatpush1.msra.mxu0 0.0
        %3359 = vmatprep.subr.mxu0 0.0
        %3360 = vmatpush1.msra.mxu0 0.0
        %3361 = vmatprep.subr.mxu0 0.0
        %3362 = vmatpush1.msra.mxu0 0.0
        %3363 = vmatprep.subr.mxu0 0.0
        %3364 = vmatpush1.msra.mxu0 0.0
        %3365 = vmatprep.subr.mxu0 0.0
        %3366 = vmatpush1.msra.mxu0 0.0
        %3367 = vmatprep.subr.mxu0 0.0
        %3368 = vmatpush1.msra.mxu0 0.0
        %3369 = vmatprep.subr.mxu0 0.0
        %3370 = vmatpush1.msra.mxu0 0.0
        %3371 = vmatprep.subr.mxu0 0.0
        %3372 = vmatpush1.msra.mxu0 0.0
        %3373 = vmatprep.subr.mxu0 0.0
        %3374 = vmatpush1.msra.mxu0 0.0
        %3375 = vmatprep.subr.mxu0 0.0
        %3376 = vmatpush1.msra.mxu0 0.0
        %3377 = vmatprep.subr.mxu0 0.0
        %3378 = vmatpush1.msra.mxu0 0.0
        %3379 = vmatprep.subr.mxu0 0.0
        %3380 = vmatpush1.msra.mxu0 0.0
        %3381 = vmatprep.subr.mxu0 0.0
        %3382 = vmatpush1.msra.mxu0 0.0
        %3383 = vmatprep.subr.mxu0 0.0
        %3384 = vmatpush1.msra.mxu0 0.0
        %3385 = vmatprep.subr.mxu0 0.0
        %3386 = vmatpush1.msra.mxu0 0.0
        %3387 = vmatprep.subr.mxu0 0.0
        %3388 = vmatpush1.msra.mxu0 0.0
        %3389 = vmatprep.subr.mxu0 0.0
        %3390 = vmatpush1.msra.mxu0 0.0
        %3391 = vmatprep.subr.mxu0 0.0
        %3392 = vmatpush1.msra.mxu0 0.0
        %3393 = vmatprep.subr.mxu0 0.0
        %3394 = vmatpush1.msra.mxu0 0.0
        %3395 = vmatprep.mubr.f32.mxu0 0.0
        %3396 = vmatmul.mubr.f32.gmra.mrb[0].mxu0 %v3188
        %v3397 = vpop.f32.mrb[0].mxu0
        %v3398 = vadd.f32 0.0, %v3397
        %v3399 = vpop.f32.mrb[0].mxu0
        %3400 = vmatprep.mubr.f32.mxu0 0.0
        %3401 = vmatmul.mubr.f32.gmra.mrb[0].mxu0 %v3191
        %v3402 = vpop.f32.mrb[0].mxu0
        %v3403 = vadd.f32 0.0, %v3402
        %v3404 = vpop.f32.mrb[0].mxu0
        %3405 = vmatprep.mubr.f32.mxu0 0.0
        %3406 = vmatmul.mubr.f32.gmra.mrb[0].mxu0 %v3194
        %v3407 = vpop.f32.mrb[0].mxu0
        %v3408 = vpop.f32.mrb[0].mxu0
        %3409 = vmatprep.mubr.f32.mxu0 0.0
        %3410 = vmatmul.mubr.f32.gmra.mrb[0].mxu0 %v3197
        %v3411 = vpop.f32.mrb[0].mxu0
        %v3412 = vadd.f32 0.0, %v3411
        %v3413 = vpop.f32.mrb[0].mxu0
        %3414 = vmatprep.mubr.f32.mxu0 0.0
        %3415 = vmatmul.mubr.f32.gmra.mrb[0].mxu0 %v3200
        %v3416 = vpop.f32.mrb[0].mxu0
        %v3417 = vadd.f32 0.0, %v3416
        %v3418 = vpop.f32.mrb[0].mxu0
        %3419 = vmatprep.mubr.f32.mxu0 0.0
        %3420 = vmatmul.mubr.f32.gmra.mrb[0].mxu0 %v3203
        %v3421 = vpop.f32.mrb[0].mxu0
        %v3422 = vpop.f32.mrb[0].mxu0
        %3423 = vmatprep.mubr.f32.mxu0 0.0
        %3424 = vmatmul.mubr.f32.gmra.mrb[0].mxu0 %v3206
        %v3425 = vpop.f32.mrb[0].mxu0
        %v3426 = vadd.f32 0.0, %v3425
        %v3427 = vpop.f32.mrb[0].mxu0
        %3428 = vmatprep.mubr.f32.mxu0 0.0
        %3429 = vmatmul.mubr.f32.gmra.mrb[0].mxu0 %v3209
        %v3430 = vpop.f32.mrb[0].mxu0
        %v3431 = vadd.f32 0.0, %v3430
        %v3432 = vpop.f32.mrb[0].mxu0
        %3433 = vmatprep.mubr.f32.mxu0 0.0
        %3434 = vmatmul.mubr.f32.gmra.mrb[0].mxu0 %v3212
        %v3435 = vpop.f32.mrb[0].mxu0
        %v3436 = vpop.f32.mrb[0].mxu0
        %3437 = vmatprep.mubr.f32.mxu0 0.0
        %3438 = vmatmul.mubr.f32.gmra.mrb[0].mxu0 %v3215
        %v3439 = vpop.f32.mrb[0].mxu0
        %v3440 = vadd.f32 0.0, %v3439
        %v3441 = vpop.f32.mrb[0].mxu0
        %3442 = vmatprep.mubr.f32.mxu0 0.0
        %3443 = vmatmul.mubr.f32.gmra.mrb[0].mxu0 %v3218
        %v3444 = vpop.f32.mrb[0].mxu0
        %v3445 = vadd.f32 0.0, %v3444
        %v3446 = vpop.f32.mrb[0].mxu0
        %3447 = vmatprep.mubr.f32.mxu0 0.0
        %3448 = vmatmul.mubr.f32.gmra.mrb[0].mxu0 %v3221
        %v3449 = vpop.f32.mrb[0].mxu0
        %v3450 = vpop.f32.mrb[0].mxu0
        %3451 = vmatprep.mubr.f32.mxu0 0.0
        %3452 = vmatmul.mubr.f32.gmra.mrb[0].mxu0 %v3224
        %v3453 = vpop.f32.mrb[0].mxu0
        %v3454 = vadd.f32 0.0, %v3453
        %v3455 = vpop.f32.mrb[0].mxu0
        %3456 = vmatprep.mubr.f32.mxu0 0.0
        %3457 = vmatmul.mubr.f32.gmra.mrb[0].mxu0 %v3227
        %v3458 = vpop.f32.mrb[0].mxu0
        %v3459 = vadd.f32 0.0, %v3458
        %v3460 = vpop.f32.mrb[0].mxu0
        %3461 = vmatprep.mubr.f32.mxu0 0.0
        %3462 = vmatmul.mubr.f32.gmra.mrb[0].mxu0 %v3230
        %v3463 = vpop.f32.mrb[0].mxu0
        %v3464 = vpop.f32.mrb[0].mxu0
        %3465 = vmatprep.mubr.f32.mxu0 0.0
        %3466 = vmatmul.mubr.f32.gmra.mrb[0].mxu0 %v3233
        %v3467 = vpop.f32.mrb[0].mxu0
        %v3468 = vadd.f32 0.0, %v3467
        %v3469 = vpop.f32.mrb[0].mxu0
        %3470 = vmatprep.mubr.f32.mxu0 0.0
        %3471 = vmatmul.mubr.f32.gmra.mrb[0].mxu0 %v3236
        %v3472 = vpop.f32.mrb[0].mxu0
        %v3473 = vadd.f32 0.0, %v3472
        %v3474 = vpop.f32.mrb[0].mxu0
        %3475 = vmatprep.mubr.f32.mxu0 0.0
        %3476 = vmatmul.mubr.f32.gmra.mrb[0].mxu0 %v3239
        %v3477 = vpop.f32.mrb[0].mxu0
        %v3478 = vpop.f32.mrb[0].mxu0
        %3479 = vmatprep.mubr.f32.mxu0 0.0
        %3480 = vmatmul.mubr.f32.gmra.mrb[0].mxu0 %v3242
        %v3481 = vpop.f32.mrb[0].mxu0
        %v3482 = vadd.f32 0.0, %v3481
        %v3483 = vpop.f32.mrb[0].mxu0
        %3484 = vmatprep.mubr.f32.mxu0 0.0
        %3485 = vmatmul.mubr.f32.gmra.mrb[0].mxu0 %v3245
        %v3486 = vpop.f32.mrb[0].mxu0
        %v3487 = vadd.f32 0.0, %v3486
        %v3488 = vpop.f32.mrb[0].mxu0
        %3489 = vmatprep.mubr.f32.mxu0 0.0
        %3490 = vmatmul.mubr.f32.gmra.mrb[0].mxu0 %v3248
        %v3491 = vpop.f32.mrb[0].mxu0
        %v3492 = vpop.f32.mrb[0].mxu0
        %3493 = vmatprep.mubr.f32.mxu0 0.0
        %3494 = vmatmul.mubr.f32.gmra.mrb[0].mxu0 %v3251
        %v3495 = vpop.f32.mrb[0].mxu0
        %v3496 = vadd.f32 0.0, %v3495
        %v3497 = vpop.f32.mrb[0].mxu0
        %3498 = vmatprep.mubr.f32.mxu0 0.0
        %3499 = vmatmul.mubr.f32.gmra.mrb[0].mxu0 %v3254
        %v3500 = vpop.f32.mrb[0].mxu0
        %v3501 = vadd.f32 0.0, %v3500
        %v3502 = vpop.f32.mrb[0].mxu0
        %3503 = vmatprep.mubr.f32.mxu0 0.0
        %3504 = vmatmul.mubr.f32.gmra.mrb[0].mxu0 %v3257
        %v3505 = vpop.f32.mrb[0].mxu0
        %v3506 = vpop.f32.mrb[0].mxu0
        %3507 = vmatprep.mubr.f32.mxu0 0.0
        %3508 = vmatmul.mubr.f32.gmra.mrb[0].mxu0 %v3260
        %v3509 = vpop.f32.mrb[0].mxu0
        %v3510 = vadd.f32 0.0, %v3509
        %v3511 = vpop.f32.mrb[0].mxu0
        %3512 = vmatprep.mubr.f32.mxu0 0.0
        %3513 = vmatmul.mubr.f32.gmra.mrb[0].mxu0 %v3263
        %v3514 = vpop.f32.mrb[0].mxu0
        %v3515 = vadd.f32 0.0, %v3514
        %v3516 = vpop.f32.mrb[0].mxu0
        %3517 = vmatprep.mubr.f32.mxu0 0.0
        %3518 = vmatmul.mubr.f32.gmra.mrb[0].mxu0 %v3266
        %v3519 = vpop.f32.mrb[0].mxu0
        %v3520 = vpop.f32.mrb[0].mxu0
        %3521 = vmatprep.mubr.f32.mxu0 0.0
        %3522 = vmatmul.mubr.f32.gmra.mrb[0].mxu0 %v3269
        %v3523 = vpop.f32.mrb[0].mxu0
        %v3524 = vadd.f32 0.0, %v3523
        %v3525 = vpop.f32.mrb[0].mxu0
        %3526 = vmatprep.mubr.f32.mxu0 0.0
        %3527 = vmatmul.mubr.f32.gmra.mrb[0].mxu0 %v3272
        %v3528 = vpop.f32.mrb[0].mxu0
        %v3529 = vadd.f32 0.0, %v3528
        %v3530 = vpop.f32.mrb[0].mxu0
        %3531 = vmatprep.mubr.f32.mxu0 0.0
        %3532 = vmatmul.mubr.f32.gmra.mrb[0].mxu0 %v3275
        %v3533 = vpop.f32.mrb[0].mxu0
        %v3534 = vpop.f32.mrb[0].mxu0
        %3535 = vmatprep.mubr.f32.mxu0 0.0
        %3536 = vmatmul.mubr.f32.gmra.mrb[0].mxu0 %v3278
        %v3537 = vpop.f32.mrb[0].mxu0
        %v3538 = vadd.f32 0.0, %v3537
        %v3539 = vpop.f32.mrb[0].mxu0
        %3540 = vmatprep.mubr.f32.mxu0 0.0
        %3541 = vmatmul.mubr.f32.gmra.mrb[0].mxu0 %v3281
        %v3542 = vpop.f32.mrb[0].mxu0
        %v3543 = vadd.f32 0.0, %v3542
        %v3544 = vpop.f32.mrb[0].mxu0
        %3545 = vmatprep.mubr.f32.mxu0 0.0
        %3546 = vmatmul.mubr.f32.gmra.mrb[0].mxu0 %v3284
        %v3547 = vpop.f32.mrb[0].mxu0
        %v3548 = vpop.f32.mrb[0].mxu0
        %3549 = vmatprep.mubr.f32.mxu0 0.0
        %3550 = vmatmul.mubr.f32.gmra.mrb[0].mxu0 %v3287
        %v3551 = vpop.f32.mrb[0].mxu0
        %v3552 = vadd.f32 0.0, %v3551
        %v3553 = vpop.f32.mrb[0].mxu0
        %3554 = vmatprep.mubr.f32.mxu0 0.0
        %3555 = vmatmul.mubr.f32.gmra.mrb[0].mxu0 %v3290
        %v3556 = vpop.f32.mrb[0].mxu0
        %v3557 = vadd.f32 0.0, %v3556
        %v3558 = vpop.f32.mrb[0].mxu0
        %3559 = vmatprep.mubr.f32.mxu0 0.0
        %3560 = vmatmul.mubr.f32.gmra.mrb[0].mxu0 %v3293
        %v3561 = vpop.f32.mrb[0].mxu0
        %v3562 = vpop.f32.mrb[0].mxu0
        %3563 = vmatprep.mubr.f32.mxu0 0.0
        %3564 = vmatmul.mubr.f32.gmra.mrb[0].mxu0 %v3296
        %v3565 = vpop.f32.mrb[0].mxu0
        %v3566 = vadd.f32 0.0, %v3565
        %v3567 = vpop.f32.mrb[0].mxu0
        %3568 = vmatprep.mubr.f32.mxu0 0.0
        %3569 = vmatmul.mubr.f32.gmra.mrb[0].mxu0 %v3299
        %v3570 = vpop.f32.mrb[0].mxu0
        %v3571 = vadd.f32 0.0, %v3570
        %v3572 = vpop.f32.mrb[0].mxu0
        %3573 = vmatprep.mubr.f32.mxu0 0.0
        %3574 = vmatmul.mubr.f32.gmra.mrb[0].mxu0 %v3302
        %v3575 = vpop.f32.mrb[0].mxu0
        %v3576 = vpop.f32.mrb[0].mxu0
        %3577 = vmatprep.mubr.f32.mxu0 0.0
        %3578 = vmatmul.mubr.f32.gmra.mrb[0].mxu0 %v3305
        %v3579 = vpop.f32.mrb[0].mxu0
        %v3580 = vadd.f32 0.0, %v3579
        %v3581 = vpop.f32.mrb[0].mxu0
        %3582 = vmatprep.mubr.f32.mxu0 0.0
        %3583 = vmatmul.mubr.f32.gmra.mrb[0].mxu0 %v3308
        %v3584 = vpop.f32.mrb[0].mxu0
        %v3585 = vadd.f32 0.0, %v3584
        %v3586 = vpop.f32.mrb[0].mxu0
        %3587 = vmatprep.mubr.f32.mxu0 0.0
        %3588 = vmatmul.mubr.f32.gmra.mrb[0].mxu0 %v3311
        %v3589 = vpop.f32.mrb[0].mxu0
        %v3590 = vpop.f32.mrb[0].mxu0
        %3591 = vmatprep.mubr.f32.mxu0 0.0
        %3592 = vmatmul.mubr.f32.gmra.mrb[0].mxu0 %v3314
        %v3593 = vpop.f32.mrb[0].mxu0
        %v3594 = vadd.f32 0.0, %v3593
        %v3595 = vpop.f32.mrb[0].mxu0
        %3596 = vmatprep.mubr.f32.mxu0 0.0
        %3597 = vmatmul.mubr.f32.gmra.mrb[0].mxu0 %v3317
        %v3598 = vpop.f32.mrb[0].mxu0
        %v3599 = vadd.f32 0.0, %v3598
        %v3600 = vpop.f32.mrb[0].mxu0
        %3601 = vmatprep.mubr.f32.mxu0 0.0
        %3602 = vmatmul.mubr.f32.gmra.mrb[0].mxu0 %v3320
        %v3603 = vpop.f32.mrb[0].mxu0
        %v3604 = vpop.f32.mrb[0].mxu0
        %3605 = vmatprep.mubr.f32.mxu0 0.0
        %3606 = vmatmul.mubr.f32.gmra.mrb[0].mxu0 %v3323
        %v3607 = vpop.f32.mrb[0].mxu0
        %v3608 = vadd.f32 0.0, %v3607
        %v3609 = vpop.f32.mrb[0].mxu0
        %3610 = vmatprep.mubr.f32.mxu0 0.0
        %3611 = vmatmul.mubr.f32.gmra.mrb[0].mxu0 %v3326
        %v3612 = vpop.f32.mrb[0].mxu0
        %v3613 = vadd.f32 0.0, %v3612
        %v3614 = vpop.f32.mrb[0].mxu0
        %3615 = vmatprep.mubr.f32.mxu0 0.0
        %3616 = vmatmul.mubr.f32.gmra.mrb[0].mxu0 %v3329
        %v3617 = vpop.f32.mrb[0].mxu0
        %v3618 = vpop.f32.mrb[0].mxu0
        %3619 = vdwg.mxu0
        %v3620 = vadd.f32 %v2912, %v3398
        %v3621 = vadd.f32 %v2917, %v3403
        %v3622 = vadd.f32 %v2926, %v3412
        %v3623 = vadd.f32 %v2931, %v3417
        %v3624 = vadd.f32 %v2940, %v3426
        %v3625 = vadd.f32 %v2945, %v3431
        %v3626 = vadd.f32 %v2954, %v3440
        %v3627 = vadd.f32 %v2959, %v3445
        %v3628 = vadd.f32 %v2968, %v3454
        %v3629 = vadd.f32 %v2973, %v3459
        %v3630 = vadd.f32 %v2982, %v3468
        %v3631 = vadd.f32 %v2987, %v3473
        %v3632 = vadd.f32 %v2996, %v3482
        %v3633 = vadd.f32 %v3001, %v3487
        %v3634 = vadd.f32 %v3010, %v3496
        %v3635 = vadd.f32 %v3015, %v3501
        %v3636 = vadd.f32 %v3024, %v3510
        %v3637 = vadd.f32 %v3029, %v3515
        %v3638 = vadd.f32 %v3038, %v3524
        %v3639 = vadd.f32 %v3043, %v3529
        %v3640 = vadd.f32 %v3052, %v3538
        %v3641 = vadd.f32 %v3057, %v3543
        %v3642 = vadd.f32 %v3066, %v3552
        %v3643 = vadd.f32 %v3071, %v3557
        %v3644 = vadd.f32 %v3080, %v3566
        %v3645 = vadd.f32 %v3085, %v3571
        %v3646 = vadd.f32 %v3094, %v3580
        %v3647 = vadd.f32 %v3099, %v3585
        %v3648 = vadd.f32 %v3108, %v3594
        %v3649 = vadd.f32 %v3113, %v3599
        %v3650 = vadd.f32 %v3122, %v3608
        %v3651 = vadd.f32 %v3127, %v3613
        %v3652 = vld [vmem:[#allocation2 + $0x2f] sm:$0xff]
        %v3653 = vld [vmem:[#allocation2 + $0x37] sm:$0xff]
        %v3654 = vld [vmem:[#allocation2 + $0x3f] sm:$0xff]
        %v3655 = vld [vmem:[#allocation2 + $0x47] sm:$0xff]
        %v3656 = vld [vmem:[#allocation2 + $0x4f] sm:$0xff]
        %v3657 = vld [vmem:[#allocation2 + $0x57] sm:$0xff]
        %v3658 = vld [vmem:[#allocation2 + $0x5f] sm:$0xff]
        %v3659 = vld [vmem:[#allocation2 + $0x67] sm:$0xff]
        %v3660 = vld [vmem:[#allocation2 + $0x6f] sm:$0xff]
        %v3661 = vld [vmem:[#allocation2 + $0x77] sm:$0xff]
        %v3662 = vld [vmem:[#allocation2 + $0x7f] sm:$0xff]
        %v3663 = vld [vmem:[#allocation2 + $0x87] sm:$0xff]
        %v3664 = vld [vmem:[#allocation2 + $0x8f] sm:$0xff]
        %v3665 = vld [vmem:[#allocation2 + $0x97] sm:$0xff]
        %v3666 = vld [vmem:[#allocation2 + $0x9f] sm:$0xff]
        %v3667 = vld [vmem:[#allocation2 + $0xa7] sm:$0xff]
        %v3668 = vld [vmem:[#allocation2 + $0xaf] sm:$0xff]
        %v3669 = vld [vmem:[#allocation2 + $0xb7] sm:$0xff]
        %v3670 = vld [vmem:[#allocation2 + $0xbf] sm:$0xff]
        %v3671 = vld [vmem:[#allocation2 + $0xc7] sm:$0xff]
        %v3672 = vld [vmem:[#allocation2 + $0xcf] sm:$0xff]
        %v3673 = vld [vmem:[#allocation2 + $0xd7] sm:$0xff]
        %v3674 = vld [vmem:[#allocation2 + $0xdf] sm:$0xff]
        %v3675 = vld [vmem:[#allocation2 + $0xe7] sm:$0xff]
        %v3676 = vld [vmem:[#allocation2 + $0xef] sm:$0xff]
        %v3677 = vld [vmem:[#allocation2 + $0xf7] sm:$0xff]
        %v3678 = vld [vmem:[#allocation2 + $0xff] sm:$0xff]
        %v3679 = vld [vmem:[#allocation2 + $0x107] sm:$0xff]
        %v3680 = vld [vmem:[#allocation2 + $0x10f] sm:$0xff]
        %v3681 = vld [vmem:[#allocation2 + $0x117] sm:$0xff]
        %v3682 = vld [vmem:[#allocation2 + $0x11f] sm:$0xff]
        %v3683 = vld [vmem:[#allocation2 + $0x127] sm:$0xff]
        %v3684 = vld [vmem:[#allocation2 + $0x12f] sm:$0xff]
        %v3685 = vld [vmem:[#allocation2 + $0x137] sm:$0xff]
        %v3686 = vld [vmem:[#allocation2 + $0x13f] sm:$0xff]
        %v3687 = vld [vmem:[#allocation2 + $0x147] sm:$0xff]
        %v3688 = vld [vmem:[#allocation2 + $0x14f] sm:$0xff]
        %v3689 = vld [vmem:[#allocation2 + $0x157] sm:$0xff]
        %v3690 = vld [vmem:[#allocation2 + $0x15f] sm:$0xff]
        %v3691 = vld [vmem:[#allocation2 + $0x167] sm:$0xff]
        %v3692 = vld [vmem:[#allocation2 + $0x16f] sm:$0xff]
        %v3693 = vld [vmem:[#allocation2 + $0x177] sm:$0xff]
        %v3694 = vld [vmem:[#allocation2 + $0x17f] sm:$0xff]
        %v3695 = vld [vmem:[#allocation2 + $0x187] sm:$0xff]
        %v3696 = vld [vmem:[#allocation2 + $0x18f] sm:$0xff]
        %v3697 = vld [vmem:[#allocation2 + $0x197] sm:$0xff]
        %v3698 = vld [vmem:[#allocation2 + $0x19f] sm:$0xff]
        %v3699 = vld [vmem:[#allocation2 + $0x1a7] sm:$0xff]
        %s3700 = scalar_lea.vmem [#allocation3], 96
        %v3701 = vld [vmem:[%s3700] sm:$0xff]
        %v3702 = vld [vmem:[%s3700 + $0x8] sm:$0xff]
        %v3703 = vld [vmem:[%s3700 + $0x10] sm:$0xff]
        %v3704 = vld [vmem:[%s3700 + $0x18] sm:$0xff]
        %v3706 = vsel %vm346, %v3652, 0
        %v3709 = vsel %vm346, %v3653, 0
        %v3712 = vsel %vm346, %v3654, 0
        %v3715 = vsel %vm346, %v3655, 0
        %v3718 = vsel %vm346, %v3656, 0
        %v3721 = vsel %vm346, %v3657, 0
        %v3724 = vsel %vm346, %v3658, 0
        %v3727 = vsel %vm346, %v3659, 0
        %v3730 = vsel %vm346, %v3660, 0
        %v3733 = vsel %vm346, %v3661, 0
        %v3736 = vsel %vm346, %v3662, 0
        %v3739 = vsel %vm346, %v3663, 0
        %v3742 = vsel %vm346, %v3664, 0
        %v3745 = vsel %vm346, %v3665, 0
        %v3748 = vsel %vm346, %v3666, 0
        %v3751 = vsel %vm346, %v3667, 0
        %v3754 = vsel %vm346, %v3668, 0
        %v3757 = vsel %vm346, %v3669, 0
        %v3760 = vsel %vm346, %v3670, 0
        %v3763 = vsel %vm346, %v3671, 0
        %v3766 = vsel %vm346, %v3672, 0
        %v3769 = vsel %vm346, %v3673, 0
        %v3772 = vsel %vm346, %v3674, 0
        %v3775 = vsel %vm346, %v3675, 0
        %v3778 = vsel %vm346, %v3676, 0
        %v3781 = vsel %vm346, %v3677, 0
        %v3784 = vsel %vm346, %v3678, 0
        %v3787 = vsel %vm346, %v3679, 0
        %v3790 = vsel %vm346, %v3680, 0
        %v3793 = vsel %vm346, %v3681, 0
        %v3796 = vsel %vm346, %v3682, 0
        %v3799 = vsel %vm346, %v3683, 0
        %v3802 = vsel %vm346, %v3684, 0
        %v3805 = vsel %vm346, %v3685, 0
        %v3808 = vsel %vm346, %v3686, 0
        %v3811 = vsel %vm346, %v3687, 0
        %v3814 = vsel %vm346, %v3688, 0
        %v3817 = vsel %vm346, %v3689, 0
        %v3820 = vsel %vm346, %v3690, 0
        %v3823 = vsel %vm346, %v3691, 0
        %v3826 = vsel %vm346, %v3692, 0
        %v3829 = vsel %vm346, %v3693, 0
        %v3832 = vsel %vm346, %v3694, 0
        %v3835 = vsel %vm346, %v3695, 0
        %v3838 = vsel %vm346, %v3696, 0
        %v3841 = vsel %vm346, %v3697, 0
        %v3844 = vsel %vm346, %v3698, 0
        %v3847 = vsel %vm346, %v3699, 0
        %3849 = vmatprep.subr.mxu0 0.0
        %3850 = vmatpush1.msra.mxu0 %v3701
        %3851 = vmatprep.subr.mxu0 0.0
        %3852 = vmatpush1.msra.mxu0 %v3702
        %3853 = vmatprep.subr.mxu0 0.0
        %3854 = vmatpush1.msra.mxu0 %v3703
        %3855 = vmatprep.subr.mxu0 0.0
        %3856 = vmatpush1.msra.mxu0 %v3704
        %3857 = vmatprep.subr.mxu0 0.0
        %3858 = vmatpush1.msra.mxu0 0.0
        %3859 = vmatprep.subr.mxu0 0.0
        %3860 = vmatpush1.msra.mxu0 0.0
        %3861 = vmatprep.subr.mxu0 0.0
        %3862 = vmatpush1.msra.mxu0 0.0
        %3863 = vmatprep.subr.mxu0 0.0
        %3864 = vmatpush1.msra.mxu0 0.0
        %3865 = vmatprep.subr.mxu0 0.0
        %3866 = vmatpush1.msra.mxu0 0.0
        %3867 = vmatprep.subr.mxu0 0.0
        %3868 = vmatpush1.msra.mxu0 0.0
        %3869 = vmatprep.subr.mxu0 0.0
        %3870 = vmatpush1.msra.mxu0 0.0
        %3871 = vmatprep.subr.mxu0 0.0
        %3872 = vmatpush1.msra.mxu0 0.0
        %3873 = vmatprep.subr.mxu0 0.0
        %3874 = vmatpush1.msra.mxu0 0.0
        %3875 = vmatprep.subr.mxu0 0.0
        %3876 = vmatpush1.msra.mxu0 0.0
        %3877 = vmatprep.subr.mxu0 0.0
        %3878 = vmatpush1.msra.mxu0 0.0
        %3879 = vmatprep.subr.mxu0 0.0
        %3880 = vmatpush1.msra.mxu0 0.0
        %3881 = vmatprep.subr.mxu0 0.0
        %3882 = vmatpush1.msra.mxu0 0.0
        %3883 = vmatprep.subr.mxu0 0.0
        %3884 = vmatpush1.msra.mxu0 0.0
        %3885 = vmatprep.subr.mxu0 0.0
        %3886 = vmatpush1.msra.mxu0 0.0
        %3887 = vmatprep.subr.mxu0 0.0
        %3888 = vmatpush1.msra.mxu0 0.0
        %3889 = vmatprep.subr.mxu0 0.0
        %3890 = vmatpush1.msra.mxu0 0.0
        %3891 = vmatprep.subr.mxu0 0.0
        %3892 = vmatpush1.msra.mxu0 0.0
        %3893 = vmatprep.subr.mxu0 0.0
        %3894 = vmatpush1.msra.mxu0 0.0
        %3895 = vmatprep.subr.mxu0 0.0
        %3896 = vmatpush1.msra.mxu0 0.0
        %3897 = vmatprep.subr.mxu0 0.0
        %3898 = vmatpush1.msra.mxu0 0.0
        %3899 = vmatprep.subr.mxu0 0.0
        %3900 = vmatpush1.msra.mxu0 0.0
        %3901 = vmatprep.subr.mxu0 0.0
        %3902 = vmatpush1.msra.mxu0 0.0
        %3903 = vmatprep.subr.mxu0 0.0
        %3904 = vmatpush1.msra.mxu0 0.0
        %3905 = vmatprep.subr.mxu0 0.0
        %3906 = vmatpush1.msra.mxu0 0.0
        %3907 = vmatprep.subr.mxu0 0.0
        %3908 = vmatpush1.msra.mxu0 0.0
        %3909 = vmatprep.subr.mxu0 0.0
        %3910 = vmatpush1.msra.mxu0 0.0
        %3911 = vmatprep.subr.mxu0 0.0
        %3912 = vmatpush1.msra.mxu0 0.0
        %3913 = vmatprep.mubr.f32.mxu0 0.0
        %3914 = vmatmul.mubr.f32.gmra.mrb[0].mxu0 %v3706
        %v3915 = vpop.f32.mrb[0].mxu0
        %v3916 = vadd.f32 0.0, %v3915
        %v3917 = vpop.f32.mrb[0].mxu0
        %3918 = vmatprep.mubr.f32.mxu0 0.0
        %3919 = vmatmul.mubr.f32.gmra.mrb[0].mxu0 %v3709
        %v3920 = vpop.f32.mrb[0].mxu0
        %v3921 = vadd.f32 0.0, %v3920
        %v3922 = vpop.f32.mrb[0].mxu0
        %3923 = vmatprep.mubr.f32.mxu0 0.0
        %3924 = vmatmul.mubr.f32.gmra.mrb[0].mxu0 %v3712
        %v3925 = vpop.f32.mrb[0].mxu0
        %v3926 = vpop.f32.mrb[0].mxu0
        %3927 = vmatprep.mubr.f32.mxu0 0.0
        %3928 = vmatmul.mubr.f32.gmra.mrb[0].mxu0 %v3715
        %v3929 = vpop.f32.mrb[0].mxu0
        %v3930 = vadd.f32 0.0, %v3929
        %v3931 = vpop.f32.mrb[0].mxu0
        %3932 = vmatprep.mubr.f32.mxu0 0.0
        %3933 = vmatmul.mubr.f32.gmra.mrb[0].mxu0 %v3718
        %v3934 = vpop.f32.mrb[0].mxu0
        %v3935 = vadd.f32 0.0, %v3934
        %v3936 = vpop.f32.mrb[0].mxu0
        %3937 = vmatprep.mubr.f32.mxu0 0.0
        %3938 = vmatmul.mubr.f32.gmra.mrb[0].mxu0 %v3721
        %v3939 = vpop.f32.mrb[0].mxu0
        %v3940 = vpop.f32.mrb[0].mxu0
        %3941 = vmatprep.mubr.f32.mxu0 0.0
        %3942 = vmatmul.mubr.f32.gmra.mrb[0].mxu0 %v3724
        %v3943 = vpop.f32.mrb[0].mxu0
        %v3944 = vadd.f32 0.0, %v3943
        %v3945 = vpop.f32.mrb[0].mxu0
        %3946 = vmatprep.mubr.f32.mxu0 0.0
        %3947 = vmatmul.mubr.f32.gmra.mrb[0].mxu0 %v3727
        %v3948 = vpop.f32.mrb[0].mxu0
        %v3949 = vadd.f32 0.0, %v3948
        %v3950 = vpop.f32.mrb[0].mxu0
        %3951 = vmatprep.mubr.f32.mxu0 0.0
        %3952 = vmatmul.mubr.f32.gmra.mrb[0].mxu0 %v3730
        %v3953 = vpop.f32.mrb[0].mxu0
        %v3954 = vpop.f32.mrb[0].mxu0
        %3955 = vmatprep.mubr.f32.mxu0 0.0
        %3956 = vmatmul.mubr.f32.gmra.mrb[0].mxu0 %v3733
        %v3957 = vpop.f32.mrb[0].mxu0
        %v3958 = vadd.f32 0.0, %v3957
        %v3959 = vpop.f32.mrb[0].mxu0
        %3960 = vmatprep.mubr.f32.mxu0 0.0
        %3961 = vmatmul.mubr.f32.gmra.mrb[0].mxu0 %v3736
        %v3962 = vpop.f32.mrb[0].mxu0
        %v3963 = vadd.f32 0.0, %v3962
        %v3964 = vpop.f32.mrb[0].mxu0
        %3965 = vmatprep.mubr.f32.mxu0 0.0
        %3966 = vmatmul.mubr.f32.gmra.mrb[0].mxu0 %v3739
        %v3967 = vpop.f32.mrb[0].mxu0
        %v3968 = vpop.f32.mrb[0].mxu0
        %3969 = vmatprep.mubr.f32.mxu0 0.0
        %3970 = vmatmul.mubr.f32.gmra.mrb[0].mxu0 %v3742
        %v3971 = vpop.f32.mrb[0].mxu0
        %v3972 = vadd.f32 0.0, %v3971
        %v3973 = vpop.f32.mrb[0].mxu0
        %3974 = vmatprep.mubr.f32.mxu0 0.0
        %3975 = vmatmul.mubr.f32.gmra.mrb[0].mxu0 %v3745
        %v3976 = vpop.f32.mrb[0].mxu0
        %v3977 = vadd.f32 0.0, %v3976
        %v3978 = vpop.f32.mrb[0].mxu0
        %3979 = vmatprep.mubr.f32.mxu0 0.0
        %3980 = vmatmul.mubr.f32.gmra.mrb[0].mxu0 %v3748
        %v3981 = vpop.f32.mrb[0].mxu0
        %v3982 = vpop.f32.mrb[0].mxu0
        %3983 = vmatprep.mubr.f32.mxu0 0.0
        %3984 = vmatmul.mubr.f32.gmra.mrb[0].mxu0 %v3751
        %v3985 = vpop.f32.mrb[0].mxu0
        %v3986 = vadd.f32 0.0, %v3985
        %v3987 = vpop.f32.mrb[0].mxu0
        %3988 = vmatprep.mubr.f32.mxu0 0.0
        %3989 = vmatmul.mubr.f32.gmra.mrb[0].mxu0 %v3754
        %v3990 = vpop.f32.mrb[0].mxu0
        %v3991 = vadd.f32 0.0, %v3990
        %v3992 = vpop.f32.mrb[0].mxu0
        %3993 = vmatprep.mubr.f32.mxu0 0.0
        %3994 = vmatmul.mubr.f32.gmra.mrb[0].mxu0 %v3757
        %v3995 = vpop.f32.mrb[0].mxu0
        %v3996 = vpop.f32.mrb[0].mxu0
        %3997 = vmatprep.mubr.f32.mxu0 0.0
        %3998 = vmatmul.mubr.f32.gmra.mrb[0].mxu0 %v3760
        %v3999 = vpop.f32.mrb[0].mxu0
        %v4000 = vadd.f32 0.0, %v3999
        %v4001 = vpop.f32.mrb[0].mxu0
        %4002 = vmatprep.mubr.f32.mxu0 0.0
        %4003 = vmatmul.mubr.f32.gmra.mrb[0].mxu0 %v3763
        %v4004 = vpop.f32.mrb[0].mxu0
        %v4005 = vadd.f32 0.0, %v4004
        %v4006 = vpop.f32.mrb[0].mxu0
        %4007 = vmatprep.mubr.f32.mxu0 0.0
        %4008 = vmatmul.mubr.f32.gmra.mrb[0].mxu0 %v3766
        %v4009 = vpop.f32.mrb[0].mxu0
        %v4010 = vpop.f32.mrb[0].mxu0
        %4011 = vmatprep.mubr.f32.mxu0 0.0
        %4012 = vmatmul.mubr.f32.gmra.mrb[0].mxu0 %v3769
        %v4013 = vpop.f32.mrb[0].mxu0
        %v4014 = vadd.f32 0.0, %v4013
        %v4015 = vpop.f32.mrb[0].mxu0
        %4016 = vmatprep.mubr.f32.mxu0 0.0
        %4017 = vmatmul.mubr.f32.gmra.mrb[0].mxu0 %v3772
        %v4018 = vpop.f32.mrb[0].mxu0
        %v4019 = vadd.f32 0.0, %v4018
        %v4020 = vpop.f32.mrb[0].mxu0
        %4021 = vmatprep.mubr.f32.mxu0 0.0
        %4022 = vmatmul.mubr.f32.gmra.mrb[0].mxu0 %v3775
        %v4023 = vpop.f32.mrb[0].mxu0
        %v4024 = vpop.f32.mrb[0].mxu0
        %4025 = vmatprep.mubr.f32.mxu0 0.0
        %4026 = vmatmul.mubr.f32.gmra.mrb[0].mxu0 %v3778
        %v4027 = vpop.f32.mrb[0].mxu0
        %v4028 = vadd.f32 0.0, %v4027
        %v4029 = vpop.f32.mrb[0].mxu0
        %4030 = vmatprep.mubr.f32.mxu0 0.0
        %4031 = vmatmul.mubr.f32.gmra.mrb[0].mxu0 %v3781
        %v4032 = vpop.f32.mrb[0].mxu0
        %v4033 = vadd.f32 0.0, %v4032
        %v4034 = vpop.f32.mrb[0].mxu0
        %4035 = vmatprep.mubr.f32.mxu0 0.0
        %4036 = vmatmul.mubr.f32.gmra.mrb[0].mxu0 %v3784
        %v4037 = vpop.f32.mrb[0].mxu0
        %v4038 = vpop.f32.mrb[0].mxu0
        %4039 = vmatprep.mubr.f32.mxu0 0.0
        %4040 = vmatmul.mubr.f32.gmra.mrb[0].mxu0 %v3787
        %v4041 = vpop.f32.mrb[0].mxu0
        %v4042 = vadd.f32 0.0, %v4041
        %v4043 = vpop.f32.mrb[0].mxu0
        %4044 = vmatprep.mubr.f32.mxu0 0.0
        %4045 = vmatmul.mubr.f32.gmra.mrb[0].mxu0 %v3790
        %v4046 = vpop.f32.mrb[0].mxu0
        %v4047 = vadd.f32 0.0, %v4046
        %v4048 = vpop.f32.mrb[0].mxu0
        %4049 = vmatprep.mubr.f32.mxu0 0.0
        %4050 = vmatmul.mubr.f32.gmra.mrb[0].mxu0 %v3793
        %v4051 = vpop.f32.mrb[0].mxu0
        %v4052 = vpop.f32.mrb[0].mxu0
        %4053 = vmatprep.mubr.f32.mxu0 0.0
        %4054 = vmatmul.mubr.f32.gmra.mrb[0].mxu0 %v3796
        %v4055 = vpop.f32.mrb[0].mxu0
        %v4056 = vadd.f32 0.0, %v4055
        %v4057 = vpop.f32.mrb[0].mxu0
        %4058 = vmatprep.mubr.f32.mxu0 0.0
        %4059 = vmatmul.mubr.f32.gmra.mrb[0].mxu0 %v3799
        %v4060 = vpop.f32.mrb[0].mxu0
        %v4061 = vadd.f32 0.0, %v4060
        %v4062 = vpop.f32.mrb[0].mxu0
        %4063 = vmatprep.mubr.f32.mxu0 0.0
        %4064 = vmatmul.mubr.f32.gmra.mrb[0].mxu0 %v3802
        %v4065 = vpop.f32.mrb[0].mxu0
        %v4066 = vpop.f32.mrb[0].mxu0
        %4067 = vmatprep.mubr.f32.mxu0 0.0
        %4068 = vmatmul.mubr.f32.gmra.mrb[0].mxu0 %v3805
        %v4069 = vpop.f32.mrb[0].mxu0
        %v4070 = vadd.f32 0.0, %v4069
        %v4071 = vpop.f32.mrb[0].mxu0
        %4072 = vmatprep.mubr.f32.mxu0 0.0
        %4073 = vmatmul.mubr.f32.gmra.mrb[0].mxu0 %v3808
        %v4074 = vpop.f32.mrb[0].mxu0
        %v4075 = vadd.f32 0.0, %v4074
        %v4076 = vpop.f32.mrb[0].mxu0
        %4077 = vmatprep.mubr.f32.mxu0 0.0
        %4078 = vmatmul.mubr.f32.gmra.mrb[0].mxu0 %v3811
        %v4079 = vpop.f32.mrb[0].mxu0
        %v4080 = vpop.f32.mrb[0].mxu0
        %4081 = vmatprep.mubr.f32.mxu0 0.0
        %4082 = vmatmul.mubr.f32.gmra.mrb[0].mxu0 %v3814
        %v4083 = vpop.f32.mrb[0].mxu0
        %v4084 = vadd.f32 0.0, %v4083
        %v4085 = vpop.f32.mrb[0].mxu0
        %4086 = vmatprep.mubr.f32.mxu0 0.0
        %4087 = vmatmul.mubr.f32.gmra.mrb[0].mxu0 %v3817
        %v4088 = vpop.f32.mrb[0].mxu0
        %v4089 = vadd.f32 0.0, %v4088
        %v4090 = vpop.f32.mrb[0].mxu0
        %4091 = vmatprep.mubr.f32.mxu0 0.0
        %4092 = vmatmul.mubr.f32.gmra.mrb[0].mxu0 %v3820
        %v4093 = vpop.f32.mrb[0].mxu0
        %v4094 = vpop.f32.mrb[0].mxu0
        %4095 = vmatprep.mubr.f32.mxu0 0.0
        %4096 = vmatmul.mubr.f32.gmra.mrb[0].mxu0 %v3823
        %v4097 = vpop.f32.mrb[0].mxu0
        %v4098 = vadd.f32 0.0, %v4097
        %v4099 = vpop.f32.mrb[0].mxu0
        %4100 = vmatprep.mubr.f32.mxu0 0.0
        %4101 = vmatmul.mubr.f32.gmra.mrb[0].mxu0 %v3826
        %v4102 = vpop.f32.mrb[0].mxu0
        %v4103 = vadd.f32 0.0, %v4102
        %v4104 = vpop.f32.mrb[0].mxu0
        %4105 = vmatprep.mubr.f32.mxu0 0.0
        %4106 = vmatmul.mubr.f32.gmra.mrb[0].mxu0 %v3829
        %v4107 = vpop.f32.mrb[0].mxu0
        %v4108 = vpop.f32.mrb[0].mxu0
        %4109 = vmatprep.mubr.f32.mxu0 0.0
        %4110 = vmatmul.mubr.f32.gmra.mrb[0].mxu0 %v3832
        %v4111 = vpop.f32.mrb[0].mxu0
        %v4112 = vadd.f32 0.0, %v4111
        %v4113 = vpop.f32.mrb[0].mxu0
        %4114 = vmatprep.mubr.f32.mxu0 0.0
        %4115 = vmatmul.mubr.f32.gmra.mrb[0].mxu0 %v3835
        %v4116 = vpop.f32.mrb[0].mxu0
        %v4117 = vadd.f32 0.0, %v4116
        %v4118 = vpop.f32.mrb[0].mxu0
        %4119 = vmatprep.mubr.f32.mxu0 0.0
        %4120 = vmatmul.mubr.f32.gmra.mrb[0].mxu0 %v3838
        %v4121 = vpop.f32.mrb[0].mxu0
        %v4122 = vpop.f32.mrb[0].mxu0
        %4123 = vmatprep.mubr.f32.mxu0 0.0
        %4124 = vmatmul.mubr.f32.gmra.mrb[0].mxu0 %v3841
        %v4125 = vpop.f32.mrb[0].mxu0
        %v4126 = vadd.f32 0.0, %v4125
        %v4127 = vpop.f32.mrb[0].mxu0
        %4128 = vmatprep.mubr.f32.mxu0 0.0
        %4129 = vmatmul.mubr.f32.gmra.mrb[0].mxu0 %v3844
        %v4130 = vpop.f32.mrb[0].mxu0
        %v4131 = vadd.f32 0.0, %v4130
        %v4132 = vpop.f32.mrb[0].mxu0
        %4133 = vmatprep.mubr.f32.mxu0 0.0
        %4134 = vmatmul.mubr.f32.gmra.mrb[0].mxu0 %v3847
        %v4135 = vpop.f32.mrb[0].mxu0
        %v4136 = vpop.f32.mrb[0].mxu0
        %4137 = vdwg.mxu0
        %v4138 = vadd.f32 %v3620, %v3916
        %v4139 = vadd.f32 %v3621, %v3921
        %v4140 = vadd.f32 %v3622, %v3930
        %v4141 = vadd.f32 %v3623, %v3935
        %v4142 = vadd.f32 %v3624, %v3944
        %v4143 = vadd.f32 %v3625, %v3949
        %v4144 = vadd.f32 %v3626, %v3958
        %v4145 = vadd.f32 %v3627, %v3963
        %v4146 = vadd.f32 %v3628, %v3972
        %v4147 = vadd.f32 %v3629, %v3977
        %v4148 = vadd.f32 %v3630, %v3986
        %v4149 = vadd.f32 %v3631, %v3991
        %v4150 = vadd.f32 %v3632, %v4000
        %v4151 = vadd.f32 %v3633, %v4005
        %v4152 = vadd.f32 %v3634, %v4014
        %v4153 = vadd.f32 %v3635, %v4019
        %v4154 = vadd.f32 %v3636, %v4028
        %v4155 = vadd.f32 %v3637, %v4033
        %v4156 = vadd.f32 %v3638, %v4042
        %v4157 = vadd.f32 %v3639, %v4047
        %v4158 = vadd.f32 %v3640, %v4056
        %v4159 = vadd.f32 %v3641, %v4061
        %v4160 = vadd.f32 %v3642, %v4070
        %v4161 = vadd.f32 %v3643, %v4075
        %v4162 = vadd.f32 %v3644, %v4084
        %v4163 = vadd.f32 %v3645, %v4089
        %v4164 = vadd.f32 %v3646, %v4098
        %v4165 = vadd.f32 %v3647, %v4103
        %v4166 = vadd.f32 %v3648, %v4112
        %v4167 = vadd.f32 %v3649, %v4117
        %v4168 = vadd.f32 %v3650, %v4126
        %v4169 = vadd.f32 %v3651, %v4131
        %v4170 = vld [vmem:[#allocation2 + $0x30] sm:$0xff]
        %v4171 = vld [vmem:[#allocation2 + $0x38] sm:$0xff]
        %v4172 = vld [vmem:[#allocation2 + $0x40] sm:$0xff]
        %v4173 = vld [vmem:[#allocation2 + $0x48] sm:$0xff]
        %v4174 = vld [vmem:[#allocation2 + $0x50] sm:$0xff]
        %v4175 = vld [vmem:[#allocation2 + $0x58] sm:$0xff]
        %v4176 = vld [vmem:[#allocation2 + $0x60] sm:$0xff]
        %v4177 = vld [vmem:[#allocation2 + $0x68] sm:$0xff]
        %v4178 = vld [vmem:[#allocation2 + $0x70] sm:$0xff]
        %v4179 = vld [vmem:[#allocation2 + $0x78] sm:$0xff]
        %v4180 = vld [vmem:[#allocation2 + $0x80] sm:$0xff]
        %v4181 = vld [vmem:[#allocation2 + $0x88] sm:$0xff]
        %v4182 = vld [vmem:[#allocation2 + $0x90] sm:$0xff]
        %v4183 = vld [vmem:[#allocation2 + $0x98] sm:$0xff]
        %v4184 = vld [vmem:[#allocation2 + $0xa0] sm:$0xff]
        %v4185 = vld [vmem:[#allocation2 + $0xa8] sm:$0xff]
        %v4186 = vld [vmem:[#allocation2 + $0xb0] sm:$0xff]
        %v4187 = vld [vmem:[#allocation2 + $0xb8] sm:$0xff]
        %v4188 = vld [vmem:[#allocation2 + $0xc0] sm:$0xff]
        %v4189 = vld [vmem:[#allocation2 + $0xc8] sm:$0xff]
        %v4190 = vld [vmem:[#allocation2 + $0xd0] sm:$0xff]
        %v4191 = vld [vmem:[#allocation2 + $0xd8] sm:$0xff]
        %v4192 = vld [vmem:[#allocation2 + $0xe0] sm:$0xff]
        %v4193 = vld [vmem:[#allocation2 + $0xe8] sm:$0xff]
        %v4194 = vld [vmem:[#allocation2 + $0xf0] sm:$0xff]
        %v4195 = vld [vmem:[#allocation2 + $0xf8] sm:$0xff]
        %v4196 = vld [vmem:[#allocation2 + $0x100] sm:$0xff]
        %v4197 = vld [vmem:[#allocation2 + $0x108] sm:$0xff]
        %v4198 = vld [vmem:[#allocation2 + $0x110] sm:$0xff]
        %v4199 = vld [vmem:[#allocation2 + $0x118] sm:$0xff]
        %v4200 = vld [vmem:[#allocation2 + $0x120] sm:$0xff]
        %v4201 = vld [vmem:[#allocation2 + $0x128] sm:$0xff]
        %v4202 = vld [vmem:[#allocation2 + $0x130] sm:$0xff]
        %v4203 = vld [vmem:[#allocation2 + $0x138] sm:$0xff]
        %v4204 = vld [vmem:[#allocation2 + $0x140] sm:$0xff]
        %v4205 = vld [vmem:[#allocation2 + $0x148] sm:$0xff]
        %v4206 = vld [vmem:[#allocation2 + $0x150] sm:$0xff]
        %v4207 = vld [vmem:[#allocation2 + $0x158] sm:$0xff]
        %v4208 = vld [vmem:[#allocation2 + $0x160] sm:$0xff]
        %v4209 = vld [vmem:[#allocation2 + $0x168] sm:$0xff]
        %v4210 = vld [vmem:[#allocation2 + $0x170] sm:$0xff]
        %v4211 = vld [vmem:[#allocation2 + $0x178] sm:$0xff]
        %v4212 = vld [vmem:[#allocation2 + $0x180] sm:$0xff]
        %v4213 = vld [vmem:[#allocation2 + $0x188] sm:$0xff]
        %v4214 = vld [vmem:[#allocation2 + $0x190] sm:$0xff]
        %v4215 = vld [vmem:[#allocation2 + $0x198] sm:$0xff]
        %v4216 = vld [vmem:[#allocation2 + $0x1a0] sm:$0xff]
        %v4217 = vld [vmem:[#allocation2 + $0x1a8] sm:$0xff]
        %s4218 = scalar_lea.vmem [#allocation3], 128
        %v4219 = vld [vmem:[%s4218] sm:$0xff]
        %v4220 = vld [vmem:[%s4218 + $0x8] sm:$0xff]
        %v4221 = vld [vmem:[%s4218 + $0x10] sm:$0xff]
        %v4222 = vld [vmem:[%s4218 + $0x18] sm:$0xff]
        %v4224 = vsel %vm346, %v4170, 0
        %v4227 = vsel %vm346, %v4171, 0
        %v4230 = vsel %vm346, %v4172, 0
        %v4233 = vsel %vm346, %v4173, 0
        %v4236 = vsel %vm346, %v4174, 0
        %v4239 = vsel %vm346, %v4175, 0
        %v4242 = vsel %vm346, %v4176, 0
        %v4245 = vsel %vm346, %v4177, 0
        %v4248 = vsel %vm346, %v4178, 0
        %v4251 = vsel %vm346, %v4179, 0
        %v4254 = vsel %vm346, %v4180, 0
        %v4257 = vsel %vm346, %v4181, 0
        %v4260 = vsel %vm346, %v4182, 0
        %v4263 = vsel %vm346, %v4183, 0
        %v4266 = vsel %vm346, %v4184, 0
        %v4269 = vsel %vm346, %v4185, 0
        %v4272 = vsel %vm346, %v4186, 0
        %v4275 = vsel %vm346, %v4187, 0
        %v4278 = vsel %vm346, %v4188, 0
        %v4281 = vsel %vm346, %v4189, 0
        %v4284 = vsel %vm346, %v4190, 0
        %v4287 = vsel %vm346, %v4191, 0
        %v4290 = vsel %vm346, %v4192, 0
        %v4293 = vsel %vm346, %v4193, 0
        %v4296 = vsel %vm346, %v4194, 0
        %v4299 = vsel %vm346, %v4195, 0
        %v4302 = vsel %vm346, %v4196, 0
        %v4305 = vsel %vm346, %v4197, 0
        %v4308 = vsel %vm346, %v4198, 0
        %v4311 = vsel %vm346, %v4199, 0
        %v4314 = vsel %vm346, %v4200, 0
        %v4317 = vsel %vm346, %v4201, 0
        %v4320 = vsel %vm346, %v4202, 0
        %v4323 = vsel %vm346, %v4203, 0
        %v4326 = vsel %vm346, %v4204, 0
        %v4329 = vsel %vm346, %v4205, 0
        %v4332 = vsel %vm346, %v4206, 0
        %v4335 = vsel %vm346, %v4207, 0
        %v4338 = vsel %vm346, %v4208, 0
        %v4341 = vsel %vm346, %v4209, 0
        %v4344 = vsel %vm346, %v4210, 0
        %v4347 = vsel %vm346, %v4211, 0
        %v4350 = vsel %vm346, %v4212, 0
        %v4353 = vsel %vm346, %v4213, 0
        %v4356 = vsel %vm346, %v4214, 0
        %v4359 = vsel %vm346, %v4215, 0
        %v4362 = vsel %vm346, %v4216, 0
        %v4365 = vsel %vm346, %v4217, 0
        %4367 = vmatprep.subr.mxu0 0.0
        %4368 = vmatpush1.msra.mxu0 %v4219
        %4369 = vmatprep.subr.mxu0 0.0
        %4370 = vmatpush1.msra.mxu0 %v4220
        %4371 = vmatprep.subr.mxu0 0.0
        %4372 = vmatpush1.msra.mxu0 %v4221
        %4373 = vmatprep.subr.mxu0 0.0
        %4374 = vmatpush1.msra.mxu0 %v4222
        %4375 = vmatprep.subr.mxu0 0.0
        %4376 = vmatpush1.msra.mxu0 0.0
        %4377 = vmatprep.subr.mxu0 0.0
        %4378 = vmatpush1.msra.mxu0 0.0
        %4379 = vmatprep.subr.mxu0 0.0
        %4380 = vmatpush1.msra.mxu0 0.0
        %4381 = vmatprep.subr.mxu0 0.0
        %4382 = vmatpush1.msra.mxu0 0.0
        %4383 = vmatprep.subr.mxu0 0.0
        %4384 = vmatpush1.msra.mxu0 0.0
        %4385 = vmatprep.subr.mxu0 0.0
        %4386 = vmatpush1.msra.mxu0 0.0
        %4387 = vmatprep.subr.mxu0 0.0
        %4388 = vmatpush1.msra.mxu0 0.0
        %4389 = vmatprep.subr.mxu0 0.0
        %4390 = vmatpush1.msra.mxu0 0.0
        %4391 = vmatprep.subr.mxu0 0.0
        %4392 = vmatpush1.msra.mxu0 0.0
        %4393 = vmatprep.subr.mxu0 0.0
        %4394 = vmatpush1.msra.mxu0 0.0
        %4395 = vmatprep.subr.mxu0 0.0
        %4396 = vmatpush1.msra.mxu0 0.0
        %4397 = vmatprep.subr.mxu0 0.0
        %4398 = vmatpush1.msra.mxu0 0.0
        %4399 = vmatprep.subr.mxu0 0.0
        %4400 = vmatpush1.msra.mxu0 0.0
        %4401 = vmatprep.subr.mxu0 0.0
        %4402 = vmatpush1.msra.mxu0 0.0
        %4403 = vmatprep.subr.mxu0 0.0
        %4404 = vmatpush1.msra.mxu0 0.0
        %4405 = vmatprep.subr.mxu0 0.0
        %4406 = vmatpush1.msra.mxu0 0.0
        %4407 = vmatprep.subr.mxu0 0.0
        %4408 = vmatpush1.msra.mxu0 0.0
        %4409 = vmatprep.subr.mxu0 0.0
        %4410 = vmatpush1.msra.mxu0 0.0
        %4411 = vmatprep.subr.mxu0 0.0
        %4412 = vmatpush1.msra.mxu0 0.0
        %4413 = vmatprep.subr.mxu0 0.0
        %4414 = vmatpush1.msra.mxu0 0.0
        %4415 = vmatprep.subr.mxu0 0.0
        %4416 = vmatpush1.msra.mxu0 0.0
        %4417 = vmatprep.subr.mxu0 0.0
        %4418 = vmatpush1.msra.mxu0 0.0
        %4419 = vmatprep.subr.mxu0 0.0
        %4420 = vmatpush1.msra.mxu0 0.0
        %4421 = vmatprep.subr.mxu0 0.0
        %4422 = vmatpush1.msra.mxu0 0.0
        %4423 = vmatprep.subr.mxu0 0.0
        %4424 = vmatpush1.msra.mxu0 0.0
        %4425 = vmatprep.subr.mxu0 0.0
        %4426 = vmatpush1.msra.mxu0 0.0
        %4427 = vmatprep.subr.mxu0 0.0
        %4428 = vmatpush1.msra.mxu0 0.0
        %4429 = vmatprep.subr.mxu0 0.0
        %4430 = vmatpush1.msra.mxu0 0.0
        %4431 = vmatprep.mubr.f32.mxu0 0.0
        %4432 = vmatmul.mubr.f32.gmra.mrb[0].mxu0 %v4224
        %v4433 = vpop.f32.mrb[0].mxu0
        %v4434 = vadd.f32 0.0, %v4433
        %v4435 = vpop.f32.mrb[0].mxu0
        %4436 = vmatprep.mubr.f32.mxu0 0.0
        %4437 = vmatmul.mubr.f32.gmra.mrb[0].mxu0 %v4227
        %v4438 = vpop.f32.mrb[0].mxu0
        %v4439 = vadd.f32 0.0, %v4438
        %v4440 = vpop.f32.mrb[0].mxu0
        %4441 = vmatprep.mubr.f32.mxu0 0.0
        %4442 = vmatmul.mubr.f32.gmra.mrb[0].mxu0 %v4230
        %v4443 = vpop.f32.mrb[0].mxu0
        %v4444 = vpop.f32.mrb[0].mxu0
        %4445 = vmatprep.mubr.f32.mxu0 0.0
        %4446 = vmatmul.mubr.f32.gmra.mrb[0].mxu0 %v4233
        %v4447 = vpop.f32.mrb[0].mxu0
        %v4448 = vadd.f32 0.0, %v4447
        %v4449 = vpop.f32.mrb[0].mxu0
        %4450 = vmatprep.mubr.f32.mxu0 0.0
        %4451 = vmatmul.mubr.f32.gmra.mrb[0].mxu0 %v4236
        %v4452 = vpop.f32.mrb[0].mxu0
        %v4453 = vadd.f32 0.0, %v4452
        %v4454 = vpop.f32.mrb[0].mxu0
        %4455 = vmatprep.mubr.f32.mxu0 0.0
        %4456 = vmatmul.mubr.f32.gmra.mrb[0].mxu0 %v4239
        %v4457 = vpop.f32.mrb[0].mxu0
        %v4458 = vpop.f32.mrb[0].mxu0
        %4459 = vmatprep.mubr.f32.mxu0 0.0
        %4460 = vmatmul.mubr.f32.gmra.mrb[0].mxu0 %v4242
        %v4461 = vpop.f32.mrb[0].mxu0
        %v4462 = vadd.f32 0.0, %v4461
        %v4463 = vpop.f32.mrb[0].mxu0
        %4464 = vmatprep.mubr.f32.mxu0 0.0
        %4465 = vmatmul.mubr.f32.gmra.mrb[0].mxu0 %v4245
        %v4466 = vpop.f32.mrb[0].mxu0
        %v4467 = vadd.f32 0.0, %v4466
        %v4468 = vpop.f32.mrb[0].mxu0
        %4469 = vmatprep.mubr.f32.mxu0 0.0
        %4470 = vmatmul.mubr.f32.gmra.mrb[0].mxu0 %v4248
        %v4471 = vpop.f32.mrb[0].mxu0
        %v4472 = vpop.f32.mrb[0].mxu0
        %4473 = vmatprep.mubr.f32.mxu0 0.0
        %4474 = vmatmul.mubr.f32.gmra.mrb[0].mxu0 %v4251
        %v4475 = vpop.f32.mrb[0].mxu0
        %v4476 = vadd.f32 0.0, %v4475
        %v4477 = vpop.f32.mrb[0].mxu0
        %4478 = vmatprep.mubr.f32.mxu0 0.0
        %4479 = vmatmul.mubr.f32.gmra.mrb[0].mxu0 %v4254
        %v4480 = vpop.f32.mrb[0].mxu0
        %v4481 = vadd.f32 0.0, %v4480
        %v4482 = vpop.f32.mrb[0].mxu0
        %4483 = vmatprep.mubr.f32.mxu0 0.0
        %4484 = vmatmul.mubr.f32.gmra.mrb[0].mxu0 %v4257
        %v4485 = vpop.f32.mrb[0].mxu0
        %v4486 = vpop.f32.mrb[0].mxu0
        %4487 = vmatprep.mubr.f32.mxu0 0.0
        %4488 = vmatmul.mubr.f32.gmra.mrb[0].mxu0 %v4260
        %v4489 = vpop.f32.mrb[0].mxu0
        %v4490 = vadd.f32 0.0, %v4489
        %v4491 = vpop.f32.mrb[0].mxu0
        %4492 = vmatprep.mubr.f32.mxu0 0.0
        %4493 = vmatmul.mubr.f32.gmra.mrb[0].mxu0 %v4263
        %v4494 = vpop.f32.mrb[0].mxu0
        %v4495 = vadd.f32 0.0, %v4494
        %v4496 = vpop.f32.mrb[0].mxu0
        %4497 = vmatprep.mubr.f32.mxu0 0.0
        %4498 = vmatmul.mubr.f32.gmra.mrb[0].mxu0 %v4266
        %v4499 = vpop.f32.mrb[0].mxu0
        %v4500 = vpop.f32.mrb[0].mxu0
        %4501 = vmatprep.mubr.f32.mxu0 0.0
        %4502 = vmatmul.mubr.f32.gmra.mrb[0].mxu0 %v4269
        %v4503 = vpop.f32.mrb[0].mxu0
        %v4504 = vadd.f32 0.0, %v4503
        %v4505 = vpop.f32.mrb[0].mxu0
        %4506 = vmatprep.mubr.f32.mxu0 0.0
        %4507 = vmatmul.mubr.f32.gmra.mrb[0].mxu0 %v4272
        %v4508 = vpop.f32.mrb[0].mxu0
        %v4509 = vadd.f32 0.0, %v4508
        %v4510 = vpop.f32.mrb[0].mxu0
        %4511 = vmatprep.mubr.f32.mxu0 0.0
        %4512 = vmatmul.mubr.f32.gmra.mrb[0].mxu0 %v4275
        %v4513 = vpop.f32.mrb[0].mxu0
        %v4514 = vpop.f32.mrb[0].mxu0
        %4515 = vmatprep.mubr.f32.mxu0 0.0
        %4516 = vmatmul.mubr.f32.gmra.mrb[0].mxu0 %v4278
        %v4517 = vpop.f32.mrb[0].mxu0
        %v4518 = vadd.f32 0.0, %v4517
        %v4519 = vpop.f32.mrb[0].mxu0
        %4520 = vmatprep.mubr.f32.mxu0 0.0
        %4521 = vmatmul.mubr.f32.gmra.mrb[0].mxu0 %v4281
        %v4522 = vpop.f32.mrb[0].mxu0
        %v4523 = vadd.f32 0.0, %v4522
        %v4524 = vpop.f32.mrb[0].mxu0
        %4525 = vmatprep.mubr.f32.mxu0 0.0
        %4526 = vmatmul.mubr.f32.gmra.mrb[0].mxu0 %v4284
        %v4527 = vpop.f32.mrb[0].mxu0
        %v4528 = vpop.f32.mrb[0].mxu0
        %4529 = vmatprep.mubr.f32.mxu0 0.0
        %4530 = vmatmul.mubr.f32.gmra.mrb[0].mxu0 %v4287
        %v4531 = vpop.f32.mrb[0].mxu0
        %v4532 = vadd.f32 0.0, %v4531
        %v4533 = vpop.f32.mrb[0].mxu0
        %4534 = vmatprep.mubr.f32.mxu0 0.0
        %4535 = vmatmul.mubr.f32.gmra.mrb[0].mxu0 %v4290
        %v4536 = vpop.f32.mrb[0].mxu0
        %v4537 = vadd.f32 0.0, %v4536
        %v4538 = vpop.f32.mrb[0].mxu0
        %4539 = vmatprep.mubr.f32.mxu0 0.0
        %4540 = vmatmul.mubr.f32.gmra.mrb[0].mxu0 %v4293
        %v4541 = vpop.f32.mrb[0].mxu0
        %v4542 = vpop.f32.mrb[0].mxu0
        %4543 = vmatprep.mubr.f32.mxu0 0.0
        %4544 = vmatmul.mubr.f32.gmra.mrb[0].mxu0 %v4296
        %v4545 = vpop.f32.mrb[0].mxu0
        %v4546 = vadd.f32 0.0, %v4545
        %v4547 = vpop.f32.mrb[0].mxu0
        %4548 = vmatprep.mubr.f32.mxu0 0.0
        %4549 = vmatmul.mubr.f32.gmra.mrb[0].mxu0 %v4299
        %v4550 = vpop.f32.mrb[0].mxu0
        %v4551 = vadd.f32 0.0, %v4550
        %v4552 = vpop.f32.mrb[0].mxu0
        %4553 = vmatprep.mubr.f32.mxu0 0.0
        %4554 = vmatmul.mubr.f32.gmra.mrb[0].mxu0 %v4302
        %v4555 = vpop.f32.mrb[0].mxu0
        %v4556 = vpop.f32.mrb[0].mxu0
        %4557 = vmatprep.mubr.f32.mxu0 0.0
        %4558 = vmatmul.mubr.f32.gmra.mrb[0].mxu0 %v4305
        %v4559 = vpop.f32.mrb[0].mxu0
        %v4560 = vadd.f32 0.0, %v4559
        %v4561 = vpop.f32.mrb[0].mxu0
        %4562 = vmatprep.mubr.f32.mxu0 0.0
        %4563 = vmatmul.mubr.f32.gmra.mrb[0].mxu0 %v4308
        %v4564 = vpop.f32.mrb[0].mxu0
        %v4565 = vadd.f32 0.0, %v4564
        %v4566 = vpop.f32.mrb[0].mxu0
        %4567 = vmatprep.mubr.f32.mxu0 0.0
        %4568 = vmatmul.mubr.f32.gmra.mrb[0].mxu0 %v4311
        %v4569 = vpop.f32.mrb[0].mxu0
        %v4570 = vpop.f32.mrb[0].mxu0
        %4571 = vmatprep.mubr.f32.mxu0 0.0
        %4572 = vmatmul.mubr.f32.gmra.mrb[0].mxu0 %v4314
        %v4573 = vpop.f32.mrb[0].mxu0
        %v4574 = vadd.f32 0.0, %v4573
        %v4575 = vpop.f32.mrb[0].mxu0
        %4576 = vmatprep.mubr.f32.mxu0 0.0
        %4577 = vmatmul.mubr.f32.gmra.mrb[0].mxu0 %v4317
        %v4578 = vpop.f32.mrb[0].mxu0
        %v4579 = vadd.f32 0.0, %v4578
        %v4580 = vpop.f32.mrb[0].mxu0
        %4581 = vmatprep.mubr.f32.mxu0 0.0
        %4582 = vmatmul.mubr.f32.gmra.mrb[0].mxu0 %v4320
        %v4583 = vpop.f32.mrb[0].mxu0
        %v4584 = vpop.f32.mrb[0].mxu0
        %4585 = vmatprep.mubr.f32.mxu0 0.0
        %4586 = vmatmul.mubr.f32.gmra.mrb[0].mxu0 %v4323
        %v4587 = vpop.f32.mrb[0].mxu0
        %v4588 = vadd.f32 0.0, %v4587
        %v4589 = vpop.f32.mrb[0].mxu0
        %4590 = vmatprep.mubr.f32.mxu0 0.0
        %4591 = vmatmul.mubr.f32.gmra.mrb[0].mxu0 %v4326
        %v4592 = vpop.f32.mrb[0].mxu0
        %v4593 = vadd.f32 0.0, %v4592
        %v4594 = vpop.f32.mrb[0].mxu0
        %4595 = vmatprep.mubr.f32.mxu0 0.0
        %4596 = vmatmul.mubr.f32.gmra.mrb[0].mxu0 %v4329
        %v4597 = vpop.f32.mrb[0].mxu0
        %v4598 = vpop.f32.mrb[0].mxu0
        %4599 = vmatprep.mubr.f32.mxu0 0.0
        %4600 = vmatmul.mubr.f32.gmra.mrb[0].mxu0 %v4332
        %v4601 = vpop.f32.mrb[0].mxu0
        %v4602 = vadd.f32 0.0, %v4601
        %v4603 = vpop.f32.mrb[0].mxu0
        %4604 = vmatprep.mubr.f32.mxu0 0.0
        %4605 = vmatmul.mubr.f32.gmra.mrb[0].mxu0 %v4335
        %v4606 = vpop.f32.mrb[0].mxu0
        %v4607 = vadd.f32 0.0, %v4606
        %v4608 = vpop.f32.mrb[0].mxu0
        %4609 = vmatprep.mubr.f32.mxu0 0.0
        %4610 = vmatmul.mubr.f32.gmra.mrb[0].mxu0 %v4338
        %v4611 = vpop.f32.mrb[0].mxu0
        %v4612 = vpop.f32.mrb[0].mxu0
        %4613 = vmatprep.mubr.f32.mxu0 0.0
        %4614 = vmatmul.mubr.f32.gmra.mrb[0].mxu0 %v4341
        %v4615 = vpop.f32.mrb[0].mxu0
        %v4616 = vadd.f32 0.0, %v4615
        %v4617 = vpop.f32.mrb[0].mxu0
        %4618 = vmatprep.mubr.f32.mxu0 0.0
        %4619 = vmatmul.mubr.f32.gmra.mrb[0].mxu0 %v4344
        %v4620 = vpop.f32.mrb[0].mxu0
        %v4621 = vadd.f32 0.0, %v4620
        %v4622 = vpop.f32.mrb[0].mxu0
        %4623 = vmatprep.mubr.f32.mxu0 0.0
        %4624 = vmatmul.mubr.f32.gmra.mrb[0].mxu0 %v4347
        %v4625 = vpop.f32.mrb[0].mxu0
        %v4626 = vpop.f32.mrb[0].mxu0
        %4627 = vmatprep.mubr.f32.mxu0 0.0
        %4628 = vmatmul.mubr.f32.gmra.mrb[0].mxu0 %v4350
        %v4629 = vpop.f32.mrb[0].mxu0
        %v4630 = vadd.f32 0.0, %v4629
        %v4631 = vpop.f32.mrb[0].mxu0
        %4632 = vmatprep.mubr.f32.mxu0 0.0
        %4633 = vmatmul.mubr.f32.gmra.mrb[0].mxu0 %v4353
        %v4634 = vpop.f32.mrb[0].mxu0
        %v4635 = vadd.f32 0.0, %v4634
        %v4636 = vpop.f32.mrb[0].mxu0
        %4637 = vmatprep.mubr.f32.mxu0 0.0
        %4638 = vmatmul.mubr.f32.gmra.mrb[0].mxu0 %v4356
        %v4639 = vpop.f32.mrb[0].mxu0
        %v4640 = vpop.f32.mrb[0].mxu0
        %4641 = vmatprep.mubr.f32.mxu0 0.0
        %4642 = vmatmul.mubr.f32.gmra.mrb[0].mxu0 %v4359
        %v4643 = vpop.f32.mrb[0].mxu0
        %v4644 = vadd.f32 0.0, %v4643
        %v4645 = vpop.f32.mrb[0].mxu0
        %4646 = vmatprep.mubr.f32.mxu0 0.0
        %4647 = vmatmul.mubr.f32.gmra.mrb[0].mxu0 %v4362
        %v4648 = vpop.f32.mrb[0].mxu0
        %v4649 = vadd.f32 0.0, %v4648
        %v4650 = vpop.f32.mrb[0].mxu0
        %4651 = vmatprep.mubr.f32.mxu0 0.0
        %4652 = vmatmul.mubr.f32.gmra.mrb[0].mxu0 %v4365
        %v4653 = vpop.f32.mrb[0].mxu0
        %v4654 = vpop.f32.mrb[0].mxu0
        %4655 = vdwg.mxu0
        %v4656 = vadd.f32 %v4138, %v4434
        %v4657 = vadd.f32 %v4139, %v4439
        %v4658 = vadd.f32 %v4140, %v4448
        %v4659 = vadd.f32 %v4141, %v4453
        %v4660 = vadd.f32 %v4142, %v4462
        %v4661 = vadd.f32 %v4143, %v4467
        %v4662 = vadd.f32 %v4144, %v4476
        %v4663 = vadd.f32 %v4145, %v4481
        %v4664 = vadd.f32 %v4146, %v4490
        %v4665 = vadd.f32 %v4147, %v4495
        %v4666 = vadd.f32 %v4148, %v4504
        %v4667 = vadd.f32 %v4149, %v4509
        %v4668 = vadd.f32 %v4150, %v4518
        %v4669 = vadd.f32 %v4151, %v4523
        %v4670 = vadd.f32 %v4152, %v4532
        %v4671 = vadd.f32 %v4153, %v4537
        %v4672 = vadd.f32 %v4154, %v4546
        %v4673 = vadd.f32 %v4155, %v4551
        %v4674 = vadd.f32 %v4156, %v4560
        %v4675 = vadd.f32 %v4157, %v4565
        %v4676 = vadd.f32 %v4158, %v4574
        %v4677 = vadd.f32 %v4159, %v4579
        %v4678 = vadd.f32 %v4160, %v4588
        %v4679 = vadd.f32 %v4161, %v4593
        %v4680 = vadd.f32 %v4162, %v4602
        %v4681 = vadd.f32 %v4163, %v4607
        %v4682 = vadd.f32 %v4164, %v4616
        %v4683 = vadd.f32 %v4165, %v4621
        %v4684 = vadd.f32 %v4166, %v4630
        %v4685 = vadd.f32 %v4167, %v4635
        %v4686 = vadd.f32 %v4168, %v4644
        %v4687 = vadd.f32 %v4169, %v4649
        %v4688 = vld [vmem:[#allocation2 + $0x31] sm:$0xff]
        %v4689 = vld [vmem:[#allocation2 + $0x39] sm:$0xff]
        %v4690 = vld [vmem:[#allocation2 + $0x41] sm:$0xff]
        %v4691 = vld [vmem:[#allocation2 + $0x49] sm:$0xff]
        %v4692 = vld [vmem:[#allocation2 + $0x51] sm:$0xff]
        %v4693 = vld [vmem:[#allocation2 + $0x59] sm:$0xff]
        %v4694 = vld [vmem:[#allocation2 + $0x61] sm:$0xff]
        %v4695 = vld [vmem:[#allocation2 + $0x69] sm:$0xff]
        %v4696 = vld [vmem:[#allocation2 + $0x71] sm:$0xff]
        %v4697 = vld [vmem:[#allocation2 + $0x79] sm:$0xff]
        %v4698 = vld [vmem:[#allocation2 + $0x81] sm:$0xff]
        %v4699 = vld [vmem:[#allocation2 + $0x89] sm:$0xff]
        %v4700 = vld [vmem:[#allocation2 + $0x91] sm:$0xff]
        %v4701 = vld [vmem:[#allocation2 + $0x99] sm:$0xff]
        %v4702 = vld [vmem:[#allocation2 + $0xa1] sm:$0xff]
        %v4703 = vld [vmem:[#allocation2 + $0xa9] sm:$0xff]
        %v4704 = vld [vmem:[#allocation2 + $0xb1] sm:$0xff]
        %v4705 = vld [vmem:[#allocation2 + $0xb9] sm:$0xff]
        %v4706 = vld [vmem:[#allocation2 + $0xc1] sm:$0xff]
        %v4707 = vld [vmem:[#allocation2 + $0xc9] sm:$0xff]
        %v4708 = vld [vmem:[#allocation2 + $0xd1] sm:$0xff]
        %v4709 = vld [vmem:[#allocation2 + $0xd9] sm:$0xff]
        %v4710 = vld [vmem:[#allocation2 + $0xe1] sm:$0xff]
        %v4711 = vld [vmem:[#allocation2 + $0xe9] sm:$0xff]
        %v4712 = vld [vmem:[#allocation2 + $0xf1] sm:$0xff]
        %v4713 = vld [vmem:[#allocation2 + $0xf9] sm:$0xff]
        %v4714 = vld [vmem:[#allocation2 + $0x101] sm:$0xff]
        %v4715 = vld [vmem:[#allocation2 + $0x109] sm:$0xff]
        %v4716 = vld [vmem:[#allocation2 + $0x111] sm:$0xff]
        %v4717 = vld [vmem:[#allocation2 + $0x119] sm:$0xff]
        %v4718 = vld [vmem:[#allocation2 + $0x121] sm:$0xff]
        %v4719 = vld [vmem:[#allocation2 + $0x129] sm:$0xff]
        %v4720 = vld [vmem:[#allocation2 + $0x131] sm:$0xff]
        %v4721 = vld [vmem:[#allocation2 + $0x139] sm:$0xff]
        %v4722 = vld [vmem:[#allocation2 + $0x141] sm:$0xff]
        %v4723 = vld [vmem:[#allocation2 + $0x149] sm:$0xff]
        %v4724 = vld [vmem:[#allocation2 + $0x151] sm:$0xff]
        %v4725 = vld [vmem:[#allocation2 + $0x159] sm:$0xff]
        %v4726 = vld [vmem:[#allocation2 + $0x161] sm:$0xff]
        %v4727 = vld [vmem:[#allocation2 + $0x169] sm:$0xff]
        %v4728 = vld [vmem:[#allocation2 + $0x171] sm:$0xff]
        %v4729 = vld [vmem:[#allocation2 + $0x179] sm:$0xff]
        %v4730 = vld [vmem:[#allocation2 + $0x181] sm:$0xff]
        %v4731 = vld [vmem:[#allocation2 + $0x189] sm:$0xff]
        %v4732 = vld [vmem:[#allocation2 + $0x191] sm:$0xff]
        %v4733 = vld [vmem:[#allocation2 + $0x199] sm:$0xff]
        %v4734 = vld [vmem:[#allocation2 + $0x1a1] sm:$0xff]
        %v4735 = vld [vmem:[#allocation2 + $0x1a9] sm:$0xff]
        %s4736 = scalar_lea.vmem [#allocation3], 160
        %v4737 = vld [vmem:[%s4736] sm:$0xff]
        %v4738 = vld [vmem:[%s4736 + $0x8] sm:$0xff]
        %v4739 = vld [vmem:[%s4736 + $0x10] sm:$0xff]
        %v4740 = vld [vmem:[%s4736 + $0x18] sm:$0xff]
        %v4742 = vsel %vm346, %v4688, 0
        %v4745 = vsel %vm346, %v4689, 0
        %v4748 = vsel %vm346, %v4690, 0
        %v4751 = vsel %vm346, %v4691, 0
        %v4754 = vsel %vm346, %v4692, 0
        %v4757 = vsel %vm346, %v4693, 0
        %v4760 = vsel %vm346, %v4694, 0
        %v4763 = vsel %vm346, %v4695, 0
        %v4766 = vsel %vm346, %v4696, 0
        %v4769 = vsel %vm346, %v4697, 0
        %v4772 = vsel %vm346, %v4698, 0
        %v4775 = vsel %vm346, %v4699, 0
        %v4778 = vsel %vm346, %v4700, 0
        %v4781 = vsel %vm346, %v4701, 0
        %v4784 = vsel %vm346, %v4702, 0
        %v4787 = vsel %vm346, %v4703, 0
        %v4790 = vsel %vm346, %v4704, 0
        %v4793 = vsel %vm346, %v4705, 0
        %v4796 = vsel %vm346, %v4706, 0
        %v4799 = vsel %vm346, %v4707, 0
        %v4802 = vsel %vm346, %v4708, 0
        %v4805 = vsel %vm346, %v4709, 0
        %v4808 = vsel %vm346, %v4710, 0
        %v4811 = vsel %vm346, %v4711, 0
        %v4814 = vsel %vm346, %v4712, 0
        %v4817 = vsel %vm346, %v4713, 0
        %v4820 = vsel %vm346, %v4714, 0
        %v4823 = vsel %vm346, %v4715, 0
        %v4826 = vsel %vm346, %v4716, 0
        %v4829 = vsel %vm346, %v4717, 0
        %v4832 = vsel %vm346, %v4718, 0
        %v4835 = vsel %vm346, %v4719, 0
        %v4838 = vsel %vm346, %v4720, 0
        %v4841 = vsel %vm346, %v4721, 0
        %v4844 = vsel %vm346, %v4722, 0
        %v4847 = vsel %vm346, %v4723, 0
        %v4850 = vsel %vm346, %v4724, 0
        %v4853 = vsel %vm346, %v4725, 0
        %v4856 = vsel %vm346, %v4726, 0
        %v4859 = vsel %vm346, %v4727, 0
        %v4862 = vsel %vm346, %v4728, 0
        %v4865 = vsel %vm346, %v4729, 0
        %v4868 = vsel %vm346, %v4730, 0
        %v4871 = vsel %vm346, %v4731, 0
        %v4874 = vsel %vm346, %v4732, 0
        %v4877 = vsel %vm346, %v4733, 0
        %v4880 = vsel %vm346, %v4734, 0
        %v4883 = vsel %vm346, %v4735, 0
        %4885 = vmatprep.subr.mxu0 0.0
        %4886 = vmatpush1.msra.mxu0 %v4737
        %4887 = vmatprep.subr.mxu0 0.0
        %4888 = vmatpush1.msra.mxu0 %v4738
        %4889 = vmatprep.subr.mxu0 0.0
        %4890 = vmatpush1.msra.mxu0 %v4739
        %4891 = vmatprep.subr.mxu0 0.0
        %4892 = vmatpush1.msra.mxu0 %v4740
        %4893 = vmatprep.subr.mxu0 0.0
        %4894 = vmatpush1.msra.mxu0 0.0
        %4895 = vmatprep.subr.mxu0 0.0
        %4896 = vmatpush1.msra.mxu0 0.0
        %4897 = vmatprep.subr.mxu0 0.0
        %4898 = vmatpush1.msra.mxu0 0.0
        %4899 = vmatprep.subr.mxu0 0.0
        %4900 = vmatpush1.msra.mxu0 0.0
        %4901 = vmatprep.subr.mxu0 0.0
        %4902 = vmatpush1.msra.mxu0 0.0
        %4903 = vmatprep.subr.mxu0 0.0
        %4904 = vmatpush1.msra.mxu0 0.0
        %4905 = vmatprep.subr.mxu0 0.0
        %4906 = vmatpush1.msra.mxu0 0.0
        %4907 = vmatprep.subr.mxu0 0.0
        %4908 = vmatpush1.msra.mxu0 0.0
        %4909 = vmatprep.subr.mxu0 0.0
        %4910 = vmatpush1.msra.mxu0 0.0
        %4911 = vmatprep.subr.mxu0 0.0
        %4912 = vmatpush1.msra.mxu0 0.0
        %4913 = vmatprep.subr.mxu0 0.0
        %4914 = vmatpush1.msra.mxu0 0.0
        %4915 = vmatprep.subr.mxu0 0.0
        %4916 = vmatpush1.msra.mxu0 0.0
        %4917 = vmatprep.subr.mxu0 0.0
        %4918 = vmatpush1.msra.mxu0 0.0
        %4919 = vmatprep.subr.mxu0 0.0
        %4920 = vmatpush1.msra.mxu0 0.0
        %4921 = vmatprep.subr.mxu0 0.0
        %4922 = vmatpush1.msra.mxu0 0.0
        %4923 = vmatprep.subr.mxu0 0.0
        %4924 = vmatpush1.msra.mxu0 0.0
        %4925 = vmatprep.subr.mxu0 0.0
        %4926 = vmatpush1.msra.mxu0 0.0
        %4927 = vmatprep.subr.mxu0 0.0
        %4928 = vmatpush1.msra.mxu0 0.0
        %4929 = vmatprep.subr.mxu0 0.0
        %4930 = vmatpush1.msra.mxu0 0.0
        %4931 = vmatprep.subr.mxu0 0.0
        %4932 = vmatpush1.msra.mxu0 0.0
        %4933 = vmatprep.subr.mxu0 0.0
        %4934 = vmatpush1.msra.mxu0 0.0
        %4935 = vmatprep.subr.mxu0 0.0
        %4936 = vmatpush1.msra.mxu0 0.0
        %4937 = vmatprep.subr.mxu0 0.0
        %4938 = vmatpush1.msra.mxu0 0.0
        %4939 = vmatprep.subr.mxu0 0.0
        %4940 = vmatpush1.msra.mxu0 0.0
        %4941 = vmatprep.subr.mxu0 0.0
        %4942 = vmatpush1.msra.mxu0 0.0
        %4943 = vmatprep.subr.mxu0 0.0
        %4944 = vmatpush1.msra.mxu0 0.0
        %4945 = vmatprep.subr.mxu0 0.0
        %4946 = vmatpush1.msra.mxu0 0.0
        %4947 = vmatprep.subr.mxu0 0.0
        %4948 = vmatpush1.msra.mxu0 0.0
        %4949 = vmatprep.mubr.f32.mxu0 0.0
        %4950 = vmatmul.mubr.f32.gmra.mrb[0].mxu0 %v4742
        %v4951 = vpop.f32.mrb[0].mxu0
        %v4952 = vadd.f32 0.0, %v4951
        %v4953 = vpop.f32.mrb[0].mxu0
        %4954 = vmatprep.mubr.f32.mxu0 0.0
        %4955 = vmatmul.mubr.f32.gmra.mrb[0].mxu0 %v4745
        %v4956 = vpop.f32.mrb[0].mxu0
        %v4957 = vadd.f32 0.0, %v4956
        %v4958 = vpop.f32.mrb[0].mxu0
        %4959 = vmatprep.mubr.f32.mxu0 0.0
        %4960 = vmatmul.mubr.f32.gmra.mrb[0].mxu0 %v4748
        %v4961 = vpop.f32.mrb[0].mxu0
        %v4962 = vpop.f32.mrb[0].mxu0
        %4963 = vmatprep.mubr.f32.mxu0 0.0
        %4964 = vmatmul.mubr.f32.gmra.mrb[0].mxu0 %v4751
        %v4965 = vpop.f32.mrb[0].mxu0
        %v4966 = vadd.f32 0.0, %v4965
        %v4967 = vpop.f32.mrb[0].mxu0
        %4968 = vmatprep.mubr.f32.mxu0 0.0
        %4969 = vmatmul.mubr.f32.gmra.mrb[0].mxu0 %v4754
        %v4970 = vpop.f32.mrb[0].mxu0
        %v4971 = vadd.f32 0.0, %v4970
        %v4972 = vpop.f32.mrb[0].mxu0
        %4973 = vmatprep.mubr.f32.mxu0 0.0
        %4974 = vmatmul.mubr.f32.gmra.mrb[0].mxu0 %v4757
        %v4975 = vpop.f32.mrb[0].mxu0
        %v4976 = vpop.f32.mrb[0].mxu0
        %4977 = vmatprep.mubr.f32.mxu0 0.0
        %4978 = vmatmul.mubr.f32.gmra.mrb[0].mxu0 %v4760
        %v4979 = vpop.f32.mrb[0].mxu0
        %v4980 = vadd.f32 0.0, %v4979
        %v4981 = vpop.f32.mrb[0].mxu0
        %4982 = vmatprep.mubr.f32.mxu0 0.0
        %4983 = vmatmul.mubr.f32.gmra.mrb[0].mxu0 %v4763
        %v4984 = vpop.f32.mrb[0].mxu0
        %v4985 = vadd.f32 0.0, %v4984
        %v4986 = vpop.f32.mrb[0].mxu0
        %4987 = vmatprep.mubr.f32.mxu0 0.0
        %4988 = vmatmul.mubr.f32.gmra.mrb[0].mxu0 %v4766
        %v4989 = vpop.f32.mrb[0].mxu0
        %v4990 = vpop.f32.mrb[0].mxu0
        %4991 = vmatprep.mubr.f32.mxu0 0.0
        %4992 = vmatmul.mubr.f32.gmra.mrb[0].mxu0 %v4769
        %v4993 = vpop.f32.mrb[0].mxu0
        %v4994 = vadd.f32 0.0, %v4993
        %v4995 = vpop.f32.mrb[0].mxu0
        %4996 = vmatprep.mubr.f32.mxu0 0.0
        %4997 = vmatmul.mubr.f32.gmra.mrb[0].mxu0 %v4772
        %v4998 = vpop.f32.mrb[0].mxu0
        %v4999 = vadd.f32 0.0, %v4998
        %v5000 = vpop.f32.mrb[0].mxu0
        %5001 = vmatprep.mubr.f32.mxu0 0.0
        %5002 = vmatmul.mubr.f32.gmra.mrb[0].mxu0 %v4775
        %v5003 = vpop.f32.mrb[0].mxu0
        %v5004 = vpop.f32.mrb[0].mxu0
        %5005 = vmatprep.mubr.f32.mxu0 0.0
        %5006 = vmatmul.mubr.f32.gmra.mrb[0].mxu0 %v4778
        %v5007 = vpop.f32.mrb[0].mxu0
        %v5008 = vadd.f32 0.0, %v5007
        %v5009 = vpop.f32.mrb[0].mxu0
        %5010 = vmatprep.mubr.f32.mxu0 0.0
        %5011 = vmatmul.mubr.f32.gmra.mrb[0].mxu0 %v4781
        %v5012 = vpop.f32.mrb[0].mxu0
        %v5013 = vadd.f32 0.0, %v5012
        %v5014 = vpop.f32.mrb[0].mxu0
        %5015 = vmatprep.mubr.f32.mxu0 0.0
        %5016 = vmatmul.mubr.f32.gmra.mrb[0].mxu0 %v4784
        %v5017 = vpop.f32.mrb[0].mxu0
        %v5018 = vpop.f32.mrb[0].mxu0
        %5019 = vmatprep.mubr.f32.mxu0 0.0
        %5020 = vmatmul.mubr.f32.gmra.mrb[0].mxu0 %v4787
        %v5021 = vpop.f32.mrb[0].mxu0
        %v5022 = vadd.f32 0.0, %v5021
        %v5023 = vpop.f32.mrb[0].mxu0
        %5024 = vmatprep.mubr.f32.mxu0 0.0
        %5025 = vmatmul.mubr.f32.gmra.mrb[0].mxu0 %v4790
        %v5026 = vpop.f32.mrb[0].mxu0
        %v5027 = vadd.f32 0.0, %v5026
        %v5028 = vpop.f32.mrb[0].mxu0
        %5029 = vmatprep.mubr.f32.mxu0 0.0
        %5030 = vmatmul.mubr.f32.gmra.mrb[0].mxu0 %v4793
        %v5031 = vpop.f32.mrb[0].mxu0
        %v5032 = vpop.f32.mrb[0].mxu0
        %5033 = vmatprep.mubr.f32.mxu0 0.0
        %5034 = vmatmul.mubr.f32.gmra.mrb[0].mxu0 %v4796
        %v5035 = vpop.f32.mrb[0].mxu0
        %v5036 = vadd.f32 0.0, %v5035
        %v5037 = vpop.f32.mrb[0].mxu0
        %5038 = vmatprep.mubr.f32.mxu0 0.0
        %5039 = vmatmul.mubr.f32.gmra.mrb[0].mxu0 %v4799
        %v5040 = vpop.f32.mrb[0].mxu0
        %v5041 = vadd.f32 0.0, %v5040
        %v5042 = vpop.f32.mrb[0].mxu0
        %5043 = vmatprep.mubr.f32.mxu0 0.0
        %5044 = vmatmul.mubr.f32.gmra.mrb[0].mxu0 %v4802
        %v5045 = vpop.f32.mrb[0].mxu0
        %v5046 = vpop.f32.mrb[0].mxu0
        %5047 = vmatprep.mubr.f32.mxu0 0.0
        %5048 = vmatmul.mubr.f32.gmra.mrb[0].mxu0 %v4805
        %v5049 = vpop.f32.mrb[0].mxu0
        %v5050 = vadd.f32 0.0, %v5049
        %v5051 = vpop.f32.mrb[0].mxu0
        %5052 = vmatprep.mubr.f32.mxu0 0.0
        %5053 = vmatmul.mubr.f32.gmra.mrb[0].mxu0 %v4808
        %v5054 = vpop.f32.mrb[0].mxu0
        %v5055 = vadd.f32 0.0, %v5054
        %v5056 = vpop.f32.mrb[0].mxu0
        %5057 = vmatprep.mubr.f32.mxu0 0.0
        %5058 = vmatmul.mubr.f32.gmra.mrb[0].mxu0 %v4811
        %v5059 = vpop.f32.mrb[0].mxu0
        %v5060 = vpop.f32.mrb[0].mxu0
        %5061 = vmatprep.mubr.f32.mxu0 0.0
        %5062 = vmatmul.mubr.f32.gmra.mrb[0].mxu0 %v4814
        %v5063 = vpop.f32.mrb[0].mxu0
        %v5064 = vadd.f32 0.0, %v5063
        %v5065 = vpop.f32.mrb[0].mxu0
        %5066 = vmatprep.mubr.f32.mxu0 0.0
        %5067 = vmatmul.mubr.f32.gmra.mrb[0].mxu0 %v4817
        %v5068 = vpop.f32.mrb[0].mxu0
        %v5069 = vadd.f32 0.0, %v5068
        %v5070 = vpop.f32.mrb[0].mxu0
        %5071 = vmatprep.mubr.f32.mxu0 0.0
        %5072 = vmatmul.mubr.f32.gmra.mrb[0].mxu0 %v4820
        %v5073 = vpop.f32.mrb[0].mxu0
        %v5074 = vpop.f32.mrb[0].mxu0
        %5075 = vmatprep.mubr.f32.mxu0 0.0
        %5076 = vmatmul.mubr.f32.gmra.mrb[0].mxu0 %v4823
        %v5077 = vpop.f32.mrb[0].mxu0
        %v5078 = vadd.f32 0.0, %v5077
        %v5079 = vpop.f32.mrb[0].mxu0
        %5080 = vmatprep.mubr.f32.mxu0 0.0
        %5081 = vmatmul.mubr.f32.gmra.mrb[0].mxu0 %v4826
        %v5082 = vpop.f32.mrb[0].mxu0
        %v5083 = vadd.f32 0.0, %v5082
        %v5084 = vpop.f32.mrb[0].mxu0
        %5085 = vmatprep.mubr.f32.mxu0 0.0
        %5086 = vmatmul.mubr.f32.gmra.mrb[0].mxu0 %v4829
        %v5087 = vpop.f32.mrb[0].mxu0
        %v5088 = vpop.f32.mrb[0].mxu0
        %5089 = vmatprep.mubr.f32.mxu0 0.0
        %5090 = vmatmul.mubr.f32.gmra.mrb[0].mxu0 %v4832
        %v5091 = vpop.f32.mrb[0].mxu0
        %v5092 = vadd.f32 0.0, %v5091
        %v5093 = vpop.f32.mrb[0].mxu0
        %5094 = vmatprep.mubr.f32.mxu0 0.0
        %5095 = vmatmul.mubr.f32.gmra.mrb[0].mxu0 %v4835
        %v5096 = vpop.f32.mrb[0].mxu0
        %v5097 = vadd.f32 0.0, %v5096
        %v5098 = vpop.f32.mrb[0].mxu0
        %5099 = vmatprep.mubr.f32.mxu0 0.0
        %5100 = vmatmul.mubr.f32.gmra.mrb[0].mxu0 %v4838
        %v5101 = vpop.f32.mrb[0].mxu0
        %v5102 = vpop.f32.mrb[0].mxu0
        %5103 = vmatprep.mubr.f32.mxu0 0.0
        %5104 = vmatmul.mubr.f32.gmra.mrb[0].mxu0 %v4841
        %v5105 = vpop.f32.mrb[0].mxu0
        %v5106 = vadd.f32 0.0, %v5105
        %v5107 = vpop.f32.mrb[0].mxu0
        %5108 = vmatprep.mubr.f32.mxu0 0.0
        %5109 = vmatmul.mubr.f32.gmra.mrb[0].mxu0 %v4844
        %v5110 = vpop.f32.mrb[0].mxu0
        %v5111 = vadd.f32 0.0, %v5110
        %v5112 = vpop.f32.mrb[0].mxu0
        %5113 = vmatprep.mubr.f32.mxu0 0.0
        %5114 = vmatmul.mubr.f32.gmra.mrb[0].mxu0 %v4847
        %v5115 = vpop.f32.mrb[0].mxu0
        %v5116 = vpop.f32.mrb[0].mxu0
        %5117 = vmatprep.mubr.f32.mxu0 0.0
        %5118 = vmatmul.mubr.f32.gmra.mrb[0].mxu0 %v4850
        %v5119 = vpop.f32.mrb[0].mxu0
        %v5120 = vadd.f32 0.0, %v5119
        %v5121 = vpop.f32.mrb[0].mxu0
        %5122 = vmatprep.mubr.f32.mxu0 0.0
        %5123 = vmatmul.mubr.f32.gmra.mrb[0].mxu0 %v4853
        %v5124 = vpop.f32.mrb[0].mxu0
        %v5125 = vadd.f32 0.0, %v5124
        %v5126 = vpop.f32.mrb[0].mxu0
        %5127 = vmatprep.mubr.f32.mxu0 0.0
        %5128 = vmatmul.mubr.f32.gmra.mrb[0].mxu0 %v4856
        %v5129 = vpop.f32.mrb[0].mxu0
        %v5130 = vpop.f32.mrb[0].mxu0
        %5131 = vmatprep.mubr.f32.mxu0 0.0
        %5132 = vmatmul.mubr.f32.gmra.mrb[0].mxu0 %v4859
        %v5133 = vpop.f32.mrb[0].mxu0
        %v5134 = vadd.f32 0.0, %v5133
        %v5135 = vpop.f32.mrb[0].mxu0
        %5136 = vmatprep.mubr.f32.mxu0 0.0
        %5137 = vmatmul.mubr.f32.gmra.mrb[0].mxu0 %v4862
        %v5138 = vpop.f32.mrb[0].mxu0
        %v5139 = vadd.f32 0.0, %v5138
        %v5140 = vpop.f32.mrb[0].mxu0
        %5141 = vmatprep.mubr.f32.mxu0 0.0
        %5142 = vmatmul.mubr.f32.gmra.mrb[0].mxu0 %v4865
        %v5143 = vpop.f32.mrb[0].mxu0
        %v5144 = vpop.f32.mrb[0].mxu0
        %5145 = vmatprep.mubr.f32.mxu0 0.0
        %5146 = vmatmul.mubr.f32.gmra.mrb[0].mxu0 %v4868
        %v5147 = vpop.f32.mrb[0].mxu0
        %v5148 = vadd.f32 0.0, %v5147
        %v5149 = vpop.f32.mrb[0].mxu0
        %5150 = vmatprep.mubr.f32.mxu0 0.0
        %5151 = vmatmul.mubr.f32.gmra.mrb[0].mxu0 %v4871
        %v5152 = vpop.f32.mrb[0].mxu0
        %v5153 = vadd.f32 0.0, %v5152
        %v5154 = vpop.f32.mrb[0].mxu0
        %5155 = vmatprep.mubr.f32.mxu0 0.0
        %5156 = vmatmul.mubr.f32.gmra.mrb[0].mxu0 %v4874
        %v5157 = vpop.f32.mrb[0].mxu0
        %v5158 = vpop.f32.mrb[0].mxu0
        %5159 = vmatprep.mubr.f32.mxu0 0.0
        %5160 = vmatmul.mubr.f32.gmra.mrb[0].mxu0 %v4877
        %v5161 = vpop.f32.mrb[0].mxu0
        %v5162 = vadd.f32 0.0, %v5161
        %v5163 = vpop.f32.mrb[0].mxu0
        %5164 = vmatprep.mubr.f32.mxu0 0.0
        %5165 = vmatmul.mubr.f32.gmra.mrb[0].mxu0 %v4880
        %v5166 = vpop.f32.mrb[0].mxu0
        %v5167 = vadd.f32 0.0, %v5166
        %v5168 = vpop.f32.mrb[0].mxu0
        %5169 = vmatprep.mubr.f32.mxu0 0.0
        %5170 = vmatmul.mubr.f32.gmra.mrb[0].mxu0 %v4883
        %v5171 = vpop.f32.mrb[0].mxu0
        %v5172 = vpop.f32.mrb[0].mxu0
        %5173 = vdwg.mxu0
        %v5174 = vadd.f32 %v4656, %v4952
        %v5175 = vadd.f32 %v4657, %v4957
        %v5176 = vadd.f32 %v4658, %v4966
        %v5177 = vadd.f32 %v4659, %v4971
        %v5178 = vadd.f32 %v4660, %v4980
        %v5179 = vadd.f32 %v4661, %v4985
        %v5180 = vadd.f32 %v4662, %v4994
        %v5181 = vadd.f32 %v4663, %v4999
        %v5182 = vadd.f32 %v4664, %v5008
        %v5183 = vadd.f32 %v4665, %v5013
        %v5184 = vadd.f32 %v4666, %v5022
        %v5185 = vadd.f32 %v4667, %v5027
        %v5186 = vadd.f32 %v4668, %v5036
        %v5187 = vadd.f32 %v4669, %v5041
        %v5188 = vadd.f32 %v4670, %v5050
        %v5189 = vadd.f32 %v4671, %v5055
        %v5190 = vadd.f32 %v4672, %v5064
        %v5191 = vadd.f32 %v4673, %v5069
        %v5192 = vadd.f32 %v4674, %v5078
        %v5193 = vadd.f32 %v4675, %v5083
        %v5194 = vadd.f32 %v4676, %v5092
        %v5195 = vadd.f32 %v4677, %v5097
        %v5196 = vadd.f32 %v4678, %v5106
        %v5197 = vadd.f32 %v4679, %v5111
        %v5198 = vadd.f32 %v4680, %v5120
        %v5199 = vadd.f32 %v4681, %v5125
        %v5200 = vadd.f32 %v4682, %v5134
        %v5201 = vadd.f32 %v4683, %v5139
        %v5202 = vadd.f32 %v4684, %v5148
        %v5203 = vadd.f32 %v4685, %v5153
        %v5204 = vadd.f32 %v4686, %v5162
        %v5205 = vadd.f32 %v4687, %v5167
        %v5206 = vld [vmem:[#allocation2 + $0x47] sm:$0xff]
        %v5207 = vld [vmem:[#allocation2 + $0x4f] sm:$0xff]
        %v5208 = vld [vmem:[#allocation2 + $0x57] sm:$0xff]
        %v5209 = vld [vmem:[#allocation2 + $0x5f] sm:$0xff]
        %v5210 = vld [vmem:[#allocation2 + $0x67] sm:$0xff]
        %v5211 = vld [vmem:[#allocation2 + $0x6f] sm:$0xff]
        %v5212 = vld [vmem:[#allocation2 + $0x77] sm:$0xff]
        %v5213 = vld [vmem:[#allocation2 + $0x7f] sm:$0xff]
        %v5214 = vld [vmem:[#allocation2 + $0x87] sm:$0xff]
        %v5215 = vld [vmem:[#allocation2 + $0x8f] sm:$0xff]
        %v5216 = vld [vmem:[#allocation2 + $0x97] sm:$0xff]
        %v5217 = vld [vmem:[#allocation2 + $0x9f] sm:$0xff]
        %v5218 = vld [vmem:[#allocation2 + $0xa7] sm:$0xff]
        %v5219 = vld [vmem:[#allocation2 + $0xaf] sm:$0xff]
        %v5220 = vld [vmem:[#allocation2 + $0xb7] sm:$0xff]
        %v5221 = vld [vmem:[#allocation2 + $0xbf] sm:$0xff]
        %v5222 = vld [vmem:[#allocation2 + $0xc7] sm:$0xff]
        %v5223 = vld [vmem:[#allocation2 + $0xcf] sm:$0xff]
        %v5224 = vld [vmem:[#allocation2 + $0xd7] sm:$0xff]
        %v5225 = vld [vmem:[#allocation2 + $0xdf] sm:$0xff]
        %v5226 = vld [vmem:[#allocation2 + $0xe7] sm:$0xff]
        %v5227 = vld [vmem:[#allocation2 + $0xef] sm:$0xff]
        %v5228 = vld [vmem:[#allocation2 + $0xf7] sm:$0xff]
        %v5229 = vld [vmem:[#allocation2 + $0xff] sm:$0xff]
        %v5230 = vld [vmem:[#allocation2 + $0x107] sm:$0xff]
        %v5231 = vld [vmem:[#allocation2 + $0x10f] sm:$0xff]
        %v5232 = vld [vmem:[#allocation2 + $0x117] sm:$0xff]
        %v5233 = vld [vmem:[#allocation2 + $0x11f] sm:$0xff]
        %v5234 = vld [vmem:[#allocation2 + $0x127] sm:$0xff]
        %v5235 = vld [vmem:[#allocation2 + $0x12f] sm:$0xff]
        %v5236 = vld [vmem:[#allocation2 + $0x137] sm:$0xff]
        %v5237 = vld [vmem:[#allocation2 + $0x13f] sm:$0xff]
        %v5238 = vld [vmem:[#allocation2 + $0x147] sm:$0xff]
        %v5239 = vld [vmem:[#allocation2 + $0x14f] sm:$0xff]
        %v5240 = vld [vmem:[#allocation2 + $0x157] sm:$0xff]
        %v5241 = vld [vmem:[#allocation2 + $0x15f] sm:$0xff]
        %v5242 = vld [vmem:[#allocation2 + $0x167] sm:$0xff]
        %v5243 = vld [vmem:[#allocation2 + $0x16f] sm:$0xff]
        %v5244 = vld [vmem:[#allocation2 + $0x177] sm:$0xff]
        %v5245 = vld [vmem:[#allocation2 + $0x17f] sm:$0xff]
        %v5246 = vld [vmem:[#allocation2 + $0x187] sm:$0xff]
        %v5247 = vld [vmem:[#allocation2 + $0x18f] sm:$0xff]
        %v5248 = vld [vmem:[#allocation2 + $0x197] sm:$0xff]
        %v5249 = vld [vmem:[#allocation2 + $0x19f] sm:$0xff]
        %v5250 = vld [vmem:[#allocation2 + $0x1a7] sm:$0xff]
        %v5251 = vld [vmem:[#allocation2 + $0x1af] sm:$0xff]
        %v5252 = vld [vmem:[#allocation2 + $0x1b7] sm:$0xff]
        %v5253 = vld [vmem:[#allocation2 + $0x1bf] sm:$0xff]
        %s5254 = scalar_lea.vmem [#allocation3], 192
        %v5255 = vld [vmem:[%s5254] sm:$0xff]
        %v5256 = vld [vmem:[%s5254 + $0x8] sm:$0xff]
        %v5257 = vld [vmem:[%s5254 + $0x10] sm:$0xff]
        %v5258 = vld [vmem:[%s5254 + $0x18] sm:$0xff]
        %v5260 = vsel %vm346, %v5206, 0
        %v5263 = vsel %vm346, %v5207, 0
        %v5266 = vsel %vm346, %v5208, 0
        %v5269 = vsel %vm346, %v5209, 0
        %v5272 = vsel %vm346, %v5210, 0
        %v5275 = vsel %vm346, %v5211, 0
        %v5278 = vsel %vm346, %v5212, 0
        %v5281 = vsel %vm346, %v5213, 0
        %v5284 = vsel %vm346, %v5214, 0
        %v5287 = vsel %vm346, %v5215, 0
        %v5290 = vsel %vm346, %v5216, 0
        %v5293 = vsel %vm346, %v5217, 0
        %v5296 = vsel %vm346, %v5218, 0
        %v5299 = vsel %vm346, %v5219, 0
        %v5302 = vsel %vm346, %v5220, 0
        %v5305 = vsel %vm346, %v5221, 0
        %v5308 = vsel %vm346, %v5222, 0
        %v5311 = vsel %vm346, %v5223, 0
        %v5314 = vsel %vm346, %v5224, 0
        %v5317 = vsel %vm346, %v5225, 0
        %v5320 = vsel %vm346, %v5226, 0
        %v5323 = vsel %vm346, %v5227, 0
        %v5326 = vsel %vm346, %v5228, 0
        %v5329 = vsel %vm346, %v5229, 0
        %v5332 = vsel %vm346, %v5230, 0
        %v5335 = vsel %vm346, %v5231, 0
        %v5338 = vsel %vm346, %v5232, 0
        %v5341 = vsel %vm346, %v5233, 0
        %v5344 = vsel %vm346, %v5234, 0
        %v5347 = vsel %vm346, %v5235, 0
        %v5350 = vsel %vm346, %v5236, 0
        %v5353 = vsel %vm346, %v5237, 0
        %v5356 = vsel %vm346, %v5238, 0
        %v5359 = vsel %vm346, %v5239, 0
        %v5362 = vsel %vm346, %v5240, 0
        %v5365 = vsel %vm346, %v5241, 0
        %v5368 = vsel %vm346, %v5242, 0
        %v5371 = vsel %vm346, %v5243, 0
        %v5374 = vsel %vm346, %v5244, 0
        %v5377 = vsel %vm346, %v5245, 0
        %v5380 = vsel %vm346, %v5246, 0
        %v5383 = vsel %vm346, %v5247, 0
        %v5386 = vsel %vm346, %v5248, 0
        %v5389 = vsel %vm346, %v5249, 0
        %v5392 = vsel %vm346, %v5250, 0
        %v5395 = vsel %vm346, %v5251, 0
        %v5398 = vsel %vm346, %v5252, 0
        %v5401 = vsel %vm346, %v5253, 0
        %5403 = vmatprep.subr.mxu0 0.0
        %5404 = vmatpush1.msra.mxu0 %v5255
        %5405 = vmatprep.subr.mxu0 0.0
        %5406 = vmatpush1.msra.mxu0 %v5256
        %5407 = vmatprep.subr.mxu0 0.0
        %5408 = vmatpush1.msra.mxu0 %v5257
        %5409 = vmatprep.subr.mxu0 0.0
        %5410 = vmatpush1.msra.mxu0 %v5258
        %5411 = vmatprep.subr.mxu0 0.0
        %5412 = vmatpush1.msra.mxu0 0.0
        %5413 = vmatprep.subr.mxu0 0.0
        %5414 = vmatpush1.msra.mxu0 0.0
        %5415 = vmatprep.subr.mxu0 0.0
        %5416 = vmatpush1.msra.mxu0 0.0
        %5417 = vmatprep.subr.mxu0 0.0
        %5418 = vmatpush1.msra.mxu0 0.0
        %5419 = vmatprep.subr.mxu0 0.0
        %5420 = vmatpush1.msra.mxu0 0.0
        %5421 = vmatprep.subr.mxu0 0.0
        %5422 = vmatpush1.msra.mxu0 0.0
        %5423 = vmatprep.subr.mxu0 0.0
        %5424 = vmatpush1.msra.mxu0 0.0
        %5425 = vmatprep.subr.mxu0 0.0
        %5426 = vmatpush1.msra.mxu0 0.0
        %5427 = vmatprep.subr.mxu0 0.0
        %5428 = vmatpush1.msra.mxu0 0.0
        %5429 = vmatprep.subr.mxu0 0.0
        %5430 = vmatpush1.msra.mxu0 0.0
        %5431 = vmatprep.subr.mxu0 0.0
        %5432 = vmatpush1.msra.mxu0 0.0
        %5433 = vmatprep.subr.mxu0 0.0
        %5434 = vmatpush1.msra.mxu0 0.0
        %5435 = vmatprep.subr.mxu0 0.0
        %5436 = vmatpush1.msra.mxu0 0.0
        %5437 = vmatprep.subr.mxu0 0.0
        %5438 = vmatpush1.msra.mxu0 0.0
        %5439 = vmatprep.subr.mxu0 0.0
        %5440 = vmatpush1.msra.mxu0 0.0
        %5441 = vmatprep.subr.mxu0 0.0
        %5442 = vmatpush1.msra.mxu0 0.0
        %5443 = vmatprep.subr.mxu0 0.0
        %5444 = vmatpush1.msra.mxu0 0.0
        %5445 = vmatprep.subr.mxu0 0.0
        %5446 = vmatpush1.msra.mxu0 0.0
        %5447 = vmatprep.subr.mxu0 0.0
        %5448 = vmatpush1.msra.mxu0 0.0
        %5449 = vmatprep.subr.mxu0 0.0
        %5450 = vmatpush1.msra.mxu0 0.0
        %5451 = vmatprep.subr.mxu0 0.0
        %5452 = vmatpush1.msra.mxu0 0.0
        %5453 = vmatprep.subr.mxu0 0.0
        %5454 = vmatpush1.msra.mxu0 0.0
        %5455 = vmatprep.subr.mxu0 0.0
        %5456 = vmatpush1.msra.mxu0 0.0
        %5457 = vmatprep.subr.mxu0 0.0
        %5458 = vmatpush1.msra.mxu0 0.0
        %5459 = vmatprep.subr.mxu0 0.0
        %5460 = vmatpush1.msra.mxu0 0.0
        %5461 = vmatprep.subr.mxu0 0.0
        %5462 = vmatpush1.msra.mxu0 0.0
        %5463 = vmatprep.subr.mxu0 0.0
        %5464 = vmatpush1.msra.mxu0 0.0
        %5465 = vmatprep.subr.mxu0 0.0
        %5466 = vmatpush1.msra.mxu0 0.0
        %5467 = vmatprep.mubr.f32.mxu0 0.0
        %5468 = vmatmul.mubr.f32.gmra.mrb[0].mxu0 %v5260
        %v5469 = vpop.f32.mrb[0].mxu0
        %v5470 = vadd.f32 0.0, %v5469
        %v5471 = vpop.f32.mrb[0].mxu0
        %5472 = vmatprep.mubr.f32.mxu0 0.0
        %5473 = vmatmul.mubr.f32.gmra.mrb[0].mxu0 %v5263
        %v5474 = vpop.f32.mrb[0].mxu0
        %v5475 = vadd.f32 0.0, %v5474
        %v5476 = vpop.f32.mrb[0].mxu0
        %5477 = vmatprep.mubr.f32.mxu0 0.0
        %5478 = vmatmul.mubr.f32.gmra.mrb[0].mxu0 %v5266
        %v5479 = vpop.f32.mrb[0].mxu0
        %v5480 = vpop.f32.mrb[0].mxu0
        %5481 = vmatprep.mubr.f32.mxu0 0.0
        %5482 = vmatmul.mubr.f32.gmra.mrb[0].mxu0 %v5269
        %v5483 = vpop.f32.mrb[0].mxu0
        %v5484 = vadd.f32 0.0, %v5483
        %v5485 = vpop.f32.mrb[0].mxu0
        %5486 = vmatprep.mubr.f32.mxu0 0.0
        %5487 = vmatmul.mubr.f32.gmra.mrb[0].mxu0 %v5272
        %v5488 = vpop.f32.mrb[0].mxu0
        %v5489 = vadd.f32 0.0, %v5488
        %v5490 = vpop.f32.mrb[0].mxu0
        %5491 = vmatprep.mubr.f32.mxu0 0.0
        %5492 = vmatmul.mubr.f32.gmra.mrb[0].mxu0 %v5275
        %v5493 = vpop.f32.mrb[0].mxu0
        %v5494 = vpop.f32.mrb[0].mxu0
        %5495 = vmatprep.mubr.f32.mxu0 0.0
        %5496 = vmatmul.mubr.f32.gmra.mrb[0].mxu0 %v5278
        %v5497 = vpop.f32.mrb[0].mxu0
        %v5498 = vadd.f32 0.0, %v5497
        %v5499 = vpop.f32.mrb[0].mxu0
        %5500 = vmatprep.mubr.f32.mxu0 0.0
        %5501 = vmatmul.mubr.f32.gmra.mrb[0].mxu0 %v5281
        %v5502 = vpop.f32.mrb[0].mxu0
        %v5503 = vadd.f32 0.0, %v5502
        %v5504 = vpop.f32.mrb[0].mxu0
        %5505 = vmatprep.mubr.f32.mxu0 0.0
        %5506 = vmatmul.mubr.f32.gmra.mrb[0].mxu0 %v5284
        %v5507 = vpop.f32.mrb[0].mxu0
        %v5508 = vpop.f32.mrb[0].mxu0
        %5509 = vmatprep.mubr.f32.mxu0 0.0
        %5510 = vmatmul.mubr.f32.gmra.mrb[0].mxu0 %v5287
        %v5511 = vpop.f32.mrb[0].mxu0
        %v5512 = vadd.f32 0.0, %v5511
        %v5513 = vpop.f32.mrb[0].mxu0
        %5514 = vmatprep.mubr.f32.mxu0 0.0
        %5515 = vmatmul.mubr.f32.gmra.mrb[0].mxu0 %v5290
        %v5516 = vpop.f32.mrb[0].mxu0
        %v5517 = vadd.f32 0.0, %v5516
        %v5518 = vpop.f32.mrb[0].mxu0
        %5519 = vmatprep.mubr.f32.mxu0 0.0
        %5520 = vmatmul.mubr.f32.gmra.mrb[0].mxu0 %v5293
        %v5521 = vpop.f32.mrb[0].mxu0
        %v5522 = vpop.f32.mrb[0].mxu0
        %5523 = vmatprep.mubr.f32.mxu0 0.0
        %5524 = vmatmul.mubr.f32.gmra.mrb[0].mxu0 %v5296
        %v5525 = vpop.f32.mrb[0].mxu0
        %v5526 = vadd.f32 0.0, %v5525
        %v5527 = vpop.f32.mrb[0].mxu0
        %5528 = vmatprep.mubr.f32.mxu0 0.0
        %5529 = vmatmul.mubr.f32.gmra.mrb[0].mxu0 %v5299
        %v5530 = vpop.f32.mrb[0].mxu0
        %v5531 = vadd.f32 0.0, %v5530
        %v5532 = vpop.f32.mrb[0].mxu0
        %5533 = vmatprep.mubr.f32.mxu0 0.0
        %5534 = vmatmul.mubr.f32.gmra.mrb[0].mxu0 %v5302
        %v5535 = vpop.f32.mrb[0].mxu0
        %v5536 = vpop.f32.mrb[0].mxu0
        %5537 = vmatprep.mubr.f32.mxu0 0.0
        %5538 = vmatmul.mubr.f32.gmra.mrb[0].mxu0 %v5305
        %v5539 = vpop.f32.mrb[0].mxu0
        %v5540 = vadd.f32 0.0, %v5539
        %v5541 = vpop.f32.mrb[0].mxu0
        %5542 = vmatprep.mubr.f32.mxu0 0.0
        %5543 = vmatmul.mubr.f32.gmra.mrb[0].mxu0 %v5308
        %v5544 = vpop.f32.mrb[0].mxu0
        %v5545 = vadd.f32 0.0, %v5544
        %v5546 = vpop.f32.mrb[0].mxu0
        %5547 = vmatprep.mubr.f32.mxu0 0.0
        %5548 = vmatmul.mubr.f32.gmra.mrb[0].mxu0 %v5311
        %v5549 = vpop.f32.mrb[0].mxu0
        %v5550 = vpop.f32.mrb[0].mxu0
        %5551 = vmatprep.mubr.f32.mxu0 0.0
        %5552 = vmatmul.mubr.f32.gmra.mrb[0].mxu0 %v5314
        %v5553 = vpop.f32.mrb[0].mxu0
        %v5554 = vadd.f32 0.0, %v5553
        %v5555 = vpop.f32.mrb[0].mxu0
        %5556 = vmatprep.mubr.f32.mxu0 0.0
        %5557 = vmatmul.mubr.f32.gmra.mrb[0].mxu0 %v5317
        %v5558 = vpop.f32.mrb[0].mxu0
        %v5559 = vadd.f32 0.0, %v5558
        %v5560 = vpop.f32.mrb[0].mxu0
        %5561 = vmatprep.mubr.f32.mxu0 0.0
        %5562 = vmatmul.mubr.f32.gmra.mrb[0].mxu0 %v5320
        %v5563 = vpop.f32.mrb[0].mxu0
        %v5564 = vpop.f32.mrb[0].mxu0
        %5565 = vmatprep.mubr.f32.mxu0 0.0
        %5566 = vmatmul.mubr.f32.gmra.mrb[0].mxu0 %v5323
        %v5567 = vpop.f32.mrb[0].mxu0
        %v5568 = vadd.f32 0.0, %v5567
        %v5569 = vpop.f32.mrb[0].mxu0
        %5570 = vmatprep.mubr.f32.mxu0 0.0
        %5571 = vmatmul.mubr.f32.gmra.mrb[0].mxu0 %v5326
        %v5572 = vpop.f32.mrb[0].mxu0
        %v5573 = vadd.f32 0.0, %v5572
        %v5574 = vpop.f32.mrb[0].mxu0
        %5575 = vmatprep.mubr.f32.mxu0 0.0
        %5576 = vmatmul.mubr.f32.gmra.mrb[0].mxu0 %v5329
        %v5577 = vpop.f32.mrb[0].mxu0
        %v5578 = vpop.f32.mrb[0].mxu0
        %5579 = vmatprep.mubr.f32.mxu0 0.0
        %5580 = vmatmul.mubr.f32.gmra.mrb[0].mxu0 %v5332
        %v5581 = vpop.f32.mrb[0].mxu0
        %v5582 = vadd.f32 0.0, %v5581
        %v5583 = vpop.f32.mrb[0].mxu0
        %5584 = vmatprep.mubr.f32.mxu0 0.0
        %5585 = vmatmul.mubr.f32.gmra.mrb[0].mxu0 %v5335
        %v5586 = vpop.f32.mrb[0].mxu0
        %v5587 = vadd.f32 0.0, %v5586
        %v5588 = vpop.f32.mrb[0].mxu0
        %5589 = vmatprep.mubr.f32.mxu0 0.0
        %5590 = vmatmul.mubr.f32.gmra.mrb[0].mxu0 %v5338
        %v5591 = vpop.f32.mrb[0].mxu0
        %v5592 = vpop.f32.mrb[0].mxu0
        %5593 = vmatprep.mubr.f32.mxu0 0.0
        %5594 = vmatmul.mubr.f32.gmra.mrb[0].mxu0 %v5341
        %v5595 = vpop.f32.mrb[0].mxu0
        %v5596 = vadd.f32 0.0, %v5595
        %v5597 = vpop.f32.mrb[0].mxu0
        %5598 = vmatprep.mubr.f32.mxu0 0.0
        %5599 = vmatmul.mubr.f32.gmra.mrb[0].mxu0 %v5344
        %v5600 = vpop.f32.mrb[0].mxu0
        %v5601 = vadd.f32 0.0, %v5600
        %v5602 = vpop.f32.mrb[0].mxu0
        %5603 = vmatprep.mubr.f32.mxu0 0.0
        %5604 = vmatmul.mubr.f32.gmra.mrb[0].mxu0 %v5347
        %v5605 = vpop.f32.mrb[0].mxu0
        %v5606 = vpop.f32.mrb[0].mxu0
        %5607 = vmatprep.mubr.f32.mxu0 0.0
        %5608 = vmatmul.mubr.f32.gmra.mrb[0].mxu0 %v5350
        %v5609 = vpop.f32.mrb[0].mxu0
        %v5610 = vadd.f32 0.0, %v5609
        %v5611 = vpop.f32.mrb[0].mxu0
        %5612 = vmatprep.mubr.f32.mxu0 0.0
        %5613 = vmatmul.mubr.f32.gmra.mrb[0].mxu0 %v5353
        %v5614 = vpop.f32.mrb[0].mxu0
        %v5615 = vadd.f32 0.0, %v5614
        %v5616 = vpop.f32.mrb[0].mxu0
        %5617 = vmatprep.mubr.f32.mxu0 0.0
        %5618 = vmatmul.mubr.f32.gmra.mrb[0].mxu0 %v5356
        %v5619 = vpop.f32.mrb[0].mxu0
        %v5620 = vpop.f32.mrb[0].mxu0
        %5621 = vmatprep.mubr.f32.mxu0 0.0
        %5622 = vmatmul.mubr.f32.gmra.mrb[0].mxu0 %v5359
        %v5623 = vpop.f32.mrb[0].mxu0
        %v5624 = vadd.f32 0.0, %v5623
        %v5625 = vpop.f32.mrb[0].mxu0
        %5626 = vmatprep.mubr.f32.mxu0 0.0
        %5627 = vmatmul.mubr.f32.gmra.mrb[0].mxu0 %v5362
        %v5628 = vpop.f32.mrb[0].mxu0
        %v5629 = vadd.f32 0.0, %v5628
        %v5630 = vpop.f32.mrb[0].mxu0
        %5631 = vmatprep.mubr.f32.mxu0 0.0
        %5632 = vmatmul.mubr.f32.gmra.mrb[0].mxu0 %v5365
        %v5633 = vpop.f32.mrb[0].mxu0
        %v5634 = vpop.f32.mrb[0].mxu0
        %5635 = vmatprep.mubr.f32.mxu0 0.0
        %5636 = vmatmul.mubr.f32.gmra.mrb[0].mxu0 %v5368
        %v5637 = vpop.f32.mrb[0].mxu0
        %v5638 = vadd.f32 0.0, %v5637
        %v5639 = vpop.f32.mrb[0].mxu0
        %5640 = vmatprep.mubr.f32.mxu0 0.0
        %5641 = vmatmul.mubr.f32.gmra.mrb[0].mxu0 %v5371
        %v5642 = vpop.f32.mrb[0].mxu0
        %v5643 = vadd.f32 0.0, %v5642
        %v5644 = vpop.f32.mrb[0].mxu0
        %5645 = vmatprep.mubr.f32.mxu0 0.0
        %5646 = vmatmul.mubr.f32.gmra.mrb[0].mxu0 %v5374
        %v5647 = vpop.f32.mrb[0].mxu0
        %v5648 = vpop.f32.mrb[0].mxu0
        %5649 = vmatprep.mubr.f32.mxu0 0.0
        %5650 = vmatmul.mubr.f32.gmra.mrb[0].mxu0 %v5377
        %v5651 = vpop.f32.mrb[0].mxu0
        %v5652 = vadd.f32 0.0, %v5651
        %v5653 = vpop.f32.mrb[0].mxu0
        %5654 = vmatprep.mubr.f32.mxu0 0.0
        %5655 = vmatmul.mubr.f32.gmra.mrb[0].mxu0 %v5380
        %v5656 = vpop.f32.mrb[0].mxu0
        %v5657 = vadd.f32 0.0, %v5656
        %v5658 = vpop.f32.mrb[0].mxu0
        %5659 = vmatprep.mubr.f32.mxu0 0.0
        %5660 = vmatmul.mubr.f32.gmra.mrb[0].mxu0 %v5383
        %v5661 = vpop.f32.mrb[0].mxu0
        %v5662 = vpop.f32.mrb[0].mxu0
        %5663 = vmatprep.mubr.f32.mxu0 0.0
        %5664 = vmatmul.mubr.f32.gmra.mrb[0].mxu0 %v5386
        %v5665 = vpop.f32.mrb[0].mxu0
        %v5666 = vadd.f32 0.0, %v5665
        %v5667 = vpop.f32.mrb[0].mxu0
        %5668 = vmatprep.mubr.f32.mxu0 0.0
        %5669 = vmatmul.mubr.f32.gmra.mrb[0].mxu0 %v5389
        %v5670 = vpop.f32.mrb[0].mxu0
        %v5671 = vadd.f32 0.0, %v5670
        %v5672 = vpop.f32.mrb[0].mxu0
        %5673 = vmatprep.mubr.f32.mxu0 0.0
        %5674 = vmatmul.mubr.f32.gmra.mrb[0].mxu0 %v5392
        %v5675 = vpop.f32.mrb[0].mxu0
        %v5676 = vpop.f32.mrb[0].mxu0
        %5677 = vmatprep.mubr.f32.mxu0 0.0
        %5678 = vmatmul.mubr.f32.gmra.mrb[0].mxu0 %v5395
        %v5679 = vpop.f32.mrb[0].mxu0
        %v5680 = vadd.f32 0.0, %v5679
        %v5681 = vpop.f32.mrb[0].mxu0
        %5682 = vmatprep.mubr.f32.mxu0 0.0
        %5683 = vmatmul.mubr.f32.gmra.mrb[0].mxu0 %v5398
        %v5684 = vpop.f32.mrb[0].mxu0
        %v5685 = vadd.f32 0.0, %v5684
        %v5686 = vpop.f32.mrb[0].mxu0
        %5687 = vmatprep.mubr.f32.mxu0 0.0
        %5688 = vmatmul.mubr.f32.gmra.mrb[0].mxu0 %v5401
        %v5689 = vpop.f32.mrb[0].mxu0
        %v5690 = vpop.f32.mrb[0].mxu0
        %5691 = vdwg.mxu0
        %v5692 = vadd.f32 %v5174, %v5470
        %v5693 = vadd.f32 %v5175, %v5475
        %v5694 = vadd.f32 %v5176, %v5484
        %v5695 = vadd.f32 %v5177, %v5489
        %v5696 = vadd.f32 %v5178, %v5498
        %v5697 = vadd.f32 %v5179, %v5503
        %v5698 = vadd.f32 %v5180, %v5512
        %v5699 = vadd.f32 %v5181, %v5517
        %v5700 = vadd.f32 %v5182, %v5526
        %v5701 = vadd.f32 %v5183, %v5531
        %v5702 = vadd.f32 %v5184, %v5540
        %v5703 = vadd.f32 %v5185, %v5545
        %v5704 = vadd.f32 %v5186, %v5554
        %v5705 = vadd.f32 %v5187, %v5559
        %v5706 = vadd.f32 %v5188, %v5568
        %v5707 = vadd.f32 %v5189, %v5573
        %v5708 = vadd.f32 %v5190, %v5582
        %v5709 = vadd.f32 %v5191, %v5587
        %v5710 = vadd.f32 %v5192, %v5596
        %v5711 = vadd.f32 %v5193, %v5601
        %v5712 = vadd.f32 %v5194, %v5610
        %v5713 = vadd.f32 %v5195, %v5615
        %v5714 = vadd.f32 %v5196, %v5624
        %v5715 = vadd.f32 %v5197, %v5629
        %v5716 = vadd.f32 %v5198, %v5638
        %v5717 = vadd.f32 %v5199, %v5643
        %v5718 = vadd.f32 %v5200, %v5652
        %v5719 = vadd.f32 %v5201, %v5657
        %v5720 = vadd.f32 %v5202, %v5666
        %v5721 = vadd.f32 %v5203, %v5671
        %v5722 = vadd.f32 %v5204, %v5680
        %v5723 = vadd.f32 %v5205, %v5685
        %v5724 = vld [vmem:[#allocation2 + $0x48] sm:$0xff]
        %v5725 = vld [vmem:[#allocation2 + $0x50] sm:$0xff]
        %v5726 = vld [vmem:[#allocation2 + $0x58] sm:$0xff]
        %v5727 = vld [vmem:[#allocation2 + $0x60] sm:$0xff]
        %v5728 = vld [vmem:[#allocation2 + $0x68] sm:$0xff]
        %v5729 = vld [vmem:[#allocation2 + $0x70] sm:$0xff]
        %v5730 = vld [vmem:[#allocation2 + $0x78] sm:$0xff]
        %v5731 = vld [vmem:[#allocation2 + $0x80] sm:$0xff]
        %v5732 = vld [vmem:[#allocation2 + $0x88] sm:$0xff]
        %v5733 = vld [vmem:[#allocation2 + $0x90] sm:$0xff]
        %v5734 = vld [vmem:[#allocation2 + $0x98] sm:$0xff]
        %v5735 = vld [vmem:[#allocation2 + $0xa0] sm:$0xff]
        %v5736 = vld [vmem:[#allocation2 + $0xa8] sm:$0xff]
        %v5737 = vld [vmem:[#allocation2 + $0xb0] sm:$0xff]
        %v5738 = vld [vmem:[#allocation2 + $0xb8] sm:$0xff]
        %v5739 = vld [vmem:[#allocation2 + $0xc0] sm:$0xff]
        %v5740 = vld [vmem:[#allocation2 + $0xc8] sm:$0xff]
        %v5741 = vld [vmem:[#allocation2 + $0xd0] sm:$0xff]
        %v5742 = vld [vmem:[#allocation2 + $0xd8] sm:$0xff]
        %v5743 = vld [vmem:[#allocation2 + $0xe0] sm:$0xff]
        %v5744 = vld [vmem:[#allocation2 + $0xe8] sm:$0xff]
        %v5745 = vld [vmem:[#allocation2 + $0xf0] sm:$0xff]
        %v5746 = vld [vmem:[#allocation2 + $0xf8] sm:$0xff]
        %v5747 = vld [vmem:[#allocation2 + $0x100] sm:$0xff]
        %v5748 = vld [vmem:[#allocation2 + $0x108] sm:$0xff]
        %v5749 = vld [vmem:[#allocation2 + $0x110] sm:$0xff]
        %v5750 = vld [vmem:[#allocation2 + $0x118] sm:$0xff]
        %v5751 = vld [vmem:[#allocation2 + $0x120] sm:$0xff]
        %v5752 = vld [vmem:[#allocation2 + $0x128] sm:$0xff]
        %v5753 = vld [vmem:[#allocation2 + $0x130] sm:$0xff]
        %v5754 = vld [vmem:[#allocation2 + $0x138] sm:$0xff]
        %v5755 = vld [vmem:[#allocation2 + $0x140] sm:$0xff]
        %v5756 = vld [vmem:[#allocation2 + $0x148] sm:$0xff]
        %v5757 = vld [vmem:[#allocation2 + $0x150] sm:$0xff]
        %v5758 = vld [vmem:[#allocation2 + $0x158] sm:$0xff]
        %v5759 = vld [vmem:[#allocation2 + $0x160] sm:$0xff]
        %v5760 = vld [vmem:[#allocation2 + $0x168] sm:$0xff]
        %v5761 = vld [vmem:[#allocation2 + $0x170] sm:$0xff]
        %v5762 = vld [vmem:[#allocation2 + $0x178] sm:$0xff]
        %v5763 = vld [vmem:[#allocation2 + $0x180] sm:$0xff]
        %v5764 = vld [vmem:[#allocation2 + $0x188] sm:$0xff]
        %v5765 = vld [vmem:[#allocation2 + $0x190] sm:$0xff]
        %v5766 = vld [vmem:[#allocation2 + $0x198] sm:$0xff]
        %v5767 = vld [vmem:[#allocation2 + $0x1a0] sm:$0xff]
        %v5768 = vld [vmem:[#allocation2 + $0x1a8] sm:$0xff]
        %v5769 = vld [vmem:[#allocation2 + $0x1b0] sm:$0xff]
        %v5770 = vld [vmem:[#allocation2 + $0x1b8] sm:$0xff]
        %v5771 = vld [vmem:[#allocation2 + $0x1c0] sm:$0xff]
        %s5772 = scalar_lea.vmem [#allocation3], 224
        %v5773 = vld [vmem:[%s5772] sm:$0xff]
        %v5774 = vld [vmem:[%s5772 + $0x8] sm:$0xff]
        %v5775 = vld [vmem:[%s5772 + $0x10] sm:$0xff]
        %v5776 = vld [vmem:[%s5772 + $0x18] sm:$0xff]
        %v5778 = vsel %vm346, %v5724, 0
        %v5781 = vsel %vm346, %v5725, 0
        %v5784 = vsel %vm346, %v5726, 0
        %v5787 = vsel %vm346, %v5727, 0
        %v5790 = vsel %vm346, %v5728, 0
        %v5793 = vsel %vm346, %v5729, 0
        %v5796 = vsel %vm346, %v5730, 0
        %v5799 = vsel %vm346, %v5731, 0
        %v5802 = vsel %vm346, %v5732, 0
        %v5805 = vsel %vm346, %v5733, 0
        %v5808 = vsel %vm346, %v5734, 0
        %v5811 = vsel %vm346, %v5735, 0
        %v5814 = vsel %vm346, %v5736, 0
        %v5817 = vsel %vm346, %v5737, 0
        %v5820 = vsel %vm346, %v5738, 0
        %v5823 = vsel %vm346, %v5739, 0
        %v5826 = vsel %vm346, %v5740, 0
        %v5829 = vsel %vm346, %v5741, 0
        %v5832 = vsel %vm346, %v5742, 0
        %v5835 = vsel %vm346, %v5743, 0
        %v5838 = vsel %vm346, %v5744, 0
        %v5841 = vsel %vm346, %v5745, 0
        %v5844 = vsel %vm346, %v5746, 0
        %v5847 = vsel %vm346, %v5747, 0
        %v5850 = vsel %vm346, %v5748, 0
        %v5853 = vsel %vm346, %v5749, 0
        %v5856 = vsel %vm346, %v5750, 0
        %v5859 = vsel %vm346, %v5751, 0
        %v5862 = vsel %vm346, %v5752, 0
        %v5865 = vsel %vm346, %v5753, 0
        %v5868 = vsel %vm346, %v5754, 0
        %v5871 = vsel %vm346, %v5755, 0
        %v5874 = vsel %vm346, %v5756, 0
        %v5877 = vsel %vm346, %v5757, 0
        %v5880 = vsel %vm346, %v5758, 0
        %v5883 = vsel %vm346, %v5759, 0
        %v5886 = vsel %vm346, %v5760, 0
        %v5889 = vsel %vm346, %v5761, 0
        %v5892 = vsel %vm346, %v5762, 0
        %v5895 = vsel %vm346, %v5763, 0
        %v5898 = vsel %vm346, %v5764, 0
        %v5901 = vsel %vm346, %v5765, 0
        %v5904 = vsel %vm346, %v5766, 0
        %v5907 = vsel %vm346, %v5767, 0
        %v5910 = vsel %vm346, %v5768, 0
        %v5913 = vsel %vm346, %v5769, 0
        %v5916 = vsel %vm346, %v5770, 0
        %v5919 = vsel %vm346, %v5771, 0
        %5921 = vmatprep.subr.mxu0 0.0
        %5922 = vmatpush1.msra.mxu0 %v5773
        %5923 = vmatprep.subr.mxu0 0.0
        %5924 = vmatpush1.msra.mxu0 %v5774
        %5925 = vmatprep.subr.mxu0 0.0
        %5926 = vmatpush1.msra.mxu0 %v5775
        %5927 = vmatprep.subr.mxu0 0.0
        %5928 = vmatpush1.msra.mxu0 %v5776
        %5929 = vmatprep.subr.mxu0 0.0
        %5930 = vmatpush1.msra.mxu0 0.0
        %5931 = vmatprep.subr.mxu0 0.0
        %5932 = vmatpush1.msra.mxu0 0.0
        %5933 = vmatprep.subr.mxu0 0.0
        %5934 = vmatpush1.msra.mxu0 0.0
        %5935 = vmatprep.subr.mxu0 0.0
        %5936 = vmatpush1.msra.mxu0 0.0
        %5937 = vmatprep.subr.mxu0 0.0
        %5938 = vmatpush1.msra.mxu0 0.0
        %5939 = vmatprep.subr.mxu0 0.0
        %5940 = vmatpush1.msra.mxu0 0.0
        %5941 = vmatprep.subr.mxu0 0.0
        %5942 = vmatpush1.msra.mxu0 0.0
        %5943 = vmatprep.subr.mxu0 0.0
        %5944 = vmatpush1.msra.mxu0 0.0
        %5945 = vmatprep.subr.mxu0 0.0
        %5946 = vmatpush1.msra.mxu0 0.0
        %5947 = vmatprep.subr.mxu0 0.0
        %5948 = vmatpush1.msra.mxu0 0.0
        %5949 = vmatprep.subr.mxu0 0.0
        %5950 = vmatpush1.msra.mxu0 0.0
        %5951 = vmatprep.subr.mxu0 0.0
        %5952 = vmatpush1.msra.mxu0 0.0
        %5953 = vmatprep.subr.mxu0 0.0
        %5954 = vmatpush1.msra.mxu0 0.0
        %5955 = vmatprep.subr.mxu0 0.0
        %5956 = vmatpush1.msra.mxu0 0.0
        %5957 = vmatprep.subr.mxu0 0.0
        %5958 = vmatpush1.msra.mxu0 0.0
        %5959 = vmatprep.subr.mxu0 0.0
        %5960 = vmatpush1.msra.mxu0 0.0
        %5961 = vmatprep.subr.mxu0 0.0
        %5962 = vmatpush1.msra.mxu0 0.0
        %5963 = vmatprep.subr.mxu0 0.0
        %5964 = vmatpush1.msra.mxu0 0.0
        %5965 = vmatprep.subr.mxu0 0.0
        %5966 = vmatpush1.msra.mxu0 0.0
        %5967 = vmatprep.subr.mxu0 0.0
        %5968 = vmatpush1.msra.mxu0 0.0
        %5969 = vmatprep.subr.mxu0 0.0
        %5970 = vmatpush1.msra.mxu0 0.0
        %5971 = vmatprep.subr.mxu0 0.0
        %5972 = vmatpush1.msra.mxu0 0.0
        %5973 = vmatprep.subr.mxu0 0.0
        %5974 = vmatpush1.msra.mxu0 0.0
        %5975 = vmatprep.subr.mxu0 0.0
        %5976 = vmatpush1.msra.mxu0 0.0
        %5977 = vmatprep.subr.mxu0 0.0
        %5978 = vmatpush1.msra.mxu0 0.0
        %5979 = vmatprep.subr.mxu0 0.0
        %5980 = vmatpush1.msra.mxu0 0.0
        %5981 = vmatprep.subr.mxu0 0.0
        %5982 = vmatpush1.msra.mxu0 0.0
        %5983 = vmatprep.subr.mxu0 0.0
        %5984 = vmatpush1.msra.mxu0 0.0
        %5985 = vmatprep.mubr.f32.mxu0 0.0
        %5986 = vmatmul.mubr.f32.gmra.mrb[0].mxu0 %v5778
        %v5987 = vpop.f32.mrb[0].mxu0
        %v5988 = vadd.f32 0.0, %v5987
        %v5989 = vpop.f32.mrb[0].mxu0
        %5990 = vmatprep.mubr.f32.mxu0 0.0
        %5991 = vmatmul.mubr.f32.gmra.mrb[0].mxu0 %v5781
        %v5992 = vpop.f32.mrb[0].mxu0
        %v5993 = vadd.f32 0.0, %v5992
        %v5994 = vpop.f32.mrb[0].mxu0
        %5995 = vmatprep.mubr.f32.mxu0 0.0
        %5996 = vmatmul.mubr.f32.gmra.mrb[0].mxu0 %v5784
        %v5997 = vpop.f32.mrb[0].mxu0
        %v5998 = vpop.f32.mrb[0].mxu0
        %5999 = vmatprep.mubr.f32.mxu0 0.0
        %6000 = vmatmul.mubr.f32.gmra.mrb[0].mxu0 %v5787
        %v6001 = vpop.f32.mrb[0].mxu0
        %v6002 = vadd.f32 0.0, %v6001
        %v6003 = vpop.f32.mrb[0].mxu0
        %6004 = vmatprep.mubr.f32.mxu0 0.0
        %6005 = vmatmul.mubr.f32.gmra.mrb[0].mxu0 %v5790
        %v6006 = vpop.f32.mrb[0].mxu0
        %v6007 = vadd.f32 0.0, %v6006
        %v6008 = vpop.f32.mrb[0].mxu0
        %6009 = vmatprep.mubr.f32.mxu0 0.0
        %6010 = vmatmul.mubr.f32.gmra.mrb[0].mxu0 %v5793
        %v6011 = vpop.f32.mrb[0].mxu0
        %v6012 = vpop.f32.mrb[0].mxu0
        %6013 = vmatprep.mubr.f32.mxu0 0.0
        %6014 = vmatmul.mubr.f32.gmra.mrb[0].mxu0 %v5796
        %v6015 = vpop.f32.mrb[0].mxu0
        %v6016 = vadd.f32 0.0, %v6015
        %v6017 = vpop.f32.mrb[0].mxu0
        %6018 = vmatprep.mubr.f32.mxu0 0.0
        %6019 = vmatmul.mubr.f32.gmra.mrb[0].mxu0 %v5799
        %v6020 = vpop.f32.mrb[0].mxu0
        %v6021 = vadd.f32 0.0, %v6020
        %v6022 = vpop.f32.mrb[0].mxu0
        %6023 = vmatprep.mubr.f32.mxu0 0.0
        %6024 = vmatmul.mubr.f32.gmra.mrb[0].mxu0 %v5802
        %v6025 = vpop.f32.mrb[0].mxu0
        %v6026 = vpop.f32.mrb[0].mxu0
        %6027 = vmatprep.mubr.f32.mxu0 0.0
        %6028 = vmatmul.mubr.f32.gmra.mrb[0].mxu0 %v5805
        %v6029 = vpop.f32.mrb[0].mxu0
        %v6030 = vadd.f32 0.0, %v6029
        %v6031 = vpop.f32.mrb[0].mxu0
        %6032 = vmatprep.mubr.f32.mxu0 0.0
        %6033 = vmatmul.mubr.f32.gmra.mrb[0].mxu0 %v5808
        %v6034 = vpop.f32.mrb[0].mxu0
        %v6035 = vadd.f32 0.0, %v6034
        %v6036 = vpop.f32.mrb[0].mxu0
        %6037 = vmatprep.mubr.f32.mxu0 0.0
        %6038 = vmatmul.mubr.f32.gmra.mrb[0].mxu0 %v5811
        %v6039 = vpop.f32.mrb[0].mxu0
        %v6040 = vpop.f32.mrb[0].mxu0
        %6041 = vmatprep.mubr.f32.mxu0 0.0
        %6042 = vmatmul.mubr.f32.gmra.mrb[0].mxu0 %v5814
        %v6043 = vpop.f32.mrb[0].mxu0
        %v6044 = vadd.f32 0.0, %v6043
        %v6045 = vpop.f32.mrb[0].mxu0
        %6046 = vmatprep.mubr.f32.mxu0 0.0
        %6047 = vmatmul.mubr.f32.gmra.mrb[0].mxu0 %v5817
        %v6048 = vpop.f32.mrb[0].mxu0
        %v6049 = vadd.f32 0.0, %v6048
        %v6050 = vpop.f32.mrb[0].mxu0
        %6051 = vmatprep.mubr.f32.mxu0 0.0
        %6052 = vmatmul.mubr.f32.gmra.mrb[0].mxu0 %v5820
        %v6053 = vpop.f32.mrb[0].mxu0
        %v6054 = vpop.f32.mrb[0].mxu0
        %6055 = vmatprep.mubr.f32.mxu0 0.0
        %6056 = vmatmul.mubr.f32.gmra.mrb[0].mxu0 %v5823
        %v6057 = vpop.f32.mrb[0].mxu0
        %v6058 = vadd.f32 0.0, %v6057
        %v6059 = vpop.f32.mrb[0].mxu0
        %6060 = vmatprep.mubr.f32.mxu0 0.0
        %6061 = vmatmul.mubr.f32.gmra.mrb[0].mxu0 %v5826
        %v6062 = vpop.f32.mrb[0].mxu0
        %v6063 = vadd.f32 0.0, %v6062
        %v6064 = vpop.f32.mrb[0].mxu0
        %6065 = vmatprep.mubr.f32.mxu0 0.0
        %6066 = vmatmul.mubr.f32.gmra.mrb[0].mxu0 %v5829
        %v6067 = vpop.f32.mrb[0].mxu0
        %v6068 = vpop.f32.mrb[0].mxu0
        %6069 = vmatprep.mubr.f32.mxu0 0.0
        %6070 = vmatmul.mubr.f32.gmra.mrb[0].mxu0 %v5832
        %v6071 = vpop.f32.mrb[0].mxu0
        %v6072 = vadd.f32 0.0, %v6071
        %v6073 = vpop.f32.mrb[0].mxu0
        %6074 = vmatprep.mubr.f32.mxu0 0.0
        %6075 = vmatmul.mubr.f32.gmra.mrb[0].mxu0 %v5835
        %v6076 = vpop.f32.mrb[0].mxu0
        %v6077 = vadd.f32 0.0, %v6076
        %v6078 = vpop.f32.mrb[0].mxu0
        %6079 = vmatprep.mubr.f32.mxu0 0.0
        %6080 = vmatmul.mubr.f32.gmra.mrb[0].mxu0 %v5838
        %v6081 = vpop.f32.mrb[0].mxu0
        %v6082 = vpop.f32.mrb[0].mxu0
        %6083 = vmatprep.mubr.f32.mxu0 0.0
        %6084 = vmatmul.mubr.f32.gmra.mrb[0].mxu0 %v5841
        %v6085 = vpop.f32.mrb[0].mxu0
        %v6086 = vadd.f32 0.0, %v6085
        %v6087 = vpop.f32.mrb[0].mxu0
        %6088 = vmatprep.mubr.f32.mxu0 0.0
        %6089 = vmatmul.mubr.f32.gmra.mrb[0].mxu0 %v5844
        %v6090 = vpop.f32.mrb[0].mxu0
        %v6091 = vadd.f32 0.0, %v6090
        %v6092 = vpop.f32.mrb[0].mxu0
        %6093 = vmatprep.mubr.f32.mxu0 0.0
        %6094 = vmatmul.mubr.f32.gmra.mrb[0].mxu0 %v5847
        %v6095 = vpop.f32.mrb[0].mxu0
        %v6096 = vpop.f32.mrb[0].mxu0
        %6097 = vmatprep.mubr.f32.mxu0 0.0
        %6098 = vmatmul.mubr.f32.gmra.mrb[0].mxu0 %v5850
        %v6099 = vpop.f32.mrb[0].mxu0
        %v6100 = vadd.f32 0.0, %v6099
        %v6101 = vpop.f32.mrb[0].mxu0
        %6102 = vmatprep.mubr.f32.mxu0 0.0
        %6103 = vmatmul.mubr.f32.gmra.mrb[0].mxu0 %v5853
        %v6104 = vpop.f32.mrb[0].mxu0
        %v6105 = vadd.f32 0.0, %v6104
        %v6106 = vpop.f32.mrb[0].mxu0
        %6107 = vmatprep.mubr.f32.mxu0 0.0
        %6108 = vmatmul.mubr.f32.gmra.mrb[0].mxu0 %v5856
        %v6109 = vpop.f32.mrb[0].mxu0
        %v6110 = vpop.f32.mrb[0].mxu0
        %6111 = vmatprep.mubr.f32.mxu0 0.0
        %6112 = vmatmul.mubr.f32.gmra.mrb[0].mxu0 %v5859
        %v6113 = vpop.f32.mrb[0].mxu0
        %v6114 = vadd.f32 0.0, %v6113
        %v6115 = vpop.f32.mrb[0].mxu0
        %6116 = vmatprep.mubr.f32.mxu0 0.0
        %6117 = vmatmul.mubr.f32.gmra.mrb[0].mxu0 %v5862
        %v6118 = vpop.f32.mrb[0].mxu0
        %v6119 = vadd.f32 0.0, %v6118
        %v6120 = vpop.f32.mrb[0].mxu0
        %6121 = vmatprep.mubr.f32.mxu0 0.0
        %6122 = vmatmul.mubr.f32.gmra.mrb[0].mxu0 %v5865
        %v6123 = vpop.f32.mrb[0].mxu0
        %v6124 = vpop.f32.mrb[0].mxu0
        %6125 = vmatprep.mubr.f32.mxu0 0.0
        %6126 = vmatmul.mubr.f32.gmra.mrb[0].mxu0 %v5868
        %v6127 = vpop.f32.mrb[0].mxu0
        %v6128 = vadd.f32 0.0, %v6127
        %v6129 = vpop.f32.mrb[0].mxu0
        %6130 = vmatprep.mubr.f32.mxu0 0.0
        %6131 = vmatmul.mubr.f32.gmra.mrb[0].mxu0 %v5871
        %v6132 = vpop.f32.mrb[0].mxu0
        %v6133 = vadd.f32 0.0, %v6132
        %v6134 = vpop.f32.mrb[0].mxu0
        %6135 = vmatprep.mubr.f32.mxu0 0.0
        %6136 = vmatmul.mubr.f32.gmra.mrb[0].mxu0 %v5874
        %v6137 = vpop.f32.mrb[0].mxu0
        %v6138 = vpop.f32.mrb[0].mxu0
        %6139 = vmatprep.mubr.f32.mxu0 0.0
        %6140 = vmatmul.mubr.f32.gmra.mrb[0].mxu0 %v5877
        %v6141 = vpop.f32.mrb[0].mxu0
        %v6142 = vadd.f32 0.0, %v6141
        %v6143 = vpop.f32.mrb[0].mxu0
        %6144 = vmatprep.mubr.f32.mxu0 0.0
        %6145 = vmatmul.mubr.f32.gmra.mrb[0].mxu0 %v5880
        %v6146 = vpop.f32.mrb[0].mxu0
        %v6147 = vadd.f32 0.0, %v6146
        %v6148 = vpop.f32.mrb[0].mxu0
        %6149 = vmatprep.mubr.f32.mxu0 0.0
        %6150 = vmatmul.mubr.f32.gmra.mrb[0].mxu0 %v5883
        %v6151 = vpop.f32.mrb[0].mxu0
        %v6152 = vpop.f32.mrb[0].mxu0
        %6153 = vmatprep.mubr.f32.mxu0 0.0
        %6154 = vmatmul.mubr.f32.gmra.mrb[0].mxu0 %v5886
        %v6155 = vpop.f32.mrb[0].mxu0
        %v6156 = vadd.f32 0.0, %v6155
        %v6157 = vpop.f32.mrb[0].mxu0
        %6158 = vmatprep.mubr.f32.mxu0 0.0
        %6159 = vmatmul.mubr.f32.gmra.mrb[0].mxu0 %v5889
        %v6160 = vpop.f32.mrb[0].mxu0
        %v6161 = vadd.f32 0.0, %v6160
        %v6162 = vpop.f32.mrb[0].mxu0
        %6163 = vmatprep.mubr.f32.mxu0 0.0
        %6164 = vmatmul.mubr.f32.gmra.mrb[0].mxu0 %v5892
        %v6165 = vpop.f32.mrb[0].mxu0
        %v6166 = vpop.f32.mrb[0].mxu0
        %6167 = vmatprep.mubr.f32.mxu0 0.0
        %6168 = vmatmul.mubr.f32.gmra.mrb[0].mxu0 %v5895
        %v6169 = vpop.f32.mrb[0].mxu0
        %v6170 = vadd.f32 0.0, %v6169
        %v6171 = vpop.f32.mrb[0].mxu0
        %6172 = vmatprep.mubr.f32.mxu0 0.0
        %6173 = vmatmul.mubr.f32.gmra.mrb[0].mxu0 %v5898
        %v6174 = vpop.f32.mrb[0].mxu0
        %v6175 = vadd.f32 0.0, %v6174
        %v6176 = vpop.f32.mrb[0].mxu0
        %6177 = vmatprep.mubr.f32.mxu0 0.0
        %6178 = vmatmul.mubr.f32.gmra.mrb[0].mxu0 %v5901
        %v6179 = vpop.f32.mrb[0].mxu0
        %v6180 = vpop.f32.mrb[0].mxu0
        %6181 = vmatprep.mubr.f32.mxu0 0.0
        %6182 = vmatmul.mubr.f32.gmra.mrb[0].mxu0 %v5904
        %v6183 = vpop.f32.mrb[0].mxu0
        %v6184 = vadd.f32 0.0, %v6183
        %v6185 = vpop.f32.mrb[0].mxu0
        %6186 = vmatprep.mubr.f32.mxu0 0.0
        %6187 = vmatmul.mubr.f32.gmra.mrb[0].mxu0 %v5907
        %v6188 = vpop.f32.mrb[0].mxu0
        %v6189 = vadd.f32 0.0, %v6188
        %v6190 = vpop.f32.mrb[0].mxu0
        %6191 = vmatprep.mubr.f32.mxu0 0.0
        %6192 = vmatmul.mubr.f32.gmra.mrb[0].mxu0 %v5910
        %v6193 = vpop.f32.mrb[0].mxu0
        %v6194 = vpop.f32.mrb[0].mxu0
        %6195 = vmatprep.mubr.f32.mxu0 0.0
        %6196 = vmatmul.mubr.f32.gmra.mrb[0].mxu0 %v5913
        %v6197 = vpop.f32.mrb[0].mxu0
        %v6198 = vadd.f32 0.0, %v6197
        %v6199 = vpop.f32.mrb[0].mxu0
        %6200 = vmatprep.mubr.f32.mxu0 0.0
        %6201 = vmatmul.mubr.f32.gmra.mrb[0].mxu0 %v5916
        %v6202 = vpop.f32.mrb[0].mxu0
        %v6203 = vadd.f32 0.0, %v6202
        %v6204 = vpop.f32.mrb[0].mxu0
        %6205 = vmatprep.mubr.f32.mxu0 0.0
        %6206 = vmatmul.mubr.f32.gmra.mrb[0].mxu0 %v5919
        %v6207 = vpop.f32.mrb[0].mxu0
        %v6208 = vpop.f32.mrb[0].mxu0
        %6209 = vdwg.mxu0
        %v6210 = vadd.f32 %v5692, %v5988
        %v6211 = vadd.f32 %v5693, %v5993
        %v6212 = vadd.f32 %v5694, %v6002
        %v6213 = vadd.f32 %v5695, %v6007
        %v6214 = vadd.f32 %v5696, %v6016
        %v6215 = vadd.f32 %v5697, %v6021
        %v6216 = vadd.f32 %v5698, %v6030
        %v6217 = vadd.f32 %v5699, %v6035
        %v6218 = vadd.f32 %v5700, %v6044
        %v6219 = vadd.f32 %v5701, %v6049
        %v6220 = vadd.f32 %v5702, %v6058
        %v6221 = vadd.f32 %v5703, %v6063
        %v6222 = vadd.f32 %v5704, %v6072
        %v6223 = vadd.f32 %v5705, %v6077
        %v6224 = vadd.f32 %v5706, %v6086
        %v6225 = vadd.f32 %v5707, %v6091
        %v6226 = vadd.f32 %v5708, %v6100
        %v6227 = vadd.f32 %v5709, %v6105
        %v6228 = vadd.f32 %v5710, %v6114
        %v6229 = vadd.f32 %v5711, %v6119
        %v6230 = vadd.f32 %v5712, %v6128
        %v6231 = vadd.f32 %v5713, %v6133
        %v6232 = vadd.f32 %v5714, %v6142
        %v6233 = vadd.f32 %v5715, %v6147
        %v6234 = vadd.f32 %v5716, %v6156
        %v6235 = vadd.f32 %v5717, %v6161
        %v6236 = vadd.f32 %v5718, %v6170
        %v6237 = vadd.f32 %v5719, %v6175
        %v6238 = vadd.f32 %v5720, %v6184
        %v6239 = vadd.f32 %v5721, %v6189
        %v6240 = vadd.f32 %v5722, %v6198
        %v6241 = vadd.f32 %v5723, %v6203
        %v6242 = vld [vmem:[#allocation2 + $0x49] sm:$0xff]
        %v6243 = vld [vmem:[#allocation2 + $0x51] sm:$0xff]
        %v6244 = vld [vmem:[#allocation2 + $0x59] sm:$0xff]
        %v6245 = vld [vmem:[#allocation2 + $0x61] sm:$0xff]
        %v6246 = vld [vmem:[#allocation2 + $0x69] sm:$0xff]
        %v6247 = vld [vmem:[#allocation2 + $0x71] sm:$0xff]
        %v6248 = vld [vmem:[#allocation2 + $0x79] sm:$0xff]
        %v6249 = vld [vmem:[#allocation2 + $0x81] sm:$0xff]
        %v6250 = vld [vmem:[#allocation2 + $0x89] sm:$0xff]
        %v6251 = vld [vmem:[#allocation2 + $0x91] sm:$0xff]
        %v6252 = vld [vmem:[#allocation2 + $0x99] sm:$0xff]
        %v6253 = vld [vmem:[#allocation2 + $0xa1] sm:$0xff]
        %v6254 = vld [vmem:[#allocation2 + $0xa9] sm:$0xff]
        %v6255 = vld [vmem:[#allocation2 + $0xb1] sm:$0xff]
        %v6256 = vld [vmem:[#allocation2 + $0xb9] sm:$0xff]
        %v6257 = vld [vmem:[#allocation2 + $0xc1] sm:$0xff]
        %v6258 = vld [vmem:[#allocation2 + $0xc9] sm:$0xff]
        %v6259 = vld [vmem:[#allocation2 + $0xd1] sm:$0xff]
        %v6260 = vld [vmem:[#allocation2 + $0xd9] sm:$0xff]
        %v6261 = vld [vmem:[#allocation2 + $0xe1] sm:$0xff]
        %v6262 = vld [vmem:[#allocation2 + $0xe9] sm:$0xff]
        %v6263 = vld [vmem:[#allocation2 + $0xf1] sm:$0xff]
        %v6264 = vld [vmem:[#allocation2 + $0xf9] sm:$0xff]
        %v6265 = vld [vmem:[#allocation2 + $0x101] sm:$0xff]
        %v6266 = vld [vmem:[#allocation2 + $0x109] sm:$0xff]
        %v6267 = vld [vmem:[#allocation2 + $0x111] sm:$0xff]
        %v6268 = vld [vmem:[#allocation2 + $0x119] sm:$0xff]
        %v6269 = vld [vmem:[#allocation2 + $0x121] sm:$0xff]
        %v6270 = vld [vmem:[#allocation2 + $0x129] sm:$0xff]
        %v6271 = vld [vmem:[#allocation2 + $0x131] sm:$0xff]
        %v6272 = vld [vmem:[#allocation2 + $0x139] sm:$0xff]
        %v6273 = vld [vmem:[#allocation2 + $0x141] sm:$0xff]
        %v6274 = vld [vmem:[#allocation2 + $0x149] sm:$0xff]
        %v6275 = vld [vmem:[#allocation2 + $0x151] sm:$0xff]
        %v6276 = vld [vmem:[#allocation2 + $0x159] sm:$0xff]
        %v6277 = vld [vmem:[#allocation2 + $0x161] sm:$0xff]
        %v6278 = vld [vmem:[#allocation2 + $0x169] sm:$0xff]
        %v6279 = vld [vmem:[#allocation2 + $0x171] sm:$0xff]
        %v6280 = vld [vmem:[#allocation2 + $0x179] sm:$0xff]
        %v6281 = vld [vmem:[#allocation2 + $0x181] sm:$0xff]
        %v6282 = vld [vmem:[#allocation2 + $0x189] sm:$0xff]
        %v6283 = vld [vmem:[#allocation2 + $0x191] sm:$0xff]
        %v6284 = vld [vmem:[#allocation2 + $0x199] sm:$0xff]
        %v6285 = vld [vmem:[#allocation2 + $0x1a1] sm:$0xff]
        %v6286 = vld [vmem:[#allocation2 + $0x1a9] sm:$0xff]
        %v6287 = vld [vmem:[#allocation2 + $0x1b1] sm:$0xff]
        %v6288 = vld [vmem:[#allocation2 + $0x1b9] sm:$0xff]
        %v6289 = vld [vmem:[#allocation2 + $0x1c1] sm:$0xff]
        %s6290 = scalar_lea.vmem [#allocation3], 256
        %v6291 = vld [vmem:[%s6290] sm:$0xff]
        %v6292 = vld [vmem:[%s6290 + $0x8] sm:$0xff]
        %v6293 = vld [vmem:[%s6290 + $0x10] sm:$0xff]
        %v6294 = vld [vmem:[%s6290 + $0x18] sm:$0xff]
        %v6296 = vsel %vm346, %v6242, 0
        %v6299 = vsel %vm346, %v6243, 0
        %v6302 = vsel %vm346, %v6244, 0
        %v6305 = vsel %vm346, %v6245, 0
        %v6308 = vsel %vm346, %v6246, 0
        %v6311 = vsel %vm346, %v6247, 0
        %v6314 = vsel %vm346, %v6248, 0
        %v6317 = vsel %vm346, %v6249, 0
        %v6320 = vsel %vm346, %v6250, 0
        %v6323 = vsel %vm346, %v6251, 0
        %v6326 = vsel %vm346, %v6252, 0
        %v6329 = vsel %vm346, %v6253, 0
        %v6332 = vsel %vm346, %v6254, 0
        %v6335 = vsel %vm346, %v6255, 0
        %v6338 = vsel %vm346, %v6256, 0
        %v6341 = vsel %vm346, %v6257, 0
        %v6344 = vsel %vm346, %v6258, 0
        %v6347 = vsel %vm346, %v6259, 0
        %v6350 = vsel %vm346, %v6260, 0
        %v6353 = vsel %vm346, %v6261, 0
        %v6356 = vsel %vm346, %v6262, 0
        %v6359 = vsel %vm346, %v6263, 0
        %v6362 = vsel %vm346, %v6264, 0
        %v6365 = vsel %vm346, %v6265, 0
        %v6368 = vsel %vm346, %v6266, 0
        %v6371 = vsel %vm346, %v6267, 0
        %v6374 = vsel %vm346, %v6268, 0
        %v6377 = vsel %vm346, %v6269, 0
        %v6380 = vsel %vm346, %v6270, 0
        %v6383 = vsel %vm346, %v6271, 0
        %v6386 = vsel %vm346, %v6272, 0
        %v6389 = vsel %vm346, %v6273, 0
        %v6392 = vsel %vm346, %v6274, 0
        %v6395 = vsel %vm346, %v6275, 0
        %v6398 = vsel %vm346, %v6276, 0
        %v6401 = vsel %vm346, %v6277, 0
        %v6404 = vsel %vm346, %v6278, 0
        %v6407 = vsel %vm346, %v6279, 0
        %v6410 = vsel %vm346, %v6280, 0
        %v6413 = vsel %vm346, %v6281, 0
        %v6416 = vsel %vm346, %v6282, 0
        %v6419 = vsel %vm346, %v6283, 0
        %v6422 = vsel %vm346, %v6284, 0
        %v6425 = vsel %vm346, %v6285, 0
        %v6428 = vsel %vm346, %v6286, 0
        %v6431 = vsel %vm346, %v6287, 0
        %v6434 = vsel %vm346, %v6288, 0
        %v6437 = vsel %vm346, %v6289, 0
        %6439 = vmatprep.subr.mxu0 0.0
        %6440 = vmatpush1.msra.mxu0 %v6291
        %6441 = vmatprep.subr.mxu0 0.0
        %6442 = vmatpush1.msra.mxu0 %v6292
        %6443 = vmatprep.subr.mxu0 0.0
        %6444 = vmatpush1.msra.mxu0 %v6293
        %6445 = vmatprep.subr.mxu0 0.0
        %6446 = vmatpush1.msra.mxu0 %v6294
        %6447 = vmatprep.subr.mxu0 0.0
        %6448 = vmatpush1.msra.mxu0 0.0
        %6449 = vmatprep.subr.mxu0 0.0
        %6450 = vmatpush1.msra.mxu0 0.0
        %6451 = vmatprep.subr.mxu0 0.0
        %6452 = vmatpush1.msra.mxu0 0.0
        %6453 = vmatprep.subr.mxu0 0.0
        %6454 = vmatpush1.msra.mxu0 0.0
        %6455 = vmatprep.subr.mxu0 0.0
        %6456 = vmatpush1.msra.mxu0 0.0
        %6457 = vmatprep.subr.mxu0 0.0
        %6458 = vmatpush1.msra.mxu0 0.0
        %6459 = vmatprep.subr.mxu0 0.0
        %6460 = vmatpush1.msra.mxu0 0.0
        %6461 = vmatprep.subr.mxu0 0.0
        %6462 = vmatpush1.msra.mxu0 0.0
        %6463 = vmatprep.subr.mxu0 0.0
        %6464 = vmatpush1.msra.mxu0 0.0
        %6465 = vmatprep.subr.mxu0 0.0
        %6466 = vmatpush1.msra.mxu0 0.0
        %6467 = vmatprep.subr.mxu0 0.0
        %6468 = vmatpush1.msra.mxu0 0.0
        %6469 = vmatprep.subr.mxu0 0.0
        %6470 = vmatpush1.msra.mxu0 0.0
        %6471 = vmatprep.subr.mxu0 0.0
        %6472 = vmatpush1.msra.mxu0 0.0
        %6473 = vmatprep.subr.mxu0 0.0
        %6474 = vmatpush1.msra.mxu0 0.0
        %6475 = vmatprep.subr.mxu0 0.0
        %6476 = vmatpush1.msra.mxu0 0.0
        %6477 = vmatprep.subr.mxu0 0.0
        %6478 = vmatpush1.msra.mxu0 0.0
        %6479 = vmatprep.subr.mxu0 0.0
        %6480 = vmatpush1.msra.mxu0 0.0
        %6481 = vmatprep.subr.mxu0 0.0
        %6482 = vmatpush1.msra.mxu0 0.0
        %6483 = vmatprep.subr.mxu0 0.0
        %6484 = vmatpush1.msra.mxu0 0.0
        %6485 = vmatprep.subr.mxu0 0.0
        %6486 = vmatpush1.msra.mxu0 0.0
        %6487 = vmatprep.subr.mxu0 0.0
        %6488 = vmatpush1.msra.mxu0 0.0
        %6489 = vmatprep.subr.mxu0 0.0
        %6490 = vmatpush1.msra.mxu0 0.0
        %6491 = vmatprep.subr.mxu0 0.0
        %6492 = vmatpush1.msra.mxu0 0.0
        %6493 = vmatprep.subr.mxu0 0.0
        %6494 = vmatpush1.msra.mxu0 0.0
        %6495 = vmatprep.subr.mxu0 0.0
        %6496 = vmatpush1.msra.mxu0 0.0
        %6497 = vmatprep.subr.mxu0 0.0
        %6498 = vmatpush1.msra.mxu0 0.0
        %6499 = vmatprep.subr.mxu0 0.0
        %6500 = vmatpush1.msra.mxu0 0.0
        %6501 = vmatprep.subr.mxu0 0.0
        %6502 = vmatpush1.msra.mxu0 0.0
        %6503 = vmatprep.mubr.f32.mxu0 0.0
        %6504 = vmatmul.mubr.f32.gmra.mrb[0].mxu0 %v6296
        %v6505 = vpop.f32.mrb[0].mxu0
        %v6506 = vadd.f32 0.0, %v6505
        %v6507 = vpop.f32.mrb[0].mxu0
        %6508 = vmatprep.mubr.f32.mxu0 0.0
        %6509 = vmatmul.mubr.f32.gmra.mrb[0].mxu0 %v6299
        %v6510 = vpop.f32.mrb[0].mxu0
        %v6511 = vadd.f32 0.0, %v6510
        %v6512 = vpop.f32.mrb[0].mxu0
        %6513 = vmatprep.mubr.f32.mxu0 0.0
        %6514 = vmatmul.mubr.f32.gmra.mrb[0].mxu0 %v6302
        %v6515 = vpop.f32.mrb[0].mxu0
        %v6516 = vpop.f32.mrb[0].mxu0
        %6517 = vmatprep.mubr.f32.mxu0 0.0
        %6518 = vmatmul.mubr.f32.gmra.mrb[0].mxu0 %v6305
        %v6519 = vpop.f32.mrb[0].mxu0
        %v6520 = vadd.f32 0.0, %v6519
        %v6521 = vpop.f32.mrb[0].mxu0
        %6522 = vmatprep.mubr.f32.mxu0 0.0
        %6523 = vmatmul.mubr.f32.gmra.mrb[0].mxu0 %v6308
        %v6524 = vpop.f32.mrb[0].mxu0
        %v6525 = vadd.f32 0.0, %v6524
        %v6526 = vpop.f32.mrb[0].mxu0
        %6527 = vmatprep.mubr.f32.mxu0 0.0
        %6528 = vmatmul.mubr.f32.gmra.mrb[0].mxu0 %v6311
        %v6529 = vpop.f32.mrb[0].mxu0
        %v6530 = vpop.f32.mrb[0].mxu0
        %6531 = vmatprep.mubr.f32.mxu0 0.0
        %6532 = vmatmul.mubr.f32.gmra.mrb[0].mxu0 %v6314
        %v6533 = vpop.f32.mrb[0].mxu0
        %v6534 = vadd.f32 0.0, %v6533
        %v6535 = vpop.f32.mrb[0].mxu0
        %6536 = vmatprep.mubr.f32.mxu0 0.0
        %6537 = vmatmul.mubr.f32.gmra.mrb[0].mxu0 %v6317
        %v6538 = vpop.f32.mrb[0].mxu0
        %v6539 = vadd.f32 0.0, %v6538
        %v6540 = vpop.f32.mrb[0].mxu0
        %6541 = vmatprep.mubr.f32.mxu0 0.0
        %6542 = vmatmul.mubr.f32.gmra.mrb[0].mxu0 %v6320
        %v6543 = vpop.f32.mrb[0].mxu0
        %v6544 = vpop.f32.mrb[0].mxu0
        %6545 = vmatprep.mubr.f32.mxu0 0.0
        %6546 = vmatmul.mubr.f32.gmra.mrb[0].mxu0 %v6323
        %v6547 = vpop.f32.mrb[0].mxu0
        %v6548 = vadd.f32 0.0, %v6547
        %v6549 = vpop.f32.mrb[0].mxu0
        %6550 = vmatprep.mubr.f32.mxu0 0.0
        %6551 = vmatmul.mubr.f32.gmra.mrb[0].mxu0 %v6326
        %v6552 = vpop.f32.mrb[0].mxu0
        %v6553 = vadd.f32 0.0, %v6552
        %v6554 = vpop.f32.mrb[0].mxu0
        %6555 = vmatprep.mubr.f32.mxu0 0.0
        %6556 = vmatmul.mubr.f32.gmra.mrb[0].mxu0 %v6329
        %v6557 = vpop.f32.mrb[0].mxu0
        %v6558 = vpop.f32.mrb[0].mxu0
        %6559 = vmatprep.mubr.f32.mxu0 0.0
        %6560 = vmatmul.mubr.f32.gmra.mrb[0].mxu0 %v6332
        %v6561 = vpop.f32.mrb[0].mxu0
        %v6562 = vadd.f32 0.0, %v6561
        %v6563 = vpop.f32.mrb[0].mxu0
        %6564 = vmatprep.mubr.f32.mxu0 0.0
        %6565 = vmatmul.mubr.f32.gmra.mrb[0].mxu0 %v6335
        %v6566 = vpop.f32.mrb[0].mxu0
        %v6567 = vadd.f32 0.0, %v6566
        %v6568 = vpop.f32.mrb[0].mxu0
        %6569 = vmatprep.mubr.f32.mxu0 0.0
        %6570 = vmatmul.mubr.f32.gmra.mrb[0].mxu0 %v6338
        %v6571 = vpop.f32.mrb[0].mxu0
        %v6572 = vpop.f32.mrb[0].mxu0
        %6573 = vmatprep.mubr.f32.mxu0 0.0
        %6574 = vmatmul.mubr.f32.gmra.mrb[0].mxu0 %v6341
        %v6575 = vpop.f32.mrb[0].mxu0
        %v6576 = vadd.f32 0.0, %v6575
        %v6577 = vpop.f32.mrb[0].mxu0
        %6578 = vmatprep.mubr.f32.mxu0 0.0
        %6579 = vmatmul.mubr.f32.gmra.mrb[0].mxu0 %v6344
        %v6580 = vpop.f32.mrb[0].mxu0
        %v6581 = vadd.f32 0.0, %v6580
        %v6582 = vpop.f32.mrb[0].mxu0
        %6583 = vmatprep.mubr.f32.mxu0 0.0
        %6584 = vmatmul.mubr.f32.gmra.mrb[0].mxu0 %v6347
        %v6585 = vpop.f32.mrb[0].mxu0
        %v6586 = vpop.f32.mrb[0].mxu0
        %6587 = vmatprep.mubr.f32.mxu0 0.0
        %6588 = vmatmul.mubr.f32.gmra.mrb[0].mxu0 %v6350
        %v6589 = vpop.f32.mrb[0].mxu0
        %v6590 = vadd.f32 0.0, %v6589
        %v6591 = vpop.f32.mrb[0].mxu0
        %6592 = vmatprep.mubr.f32.mxu0 0.0
        %6593 = vmatmul.mubr.f32.gmra.mrb[0].mxu0 %v6353
        %v6594 = vpop.f32.mrb[0].mxu0
        %v6595 = vadd.f32 0.0, %v6594
        %v6596 = vpop.f32.mrb[0].mxu0
        %6597 = vmatprep.mubr.f32.mxu0 0.0
        %6598 = vmatmul.mubr.f32.gmra.mrb[0].mxu0 %v6356
        %v6599 = vpop.f32.mrb[0].mxu0
        %v6600 = vpop.f32.mrb[0].mxu0
        %6601 = vmatprep.mubr.f32.mxu0 0.0
        %6602 = vmatmul.mubr.f32.gmra.mrb[0].mxu0 %v6359
        %v6603 = vpop.f32.mrb[0].mxu0
        %v6604 = vadd.f32 0.0, %v6603
        %v6605 = vpop.f32.mrb[0].mxu0
        %6606 = vmatprep.mubr.f32.mxu0 0.0
        %6607 = vmatmul.mubr.f32.gmra.mrb[0].mxu0 %v6362
        %v6608 = vpop.f32.mrb[0].mxu0
        %v6609 = vadd.f32 0.0, %v6608
        %v6610 = vpop.f32.mrb[0].mxu0
        %6611 = vmatprep.mubr.f32.mxu0 0.0
        %6612 = vmatmul.mubr.f32.gmra.mrb[0].mxu0 %v6365
        %v6613 = vpop.f32.mrb[0].mxu0
        %v6614 = vpop.f32.mrb[0].mxu0
        %6615 = vmatprep.mubr.f32.mxu0 0.0
        %6616 = vmatmul.mubr.f32.gmra.mrb[0].mxu0 %v6368
        %v6617 = vpop.f32.mrb[0].mxu0
        %v6618 = vadd.f32 0.0, %v6617
        %v6619 = vpop.f32.mrb[0].mxu0
        %6620 = vmatprep.mubr.f32.mxu0 0.0
        %6621 = vmatmul.mubr.f32.gmra.mrb[0].mxu0 %v6371
        %v6622 = vpop.f32.mrb[0].mxu0
        %v6623 = vadd.f32 0.0, %v6622
        %v6624 = vpop.f32.mrb[0].mxu0
        %6625 = vmatprep.mubr.f32.mxu0 0.0
        %6626 = vmatmul.mubr.f32.gmra.mrb[0].mxu0 %v6374
        %v6627 = vpop.f32.mrb[0].mxu0
        %v6628 = vpop.f32.mrb[0].mxu0
        %6629 = vmatprep.mubr.f32.mxu0 0.0
        %6630 = vmatmul.mubr.f32.gmra.mrb[0].mxu0 %v6377
        %v6631 = vpop.f32.mrb[0].mxu0
        %v6632 = vadd.f32 0.0, %v6631
        %v6633 = vpop.f32.mrb[0].mxu0
        %6634 = vmatprep.mubr.f32.mxu0 0.0
        %6635 = vmatmul.mubr.f32.gmra.mrb[0].mxu0 %v6380
        %v6636 = vpop.f32.mrb[0].mxu0
        %v6637 = vadd.f32 0.0, %v6636
        %v6638 = vpop.f32.mrb[0].mxu0
        %6639 = vmatprep.mubr.f32.mxu0 0.0
        %6640 = vmatmul.mubr.f32.gmra.mrb[0].mxu0 %v6383
        %v6641 = vpop.f32.mrb[0].mxu0
        %v6642 = vpop.f32.mrb[0].mxu0
        %6643 = vmatprep.mubr.f32.mxu0 0.0
        %6644 = vmatmul.mubr.f32.gmra.mrb[0].mxu0 %v6386
        %v6645 = vpop.f32.mrb[0].mxu0
        %v6646 = vadd.f32 0.0, %v6645
        %v6647 = vpop.f32.mrb[0].mxu0
        %6648 = vmatprep.mubr.f32.mxu0 0.0
        %6649 = vmatmul.mubr.f32.gmra.mrb[0].mxu0 %v6389
        %v6650 = vpop.f32.mrb[0].mxu0
        %v6651 = vadd.f32 0.0, %v6650
        %v6652 = vpop.f32.mrb[0].mxu0
        %6653 = vmatprep.mubr.f32.mxu0 0.0
        %6654 = vmatmul.mubr.f32.gmra.mrb[0].mxu0 %v6392
        %v6655 = vpop.f32.mrb[0].mxu0
        %v6656 = vpop.f32.mrb[0].mxu0
        %6657 = vmatprep.mubr.f32.mxu0 0.0
        %6658 = vmatmul.mubr.f32.gmra.mrb[0].mxu0 %v6395
        %v6659 = vpop.f32.mrb[0].mxu0
        %v6660 = vadd.f32 0.0, %v6659
        %v6661 = vpop.f32.mrb[0].mxu0
        %6662 = vmatprep.mubr.f32.mxu0 0.0
        %6663 = vmatmul.mubr.f32.gmra.mrb[0].mxu0 %v6398
        %v6664 = vpop.f32.mrb[0].mxu0
        %v6665 = vadd.f32 0.0, %v6664
        %v6666 = vpop.f32.mrb[0].mxu0
        %6667 = vmatprep.mubr.f32.mxu0 0.0
        %6668 = vmatmul.mubr.f32.gmra.mrb[0].mxu0 %v6401
        %v6669 = vpop.f32.mrb[0].mxu0
        %v6670 = vpop.f32.mrb[0].mxu0
        %6671 = vmatprep.mubr.f32.mxu0 0.0
        %6672 = vmatmul.mubr.f32.gmra.mrb[0].mxu0 %v6404
        %v6673 = vpop.f32.mrb[0].mxu0
        %v6674 = vadd.f32 0.0, %v6673
        %v6675 = vpop.f32.mrb[0].mxu0
        %6676 = vmatprep.mubr.f32.mxu0 0.0
        %6677 = vmatmul.mubr.f32.gmra.mrb[0].mxu0 %v6407
        %v6678 = vpop.f32.mrb[0].mxu0
        %v6679 = vadd.f32 0.0, %v6678
        %v6680 = vpop.f32.mrb[0].mxu0
        %6681 = vmatprep.mubr.f32.mxu0 0.0
        %6682 = vmatmul.mubr.f32.gmra.mrb[0].mxu0 %v6410
        %v6683 = vpop.f32.mrb[0].mxu0
        %v6684 = vpop.f32.mrb[0].mxu0
        %6685 = vmatprep.mubr.f32.mxu0 0.0
        %6686 = vmatmul.mubr.f32.gmra.mrb[0].mxu0 %v6413
        %v6687 = vpop.f32.mrb[0].mxu0
        %v6688 = vadd.f32 0.0, %v6687
        %v6689 = vpop.f32.mrb[0].mxu0
        %6690 = vmatprep.mubr.f32.mxu0 0.0
        %6691 = vmatmul.mubr.f32.gmra.mrb[0].mxu0 %v6416
        %v6692 = vpop.f32.mrb[0].mxu0
        %v6693 = vadd.f32 0.0, %v6692
        %v6694 = vpop.f32.mrb[0].mxu0
        %6695 = vmatprep.mubr.f32.mxu0 0.0
        %6696 = vmatmul.mubr.f32.gmra.mrb[0].mxu0 %v6419
        %v6697 = vpop.f32.mrb[0].mxu0
        %v6698 = vpop.f32.mrb[0].mxu0
        %6699 = vmatprep.mubr.f32.mxu0 0.0
        %6700 = vmatmul.mubr.f32.gmra.mrb[0].mxu0 %v6422
        %v6701 = vpop.f32.mrb[0].mxu0
        %v6702 = vadd.f32 0.0, %v6701
        %v6703 = vpop.f32.mrb[0].mxu0
        %6704 = vmatprep.mubr.f32.mxu0 0.0
        %6705 = vmatmul.mubr.f32.gmra.mrb[0].mxu0 %v6425
        %v6706 = vpop.f32.mrb[0].mxu0
        %v6707 = vadd.f32 0.0, %v6706
        %v6708 = vpop.f32.mrb[0].mxu0
        %6709 = vmatprep.mubr.f32.mxu0 0.0
        %6710 = vmatmul.mubr.f32.gmra.mrb[0].mxu0 %v6428
        %v6711 = vpop.f32.mrb[0].mxu0
        %v6712 = vpop.f32.mrb[0].mxu0
        %6713 = vmatprep.mubr.f32.mxu0 0.0
        %6714 = vmatmul.mubr.f32.gmra.mrb[0].mxu0 %v6431
        %v6715 = vpop.f32.mrb[0].mxu0
        %v6716 = vadd.f32 0.0, %v6715
        %v6717 = vpop.f32.mrb[0].mxu0
        %6718 = vmatprep.mubr.f32.mxu0 0.0
        %6719 = vmatmul.mubr.f32.gmra.mrb[0].mxu0 %v6434
        %v6720 = vpop.f32.mrb[0].mxu0
        %v6721 = vadd.f32 0.0, %v6720
        %v6722 = vpop.f32.mrb[0].mxu0
        %6723 = vmatprep.mubr.f32.mxu0 0.0
        %6724 = vmatmul.mubr.f32.gmra.mrb[0].mxu0 %v6437
        %v6725 = vpop.f32.mrb[0].mxu0
        %v6726 = vpop.f32.mrb[0].mxu0
        %6727 = vdwg.mxu0
        %v6728 = vadd.f32 %v6210, %v6506
        %v6729 = vadd.f32 %v6211, %v6511
        %v6730 = vadd.f32 %v6212, %v6520
        %v6731 = vadd.f32 %v6213, %v6525
        %v6732 = vadd.f32 %v6214, %v6534
        %v6733 = vadd.f32 %v6215, %v6539
        %v6734 = vadd.f32 %v6216, %v6548
        %v6735 = vadd.f32 %v6217, %v6553
        %v6736 = vadd.f32 %v6218, %v6562
        %v6737 = vadd.f32 %v6219, %v6567
        %v6738 = vadd.f32 %v6220, %v6576
        %v6739 = vadd.f32 %v6221, %v6581
        %v6740 = vadd.f32 %v6222, %v6590
        %v6741 = vadd.f32 %v6223, %v6595
        %v6742 = vadd.f32 %v6224, %v6604
        %v6743 = vadd.f32 %v6225, %v6609
        %v6744 = vadd.f32 %v6226, %v6618
        %v6745 = vadd.f32 %v6227, %v6623
        %v6746 = vadd.f32 %v6228, %v6632
        %v6747 = vadd.f32 %v6229, %v6637
        %v6748 = vadd.f32 %v6230, %v6646
        %v6749 = vadd.f32 %v6231, %v6651
        %v6750 = vadd.f32 %v6232, %v6660
        %v6751 = vadd.f32 %v6233, %v6665
        %v6752 = vadd.f32 %v6234, %v6674
        %v6753 = vadd.f32 %v6235, %v6679
        %v6754 = vadd.f32 %v6236, %v6688
        %v6755 = vadd.f32 %v6237, %v6693
        %v6756 = vadd.f32 %v6238, %v6702
        %v6757 = vadd.f32 %v6239, %v6707
        %v6758 = vadd.f32 %v6240, %v6716
        %v6759 = vadd.f32 %v6241, %v6721
        %v6761 = vlaneseq
        %v6762 = vshrl.u32 %v6761, 7
        %v6763 = vsub.s32 0, %v6762
        %v6764 = vrot.slane %v481, %v6763
        %v6766 = vmul.f32 %v6728, %v6764
        %v6767 = vmul.f32 %v6729, %v6764
        %v6768 = vmul.f32 %v6730, %v6764
        %v6769 = vmul.f32 %v6731, %v6764
        %v6770 = vmul.f32 %v6732, %v6764
        %v6771 = vmul.f32 %v6733, %v6764
        %v6772 = vmul.f32 %v6734, %v6764
        %v6773 = vmul.f32 %v6735, %v6764
        %v6774 = vmul.f32 %v6736, %v6764
        %v6775 = vmul.f32 %v6737, %v6764
        %v6776 = vmul.f32 %v6738, %v6764
        %v6777 = vmul.f32 %v6739, %v6764
        %v6778 = vmul.f32 %v6740, %v6764
        %v6779 = vmul.f32 %v6741, %v6764
        %v6780 = vmul.f32 %v6742, %v6764
        %v6781 = vmul.f32 %v6743, %v6764
        %v6782 = vmul.f32 %v6744, %v6764
        %v6783 = vmul.f32 %v6745, %v6764
        %v6784 = vmul.f32 %v6746, %v6764
        %v6785 = vmul.f32 %v6747, %v6764
        %v6786 = vmul.f32 %v6748, %v6764
        %v6787 = vmul.f32 %v6749, %v6764
        %v6788 = vmul.f32 %v6750, %v6764
        %v6789 = vmul.f32 %v6751, %v6764
        %v6790 = vmul.f32 %v6752, %v6764
        %v6791 = vmul.f32 %v6753, %v6764
        %v6792 = vmul.f32 %v6754, %v6764
        %v6793 = vmul.f32 %v6755, %v6764
        %v6794 = vmul.f32 %v6756, %v6764
        %v6795 = vmul.f32 %v6757, %v6764
        %v6796 = vmul.f32 %v6758, %v6764
        %v6797 = vmul.f32 %v6759, %v6764
        %v6799 = vlaneseq
        %v6800 = vshrl.u32 %v6799, 7
        %v6801 = vsub.s32 0, %v6800
        %v6802 = vrot.slane %v482, %v6801
        %v6804 = vadd.f32 %v6766, %v6802
        %v6805 = vadd.f32 %v6767, %v6802
        %v6806 = vadd.f32 %v6768, %v6802
        %v6807 = vadd.f32 %v6769, %v6802
        %v6808 = vadd.f32 %v6770, %v6802
        %v6809 = vadd.f32 %v6771, %v6802
        %v6810 = vadd.f32 %v6772, %v6802
        %v6811 = vadd.f32 %v6773, %v6802
        %v6812 = vadd.f32 %v6774, %v6802
        %v6813 = vadd.f32 %v6775, %v6802
        %v6814 = vadd.f32 %v6776, %v6802
        %v6815 = vadd.f32 %v6777, %v6802
        %v6816 = vadd.f32 %v6778, %v6802
        %v6817 = vadd.f32 %v6779, %v6802
        %v6818 = vadd.f32 %v6780, %v6802
        %v6819 = vadd.f32 %v6781, %v6802
        %v6820 = vadd.f32 %v6782, %v6802
        %v6821 = vadd.f32 %v6783, %v6802
        %v6822 = vadd.f32 %v6784, %v6802
        %v6823 = vadd.f32 %v6785, %v6802
        %v6824 = vadd.f32 %v6786, %v6802
        %v6825 = vadd.f32 %v6787, %v6802
        %v6826 = vadd.f32 %v6788, %v6802
        %v6827 = vadd.f32 %v6789, %v6802
        %v6828 = vadd.f32 %v6790, %v6802
        %v6829 = vadd.f32 %v6791, %v6802
        %v6830 = vadd.f32 %v6792, %v6802
        %v6831 = vadd.f32 %v6793, %v6802
        %v6832 = vadd.f32 %v6794, %v6802
        %v6833 = vadd.f32 %v6795, %v6802
        %v6834 = vadd.f32 %v6796, %v6802
        %v6835 = vadd.f32 %v6797, %v6802
        %v6836 = vadd.f32 %v6804, %v483
        %v6837 = vadd.f32 %v6805, %v484
        %v6838 = vadd.f32 %v6806, %v485
        %v6839 = vadd.f32 %v6807, %v486
        %v6840 = vadd.f32 %v6808, %v487
        %v6841 = vadd.f32 %v6809, %v488
        %v6842 = vadd.f32 %v6810, %v489
        %v6843 = vadd.f32 %v6811, %v490
        %v6844 = vadd.f32 %v6812, %v491
        %v6845 = vadd.f32 %v6813, %v492
        %v6846 = vadd.f32 %v6814, %v493
        %v6847 = vadd.f32 %v6815, %v494
        %v6848 = vadd.f32 %v6816, %v495
        %v6849 = vadd.f32 %v6817, %v496
        %v6850 = vadd.f32 %v6818, %v497
        %v6851 = vadd.f32 %v6819, %v498
        %v6852 = vadd.f32 %v6820, %v499
        %v6853 = vadd.f32 %v6821, %v500
        %v6854 = vadd.f32 %v6822, %v501
        %v6855 = vadd.f32 %v6823, %v502
        %v6856 = vadd.f32 %v6824, %v503
        %v6857 = vadd.f32 %v6825, %v504
        %v6858 = vadd.f32 %v6826, %v505
        %v6859 = vadd.f32 %v6827, %v506
        %v6860 = vadd.f32 %v6828, %v507
        %v6861 = vadd.f32 %v6829, %v508
        %v6862 = vadd.f32 %v6830, %v509
        %v6863 = vadd.f32 %v6831, %v510
        %v6864 = vadd.f32 %v6832, %v511
        %v6865 = vadd.f32 %v6833, %v512
        %v6866 = vadd.f32 %v6834, %v513
        %v6867 = vadd.f32 %v6835, %v514
        %v6868 = vmax.f32 %v6836, 0.0
        %v6869 = vmax.f32 %v6837, 0.0
        %v6870 = vmax.f32 %v6838, 0.0
        %v6871 = vmax.f32 %v6839, 0.0
        %v6872 = vmax.f32 %v6840, 0.0
        %v6873 = vmax.f32 %v6841, 0.0
        %v6874 = vmax.f32 %v6842, 0.0
        %v6875 = vmax.f32 %v6843, 0.0
        %v6876 = vmax.f32 %v6844, 0.0
        %v6877 = vmax.f32 %v6845, 0.0
        %v6878 = vmax.f32 %v6846, 0.0
        %v6879 = vmax.f32 %v6847, 0.0
        %v6880 = vmax.f32 %v6848, 0.0
        %v6881 = vmax.f32 %v6849, 0.0
        %v6882 = vmax.f32 %v6850, 0.0
        %v6883 = vmax.f32 %v6851, 0.0
        %v6884 = vmax.f32 %v6852, 0.0
        %v6885 = vmax.f32 %v6853, 0.0
        %v6886 = vmax.f32 %v6854, 0.0
        %v6887 = vmax.f32 %v6855, 0.0
        %v6888 = vmax.f32 %v6856, 0.0
        %v6889 = vmax.f32 %v6857, 0.0
        %v6890 = vmax.f32 %v6858, 0.0
        %v6891 = vmax.f32 %v6859, 0.0
        %v6892 = vmax.f32 %v6860, 0.0
        %v6893 = vmax.f32 %v6861, 0.0
        %v6894 = vmax.f32 %v6862, 0.0
        %v6895 = vmax.f32 %v6863, 0.0
        %v6896 = vmax.f32 %v6864, 0.0
        %v6897 = vmax.f32 %v6865, 0.0
        %v6898 = vmax.f32 %v6866, 0.0
        %v6899 = vmax.f32 %v6867, 0.0
        %6900 = vst.msk [vmem:[%s340] sm:$0xff] %vm346, %v6868
        %6901 = vst.msk [vmem:[%s340 + $0x8] sm:$0xff] %vm346, %v6869
        %6902 = vst.msk [vmem:[%s340 + $0x10] sm:$0xff] %vm346, %v6870
        %6903 = vst.msk [vmem:[%s340 + $0x18] sm:$0xff] %vm346, %v6871
        %6904 = vst.msk [vmem:[%s340 + $0x20] sm:$0xff] %vm346, %v6872
        %6905 = vst.msk [vmem:[%s340 + $0x28] sm:$0xff] %vm346, %v6873
        %6906 = vst.msk [vmem:[%s340 + $0x30] sm:$0xff] %vm346, %v6874
        %6907 = vst.msk [vmem:[%s340 + $0x38] sm:$0xff] %vm346, %v6875
        %6908 = vst.msk [vmem:[%s340 + $0x40] sm:$0xff] %vm346, %v6876
        %6909 = vst.msk [vmem:[%s340 + $0x48] sm:$0xff] %vm346, %v6877
        %6910 = vst.msk [vmem:[%s340 + $0x50] sm:$0xff] %vm346, %v6878
        %6911 = vst.msk [vmem:[%s340 + $0x58] sm:$0xff] %vm346, %v6879
        %6912 = vst.msk [vmem:[%s340 + $0x60] sm:$0xff] %vm346, %v6880
        %6913 = vst.msk [vmem:[%s340 + $0x68] sm:$0xff] %vm346, %v6881
        %6914 = vst.msk [vmem:[%s340 + $0x70] sm:$0xff] %vm346, %v6882
        %6915 = vst.msk [vmem:[%s340 + $0x78] sm:$0xff] %vm346, %v6883
        %6916 = vst.msk [vmem:[%s340 + $0x80] sm:$0xff] %vm346, %v6884
        %6917 = vst.msk [vmem:[%s340 + $0x88] sm:$0xff] %vm346, %v6885
        %6918 = vst.msk [vmem:[%s340 + $0x90] sm:$0xff] %vm346, %v6886
        %6919 = vst.msk [vmem:[%s340 + $0x98] sm:$0xff] %vm346, %v6887
        %6920 = vst.msk [vmem:[%s340 + $0xa0] sm:$0xff] %vm346, %v6888
        %6921 = vst.msk [vmem:[%s340 + $0xa8] sm:$0xff] %vm346, %v6889
        %6922 = vst.msk [vmem:[%s340 + $0xb0] sm:$0xff] %vm346, %v6890
        %6923 = vst.msk [vmem:[%s340 + $0xb8] sm:$0xff] %vm346, %v6891
        %6924 = vst.msk [vmem:[%s340 + $0xc0] sm:$0xff] %vm346, %v6892
        %6925 = vst.msk [vmem:[%s340 + $0xc8] sm:$0xff] %vm346, %v6893
        %6926 = vst.msk [vmem:[%s340 + $0xd0] sm:$0xff] %vm346, %v6894
        %6927 = vst.msk [vmem:[%s340 + $0xd8] sm:$0xff] %vm346, %v6895
        %6928 = vst.msk [vmem:[%s340 + $0xe0] sm:$0xff] %vm346, %v6896
        %6929 = vst.msk [vmem:[%s340 + $0xe8] sm:$0xff] %vm346, %v6897
        %6930 = vst.msk [vmem:[%s340 + $0xf0] sm:$0xff] %vm346, %v6898
        %6931 = vst.msk [vmem:[%s340 + $0xf8] sm:$0xff] %vm346, %v6899
        %s6932 = sand.u32 %s226, 1
        %s6933 = scalar_lea.sflag [#allocation5], %s6932
        %s6934 = sand.u32 %s226, 1
        %s6935 = smul.addr %s6934, 256
        %s6936 = scalar_lea.vmem [#allocation6], %s6935
        // Predicated region
        $region61: #{agcb_nogca_forward.1} parent=55 // pred_check
          %p6937 = pneg %p236
        $region62: #{agcb_nogca_forward.1} parent=55 // pred_check_branch
          %6939 = sbr.rel (%p6937) target = $region64
        $region63: #{agcb_nogca_forward.1} parent=55 // pred_region
          %s6941 = ssub.s32 4096, 4096
          %6942 = vsyncadd %s6933, %s6941
          %s6943 = smul.addr %s24, 32
          %s6944 = smul.addr %s6943, 128
          %s6945 = scalar_lea.hbm %s9, %s6944
          %s6946 = sshll.u32 %s6936, 4
          %s6947 = int_to_ptr.vmem [resolvable:$true] %s6946
          %6952 = dma.vmem_to_hbm [thread:$0]  %s6947, 4096, %s6945, %s6933, 128, 128, 8
        $region64: #{agcb_nogca_forward.1} parent=55 // pred_fallthru
          _
      $region56: #{agcb_nogca_forward.1} parent=5 // pred_fallthru
        _
      %p6953 = scmp.le.s32.totalorder 2, %s19
      // Predicated region
      $region65: #{agcb_nogca_forward.1} parent=5 // pred_check
        %p6954 = pneg %p6953
      $region66: #{agcb_nogca_forward.1} parent=5 // pred_check_branch
        %6956 = sbr.rel (%p6954) target = $region68
      $region67: #{agcb_nogca_forward.1} parent=5 // pred_region
        %s6957 = ssub.s32 %s19, 2
        // Predicated region
        $region69: #{agcb_nogca_forward.1} parent=67 // pred_check
          %p6958 = pneg %p242
        $region70: #{agcb_nogca_forward.1} parent=67 // pred_check_branch
          %6960 = sbr.rel (%p6958) target = $region72
        $region71: #{agcb_nogca_forward.1} parent=67 // pred_region
          %s6961 = sand.u32 %s227, 1
          %s6962 = scalar_lea.sflag [#allocation5], %s6961
          %s6963 = sand.u32 %s227, 1
          %s6964 = smul.addr %s6963, 256
          %s6965 = scalar_lea.vmem [#allocation6], %s6964
          %6966 = dma.done %s6962, 4096
        $region72: #{agcb_nogca_forward.1} parent=67 // pred_fallthru
          _
      $region68: #{agcb_nogca_forward.1} parent=5 // pred_fallthru
        _
    $region6: #{agcb_nogca_forward.1} parent=1 // loop_footer
      %s23 = sadd.s32 1, %s19
    $region7: #{agcb_nogca_forward.1} parent=1 // loop_footer_branch
      %18 = sbr.rel target = $region3
    $region8: #{agcb_nogca_forward.1} parent=1 // loop_exit
      _
    %6967 = vsyncpa [#allocation4], 1
    %s6968 = scalar_lea.sflag [#allocation4], 1
    %6969 = vsyncpa %s6968, 1
    %6970 = vsyncpa [#allocation5], 1
    %s6971 = scalar_lea.sflag [#allocation5], 1
    %6972 = vsyncpa %s6971, 1

</llo_original>
